<compile_context>
chip_gen: v7x
topology: tpu7x:2x2x1
jax: 0.10.0
libtpu: 0.0.40
codegen_flags: <defaults>
</compile_context>

<pallas_src>
import functools
import math

import jax
import jax.numpy as jnp
from jax.experimental import pallas as pl
from jax.experimental.pallas import tpu as pltpu


# --------------------- conv (4x4, stride 2, pad 1) + LeakyReLU ------------ #
def _conv_tap_kernel(x_ref, w_ref, o_ref, *, negative_slope):
    """One image per grid step.

    x_ref: (Ho+1, 2, Wo, 4*Cin) bf16   (row-pair, row-parity, out-col, K)
    w_ref: (4, 4*Cin, Cout)     bf16   (kernel-row tap, K, Cout)
    o_ref: (Ho, Wo, Cout)
    """
    Ho, Wo, Cout = o_ref.shape
    K = x_ref.shape[-1]
    acc = jnp.zeros((Ho, Wo, Cout), jnp.float32)
    for a in range(2):            # output-row-pair offset
        for p in range(2):        # input-row parity  -> kernel row kh = 2a+p
            lhs = x_ref[a:a + Ho, p, :, :]                   # (Ho, Wo, K)
            w3 = jnp.broadcast_to(w_ref[2 * a + p], (Ho, K, Cout))
            acc = acc + jnp.einsum("hwk,hkc->hwc", lhs, w3,
                                   preferred_element_type=jnp.float32)
    if negative_slope is not None:
        acc = jnp.where(acc >= 0.0, acc, negative_slope * acc)   # LeakyReLU
    o_ref[...] = acc.astype(o_ref.dtype)


def conv4x4_s2_pallas(x, w_taps, negative_slope=0.2, out_dtype=jnp.bfloat16):
    """x: (B, H, W, Cin) NHWC; w_taps: (4, 4*Cin, Cout). stride=2, pad=1."""
    B, H, W, Cin = x.shape
    assert H % 2 == 0 and W % 2 == 0
    Ho, Wo = H // 2, W // 2
    Cout = w_taps.shape[-1]

    # conv padding=1 (zeros) on both spatial dims.
    xp = jnp.pad(x, ((0, 0), (1, 1), (1, 1), (0, 0)))
    # Free row-major reshape: fold stride-2 column pairs into channels.
    xw = xp.reshape(B, 2 * Ho + 2, Wo + 1, 2 * Cin)
    # 2x column-pair duplication (only patch duplication left): K = 4*Cin,
    # ordered (kw, cin) to match the tap weights.
    xc = jnp.concatenate([xw[:, :, :Wo, :], xw[:, :, 1:, :]], axis=-1)
    # Free reshape: split rows into (row-pair, parity) for the in-kernel taps.
    x6 = xc.reshape(B, Ho + 1, 2, Wo, 4 * Cin)

    kernel = functools.partial(_conv_tap_kernel,
                               negative_slope=negative_slope)
    return pl.pallas_call(
        kernel,
        out_shape=jax.ShapeDtypeStruct((B, Ho, Wo, Cout), out_dtype),
        grid=(B,),
        in_specs=[
            pl.BlockSpec((None, Ho + 1, 2, Wo, 4 * Cin),
                         lambda b: (b, 0, 0, 0, 0)),
            pl.BlockSpec((4, 4 * Cin, Cout), lambda b: (0, 0, 0)),
        ],
        out_specs=pl.BlockSpec((None, Ho, Wo, Cout), lambda b: (b, 0, 0, 0)),
        compiler_params=pltpu.CompilerParams(
            dimension_semantics=("parallel",)),
    )(x6, w_taps)


# ------------------------------ final Linear ------------------------------ #
def _fc_kernel(a_ref, w_ref, o_ref):
    o_ref[...] = jnp.dot(a_ref[...], w_ref[...],
                         preferred_element_type=jnp.float32
                         ).astype(o_ref.dtype)


def linear_pallas(a, w):
    """(M, K) @ (K, N), bias-free; whole arrays resident (tiny layer)."""
    M, K = a.shape
    K2, N = w.shape
    assert K == K2
    return pl.pallas_call(
        _fc_kernel,
        out_shape=jax.ShapeDtypeStruct((M, N), jnp.float32),
        grid=(1,),
        in_specs=[pl.BlockSpec((M, K), lambda i: (0, 0)),
                  pl.BlockSpec((K, N), lambda i: (0, 0))],
        out_specs=pl.BlockSpec((M, N), lambda i: (0, 0)),
    )(a, w)


# ------------------------------ parameters -------------------------------- #
def spectral_normalize(w, n_iter=3, eps=1e-12):
    # TODO(synk): torch.nn.utils.spectral_norm keeps a randomly-initialized,
    # persistently updated `u` buffer and re-normalizes every forward; here we
    # use a deterministic power iteration once at parameter-build time.
    w2d = w.reshape(w.shape[0], -1)
    u = jnp.full((w2d.shape[0],), 1.0 / math.sqrt(w2d.shape[0]), w2d.dtype)
    v = None
    for _ in range(n_iter):
        v = w2d.T @ u
        v = v / (jnp.linalg.norm(v) + eps)
        u = w2d @ v
        u = u / (jnp.linalg.norm(u) + eps)
    sigma = u @ (w2d @ v)
    return w / sigma


def _conv_weight_to_taps(w):
    """(Cout, Cin, 4, 4) PyTorch weight -> (4, 4*Cin, Cout) bf16 tap matrices.

    Tap kh holds the K rows ordered (kw, cin), matching the kernel's K layout.
    """
    Cout, Cin, KH, KW = w.shape
    taps = w.transpose(2, 3, 1, 0).reshape(KH, KW * Cin, Cout)
    return taps.astype(jnp.bfloat16)


def build_d_params(key, output_dim, input_dim, image_size, GDscale,
                   Dscale4G, hidden_scale):
    """Mirrors D.__init__ (MB_STD=False, elr=False, Final_Linear='Linear').

    All weight permutations/reshapes happen here, once, not per forward."""
    up_times = int(math.log(image_size, 2) - 3)
    first_hidden_dim = image_size * GDscale // (2 ** up_times * Dscale4G)
    keys = jax.random.split(key, up_times + 2)
    conv_taps = []
    # first conv: Conv2d(input_dim, first_hidden_dim, 4, 2, 1, bias=False)
    w = 0.02 * jax.random.normal(
        keys[0], (first_hidden_dim, input_dim, 4, 4), jnp.float32)
    conv_taps.append(_conv_weight_to_taps(spectral_normalize(w)))
    hidden_dim = first_hidden_dim
    for t in range(up_times):
        w = 0.02 * jax.random.normal(
            keys[1 + t],
            (int(hidden_dim * hidden_scale), hidden_dim, 4, 4), jnp.float32)
        conv_taps.append(_conv_weight_to_taps(spectral_normalize(w)))
        hidden_dim = hidden_dim * 2
    # final Linear(hidden_dim*4*4, output_dim, bias=False).  Permute its input
    # dim from PyTorch's NCHW flatten order (c, h, w) to our NHWC (h, w, c)
    # so activations never need a transpose before the flatten.
    w_fc = 0.02 * jax.random.normal(
        keys[-1], (output_dim, hidden_dim * 4 * 4), jnp.float32)
    w_fc2 = (w_fc.reshape(output_dim, hidden_dim, 4, 4)
             .transpose(2, 3, 1, 0)
             .reshape(4 * 4 * hidden_dim, output_dim)
             .astype(jnp.bfloat16))
    return conv_taps, w_fc2


# -------------------------------- forward --------------------------------- #
def d_forward(x_nchw, conv_taps, w_fc2):
    """Forward of D: conv/LeakyReLU stack -> flatten -> Linear (bias-free)."""
    # single NCHW -> NHWC conversion; activations stay NHWC bf16 after this.
    y = jnp.transpose(x_nchw, (0, 2, 3, 1)).astype(jnp.bfloat16)
    for w_t in conv_taps:
        y = conv4x4_s2_pallas(y, w_t, negative_slope=0.2)
    B = y.shape[0]
    y = y.reshape(B, -1)            # NHWC flatten; w_fc2 pre-permuted to match
    return linear_pallas(y, w_fc2)  # f32 logits


if __name__ == "__main__":
    # Small config consistent with the module:
    # image_size=32 -> up_times=2, GDscale=2 -> first_hidden_dim=16,
    # channels 3 -> 16 -> 32 -> 64, spatial 32 -> 16 -> 8 -> 4,
    # final Linear(64*4*4=1024, output_dim=32).
    batch, input_dim, image_size = 2, 3, 32
    output_dim, GDscale, Dscale4G, hidden_scale = 32, 2, 1, 2

    key = jax.random.PRNGKey(0)
    kx, kp = jax.random.split(key)
    x = jax.random.normal(kx, (batch, input_dim, image_size, image_size),
                          jnp.float32)
    conv_taps, w_fc2 = build_d_params(kp, output_dim, input_dim, image_size,
                                      GDscale, Dscale4G, hidden_scale)

    y = jax.jit(d_forward)(x, conv_taps, w_fc2)
    jax.block_until_ready(y)
    assert y.shape == (batch, output_dim), y.shape
    assert y.dtype == jnp.float32
    print("KERNEL_OK")
</pallas_src>

<mosaic_0001>
module attributes {stable_mosaic.version = 11 : i64} {
  func.func @_conv_tap_kernel(%arg0: i32, %arg1: memref<1x17x2x16x12xbf16, #tpu.memory_space<vmem>>, %arg2: memref<4x12x16xbf16, #tpu.memory_space<vmem>>, %arg3: memref<1x16x16x16xbf16, #tpu.memory_space<vmem>>) attributes {dimension_semantics = [#tpu.dimension_semantics<parallel>], iteration_bounds = array<i64: 2>, scalar_prefetch = 0 : i64, scratch_operands = 0 : i64, tpu.core_type = #tpu.core_type<tc>, window_params = [{transform_indices = @transform_0, window_bounds = array<i64: 1, 17, 2, 16, 12>}, {pipeline_mode = #tpu.pipeline_mode<synchronous>, transform_indices = @transform_1, window_bounds = array<i64: 4, 12, 16>}, {transform_indices = @transform_2, window_bounds = array<i64: 1, 16, 16, 16>}]} {
    %cst = arith.constant 0.000000e+00 : f32
    %0 = vector.broadcast %cst : f32 to vector<16x16x16xf32>
    %c0 = arith.constant 0 : index
    %c0_0 = arith.constant 0 : index
    %c0_1 = arith.constant 0 : index
    %c0_2 = arith.constant 0 : index
    %c0_3 = arith.constant 0 : index
    %1 = vector.load %arg1[%c0, %c0_0, %c0_1, %c0_2, %c0_3] : memref<1x17x2x16x12xbf16, #tpu.memory_space<vmem>>, vector<1x16x1x16x12xbf16>
    %2 = vector.shape_cast %1 : vector<1x16x1x16x12xbf16> to vector<16x16x12xbf16>
    %c0_4 = arith.constant 0 : index
    %c0_5 = arith.constant 0 : index
    %c0_6 = arith.constant 0 : index
    %3 = vector.load %arg2[%c0_4, %c0_5, %c0_6] : memref<4x12x16xbf16, #tpu.memory_space<vmem>>, vector<1x12x16xbf16>
    %4 = vector.shape_cast %3 : vector<1x12x16xbf16> to vector<12x16xbf16>
    %5 = vector.shape_cast %4 : vector<12x16xbf16> to vector<1x12x16xbf16>
    %6 = vector.broadcast %5 : vector<1x12x16xbf16> to vector<16x12x16xbf16>
    "tpu.trace_start"() <{level = 10 : i32, message = "hwk,hkc->hwc"}> : () -> ()
    %cst_7 = arith.constant dense<0.000000e+00> : vector<16x16x16xf32>
    %7 = tpu.matmul %2, %6, %cst_7 {dimension_numbers = #tpu.dot_dimension_numbers<[2], [1], [1], [2], [0, 0, 0, 1, 1, 2], [0], [0]>} : vector<16x16x12xbf16>, vector<16x12x16xbf16>, vector<16x16x16xf32> -> vector<16x16x16xf32>
    "tpu.trace_stop"() : () -> ()
    %8 = arith.addf %0, %7 : vector<16x16x16xf32>
    %c0_8 = arith.constant 0 : index
    %c0_9 = arith.constant 0 : index
    %c1 = arith.constant 1 : index
    %c0_10 = arith.constant 0 : index
    %c0_11 = arith.constant 0 : index
    %9 = vector.load %arg1[%c0_8, %c0_9, %c1, %c0_10, %c0_11] : memref<1x17x2x16x12xbf16, #tpu.memory_space<vmem>>, vector<1x16x1x16x12xbf16>
    %10 = vector.shape_cast %9 : vector<1x16x1x16x12xbf16> to vector<16x16x12xbf16>
    %c1_12 = arith.constant 1 : index
    %c0_13 = arith.constant 0 : index
    %c0_14 = arith.constant 0 : index
    %11 = vector.load %arg2[%c1_12, %c0_13, %c0_14] : memref<4x12x16xbf16, #tpu.memory_space<vmem>>, vector<1x12x16xbf16>
    %12 = vector.shape_cast %11 : vector<1x12x16xbf16> to vector<12x16xbf16>
    %13 = vector.shape_cast %12 : vector<12x16xbf16> to vector<1x12x16xbf16>
    %14 = vector.broadcast %13 : vector<1x12x16xbf16> to vector<16x12x16xbf16>
    "tpu.trace_start"() <{level = 10 : i32, message = "hwk,hkc->hwc"}> : () -> ()
    %cst_15 = arith.constant dense<0.000000e+00> : vector<16x16x16xf32>
    %15 = tpu.matmul %10, %14, %cst_15 {dimension_numbers = #tpu.dot_dimension_numbers<[2], [1], [1], [2], [0, 0, 0, 1, 1, 2], [0], [0]>} : vector<16x16x12xbf16>, vector<16x12x16xbf16>, vector<16x16x16xf32> -> vector<16x16x16xf32>
    "tpu.trace_stop"() : () -> ()
    %16 = arith.addf %8, %15 : vector<16x16x16xf32>
    %c0_16 = arith.constant 0 : index
    %c1_17 = arith.constant 1 : index
    %c0_18 = arith.constant 0 : index
    %c0_19 = arith.constant 0 : index
    %c0_20 = arith.constant 0 : index
    %17 = vector.load %arg1[%c0_16, %c1_17, %c0_18, %c0_19, %c0_20] : memref<1x17x2x16x12xbf16, #tpu.memory_space<vmem>>, vector<1x16x1x16x12xbf16>
    %18 = vector.shape_cast %17 : vector<1x16x1x16x12xbf16> to vector<16x16x12xbf16>
    %c2 = arith.constant 2 : index
    %c0_21 = arith.constant 0 : index
    %c0_22 = arith.constant 0 : index
    %19 = vector.load %arg2[%c2, %c0_21, %c0_22] : memref<4x12x16xbf16, #tpu.memory_space<vmem>>, vector<1x12x16xbf16>
    %20 = vector.shape_cast %19 : vector<1x12x16xbf16> to vector<12x16xbf16>
    %21 = vector.shape_cast %20 : vector<12x16xbf16> to vector<1x12x16xbf16>
    %22 = vector.broadcast %21 : vector<1x12x16xbf16> to vector<16x12x16xbf16>
    "tpu.trace_start"() <{level = 10 : i32, message = "hwk,hkc->hwc"}> : () -> ()
    %cst_23 = arith.constant dense<0.000000e+00> : vector<16x16x16xf32>
    %23 = tpu.matmul %18, %22, %cst_23 {dimension_numbers = #tpu.dot_dimension_numbers<[2], [1], [1], [2], [0, 0, 0, 1, 1, 2], [0], [0]>} : vector<16x16x12xbf16>, vector<16x12x16xbf16>, vector<16x16x16xf32> -> vector<16x16x16xf32>
    "tpu.trace_stop"() : () -> ()
    %24 = arith.addf %16, %23 : vector<16x16x16xf32>
    %c0_24 = arith.constant 0 : index
    %c1_25 = arith.constant 1 : index
    %c1_26 = arith.constant 1 : index
    %c0_27 = arith.constant 0 : index
    %c0_28 = arith.constant 0 : index
    %25 = vector.load %arg1[%c0_24, %c1_25, %c1_26, %c0_27, %c0_28] : memref<1x17x2x16x12xbf16, #tpu.memory_space<vmem>>, vector<1x16x1x16x12xbf16>
    %26 = vector.shape_cast %25 : vector<1x16x1x16x12xbf16> to vector<16x16x12xbf16>
    %c3 = arith.constant 3 : index
    %c0_29 = arith.constant 0 : index
    %c0_30 = arith.constant 0 : index
    %27 = vector.load %arg2[%c3, %c0_29, %c0_30] : memref<4x12x16xbf16, #tpu.memory_space<vmem>>, vector<1x12x16xbf16>
    %28 = vector.shape_cast %27 : vector<1x12x16xbf16> to vector<12x16xbf16>
    %29 = vector.shape_cast %28 : vector<12x16xbf16> to vector<1x12x16xbf16>
    %30 = vector.broadcast %29 : vector<1x12x16xbf16> to vector<16x12x16xbf16>
    "tpu.trace_start"() <{level = 10 : i32, message = "hwk,hkc->hwc"}> : () -> ()
    %cst_31 = arith.constant dense<0.000000e+00> : vector<16x16x16xf32>
    %31 = tpu.matmul %26, %30, %cst_31 {dimension_numbers = #tpu.dot_dimension_numbers<[2], [1], [1], [2], [0, 0, 0, 1, 1, 2], [0], [0]>} : vector<16x16x12xbf16>, vector<16x12x16xbf16>, vector<16x16x16xf32> -> vector<16x16x16xf32>
    "tpu.trace_stop"() : () -> ()
    %32 = arith.addf %24, %31 : vector<16x16x16xf32>
    %cst_32 = arith.constant 0.000000e+00 : f32
    %33 = vector.broadcast %cst_32 : f32 to vector<16x16x16xf32>
    %34 = arith.cmpf oge, %32, %33 : vector<16x16x16xf32>
    %cst_33 = arith.constant 2.000000e-01 : f32
    %35 = vector.broadcast %cst_33 : f32 to vector<16x16x16xf32>
    %36 = arith.mulf %35, %32 : vector<16x16x16xf32>
    %37 = arith.select %34, %32, %36 : vector<16x16x16xi1>, vector<16x16x16xf32>
    %38 = arith.truncf %37 : vector<16x16x16xf32> to vector<16x16x16xbf16>
    %c0_34 = arith.constant 0 : index
    %c0_35 = arith.constant 0 : index
    %c0_36 = arith.constant 0 : index
    %c0_37 = arith.constant 0 : index
    %39 = vector.load %arg3[%c0_34, %c0_35, %c0_36, %c0_37] : memref<1x16x16x16xbf16, #tpu.memory_space<vmem>>, vector<1x16x16x16xbf16>
    %40 = vector.shape_cast %39 : vector<1x16x16x16xbf16> to vector<16x16x16xbf16>
    %41 = vector.shape_cast %38 : vector<16x16x16xbf16> to vector<1x16x16x16xbf16>
    tpu.vector_store %arg3[%c0_34, %c0_35, %c0_36, %c0_37], %41 {strides = array<i32>} : memref<1x16x16x16xbf16, #tpu.memory_space<vmem>>, vector<1x16x16x16xbf16>,
    return
  }
  func.func @transform_0(%arg0: i32) -> (i32, i32, i32, i32, i32) {
    %c0_i32 = arith.constant 0 : i32
    %c0_i32_0 = arith.constant 0 : i32
    %c0_i32_1 = arith.constant 0 : i32
    %c0_i32_2 = arith.constant 0 : i32
    %c0_i32_3 = arith.constant 0 : i32
    return %arg0, %c0_i32, %c0_i32_0, %c0_i32_1, %c0_i32_2 : i32, i32, i32, i32, i32
  }
  func.func @transform_1(%arg0: i32) -> (i32, i32, i32) {
    %c0_i32 = arith.constant 0 : i32
    %c0_i32_0 = arith.constant 0 : i32
    %c0_i32_1 = arith.constant 0 : i32
    %c0_i32_2 = arith.constant 0 : i32
    return %c0_i32, %c0_i32_0, %c0_i32_1 : i32, i32, i32
  }
  func.func @transform_2(%arg0: i32) -> (i32, i32, i32, i32) {
    %c0_i32 = arith.constant 0 : i32
    %c0_i32_0 = arith.constant 0 : i32
    %c0_i32_1 = arith.constant 0 : i32
    %c0_i32_2 = arith.constant 0 : i32
    return %arg0, %c0_i32, %c0_i32_0, %c0_i32_1 : i32, i32, i32, i32
  }
}

module attributes {stable_mosaic.version = 11 : i64} {
  func.func @_conv_tap_kernel(%arg0: i32, %arg1: memref<1x9x2x8x64xbf16, #tpu.memory_space<vmem>>, %arg2: memref<4x64x32xbf16, #tpu.memory_space<vmem>>, %arg3: memref<1x8x8x32xbf16, #tpu.memory_space<vmem>>) attributes {dimension_semantics = [#tpu.dimension_semantics<parallel>], iteration_bounds = array<i64: 2>, scalar_prefetch = 0 : i64, scratch_operands = 0 : i64, tpu.core_type = #tpu.core_type<tc>, window_params = [{transform_indices = @transform_0, window_bounds = array<i64: 1, 9, 2, 8, 64>}, {pipeline_mode = #tpu.pipeline_mode<synchronous>, transform_indices = @transform_1, window_bounds = array<i64: 4, 64, 32>}, {transform_indices = @transform_2, window_bounds = array<i64: 1, 8, 8, 32>}]} {
    %cst = arith.constant 0.000000e+00 : f32
    %0 = vector.broadcast %cst : f32 to vector<8x8x32xf32>
    %c0 = arith.constant 0 : index
    %c0_0 = arith.constant 0 : index
    %c0_1 = arith.constant 0 : index
    %c0_2 = arith.constant 0 : index
    %c0_3 = arith.constant 0 : index
    %1 = vector.load %arg1[%c0, %c0_0, %c0_1, %c0_2, %c0_3] : memref<1x9x2x8x64xbf16, #tpu.memory_space<vmem>>, vector<1x8x1x8x64xbf16>
    %2 = vector.shape_cast %1 : vector<1x8x1x8x64xbf16> to vector<8x8x64xbf16>
    %c0_4 = arith.constant 0 : index
    %c0_5 = arith.constant 0 : index
    %c0_6 = arith.constant 0 : index
    %3 = vector.load %arg2[%c0_4, %c0_5, %c0_6] : memref<4x64x32xbf16, #tpu.memory_space<vmem>>, vector<1x64x32xbf16>
    %4 = vector.shape_cast %3 : vector<1x64x32xbf16> to vector<64x32xbf16>
    %5 = vector.shape_cast %4 : vector<64x32xbf16> to vector<1x64x32xbf16>
    %6 = vector.broadcast %5 : vector<1x64x32xbf16> to vector<8x64x32xbf16>
    "tpu.trace_start"() <{level = 10 : i32, message = "hwk,hkc->hwc"}> : () -> ()
    %cst_7 = arith.constant dense<0.000000e+00> : vector<8x8x32xf32>
    %7 = tpu.matmul %2, %6, %cst_7 {dimension_numbers = #tpu.dot_dimension_numbers<[2], [1], [1], [2], [0, 0, 0, 1, 1, 2], [0], [0]>} : vector<8x8x64xbf16>, vector<8x64x32xbf16>, vector<8x8x32xf32> -> vector<8x8x32xf32>
    "tpu.trace_stop"() : () -> ()
    %8 = arith.addf %0, %7 : vector<8x8x32xf32>
    %c0_8 = arith.constant 0 : index
    %c0_9 = arith.constant 0 : index
    %c1 = arith.constant 1 : index
    %c0_10 = arith.constant 0 : index
    %c0_11 = arith.constant 0 : index
    %9 = vector.load %arg1[%c0_8, %c0_9, %c1, %c0_10, %c0_11] : memref<1x9x2x8x64xbf16, #tpu.memory_space<vmem>>, vector<1x8x1x8x64xbf16>
    %10 = vector.shape_cast %9 : vector<1x8x1x8x64xbf16> to vector<8x8x64xbf16>
    %c1_12 = arith.constant 1 : index
    %c0_13 = arith.constant 0 : index
    %c0_14 = arith.constant 0 : index
    %11 = vector.load %arg2[%c1_12, %c0_13, %c0_14] : memref<4x64x32xbf16, #tpu.memory_space<vmem>>, vector<1x64x32xbf16>
    %12 = vector.shape_cast %11 : vector<1x64x32xbf16> to vector<64x32xbf16>
    %13 = vector.shape_cast %12 : vector<64x32xbf16> to vector<1x64x32xbf16>
    %14 = vector.broadcast %13 : vector<1x64x32xbf16> to vector<8x64x32xbf16>
    "tpu.trace_start"() <{level = 10 : i32, message = "hwk,hkc->hwc"}> : () -> ()
    %cst_15 = arith.constant dense<0.000000e+00> : vector<8x8x32xf32>
    %15 = tpu.matmul %10, %14, %cst_15 {dimension_numbers = #tpu.dot_dimension_numbers<[2], [1], [1], [2], [0, 0, 0, 1, 1, 2], [0], [0]>} : vector<8x8x64xbf16>, vector<8x64x32xbf16>, vector<8x8x32xf32> -> vector<8x8x32xf32>
    "tpu.trace_stop"() : () -> ()
    %16 = arith.addf %8, %15 : vector<8x8x32xf32>
    %c0_16 = arith.constant 0 : index
    %c1_17 = arith.constant 1 : index
    %c0_18 = arith.constant 0 : index
    %c0_19 = arith.constant 0 : index
    %c0_20 = arith.constant 0 : index
    %17 = vector.load %arg1[%c0_16, %c1_17, %c0_18, %c0_19, %c0_20] : memref<1x9x2x8x64xbf16, #tpu.memory_space<vmem>>, vector<1x8x1x8x64xbf16>
    %18 = vector.shape_cast %17 : vector<1x8x1x8x64xbf16> to vector<8x8x64xbf16>
    %c2 = arith.constant 2 : index
    %c0_21 = arith.constant 0 : index
    %c0_22 = arith.constant 0 : index
    %19 = vector.load %arg2[%c2, %c0_21, %c0_22] : memref<4x64x32xbf16, #tpu.memory_space<vmem>>, vector<1x64x32xbf16>
    %20 = vector.shape_cast %19 : vector<1x64x32xbf16> to vector<64x32xbf16>
    %21 = vector.shape_cast %20 : vector<64x32xbf16> to vector<1x64x32xbf16>
    %22 = vector.broadcast %21 : vector<1x64x32xbf16> to vector<8x64x32xbf16>
    "tpu.trace_start"() <{level = 10 : i32, message = "hwk,hkc->hwc"}> : () -> ()
    %cst_23 = arith.constant dense<0.000000e+00> : vector<8x8x32xf32>
    %23 = tpu.matmul %18, %22, %cst_23 {dimension_numbers = #tpu.dot_dimension_numbers<[2], [1], [1], [2], [0, 0, 0, 1, 1, 2], [0], [0]>} : vector<8x8x64xbf16>, vector<8x64x32xbf16>, vector<8x8x32xf32> -> vector<8x8x32xf32>
    "tpu.trace_stop"() : () -> ()
    %24 = arith.addf %16, %23 : vector<8x8x32xf32>
    %c0_24 = arith.constant 0 : index
    %c1_25 = arith.constant 1 : index
    %c1_26 = arith.constant 1 : index
    %c0_27 = arith.constant 0 : index
    %c0_28 = arith.constant 0 : index
    %25 = vector.load %arg1[%c0_24, %c1_25, %c1_26, %c0_27, %c0_28] : memref<1x9x2x8x64xbf16, #tpu.memory_space<vmem>>, vector<1x8x1x8x64xbf16>
    %26 = vector.shape_cast %25 : vector<1x8x1x8x64xbf16> to vector<8x8x64xbf16>
    %c3 = arith.constant 3 : index
    %c0_29 = arith.constant 0 : index
    %c0_30 = arith.constant 0 : index
    %27 = vector.load %arg2[%c3, %c0_29, %c0_30] : memref<4x64x32xbf16, #tpu.memory_space<vmem>>, vector<1x64x32xbf16>
    %28 = vector.shape_cast %27 : vector<1x64x32xbf16> to vector<64x32xbf16>
    %29 = vector.shape_cast %28 : vector<64x32xbf16> to vector<1x64x32xbf16>
    %30 = vector.broadcast %29 : vector<1x64x32xbf16> to vector<8x64x32xbf16>
    "tpu.trace_start"() <{level = 10 : i32, message = "hwk,hkc->hwc"}> : () -> ()
    %cst_31 = arith.constant dense<0.000000e+00> : vector<8x8x32xf32>
    %31 = tpu.matmul %26, %30, %cst_31 {dimension_numbers = #tpu.dot_dimension_numbers<[2], [1], [1], [2], [0, 0, 0, 1, 1, 2], [0], [0]>} : vector<8x8x64xbf16>, vector<8x64x32xbf16>, vector<8x8x32xf32> -> vector<8x8x32xf32>
    "tpu.trace_stop"() : () -> ()
    %32 = arith.addf %24, %31 : vector<8x8x32xf32>
    %cst_32 = arith.constant 0.000000e+00 : f32
    %33 = vector.broadcast %cst_32 : f32 to vector<8x8x32xf32>
    %34 = arith.cmpf oge, %32, %33 : vector<8x8x32xf32>
    %cst_33 = arith.constant 2.000000e-01 : f32
    %35 = vector.broadcast %cst_33 : f32 to vector<8x8x32xf32>
    %36 = arith.mulf %35, %32 : vector<8x8x32xf32>
    %37 = arith.select %34, %32, %36 : vector<8x8x32xi1>, vector<8x8x32xf32>
    %38 = arith.truncf %37 : vector<8x8x32xf32> to vector<8x8x32xbf16>
    %c0_34 = arith.constant 0 : index
    %c0_35 = arith.constant 0 : index
    %c0_36 = arith.constant 0 : index
    %c0_37 = arith.constant 0 : index
    %39 = vector.load %arg3[%c0_34, %c0_35, %c0_36, %c0_37] : memref<1x8x8x32xbf16, #tpu.memory_space<vmem>>, vector<1x8x8x32xbf16>
    %40 = vector.shape_cast %39 : vector<1x8x8x32xbf16> to vector<8x8x32xbf16>
    %41 = vector.shape_cast %38 : vector<8x8x32xbf16> to vector<1x8x8x32xbf16>
    tpu.vector_store %arg3[%c0_34, %c0_35, %c0_36, %c0_37], %41 {strides = array<i32>} : memref<1x8x8x32xbf16, #tpu.memory_space<vmem>>, vector<1x8x8x32xbf16>,
    return
  }
  func.func @transform_0(%arg0: i32) -> (i32, i32, i32, i32, i32) {
    %c0_i32 = arith.constant 0 : i32
    %c0_i32_0 = arith.constant 0 : i32
    %c0_i32_1 = arith.constant 0 : i32
    %c0_i32_2 = arith.constant 0 : i32
    %c0_i32_3 = arith.constant 0 : i32
    return %arg0, %c0_i32, %c0_i32_0, %c0_i32_1, %c0_i32_2 : i32, i32, i32, i32, i32
  }
  func.func @transform_1(%arg0: i32) -> (i32, i32, i32) {
    %c0_i32 = arith.constant 0 : i32
    %c0_i32_0 = arith.constant 0 : i32
    %c0_i32_1 = arith.constant 0 : i32
    %c0_i32_2 = arith.constant 0 : i32
    return %c0_i32, %c0_i32_0, %c0_i32_1 : i32, i32, i32
  }
  func.func @transform_2(%arg0: i32) -> (i32, i32, i32, i32) {
    %c0_i32 = arith.constant 0 : i32
    %c0_i32_0 = arith.constant 0 : i32
    %c0_i32_1 = arith.constant 0 : i32
    %c0_i32_2 = arith.constant 0 : i32
    return %arg0, %c0_i32, %c0_i32_0, %c0_i32_1 : i32, i32, i32, i32
  }
}

module attributes {stable_mosaic.version = 11 : i64} {
  func.func @_conv_tap_kernel(%arg0: i32, %arg1: memref<1x5x2x4x128xbf16, #tpu.memory_space<vmem>>, %arg2: memref<4x128x64xbf16, #tpu.memory_space<vmem>>, %arg3: memref<1x4x4x64xbf16, #tpu.memory_space<vmem>>) attributes {dimension_semantics = [#tpu.dimension_semantics<parallel>], iteration_bounds = array<i64: 2>, scalar_prefetch = 0 : i64, scratch_operands = 0 : i64, tpu.core_type = #tpu.core_type<tc>, window_params = [{transform_indices = @transform_0, window_bounds = array<i64: 1, 5, 2, 4, 128>}, {pipeline_mode = #tpu.pipeline_mode<synchronous>, transform_indices = @transform_1, window_bounds = array<i64: 4, 128, 64>}, {transform_indices = @transform_2, window_bounds = array<i64: 1, 4, 4, 64>}]} {
    %cst = arith.constant 0.000000e+00 : f32
    %0 = vector.broadcast %cst : f32 to vector<4x4x64xf32>
    %c0 = arith.constant 0 : index
    %c0_0 = arith.constant 0 : index
    %c0_1 = arith.constant 0 : index
    %c0_2 = arith.constant 0 : index
    %c0_3 = arith.constant 0 : index
    %1 = vector.load %arg1[%c0, %c0_0, %c0_1, %c0_2, %c0_3] : memref<1x5x2x4x128xbf16, #tpu.memory_space<vmem>>, vector<1x4x1x4x128xbf16>
    %2 = vector.shape_cast %1 : vector<1x4x1x4x128xbf16> to vector<4x4x128xbf16>
    %c0_4 = arith.constant 0 : index
    %c0_5 = arith.constant 0 : index
    %c0_6 = arith.constant 0 : index
    %3 = vector.load %arg2[%c0_4, %c0_5, %c0_6] : memref<4x128x64xbf16, #tpu.memory_space<vmem>>, vector<1x128x64xbf16>
    %4 = vector.shape_cast %3 : vector<1x128x64xbf16> to vector<128x64xbf16>
    %5 = vector.shape_cast %4 : vector<128x64xbf16> to vector<1x128x64xbf16>
    %6 = vector.broadcast %5 : vector<1x128x64xbf16> to vector<4x128x64xbf16>
    "tpu.trace_start"() <{level = 10 : i32, message = "hwk,hkc->hwc"}> : () -> ()
    %cst_7 = arith.constant dense<0.000000e+00> : vector<4x4x64xf32>
    %7 = tpu.matmul %2, %6, %cst_7 {dimension_numbers = #tpu.dot_dimension_numbers<[2], [1], [1], [2], [0, 0, 0, 1, 1, 2], [0], [0]>} : vector<4x4x128xbf16>, vector<4x128x64xbf16>, vector<4x4x64xf32> -> vector<4x4x64xf32>
    "tpu.trace_stop"() : () -> ()
    %8 = arith.addf %0, %7 : vector<4x4x64xf32>
    %c0_8 = arith.constant 0 : index
    %c0_9 = arith.constant 0 : index
    %c1 = arith.constant 1 : index
    %c0_10 = arith.constant 0 : index
    %c0_11 = arith.constant 0 : index
    %9 = vector.load %arg1[%c0_8, %c0_9, %c1, %c0_10, %c0_11] : memref<1x5x2x4x128xbf16, #tpu.memory_space<vmem>>, vector<1x4x1x4x128xbf16>
    %10 = vector.shape_cast %9 : vector<1x4x1x4x128xbf16> to vector<4x4x128xbf16>
    %c1_12 = arith.constant 1 : index
    %c0_13 = arith.constant 0 : index
    %c0_14 = arith.constant 0 : index
    %11 = vector.load %arg2[%c1_12, %c0_13, %c0_14] : memref<4x128x64xbf16, #tpu.memory_space<vmem>>, vector<1x128x64xbf16>
    %12 = vector.shape_cast %11 : vector<1x128x64xbf16> to vector<128x64xbf16>
    %13 = vector.shape_cast %12 : vector<128x64xbf16> to vector<1x128x64xbf16>
    %14 = vector.broadcast %13 : vector<1x128x64xbf16> to vector<4x128x64xbf16>
    "tpu.trace_start"() <{level = 10 : i32, message = "hwk,hkc->hwc"}> : () -> ()
    %cst_15 = arith.constant dense<0.000000e+00> : vector<4x4x64xf32>
    %15 = tpu.matmul %10, %14, %cst_15 {dimension_numbers = #tpu.dot_dimension_numbers<[2], [1], [1], [2], [0, 0, 0, 1, 1, 2], [0], [0]>} : vector<4x4x128xbf16>, vector<4x128x64xbf16>, vector<4x4x64xf32> -> vector<4x4x64xf32>
    "tpu.trace_stop"() : () -> ()
    %16 = arith.addf %8, %15 : vector<4x4x64xf32>
    %c0_16 = arith.constant 0 : index
    %c1_17 = arith.constant 1 : index
    %c0_18 = arith.constant 0 : index
    %c0_19 = arith.constant 0 : index
    %c0_20 = arith.constant 0 : index
    %17 = vector.load %arg1[%c0_16, %c1_17, %c0_18, %c0_19, %c0_20] : memref<1x5x2x4x128xbf16, #tpu.memory_space<vmem>>, vector<1x4x1x4x128xbf16>
    %18 = vector.shape_cast %17 : vector<1x4x1x4x128xbf16> to vector<4x4x128xbf16>
    %c2 = arith.constant 2 : index
    %c0_21 = arith.constant 0 : index
    %c0_22 = arith.constant 0 : index
    %19 = vector.load %arg2[%c2, %c0_21, %c0_22] : memref<4x128x64xbf16, #tpu.memory_space<vmem>>, vector<1x128x64xbf16>
    %20 = vector.shape_cast %19 : vector<1x128x64xbf16> to vector<128x64xbf16>
    %21 = vector.shape_cast %20 : vector<128x64xbf16> to vector<1x128x64xbf16>
    %22 = vector.broadcast %21 : vector<1x128x64xbf16> to vector<4x128x64xbf16>
    "tpu.trace_start"() <{level = 10 : i32, message = "hwk,hkc->hwc"}> : () -> ()
    %cst_23 = arith.constant dense<0.000000e+00> : vector<4x4x64xf32>
    %23 = tpu.matmul %18, %22, %cst_23 {dimension_numbers = #tpu.dot_dimension_numbers<[2], [1], [1], [2], [0, 0, 0, 1, 1, 2], [0], [0]>} : vector<4x4x128xbf16>, vector<4x128x64xbf16>, vector<4x4x64xf32> -> vector<4x4x64xf32>
    "tpu.trace_stop"() : () -> ()
    %24 = arith.addf %16, %23 : vector<4x4x64xf32>
    %c0_24 = arith.constant 0 : index
    %c1_25 = arith.constant 1 : index
    %c1_26 = arith.constant 1 : index
    %c0_27 = arith.constant 0 : index
    %c0_28 = arith.constant 0 : index
    %25 = vector.load %arg1[%c0_24, %c1_25, %c1_26, %c0_27, %c0_28] : memref<1x5x2x4x128xbf16, #tpu.memory_space<vmem>>, vector<1x4x1x4x128xbf16>
    %26 = vector.shape_cast %25 : vector<1x4x1x4x128xbf16> to vector<4x4x128xbf16>
    %c3 = arith.constant 3 : index
    %c0_29 = arith.constant 0 : index
    %c0_30 = arith.constant 0 : index
    %27 = vector.load %arg2[%c3, %c0_29, %c0_30] : memref<4x128x64xbf16, #tpu.memory_space<vmem>>, vector<1x128x64xbf16>
    %28 = vector.shape_cast %27 : vector<1x128x64xbf16> to vector<128x64xbf16>
    %29 = vector.shape_cast %28 : vector<128x64xbf16> to vector<1x128x64xbf16>
    %30 = vector.broadcast %29 : vector<1x128x64xbf16> to vector<4x128x64xbf16>
    "tpu.trace_start"() <{level = 10 : i32, message = "hwk,hkc->hwc"}> : () -> ()
    %cst_31 = arith.constant dense<0.000000e+00> : vector<4x4x64xf32>
    %31 = tpu.matmul %26, %30, %cst_31 {dimension_numbers = #tpu.dot_dimension_numbers<[2], [1], [1], [2], [0, 0, 0, 1, 1, 2], [0], [0]>} : vector<4x4x128xbf16>, vector<4x128x64xbf16>, vector<4x4x64xf32> -> vector<4x4x64xf32>
    "tpu.trace_stop"() : () -> ()
    %32 = arith.addf %24, %31 : vector<4x4x64xf32>
    %cst_32 = arith.constant 0.000000e+00 : f32
    %33 = vector.broadcast %cst_32 : f32 to vector<4x4x64xf32>
    %34 = arith.cmpf oge, %32, %33 : vector<4x4x64xf32>
    %cst_33 = arith.constant 2.000000e-01 : f32
    %35 = vector.broadcast %cst_33 : f32 to vector<4x4x64xf32>
    %36 = arith.mulf %35, %32 : vector<4x4x64xf32>
    %37 = arith.select %34, %32, %36 : vector<4x4x64xi1>, vector<4x4x64xf32>
    %38 = arith.truncf %37 : vector<4x4x64xf32> to vector<4x4x64xbf16>
    %c0_34 = arith.constant 0 : index
    %c0_35 = arith.constant 0 : index
    %c0_36 = arith.constant 0 : index
    %c0_37 = arith.constant 0 : index
    %39 = vector.load %arg3[%c0_34, %c0_35, %c0_36, %c0_37] : memref<1x4x4x64xbf16, #tpu.memory_space<vmem>>, vector<1x4x4x64xbf16>
    %40 = vector.shape_cast %39 : vector<1x4x4x64xbf16> to vector<4x4x64xbf16>
    %41 = vector.shape_cast %38 : vector<4x4x64xbf16> to vector<1x4x4x64xbf16>
    tpu.vector_store %arg3[%c0_34, %c0_35, %c0_36, %c0_37], %41 {strides = array<i32>} : memref<1x4x4x64xbf16, #tpu.memory_space<vmem>>, vector<1x4x4x64xbf16>,
    return
  }
  func.func @transform_0(%arg0: i32) -> (i32, i32, i32, i32, i32) {
    %c0_i32 = arith.constant 0 : i32
    %c0_i32_0 = arith.constant 0 : i32
    %c0_i32_1 = arith.constant 0 : i32
    %c0_i32_2 = arith.constant 0 : i32
    %c0_i32_3 = arith.constant 0 : i32
    return %arg0, %c0_i32, %c0_i32_0, %c0_i32_1, %c0_i32_2 : i32, i32, i32, i32, i32
  }
  func.func @transform_1(%arg0: i32) -> (i32, i32, i32) {
    %c0_i32 = arith.constant 0 : i32
    %c0_i32_0 = arith.constant 0 : i32
    %c0_i32_1 = arith.constant 0 : i32
    %c0_i32_2 = arith.constant 0 : i32
    return %c0_i32, %c0_i32_0, %c0_i32_1 : i32, i32, i32
  }
  func.func @transform_2(%arg0: i32) -> (i32, i32, i32, i32) {
    %c0_i32 = arith.constant 0 : i32
    %c0_i32_0 = arith.constant 0 : i32
    %c0_i32_1 = arith.constant 0 : i32
    %c0_i32_2 = arith.constant 0 : i32
    return %arg0, %c0_i32, %c0_i32_0, %c0_i32_1 : i32, i32, i32, i32
  }
}

module attributes {stable_mosaic.version = 11 : i64} {
  func.func @_fc_kernel(%arg0: i32, %arg1: memref<2x1024xbf16, #tpu.memory_space<vmem>>, %arg2: memref<1024x32xbf16, #tpu.memory_space<vmem>>, %arg3: memref<2x32xf32, #tpu.memory_space<vmem>>) attributes {dimension_semantics = [#tpu.dimension_semantics<arbitrary>], iteration_bounds = array<i64: 1>, scalar_prefetch = 0 : i64, scratch_operands = 0 : i64, tpu.core_type = #tpu.core_type<tc>, window_params = [{pipeline_mode = #tpu.pipeline_mode<synchronous>, transform_indices = @transform_0, window_bounds = array<i64: 2, 1024>}, {pipeline_mode = #tpu.pipeline_mode<synchronous>, transform_indices = @transform_1, window_bounds = array<i64: 1024, 32>}, {pipeline_mode = #tpu.pipeline_mode<synchronous>, transform_indices = @transform_2, window_bounds = array<i64: 2, 32>}]} {
    %c0 = arith.constant 0 : index
    %c0_0 = arith.constant 0 : index
    %0 = vector.load %arg1[%c0, %c0_0] : memref<2x1024xbf16, #tpu.memory_space<vmem>>, vector<2x1024xbf16>
    %c0_1 = arith.constant 0 : index
    %c0_2 = arith.constant 0 : index
    %1 = vector.load %arg2[%c0_1, %c0_2] : memref<1024x32xbf16, #tpu.memory_space<vmem>>, vector<1024x32xbf16>
    %cst = arith.constant dense<0.000000e+00> : vector<2x32xf32>
    %2 = tpu.matmul %0, %1, %cst {dimension_numbers = #tpu.dot_dimension_numbers<[1], [0], [0], [1], [0, 0, 1, 1], [], []>} : vector<2x1024xbf16>, vector<1024x32xbf16>, vector<2x32xf32> -> vector<2x32xf32>
    %c0_3 = arith.constant 0 : index
    %c0_4 = arith.constant 0 : index
    %3 = vector.load %arg3[%c0_3, %c0_4] : memref<2x32xf32, #tpu.memory_space<vmem>>, vector<2x32xf32>
    tpu.vector_store %arg3[%c0_3, %c0_4], %2 {strides = array<i32>} : memref<2x32xf32, #tpu.memory_space<vmem>>, vector<2x32xf32>,
    return
  }
  func.func @transform_0(%arg0: i32) -> (i32, i32) {
    %c0_i32 = arith.constant 0 : i32
    %c0_i32_0 = arith.constant 0 : i32
    %c0_i32_1 = arith.constant 0 : i32
    return %c0_i32, %c0_i32_0 : i32, i32
  }
  func.func @transform_1(%arg0: i32) -> (i32, i32) {
    %c0_i32 = arith.constant 0 : i32
    %c0_i32_0 = arith.constant 0 : i32
    %c0_i32_1 = arith.constant 0 : i32
    return %c0_i32, %c0_i32_0 : i32, i32
  }
  func.func @transform_2(%arg0: i32) -> (i32, i32) {
    %c0_i32 = arith.constant 0 : i32
    %c0_i32_0 = arith.constant 0 : i32
    %c0_i32_1 = arith.constant 0 : i32
    return %c0_i32, %c0_i32_0 : i32, i32
  }
}

</mosaic_0001>

<llo_original>
// kernel: d_forward.6
$region0: #{d_forward.6}
  #allocation0 [shape = 'u32[]', space=smem, size = 0x4, offset = 0x4, fixed_abs, tag = 'smem constant byte address 0x4 - core index']
  #allocation1 [shape = 'u32[144,128]{1,0:T(1,128)}', space=vmem, size = 0x12000, scoped, tag = 'internal scratch']
  %s0 = inlined_call_operand.vmem [shape: bf16[2,5,2,4,128], index: 0, kind: input, shape index: {}]
  %s1 = inlined_call_operand.vmem [shape: bf16[4,128,64], index: 1, kind: input, shape index: {}]
  %s2 = inlined_call_operand.vmem [shape: bf16[2,4,4,64], index: 2, kind: output, shape index: {}]
  %s3 = sld [smem:[#allocation0]]
  $region41: #{d_forward.6} parent=0
    _
  %s5 = ssub.s32 1, %s3
  %s6 = scalar_select 0, %s5, %s3
  loop: start=0, step=1, limit=4
  $region2: #{d_forward.6} parent=0 // loop_pre_header
    _
  $region3: #{d_forward.6} parent=0 // loop_header
    %s8 = sphi 0, %s12
    %p9 = scmp.ge.s32.totalorder %s8, 4
    %s18 = sphi 0, %s20
    %s21 = sphi 0, %s18
    %s22 = sphi 0, %s21
    %s38 = sphi 0, %s22
    %s42 = sphi 0, %s42
    %s44 = sphi 0, %s42
    %s45 = sphi 0, %s44
    %s59 = sphi 0, %s45
    %s65 = sphi 0, %s67
    %s68 = sphi 0, %s65
    %s69 = sphi 0, %s68
    %s85 = sphi 0, %s69
  $region4: #{d_forward.6} parent=0 // loop_header_branch
    %11 = sbr.rel (%p9) target = $region8
  $region5: #{d_forward.6} parent=0 // loop_body
    %s13 = ssub.s32 %s8, 1
    %s14 = ssub.s32 %s8, 2
    %s15 = sadd.s32 %s8, 1
    %s16 = ssub.s32 %s8, %s15
    %p17 = scmp.eq.s32.totalorder %s16, 0
    %s19 = sadd.s32 %s18, 1
    %s20 = scalar_select %p17, %s18, %s19
    %p23 = pneg %p17
    %p24 = scmp.eq.s32.totalorder %s8, 1
    %p25 = por %p23, %p24
    %p26 = scmp.ne.s32.totalorder %s18, %s21
    %p27 = scmp.eq.s32.totalorder %s8, 0
    %p28 = por %p26, %p27
    %p29 = scmp.ne.s32.totalorder %s18, %s21
    %p30 = scmp.eq.s32.totalorder %s13, 1
    %p31 = por %p29, %p30
    %p32 = scmp.ne.s32.totalorder %s21, %s22
    %p33 = scmp.eq.s32.totalorder %s13, 0
    %p34 = por %p32, %p33
    %p35 = scmp.ne.s32.totalorder %s21, %s22
    %p36 = scmp.eq.s32.totalorder %s14, 1
    %p37 = por %p35, %p36
    %p39 = scmp.ne.s32.totalorder %s22, %s38
    %p40 = scmp.eq.s32.totalorder %s14, 0
    %p41 = por %p39, %p40
    %s43 = sadd.s32 %s42, 1
    %p46 = scmp.eq.s32.totalorder %s8, 1
    %p47 = scmp.ne.s32.totalorder %s42, %s44
    %p48 = scmp.eq.s32.totalorder %s8, 0
    %p49 = por %p47, %p48
    %p50 = scmp.ne.s32.totalorder %s42, %s44
    %p51 = scmp.eq.s32.totalorder %s13, 1
    %p52 = por %p50, %p51
    %p53 = scmp.ne.s32.totalorder %s44, %s45
    %p54 = scmp.eq.s32.totalorder %s13, 0
    %p55 = por %p53, %p54
    %p56 = scmp.ne.s32.totalorder %s44, %s45
    %p57 = scmp.eq.s32.totalorder %s14, 1
    %p58 = por %p56, %p57
    %p60 = scmp.ne.s32.totalorder %s45, %s59
    %p61 = scmp.eq.s32.totalorder %s14, 0
    %p62 = por %p60, %p61
    %s63 = ssub.s32 %s8, %s15
    %p64 = scmp.eq.s32.totalorder %s63, 0
    %s66 = sadd.s32 %s65, 1
    %s67 = scalar_select %p64, %s65, %s66
    %p70 = pneg %p64
    %p71 = scmp.eq.s32.totalorder %s8, 1
    %p72 = por %p70, %p71
    %p73 = scmp.ne.s32.totalorder %s65, %s68
    %p74 = scmp.eq.s32.totalorder %s8, 0
    %p75 = por %p73, %p74
    %p76 = scmp.ne.s32.totalorder %s65, %s68
    %p77 = scmp.eq.s32.totalorder %s13, 1
    %p78 = por %p76, %p77
    %p79 = scmp.ne.s32.totalorder %s68, %s69
    %p80 = scmp.eq.s32.totalorder %s13, 0
    %p81 = por %p79, %p80
    %p82 = scmp.ne.s32.totalorder %s68, %s69
    %p83 = scmp.eq.s32.totalorder %s14, 1
    %p84 = por %p82, %p83
    %p86 = scmp.ne.s32.totalorder %s69, %s85
    %p87 = scmp.eq.s32.totalorder %s14, 0
    %p88 = por %p86, %p87
    %p89 = scmp.le.s32.totalorder 1, %s8
    %p90 = scmp.lt.s32.totalorder %s8, 3
    %p91 = pnand %p89, %p90
    %p92 = pneg %p91
    // Predicated region
    $region9: #{d_forward.6} parent=5 // pred_check
      _
    $region10: #{d_forward.6} parent=5 // pred_check_branch
      %94 = sbr.rel (%p91) target = $region12
    $region11: #{d_forward.6} parent=5 // pred_region
      %s95 = ssub.s32 %s8, 1
      // Predicated region
      $region13: #{d_forward.6} parent=11 // pred_check
        %p96 = pneg %p55
      $region14: #{d_forward.6} parent=11 // pred_check_branch
        %98 = sbr.rel (%p96) target = $region16
      $region15: #{d_forward.6} parent=11 // pred_region
        _
      $region16: #{d_forward.6} parent=11 // pred_fallthru
        _
    $region12: #{d_forward.6} parent=5 // pred_fallthru
      _
    %p99 = scmp.lt.s32.totalorder %s8, 2
    // Predicated region
    $region17: #{d_forward.6} parent=5 // pred_check
      %p100 = pneg %p99
    $region18: #{d_forward.6} parent=5 // pred_check_branch
      %102 = sbr.rel (%p100) target = $region20
    $region19: #{d_forward.6} parent=5 // pred_region
      // Predicated region
      $region21: #{d_forward.6} parent=19 // pred_check
        %p103 = pneg %p28
      $region22: #{d_forward.6} parent=19 // pred_check_branch
        %105 = sbr.rel (%p103) target = $region24
      $region23: #{d_forward.6} parent=19 // pred_region
        %p106 = scmp.lt.s32.totalorder %s8, 1
        %s107 = scalar_select %p106, %s8, 1
        %s108 = smul.addr %s107, 10
        %s109 = smul.addr %s108, 2
        %s110 = scalar_lea.vmem %s0, %s109
      $region24: #{d_forward.6} parent=19 // pred_fallthru
        _
    $region20: #{d_forward.6} parent=5 // pred_fallthru
      _
    %p111 = scmp.le.s32.totalorder 1, %s8
    %p112 = scmp.lt.s32.totalorder %s8, 3
    %p113 = pnand %p111, %p112
    %p114 = pneg %p113
    // Predicated region
    $region25: #{d_forward.6} parent=5 // pred_check
      _
    $region26: #{d_forward.6} parent=5 // pred_check_branch
      %116 = sbr.rel (%p113) target = $region28
    $region27: #{d_forward.6} parent=5 // pred_region
      %s117 = ssub.s32 %s8, 1
      %p118 = scmp.lt.s32.totalorder %s13, 1
      %s119 = scalar_select %p118, %s13, 1
      %s120 = smul.addr %s119, 10
      %s121 = smul.addr %s120, 2
      %s122 = scalar_lea.vmem %s0, %s121
      %p123 = pneg %p34
      %p124 = pneg %p31
      %p125 = pneg %p55
      %p126 = pneg %p52
      %p127 = pneg %p81
      %p128 = pneg %p78
      %p129 = scmp.lt.s32.totalorder %s13, 1
      %s130 = scalar_select %p129, %s13, 1
      %s131 = smul.addr %s130, 4
      %s132 = smul.addr %s131, 2
      %s133 = scalar_lea.vmem %s2, %s132
      %p134 = scmp.lt.s32.totalorder %s13, 1
      %s135 = scalar_select %p134, %s13, 1
      %s136 = smul.addr %s135, 10
      %s137 = smul.addr %s136, 2
      %s138 = scalar_lea.vmem %s0, %s137
      %p139 = scmp.lt.s32.totalorder %s13, 1
      %s140 = scalar_select %p139, %s13, 1
      %s141 = smul.addr %s140, 4
      %s142 = smul.addr %s141, 2
      %s143 = scalar_lea.vmem %s2, %s142
      %v145 = vld [vmem:[%s138] sm:$0x3]
      %v146 = vld [vmem:[%s138 + $0x4] sm:$0x3]
      %v147 = vld [vmem:[%s138 + $0x8] sm:$0x3]
      %v148 = vld [vmem:[%s138 + $0xc] sm:$0x3]
      %v149 = vld [vmem:[%s1] sm:$0xf]
      %v150 = vld [vmem:[%s1 + $0x4] sm:$0xf]
      %v151 = vld [vmem:[%s1 + $0x8] sm:$0xf]
      %v152 = vld [vmem:[%s1 + $0xc] sm:$0xf]
      %v153 = vld [vmem:[%s1 + $0x10] sm:$0xf]
      %v154 = vld [vmem:[%s1 + $0x14] sm:$0xf]
      %v155 = vld [vmem:[%s1 + $0x18] sm:$0xf]
      %v156 = vld [vmem:[%s1 + $0x1c] sm:$0xf]
      %v157 = vld [vmem:[%s1 + $0x20] sm:$0xf]
      %v158 = vld [vmem:[%s1 + $0x24] sm:$0xf]
      %v159 = vld [vmem:[%s1 + $0x28] sm:$0xf]
      %v160 = vld [vmem:[%s1 + $0x2c] sm:$0xf]
      %v161 = vld [vmem:[%s1 + $0x30] sm:$0xf]
      %v162 = vld [vmem:[%s1 + $0x34] sm:$0xf]
      %v163 = vld [vmem:[%s1 + $0x38] sm:$0xf]
      %v164 = vld [vmem:[%s1 + $0x3c] sm:$0xf]
      %s165 = scalar_lea.vmem %s138, 2
      %v166 = vld [vmem:[%s165] sm:$0x3]
      %v167 = vld [vmem:[%s165 + $0x4] sm:$0x3]
      %v168 = vld [vmem:[%s165 + $0x8] sm:$0x3]
      %v169 = vld [vmem:[%s165 + $0xc] sm:$0x3]
      %s170 = scalar_lea.vmem %s1, 64
      %v171 = vld [vmem:[%s170] sm:$0xf]
      %v172 = vld [vmem:[%s170 + $0x4] sm:$0xf]
      %v173 = vld [vmem:[%s170 + $0x8] sm:$0xf]
      %v174 = vld [vmem:[%s170 + $0xc] sm:$0xf]
      %v175 = vld [vmem:[%s170 + $0x10] sm:$0xf]
      %v176 = vld [vmem:[%s170 + $0x14] sm:$0xf]
      %v177 = vld [vmem:[%s170 + $0x18] sm:$0xf]
      %v178 = vld [vmem:[%s170 + $0x1c] sm:$0xf]
      %v179 = vld [vmem:[%s170 + $0x20] sm:$0xf]
      %v180 = vld [vmem:[%s170 + $0x24] sm:$0xf]
      %v181 = vld [vmem:[%s170 + $0x28] sm:$0xf]
      %v182 = vld [vmem:[%s170 + $0x2c] sm:$0xf]
      %v183 = vld [vmem:[%s170 + $0x30] sm:$0xf]
      %v184 = vld [vmem:[%s170 + $0x34] sm:$0xf]
      %v185 = vld [vmem:[%s170 + $0x38] sm:$0xf]
      %v186 = vld [vmem:[%s170 + $0x3c] sm:$0xf]
      %v203 = vunpack.c.l.b16 %v171
      %v204 = vunpack.c.l.b16 %v172
      %v205 = vunpack.c.l.b16 %v173
      %v206 = vunpack.c.l.b16 %v174
      %v207 = vunpack.c.l.b16 %v175
      %v208 = vunpack.c.l.b16 %v176
      %v209 = vunpack.c.l.b16 %v177
      %v210 = vunpack.c.l.b16 %v178
      %v211 = vunpack.c.l.b16 %v179
      %v212 = vunpack.c.l.b16 %v180
      %v213 = vunpack.c.l.b16 %v181
      %v214 = vunpack.c.l.b16 %v182
      %v215 = vunpack.c.l.b16 %v183
      %v216 = vunpack.c.l.b16 %v184
      %v217 = vunpack.c.l.b16 %v185
      %v218 = vunpack.c.l.b16 %v186
      %v219 = vpack.c.b16 %v204, %v203
      %v220 = vpack.c.b16 %v206, %v205
      %v221 = vpack.c.b16 %v208, %v207
      %v222 = vpack.c.b16 %v210, %v209
      %v223 = vpack.c.b16 %v212, %v211
      %v224 = vpack.c.b16 %v214, %v213
      %v225 = vpack.c.b16 %v216, %v215
      %v226 = vpack.c.b16 %v218, %v217
      %235 = vmatprep.subr.bf16.mxu0 0
      %236 = vmatpush1.bf16.msra.mxu0 %v219
      %237 = vmatprep.subr.bf16.mxu0 0
      %238 = vmatpush1.bf16.msra.mxu0 %v220
      %239 = vmatprep.subr.bf16.mxu0 0
      %240 = vmatpush1.bf16.msra.mxu0 %v221
      %241 = vmatprep.subr.bf16.mxu0 0
      %242 = vmatpush1.bf16.msra.mxu0 %v222
      %243 = vmatprep.subr.bf16.mxu0 0
      %244 = vmatpush1.bf16.msra.mxu0 %v223
      %245 = vmatprep.subr.bf16.mxu0 0
      %246 = vmatpush1.bf16.msra.mxu0 %v224
      %247 = vmatprep.subr.bf16.mxu0 0
      %248 = vmatpush1.bf16.msra.mxu0 %v225
      %249 = vmatprep.subr.bf16.mxu0 0
      %250 = vmatpush1.bf16.msra.mxu0 %v226
      %251 = vmatprep.subr.bf16.mxu0 0
      %252 = vmatpush1.bf16.msra.mxu0 0
      %253 = vmatprep.subr.bf16.mxu0 0
      %254 = vmatpush1.bf16.msra.mxu0 0
      %255 = vmatprep.subr.bf16.mxu0 0
      %256 = vmatpush1.bf16.msra.mxu0 0
      %257 = vmatprep.subr.bf16.mxu0 0
      %258 = vmatpush1.bf16.msra.mxu0 0
      %259 = vmatprep.subr.bf16.mxu0 0
      %260 = vmatpush1.bf16.msra.mxu0 0
      %261 = vmatprep.subr.bf16.mxu0 0
      %262 = vmatpush1.bf16.msra.mxu0 0
      %263 = vmatprep.subr.bf16.mxu0 0
      %264 = vmatpush1.bf16.msra.mxu0 0
      %265 = vmatprep.subr.bf16.mxu0 0
      %266 = vmatpush1.bf16.msra.mxu0 0
      %267 = vmatprep.mubr.bf16.mxu0 0
      %268 = vmatmul.mubr.bf16.gmra.mrb[0].mxu0 %v166
      %v269 = vpop.f32.mrb[0].mxu0
      %v270 = vadd.f32 0.0, %v269
      %v271 = vpop.f32.mrb[0].mxu0
      %v272 = vpop.f32.mrb[0].mxu0
      %v273 = vpop.f32.mrb[0].mxu0
      %274 = vdwg.mxu0
      %275 = vmatprep.subr.bf16.mxu0 0
      %276 = vmatpush1.bf16.msra.mxu0 %v219
      %277 = vmatprep.subr.bf16.mxu0 0
      %278 = vmatpush1.bf16.msra.mxu0 %v220
      %279 = vmatprep.subr.bf16.mxu0 0
      %280 = vmatpush1.bf16.msra.mxu0 %v221
      %281 = vmatprep.subr.bf16.mxu0 0
      %282 = vmatpush1.bf16.msra.mxu0 %v222
      %283 = vmatprep.subr.bf16.mxu0 0
      %284 = vmatpush1.bf16.msra.mxu0 %v223
      %285 = vmatprep.subr.bf16.mxu0 0
      %286 = vmatpush1.bf16.msra.mxu0 %v224
      %287 = vmatprep.subr.bf16.mxu0 0
      %288 = vmatpush1.bf16.msra.mxu0 %v225
      %289 = vmatprep.subr.bf16.mxu0 0
      %290 = vmatpush1.bf16.msra.mxu0 %v226
      %291 = vmatprep.subr.bf16.mxu0 0
      %292 = vmatpush1.bf16.msra.mxu0 0
      %293 = vmatprep.subr.bf16.mxu0 0
      %294 = vmatpush1.bf16.msra.mxu0 0
      %295 = vmatprep.subr.bf16.mxu0 0
      %296 = vmatpush1.bf16.msra.mxu0 0
      %297 = vmatprep.subr.bf16.mxu0 0
      %298 = vmatpush1.bf16.msra.mxu0 0
      %299 = vmatprep.subr.bf16.mxu0 0
      %300 = vmatpush1.bf16.msra.mxu0 0
      %301 = vmatprep.subr.bf16.mxu0 0
      %302 = vmatpush1.bf16.msra.mxu0 0
      %303 = vmatprep.subr.bf16.mxu0 0
      %304 = vmatpush1.bf16.msra.mxu0 0
      %305 = vmatprep.subr.bf16.mxu0 0
      %306 = vmatpush1.bf16.msra.mxu0 0
      %307 = vmatprep.mubr.bf16.mxu0 0
      %308 = vmatmul.mubr.bf16.gmra.mrb[0].mxu0 %v167
      %v309 = vpop.f32.mrb[0].mxu0
      %v310 = vadd.f32 0.0, %v309
      %v311 = vpop.f32.mrb[0].mxu0
      %v312 = vpop.f32.mrb[0].mxu0
      %v313 = vpop.f32.mrb[0].mxu0
      %314 = vdwg.mxu0
      %315 = vmatprep.subr.bf16.mxu0 0
      %316 = vmatpush1.bf16.msra.mxu0 %v219
      %317 = vmatprep.subr.bf16.mxu0 0
      %318 = vmatpush1.bf16.msra.mxu0 %v220
      %319 = vmatprep.subr.bf16.mxu0 0
      %320 = vmatpush1.bf16.msra.mxu0 %v221
      %321 = vmatprep.subr.bf16.mxu0 0
      %322 = vmatpush1.bf16.msra.mxu0 %v222
      %323 = vmatprep.subr.bf16.mxu0 0
      %324 = vmatpush1.bf16.msra.mxu0 %v223
      %325 = vmatprep.subr.bf16.mxu0 0
      %326 = vmatpush1.bf16.msra.mxu0 %v224
      %327 = vmatprep.subr.bf16.mxu0 0
      %328 = vmatpush1.bf16.msra.mxu0 %v225
      %329 = vmatprep.subr.bf16.mxu0 0
      %330 = vmatpush1.bf16.msra.mxu0 %v226
      %331 = vmatprep.subr.bf16.mxu0 0
      %332 = vmatpush1.bf16.msra.mxu0 0
      %333 = vmatprep.subr.bf16.mxu0 0
      %334 = vmatpush1.bf16.msra.mxu0 0
      %335 = vmatprep.subr.bf16.mxu0 0
      %336 = vmatpush1.bf16.msra.mxu0 0
      %337 = vmatprep.subr.bf16.mxu0 0
      %338 = vmatpush1.bf16.msra.mxu0 0
      %339 = vmatprep.subr.bf16.mxu0 0
      %340 = vmatpush1.bf16.msra.mxu0 0
      %341 = vmatprep.subr.bf16.mxu0 0
      %342 = vmatpush1.bf16.msra.mxu0 0
      %343 = vmatprep.subr.bf16.mxu0 0
      %344 = vmatpush1.bf16.msra.mxu0 0
      %345 = vmatprep.subr.bf16.mxu0 0
      %346 = vmatpush1.bf16.msra.mxu0 0
      %347 = vmatprep.mubr.bf16.mxu0 0
      %348 = vmatmul.mubr.bf16.gmra.mrb[0].mxu0 %v168
      %v349 = vpop.f32.mrb[0].mxu0
      %v350 = vadd.f32 0.0, %v349
      %v351 = vpop.f32.mrb[0].mxu0
      %v352 = vpop.f32.mrb[0].mxu0
      %v353 = vpop.f32.mrb[0].mxu0
      %354 = vdwg.mxu0
      %355 = vmatprep.subr.bf16.mxu0 0
      %356 = vmatpush1.bf16.msra.mxu0 %v219
      %357 = vmatprep.subr.bf16.mxu0 0
      %358 = vmatpush1.bf16.msra.mxu0 %v220
      %359 = vmatprep.subr.bf16.mxu0 0
      %360 = vmatpush1.bf16.msra.mxu0 %v221
      %361 = vmatprep.subr.bf16.mxu0 0
      %362 = vmatpush1.bf16.msra.mxu0 %v222
      %363 = vmatprep.subr.bf16.mxu0 0
      %364 = vmatpush1.bf16.msra.mxu0 %v223
      %365 = vmatprep.subr.bf16.mxu0 0
      %366 = vmatpush1.bf16.msra.mxu0 %v224
      %367 = vmatprep.subr.bf16.mxu0 0
      %368 = vmatpush1.bf16.msra.mxu0 %v225
      %369 = vmatprep.subr.bf16.mxu0 0
      %370 = vmatpush1.bf16.msra.mxu0 %v226
      %371 = vmatprep.subr.bf16.mxu0 0
      %372 = vmatpush1.bf16.msra.mxu0 0
      %373 = vmatprep.subr.bf16.mxu0 0
      %374 = vmatpush1.bf16.msra.mxu0 0
      %375 = vmatprep.subr.bf16.mxu0 0
      %376 = vmatpush1.bf16.msra.mxu0 0
      %377 = vmatprep.subr.bf16.mxu0 0
      %378 = vmatpush1.bf16.msra.mxu0 0
      %379 = vmatprep.subr.bf16.mxu0 0
      %380 = vmatpush1.bf16.msra.mxu0 0
      %381 = vmatprep.subr.bf16.mxu0 0
      %382 = vmatpush1.bf16.msra.mxu0 0
      %383 = vmatprep.subr.bf16.mxu0 0
      %384 = vmatpush1.bf16.msra.mxu0 0
      %385 = vmatprep.subr.bf16.mxu0 0
      %386 = vmatpush1.bf16.msra.mxu0 0
      %387 = vmatprep.mubr.bf16.mxu0 0
      %388 = vmatmul.mubr.bf16.gmra.mrb[0].mxu0 %v169
      %v389 = vpop.f32.mrb[0].mxu0
      %v390 = vadd.f32 0.0, %v389
      %v391 = vpop.f32.mrb[0].mxu0
      %v392 = vpop.f32.mrb[0].mxu0
      %v393 = vpop.f32.mrb[0].mxu0
      %394 = vdwg.mxu0
      %v411 = vunpack.c.l.b16 %v149
      %v412 = vunpack.c.l.b16 %v150
      %v413 = vunpack.c.l.b16 %v151
      %v414 = vunpack.c.l.b16 %v152
      %v415 = vunpack.c.l.b16 %v153
      %v416 = vunpack.c.l.b16 %v154
      %v417 = vunpack.c.l.b16 %v155
      %v418 = vunpack.c.l.b16 %v156
      %v419 = vunpack.c.l.b16 %v157
      %v420 = vunpack.c.l.b16 %v158
      %v421 = vunpack.c.l.b16 %v159
      %v422 = vunpack.c.l.b16 %v160
      %v423 = vunpack.c.l.b16 %v161
      %v424 = vunpack.c.l.b16 %v162
      %v425 = vunpack.c.l.b16 %v163
      %v426 = vunpack.c.l.b16 %v164
      %v427 = vpack.c.b16 %v412, %v411
      %v428 = vpack.c.b16 %v414, %v413
      %v429 = vpack.c.b16 %v416, %v415
      %v430 = vpack.c.b16 %v418, %v417
      %v431 = vpack.c.b16 %v420, %v419
      %v432 = vpack.c.b16 %v422, %v421
      %v433 = vpack.c.b16 %v424, %v423
      %v434 = vpack.c.b16 %v426, %v425
      %443 = vmatprep.subr.bf16.mxu0 0
      %444 = vmatpush1.bf16.msra.mxu0 %v427
      %445 = vmatprep.subr.bf16.mxu0 0
      %446 = vmatpush1.bf16.msra.mxu0 %v428
      %447 = vmatprep.subr.bf16.mxu0 0
      %448 = vmatpush1.bf16.msra.mxu0 %v429
      %449 = vmatprep.subr.bf16.mxu0 0
      %450 = vmatpush1.bf16.msra.mxu0 %v430
      %451 = vmatprep.subr.bf16.mxu0 0
      %452 = vmatpush1.bf16.msra.mxu0 %v431
      %453 = vmatprep.subr.bf16.mxu0 0
      %454 = vmatpush1.bf16.msra.mxu0 %v432
      %455 = vmatprep.subr.bf16.mxu0 0
      %456 = vmatpush1.bf16.msra.mxu0 %v433
      %457 = vmatprep.subr.bf16.mxu0 0
      %458 = vmatpush1.bf16.msra.mxu0 %v434
      %459 = vmatprep.subr.bf16.mxu0 0
      %460 = vmatpush1.bf16.msra.mxu0 0
      %461 = vmatprep.subr.bf16.mxu0 0
      %462 = vmatpush1.bf16.msra.mxu0 0
      %463 = vmatprep.subr.bf16.mxu0 0
      %464 = vmatpush1.bf16.msra.mxu0 0
      %465 = vmatprep.subr.bf16.mxu0 0
      %466 = vmatpush1.bf16.msra.mxu0 0
      %467 = vmatprep.subr.bf16.mxu0 0
      %468 = vmatpush1.bf16.msra.mxu0 0
      %469 = vmatprep.subr.bf16.mxu0 0
      %470 = vmatpush1.bf16.msra.mxu0 0
      %471 = vmatprep.subr.bf16.mxu0 0
      %472 = vmatpush1.bf16.msra.mxu0 0
      %473 = vmatprep.subr.bf16.mxu0 0
      %474 = vmatpush1.bf16.msra.mxu0 0
      %475 = vmatprep.mubr.bf16.mxu0 0
      %476 = vmatmul.mubr.bf16.gmra.mrb[0].mxu0 %v145
      %v477 = vpop.f32.mrb[0].mxu0
      %v478 = vadd.f32 %v270, %v477
      %v479 = vpop.f32.mrb[0].mxu0
      %v480 = vpop.f32.mrb[0].mxu0
      %v481 = vpop.f32.mrb[0].mxu0
      %482 = vdwg.mxu0
      %483 = vmatprep.subr.bf16.mxu0 0
      %484 = vmatpush1.bf16.msra.mxu0 %v427
      %485 = vmatprep.subr.bf16.mxu0 0
      %486 = vmatpush1.bf16.msra.mxu0 %v428
      %487 = vmatprep.subr.bf16.mxu0 0
      %488 = vmatpush1.bf16.msra.mxu0 %v429
      %489 = vmatprep.subr.bf16.mxu0 0
      %490 = vmatpush1.bf16.msra.mxu0 %v430
      %491 = vmatprep.subr.bf16.mxu0 0
      %492 = vmatpush1.bf16.msra.mxu0 %v431
      %493 = vmatprep.subr.bf16.mxu0 0
      %494 = vmatpush1.bf16.msra.mxu0 %v432
      %495 = vmatprep.subr.bf16.mxu0 0
      %496 = vmatpush1.bf16.msra.mxu0 %v433
      %497 = vmatprep.subr.bf16.mxu0 0
      %498 = vmatpush1.bf16.msra.mxu0 %v434
      %499 = vmatprep.subr.bf16.mxu0 0
      %500 = vmatpush1.bf16.msra.mxu0 0
      %501 = vmatprep.subr.bf16.mxu0 0
      %502 = vmatpush1.bf16.msra.mxu0 0
      %503 = vmatprep.subr.bf16.mxu0 0
      %504 = vmatpush1.bf16.msra.mxu0 0
      %505 = vmatprep.subr.bf16.mxu0 0
      %506 = vmatpush1.bf16.msra.mxu0 0
      %507 = vmatprep.subr.bf16.mxu0 0
      %508 = vmatpush1.bf16.msra.mxu0 0
      %509 = vmatprep.subr.bf16.mxu0 0
      %510 = vmatpush1.bf16.msra.mxu0 0
      %511 = vmatprep.subr.bf16.mxu0 0
      %512 = vmatpush1.bf16.msra.mxu0 0
      %513 = vmatprep.subr.bf16.mxu0 0
      %514 = vmatpush1.bf16.msra.mxu0 0
      %515 = vmatprep.mubr.bf16.mxu0 0
      %516 = vmatmul.mubr.bf16.gmra.mrb[0].mxu0 %v146
      %v517 = vpop.f32.mrb[0].mxu0
      %v518 = vadd.f32 %v310, %v517
      %v519 = vpop.f32.mrb[0].mxu0
      %v520 = vpop.f32.mrb[0].mxu0
      %v521 = vpop.f32.mrb[0].mxu0
      %522 = vdwg.mxu0
      %523 = vmatprep.subr.bf16.mxu0 0
      %524 = vmatpush1.bf16.msra.mxu0 %v427
      %525 = vmatprep.subr.bf16.mxu0 0
      %526 = vmatpush1.bf16.msra.mxu0 %v428
      %527 = vmatprep.subr.bf16.mxu0 0
      %528 = vmatpush1.bf16.msra.mxu0 %v429
      %529 = vmatprep.subr.bf16.mxu0 0
      %530 = vmatpush1.bf16.msra.mxu0 %v430
      %531 = vmatprep.subr.bf16.mxu0 0
      %532 = vmatpush1.bf16.msra.mxu0 %v431
      %533 = vmatprep.subr.bf16.mxu0 0
      %534 = vmatpush1.bf16.msra.mxu0 %v432
      %535 = vmatprep.subr.bf16.mxu0 0
      %536 = vmatpush1.bf16.msra.mxu0 %v433
      %537 = vmatprep.subr.bf16.mxu0 0
      %538 = vmatpush1.bf16.msra.mxu0 %v434
      %539 = vmatprep.subr.bf16.mxu0 0
      %540 = vmatpush1.bf16.msra.mxu0 0
      %541 = vmatprep.subr.bf16.mxu0 0
      %542 = vmatpush1.bf16.msra.mxu0 0
      %543 = vmatprep.subr.bf16.mxu0 0
      %544 = vmatpush1.bf16.msra.mxu0 0
      %545 = vmatprep.subr.bf16.mxu0 0
      %546 = vmatpush1.bf16.msra.mxu0 0
      %547 = vmatprep.subr.bf16.mxu0 0
      %548 = vmatpush1.bf16.msra.mxu0 0
      %549 = vmatprep.subr.bf16.mxu0 0
      %550 = vmatpush1.bf16.msra.mxu0 0
      %551 = vmatprep.subr.bf16.mxu0 0
      %552 = vmatpush1.bf16.msra.mxu0 0
      %553 = vmatprep.subr.bf16.mxu0 0
      %554 = vmatpush1.bf16.msra.mxu0 0
      %555 = vmatprep.mubr.bf16.mxu0 0
      %556 = vmatmul.mubr.bf16.gmra.mrb[0].mxu0 %v147
      %v557 = vpop.f32.mrb[0].mxu0
      %v558 = vadd.f32 %v350, %v557
      %v559 = vpop.f32.mrb[0].mxu0
      %v560 = vpop.f32.mrb[0].mxu0
      %v561 = vpop.f32.mrb[0].mxu0
      %562 = vdwg.mxu0
      %563 = vmatprep.subr.bf16.mxu0 0
      %564 = vmatpush1.bf16.msra.mxu0 %v427
      %565 = vmatprep.subr.bf16.mxu0 0
      %566 = vmatpush1.bf16.msra.mxu0 %v428
      %567 = vmatprep.subr.bf16.mxu0 0
      %568 = vmatpush1.bf16.msra.mxu0 %v429
      %569 = vmatprep.subr.bf16.mxu0 0
      %570 = vmatpush1.bf16.msra.mxu0 %v430
      %571 = vmatprep.subr.bf16.mxu0 0
      %572 = vmatpush1.bf16.msra.mxu0 %v431
      %573 = vmatprep.subr.bf16.mxu0 0
      %574 = vmatpush1.bf16.msra.mxu0 %v432
      %575 = vmatprep.subr.bf16.mxu0 0
      %576 = vmatpush1.bf16.msra.mxu0 %v433
      %577 = vmatprep.subr.bf16.mxu0 0
      %578 = vmatpush1.bf16.msra.mxu0 %v434
      %579 = vmatprep.subr.bf16.mxu0 0
      %580 = vmatpush1.bf16.msra.mxu0 0
      %581 = vmatprep.subr.bf16.mxu0 0
      %582 = vmatpush1.bf16.msra.mxu0 0
      %583 = vmatprep.subr.bf16.mxu0 0
      %584 = vmatpush1.bf16.msra.mxu0 0
      %585 = vmatprep.subr.bf16.mxu0 0
      %586 = vmatpush1.bf16.msra.mxu0 0
      %587 = vmatprep.subr.bf16.mxu0 0
      %588 = vmatpush1.bf16.msra.mxu0 0
      %589 = vmatprep.subr.bf16.mxu0 0
      %590 = vmatpush1.bf16.msra.mxu0 0
      %591 = vmatprep.subr.bf16.mxu0 0
      %592 = vmatpush1.bf16.msra.mxu0 0
      %593 = vmatprep.subr.bf16.mxu0 0
      %594 = vmatpush1.bf16.msra.mxu0 0
      %595 = vmatprep.mubr.bf16.mxu0 0
      %596 = vmatmul.mubr.bf16.gmra.mrb[0].mxu0 %v148
      %v597 = vpop.f32.mrb[0].mxu0
      %v598 = vadd.f32 %v390, %v597
      %v599 = vpop.f32.mrb[0].mxu0
      %v600 = vpop.f32.mrb[0].mxu0
      %v601 = vpop.f32.mrb[0].mxu0
      %602 = vdwg.mxu0
      %s603 = scalar_lea.vmem %s138, 4
      %v604 = vld [vmem:[%s603] sm:$0x3]
      %v605 = vld [vmem:[%s603 + $0x4] sm:$0x3]
      %v606 = vld [vmem:[%s603 + $0x8] sm:$0x3]
      %v607 = vld [vmem:[%s603 + $0xc] sm:$0x3]
      %s608 = scalar_lea.vmem %s1, 128
      %v609 = vld [vmem:[%s608] sm:$0xf]
      %v610 = vld [vmem:[%s608 + $0x4] sm:$0xf]
      %v611 = vld [vmem:[%s608 + $0x8] sm:$0xf]
      %v612 = vld [vmem:[%s608 + $0xc] sm:$0xf]
      %v613 = vld [vmem:[%s608 + $0x10] sm:$0xf]
      %v614 = vld [vmem:[%s608 + $0x14] sm:$0xf]
      %v615 = vld [vmem:[%s608 + $0x18] sm:$0xf]
      %v616 = vld [vmem:[%s608 + $0x1c] sm:$0xf]
      %v617 = vld [vmem:[%s608 + $0x20] sm:$0xf]
      %v618 = vld [vmem:[%s608 + $0x24] sm:$0xf]
      %v619 = vld [vmem:[%s608 + $0x28] sm:$0xf]
      %v620 = vld [vmem:[%s608 + $0x2c] sm:$0xf]
      %v621 = vld [vmem:[%s608 + $0x30] sm:$0xf]
      %v622 = vld [vmem:[%s608 + $0x34] sm:$0xf]
      %v623 = vld [vmem:[%s608 + $0x38] sm:$0xf]
      %v624 = vld [vmem:[%s608 + $0x3c] sm:$0xf]
      %v641 = vunpack.c.l.b16 %v609
      %v642 = vunpack.c.l.b16 %v610
      %v643 = vunpack.c.l.b16 %v611
      %v644 = vunpack.c.l.b16 %v612
      %v645 = vunpack.c.l.b16 %v613
      %v646 = vunpack.c.l.b16 %v614
      %v647 = vunpack.c.l.b16 %v615
      %v648 = vunpack.c.l.b16 %v616
      %v649 = vunpack.c.l.b16 %v617
      %v650 = vunpack.c.l.b16 %v618
      %v651 = vunpack.c.l.b16 %v619
      %v652 = vunpack.c.l.b16 %v620
      %v653 = vunpack.c.l.b16 %v621
      %v654 = vunpack.c.l.b16 %v622
      %v655 = vunpack.c.l.b16 %v623
      %v656 = vunpack.c.l.b16 %v624
      %v657 = vpack.c.b16 %v642, %v641
      %v658 = vpack.c.b16 %v644, %v643
      %v659 = vpack.c.b16 %v646, %v645
      %v660 = vpack.c.b16 %v648, %v647
      %v661 = vpack.c.b16 %v650, %v649
      %v662 = vpack.c.b16 %v652, %v651
      %v663 = vpack.c.b16 %v654, %v653
      %v664 = vpack.c.b16 %v656, %v655
      %673 = vmatprep.subr.bf16.mxu0 0
      %674 = vmatpush1.bf16.msra.mxu0 %v657
      %675 = vmatprep.subr.bf16.mxu0 0
      %676 = vmatpush1.bf16.msra.mxu0 %v658
      %677 = vmatprep.subr.bf16.mxu0 0
      %678 = vmatpush1.bf16.msra.mxu0 %v659
      %679 = vmatprep.subr.bf16.mxu0 0
      %680 = vmatpush1.bf16.msra.mxu0 %v660
      %681 = vmatprep.subr.bf16.mxu0 0
      %682 = vmatpush1.bf16.msra.mxu0 %v661
      %683 = vmatprep.subr.bf16.mxu0 0
      %684 = vmatpush1.bf16.msra.mxu0 %v662
      %685 = vmatprep.subr.bf16.mxu0 0
      %686 = vmatpush1.bf16.msra.mxu0 %v663
      %687 = vmatprep.subr.bf16.mxu0 0
      %688 = vmatpush1.bf16.msra.mxu0 %v664
      %689 = vmatprep.subr.bf16.mxu0 0
      %690 = vmatpush1.bf16.msra.mxu0 0
      %691 = vmatprep.subr.bf16.mxu0 0
      %692 = vmatpush1.bf16.msra.mxu0 0
      %693 = vmatprep.subr.bf16.mxu0 0
      %694 = vmatpush1.bf16.msra.mxu0 0
      %695 = vmatprep.subr.bf16.mxu0 0
      %696 = vmatpush1.bf16.msra.mxu0 0
      %697 = vmatprep.subr.bf16.mxu0 0
      %698 = vmatpush1.bf16.msra.mxu0 0
      %699 = vmatprep.subr.bf16.mxu0 0
      %700 = vmatpush1.bf16.msra.mxu0 0
      %701 = vmatprep.subr.bf16.mxu0 0
      %702 = vmatpush1.bf16.msra.mxu0 0
      %703 = vmatprep.subr.bf16.mxu0 0
      %704 = vmatpush1.bf16.msra.mxu0 0
      %705 = vmatprep.mubr.bf16.mxu0 0
      %706 = vmatmul.mubr.bf16.gmra.mrb[0].mxu0 %v604
      %v707 = vpop.f32.mrb[0].mxu0
      %v708 = vadd.f32 0.0, %v707
      %v709 = vpop.f32.mrb[0].mxu0
      %v710 = vpop.f32.mrb[0].mxu0
      %v711 = vpop.f32.mrb[0].mxu0
      %712 = vdwg.mxu0
      %713 = vmatprep.subr.bf16.mxu0 0
      %714 = vmatpush1.bf16.msra.mxu0 %v657
      %715 = vmatprep.subr.bf16.mxu0 0
      %716 = vmatpush1.bf16.msra.mxu0 %v658
      %717 = vmatprep.subr.bf16.mxu0 0
      %718 = vmatpush1.bf16.msra.mxu0 %v659
      %719 = vmatprep.subr.bf16.mxu0 0
      %720 = vmatpush1.bf16.msra.mxu0 %v660
      %721 = vmatprep.subr.bf16.mxu0 0
      %722 = vmatpush1.bf16.msra.mxu0 %v661
      %723 = vmatprep.subr.bf16.mxu0 0
      %724 = vmatpush1.bf16.msra.mxu0 %v662
      %725 = vmatprep.subr.bf16.mxu0 0
      %726 = vmatpush1.bf16.msra.mxu0 %v663
      %727 = vmatprep.subr.bf16.mxu0 0
      %728 = vmatpush1.bf16.msra.mxu0 %v664
      %729 = vmatprep.subr.bf16.mxu0 0
      %730 = vmatpush1.bf16.msra.mxu0 0
      %731 = vmatprep.subr.bf16.mxu0 0
      %732 = vmatpush1.bf16.msra.mxu0 0
      %733 = vmatprep.subr.bf16.mxu0 0
      %734 = vmatpush1.bf16.msra.mxu0 0
      %735 = vmatprep.subr.bf16.mxu0 0
      %736 = vmatpush1.bf16.msra.mxu0 0
      %737 = vmatprep.subr.bf16.mxu0 0
      %738 = vmatpush1.bf16.msra.mxu0 0
      %739 = vmatprep.subr.bf16.mxu0 0
      %740 = vmatpush1.bf16.msra.mxu0 0
      %741 = vmatprep.subr.bf16.mxu0 0
      %742 = vmatpush1.bf16.msra.mxu0 0
      %743 = vmatprep.subr.bf16.mxu0 0
      %744 = vmatpush1.bf16.msra.mxu0 0
      %745 = vmatprep.mubr.bf16.mxu0 0
      %746 = vmatmul.mubr.bf16.gmra.mrb[0].mxu0 %v605
      %v747 = vpop.f32.mrb[0].mxu0
      %v748 = vadd.f32 0.0, %v747
      %v749 = vpop.f32.mrb[0].mxu0
      %v750 = vpop.f32.mrb[0].mxu0
      %v751 = vpop.f32.mrb[0].mxu0
      %752 = vdwg.mxu0
      %753 = vmatprep.subr.bf16.mxu0 0
      %754 = vmatpush1.bf16.msra.mxu0 %v657
      %755 = vmatprep.subr.bf16.mxu0 0
      %756 = vmatpush1.bf16.msra.mxu0 %v658
      %757 = vmatprep.subr.bf16.mxu0 0
      %758 = vmatpush1.bf16.msra.mxu0 %v659
      %759 = vmatprep.subr.bf16.mxu0 0
      %760 = vmatpush1.bf16.msra.mxu0 %v660
      %761 = vmatprep.subr.bf16.mxu0 0
      %762 = vmatpush1.bf16.msra.mxu0 %v661
      %763 = vmatprep.subr.bf16.mxu0 0
      %764 = vmatpush1.bf16.msra.mxu0 %v662
      %765 = vmatprep.subr.bf16.mxu0 0
      %766 = vmatpush1.bf16.msra.mxu0 %v663
      %767 = vmatprep.subr.bf16.mxu0 0
      %768 = vmatpush1.bf16.msra.mxu0 %v664
      %769 = vmatprep.subr.bf16.mxu0 0
      %770 = vmatpush1.bf16.msra.mxu0 0
      %771 = vmatprep.subr.bf16.mxu0 0
      %772 = vmatpush1.bf16.msra.mxu0 0
      %773 = vmatprep.subr.bf16.mxu0 0
      %774 = vmatpush1.bf16.msra.mxu0 0
      %775 = vmatprep.subr.bf16.mxu0 0
      %776 = vmatpush1.bf16.msra.mxu0 0
      %777 = vmatprep.subr.bf16.mxu0 0
      %778 = vmatpush1.bf16.msra.mxu0 0
      %779 = vmatprep.subr.bf16.mxu0 0
      %780 = vmatpush1.bf16.msra.mxu0 0
      %781 = vmatprep.subr.bf16.mxu0 0
      %782 = vmatpush1.bf16.msra.mxu0 0
      %783 = vmatprep.subr.bf16.mxu0 0
      %784 = vmatpush1.bf16.msra.mxu0 0
      %785 = vmatprep.mubr.bf16.mxu0 0
      %786 = vmatmul.mubr.bf16.gmra.mrb[0].mxu0 %v606
      %v787 = vpop.f32.mrb[0].mxu0
      %v788 = vadd.f32 0.0, %v787
      %v789 = vpop.f32.mrb[0].mxu0
      %v790 = vpop.f32.mrb[0].mxu0
      %v791 = vpop.f32.mrb[0].mxu0
      %792 = vdwg.mxu0
      %793 = vmatprep.subr.bf16.mxu0 0
      %794 = vmatpush1.bf16.msra.mxu0 %v657
      %795 = vmatprep.subr.bf16.mxu0 0
      %796 = vmatpush1.bf16.msra.mxu0 %v658
      %797 = vmatprep.subr.bf16.mxu0 0
      %798 = vmatpush1.bf16.msra.mxu0 %v659
      %799 = vmatprep.subr.bf16.mxu0 0
      %800 = vmatpush1.bf16.msra.mxu0 %v660
      %801 = vmatprep.subr.bf16.mxu0 0
      %802 = vmatpush1.bf16.msra.mxu0 %v661
      %803 = vmatprep.subr.bf16.mxu0 0
      %804 = vmatpush1.bf16.msra.mxu0 %v662
      %805 = vmatprep.subr.bf16.mxu0 0
      %806 = vmatpush1.bf16.msra.mxu0 %v663
      %807 = vmatprep.subr.bf16.mxu0 0
      %808 = vmatpush1.bf16.msra.mxu0 %v664
      %809 = vmatprep.subr.bf16.mxu0 0
      %810 = vmatpush1.bf16.msra.mxu0 0
      %811 = vmatprep.subr.bf16.mxu0 0
      %812 = vmatpush1.bf16.msra.mxu0 0
      %813 = vmatprep.subr.bf16.mxu0 0
      %814 = vmatpush1.bf16.msra.mxu0 0
      %815 = vmatprep.subr.bf16.mxu0 0
      %816 = vmatpush1.bf16.msra.mxu0 0
      %817 = vmatprep.subr.bf16.mxu0 0
      %818 = vmatpush1.bf16.msra.mxu0 0
      %819 = vmatprep.subr.bf16.mxu0 0
      %820 = vmatpush1.bf16.msra.mxu0 0
      %821 = vmatprep.subr.bf16.mxu0 0
      %822 = vmatpush1.bf16.msra.mxu0 0
      %823 = vmatprep.subr.bf16.mxu0 0
      %824 = vmatpush1.bf16.msra.mxu0 0
      %825 = vmatprep.mubr.bf16.mxu0 0
      %826 = vmatmul.mubr.bf16.gmra.mrb[0].mxu0 %v607
      %v827 = vpop.f32.mrb[0].mxu0
      %v828 = vadd.f32 0.0, %v827
      %v829 = vpop.f32.mrb[0].mxu0
      %v830 = vpop.f32.mrb[0].mxu0
      %v831 = vpop.f32.mrb[0].mxu0
      %832 = vdwg.mxu0
      %v833 = vadd.f32 %v478, %v708
      %v834 = vadd.f32 %v518, %v748
      %v835 = vadd.f32 %v558, %v788
      %v836 = vadd.f32 %v598, %v828
      %s837 = scalar_lea.vmem %s138, 6
      %v838 = vld [vmem:[%s837] sm:$0x3]
      %v839 = vld [vmem:[%s837 + $0x4] sm:$0x3]
      %v840 = vld [vmem:[%s837 + $0x8] sm:$0x3]
      %v841 = vld [vmem:[%s837 + $0xc] sm:$0x3]
      %s842 = scalar_lea.vmem %s1, 192
      %v843 = vld [vmem:[%s842] sm:$0xf]
      %v844 = vld [vmem:[%s842 + $0x4] sm:$0xf]
      %v845 = vld [vmem:[%s842 + $0x8] sm:$0xf]
      %v846 = vld [vmem:[%s842 + $0xc] sm:$0xf]
      %v847 = vld [vmem:[%s842 + $0x10] sm:$0xf]
      %v848 = vld [vmem:[%s842 + $0x14] sm:$0xf]
      %v849 = vld [vmem:[%s842 + $0x18] sm:$0xf]
      %v850 = vld [vmem:[%s842 + $0x1c] sm:$0xf]
      %v851 = vld [vmem:[%s842 + $0x20] sm:$0xf]
      %v852 = vld [vmem:[%s842 + $0x24] sm:$0xf]
      %v853 = vld [vmem:[%s842 + $0x28] sm:$0xf]
      %v854 = vld [vmem:[%s842 + $0x2c] sm:$0xf]
      %v855 = vld [vmem:[%s842 + $0x30] sm:$0xf]
      %v856 = vld [vmem:[%s842 + $0x34] sm:$0xf]
      %v857 = vld [vmem:[%s842 + $0x38] sm:$0xf]
      %v858 = vld [vmem:[%s842 + $0x3c] sm:$0xf]
      %v875 = vunpack.c.l.b16 %v843
      %v876 = vunpack.c.l.b16 %v844
      %v877 = vunpack.c.l.b16 %v845
      %v878 = vunpack.c.l.b16 %v846
      %v879 = vunpack.c.l.b16 %v847
      %v880 = vunpack.c.l.b16 %v848
      %v881 = vunpack.c.l.b16 %v849
      %v882 = vunpack.c.l.b16 %v850
      %v883 = vunpack.c.l.b16 %v851
      %v884 = vunpack.c.l.b16 %v852
      %v885 = vunpack.c.l.b16 %v853
      %v886 = vunpack.c.l.b16 %v854
      %v887 = vunpack.c.l.b16 %v855
      %v888 = vunpack.c.l.b16 %v856
      %v889 = vunpack.c.l.b16 %v857
      %v890 = vunpack.c.l.b16 %v858
      %v891 = vpack.c.b16 %v876, %v875
      %v892 = vpack.c.b16 %v878, %v877
      %v893 = vpack.c.b16 %v880, %v879
      %v894 = vpack.c.b16 %v882, %v881
      %v895 = vpack.c.b16 %v884, %v883
      %v896 = vpack.c.b16 %v886, %v885
      %v897 = vpack.c.b16 %v888, %v887
      %v898 = vpack.c.b16 %v890, %v889
      %907 = vmatprep.subr.bf16.mxu0 0
      %908 = vmatpush1.bf16.msra.mxu0 %v891
      %909 = vmatprep.subr.bf16.mxu0 0
      %910 = vmatpush1.bf16.msra.mxu0 %v892
      %911 = vmatprep.subr.bf16.mxu0 0
      %912 = vmatpush1.bf16.msra.mxu0 %v893
      %913 = vmatprep.subr.bf16.mxu0 0
      %914 = vmatpush1.bf16.msra.mxu0 %v894
      %915 = vmatprep.subr.bf16.mxu0 0
      %916 = vmatpush1.bf16.msra.mxu0 %v895
      %917 = vmatprep.subr.bf16.mxu0 0
      %918 = vmatpush1.bf16.msra.mxu0 %v896
      %919 = vmatprep.subr.bf16.mxu0 0
      %920 = vmatpush1.bf16.msra.mxu0 %v897
      %921 = vmatprep.subr.bf16.mxu0 0
      %922 = vmatpush1.bf16.msra.mxu0 %v898
      %923 = vmatprep.subr.bf16.mxu0 0
      %924 = vmatpush1.bf16.msra.mxu0 0
      %925 = vmatprep.subr.bf16.mxu0 0
      %926 = vmatpush1.bf16.msra.mxu0 0
      %927 = vmatprep.subr.bf16.mxu0 0
      %928 = vmatpush1.bf16.msra.mxu0 0
      %929 = vmatprep.subr.bf16.mxu0 0
      %930 = vmatpush1.bf16.msra.mxu0 0
      %931 = vmatprep.subr.bf16.mxu0 0
      %932 = vmatpush1.bf16.msra.mxu0 0
      %933 = vmatprep.subr.bf16.mxu0 0
      %934 = vmatpush1.bf16.msra.mxu0 0
      %935 = vmatprep.subr.bf16.mxu0 0
      %936 = vmatpush1.bf16.msra.mxu0 0
      %937 = vmatprep.subr.bf16.mxu0 0
      %938 = vmatpush1.bf16.msra.mxu0 0
      %939 = vmatprep.mubr.bf16.mxu0 0
      %940 = vmatmul.mubr.bf16.gmra.mrb[0].mxu0 %v838
      %v941 = vpop.f32.mrb[0].mxu0
      %v942 = vadd.f32 0.0, %v941
      %v943 = vpop.f32.mrb[0].mxu0
      %v944 = vpop.f32.mrb[0].mxu0
      %v945 = vpop.f32.mrb[0].mxu0
      %946 = vdwg.mxu0
      %947 = vmatprep.subr.bf16.mxu0 0
      %948 = vmatpush1.bf16.msra.mxu0 %v891
      %949 = vmatprep.subr.bf16.mxu0 0
      %950 = vmatpush1.bf16.msra.mxu0 %v892
      %951 = vmatprep.subr.bf16.mxu0 0
      %952 = vmatpush1.bf16.msra.mxu0 %v893
      %953 = vmatprep.subr.bf16.mxu0 0
      %954 = vmatpush1.bf16.msra.mxu0 %v894
      %955 = vmatprep.subr.bf16.mxu0 0
      %956 = vmatpush1.bf16.msra.mxu0 %v895
      %957 = vmatprep.subr.bf16.mxu0 0
      %958 = vmatpush1.bf16.msra.mxu0 %v896
      %959 = vmatprep.subr.bf16.mxu0 0
      %960 = vmatpush1.bf16.msra.mxu0 %v897
      %961 = vmatprep.subr.bf16.mxu0 0
      %962 = vmatpush1.bf16.msra.mxu0 %v898
      %963 = vmatprep.subr.bf16.mxu0 0
      %964 = vmatpush1.bf16.msra.mxu0 0
      %965 = vmatprep.subr.bf16.mxu0 0
      %966 = vmatpush1.bf16.msra.mxu0 0
      %967 = vmatprep.subr.bf16.mxu0 0
      %968 = vmatpush1.bf16.msra.mxu0 0
      %969 = vmatprep.subr.bf16.mxu0 0
      %970 = vmatpush1.bf16.msra.mxu0 0
      %971 = vmatprep.subr.bf16.mxu0 0
      %972 = vmatpush1.bf16.msra.mxu0 0
      %973 = vmatprep.subr.bf16.mxu0 0
      %974 = vmatpush1.bf16.msra.mxu0 0
      %975 = vmatprep.subr.bf16.mxu0 0
      %976 = vmatpush1.bf16.msra.mxu0 0
      %977 = vmatprep.subr.bf16.mxu0 0
      %978 = vmatpush1.bf16.msra.mxu0 0
      %979 = vmatprep.mubr.bf16.mxu0 0
      %980 = vmatmul.mubr.bf16.gmra.mrb[0].mxu0 %v839
      %v981 = vpop.f32.mrb[0].mxu0
      %v982 = vadd.f32 0.0, %v981
      %v983 = vpop.f32.mrb[0].mxu0
      %v984 = vpop.f32.mrb[0].mxu0
      %v985 = vpop.f32.mrb[0].mxu0
      %986 = vdwg.mxu0
      %987 = vmatprep.subr.bf16.mxu0 0
      %988 = vmatpush1.bf16.msra.mxu0 %v891
      %989 = vmatprep.subr.bf16.mxu0 0
      %990 = vmatpush1.bf16.msra.mxu0 %v892
      %991 = vmatprep.subr.bf16.mxu0 0
      %992 = vmatpush1.bf16.msra.mxu0 %v893
      %993 = vmatprep.subr.bf16.mxu0 0
      %994 = vmatpush1.bf16.msra.mxu0 %v894
      %995 = vmatprep.subr.bf16.mxu0 0
      %996 = vmatpush1.bf16.msra.mxu0 %v895
      %997 = vmatprep.subr.bf16.mxu0 0
      %998 = vmatpush1.bf16.msra.mxu0 %v896
      %999 = vmatprep.subr.bf16.mxu0 0
      %1000 = vmatpush1.bf16.msra.mxu0 %v897
      %1001 = vmatprep.subr.bf16.mxu0 0
      %1002 = vmatpush1.bf16.msra.mxu0 %v898
      %1003 = vmatprep.subr.bf16.mxu0 0
      %1004 = vmatpush1.bf16.msra.mxu0 0
      %1005 = vmatprep.subr.bf16.mxu0 0
      %1006 = vmatpush1.bf16.msra.mxu0 0
      %1007 = vmatprep.subr.bf16.mxu0 0
      %1008 = vmatpush1.bf16.msra.mxu0 0
      %1009 = vmatprep.subr.bf16.mxu0 0
      %1010 = vmatpush1.bf16.msra.mxu0 0
      %1011 = vmatprep.subr.bf16.mxu0 0
      %1012 = vmatpush1.bf16.msra.mxu0 0
      %1013 = vmatprep.subr.bf16.mxu0 0
      %1014 = vmatpush1.bf16.msra.mxu0 0
      %1015 = vmatprep.subr.bf16.mxu0 0
      %1016 = vmatpush1.bf16.msra.mxu0 0
      %1017 = vmatprep.subr.bf16.mxu0 0
      %1018 = vmatpush1.bf16.msra.mxu0 0
      %1019 = vmatprep.mubr.bf16.mxu0 0
      %1020 = vmatmul.mubr.bf16.gmra.mrb[0].mxu0 %v840
      %v1021 = vpop.f32.mrb[0].mxu0
      %v1022 = vadd.f32 0.0, %v1021
      %v1023 = vpop.f32.mrb[0].mxu0
      %v1024 = vpop.f32.mrb[0].mxu0
      %v1025 = vpop.f32.mrb[0].mxu0
      %1026 = vdwg.mxu0
      %1027 = vmatprep.subr.bf16.mxu0 0
      %1028 = vmatpush1.bf16.msra.mxu0 %v891
      %1029 = vmatprep.subr.bf16.mxu0 0
      %1030 = vmatpush1.bf16.msra.mxu0 %v892
      %1031 = vmatprep.subr.bf16.mxu0 0
      %1032 = vmatpush1.bf16.msra.mxu0 %v893
      %1033 = vmatprep.subr.bf16.mxu0 0
      %1034 = vmatpush1.bf16.msra.mxu0 %v894
      %1035 = vmatprep.subr.bf16.mxu0 0
      %1036 = vmatpush1.bf16.msra.mxu0 %v895
      %1037 = vmatprep.subr.bf16.mxu0 0
      %1038 = vmatpush1.bf16.msra.mxu0 %v896
      %1039 = vmatprep.subr.bf16.mxu0 0
      %1040 = vmatpush1.bf16.msra.mxu0 %v897
      %1041 = vmatprep.subr.bf16.mxu0 0
      %1042 = vmatpush1.bf16.msra.mxu0 %v898
      %1043 = vmatprep.subr.bf16.mxu0 0
      %1044 = vmatpush1.bf16.msra.mxu0 0
      %1045 = vmatprep.subr.bf16.mxu0 0
      %1046 = vmatpush1.bf16.msra.mxu0 0
      %1047 = vmatprep.subr.bf16.mxu0 0
      %1048 = vmatpush1.bf16.msra.mxu0 0
      %1049 = vmatprep.subr.bf16.mxu0 0
      %1050 = vmatpush1.bf16.msra.mxu0 0
      %1051 = vmatprep.subr.bf16.mxu0 0
      %1052 = vmatpush1.bf16.msra.mxu0 0
      %1053 = vmatprep.subr.bf16.mxu0 0
      %1054 = vmatpush1.bf16.msra.mxu0 0
      %1055 = vmatprep.subr.bf16.mxu0 0
      %1056 = vmatpush1.bf16.msra.mxu0 0
      %1057 = vmatprep.subr.bf16.mxu0 0
      %1058 = vmatpush1.bf16.msra.mxu0 0
      %1059 = vmatprep.mubr.bf16.mxu0 0
      %1060 = vmatmul.mubr.bf16.gmra.mrb[0].mxu0 %v841
      %v1061 = vpop.f32.mrb[0].mxu0
      %v1062 = vadd.f32 0.0, %v1061
      %v1063 = vpop.f32.mrb[0].mxu0
      %v1064 = vpop.f32.mrb[0].mxu0
      %v1065 = vpop.f32.mrb[0].mxu0
      %1066 = vdwg.mxu0
      %v1067 = vadd.f32 %v833, %v942
      %v1068 = vadd.f32 %v834, %v982
      %v1069 = vadd.f32 %v835, %v1022
      %v1070 = vadd.f32 %v836, %v1062
      %vm1071 = vcmp.ge.f32.partialorder %v1067, 0.0
      %vm1072 = vcmp.ge.f32.partialorder %v1068, 0.0
      %vm1073 = vcmp.ge.f32.partialorder %v1069, 0.0
      %vm1074 = vcmp.ge.f32.partialorder %v1070, 0.0
      %v1075 = vmul.f32 %v1067, 0.2
      %v1076 = vmul.f32 %v1068, 0.2
      %v1077 = vmul.f32 %v1069, 0.2
      %v1078 = vmul.f32 %v1070, 0.2
      %v1079 = vsel %vm1071, %v1067, %v1075
      %v1080 = vsel %vm1072, %v1068, %v1076
      %v1081 = vsel %vm1073, %v1069, %v1077
      %v1082 = vsel %vm1074, %v1070, %v1078
      %v1083 = vpack.c.bf16 %v1079, %v1079
      %v1084 = vpack.c.bf16 %v1080, %v1080
      %v1085 = vpack.c.bf16 %v1081, %v1081
      %v1086 = vpack.c.bf16 %v1082, %v1082
      %vm1087 = vcmask 517120
      %1088 = vst.msk [vmem:[%s143] sm:$0x3] %vm1087, %v1083
      %1089 = vst.msk [vmem:[%s143 + $0x2] sm:$0x3] %vm1087, %v1084
      %1090 = vst.msk [vmem:[%s143 + $0x4] sm:$0x3] %vm1087, %v1085
      %1091 = vst.msk [vmem:[%s143 + $0x6] sm:$0x3] %vm1087, %v1086
      %p1092 = scmp.lt.s32.totalorder %s13, 1
      %s1093 = scalar_select %p1092, %s13, 1
      %s1094 = smul.addr %s1093, 4
      %s1095 = smul.addr %s1094, 2
      %s1096 = scalar_lea.vmem %s2, %s1095
      // Predicated region
      $region29: #{d_forward.6} parent=27 // pred_check
        %p1097 = pneg %p78
      $region30: #{d_forward.6} parent=27 // pred_check_branch
        %1099 = sbr.rel (%p1097) target = $region32
      $region31: #{d_forward.6} parent=27 // pred_region
        _
      $region32: #{d_forward.6} parent=27 // pred_fallthru
        _
    $region28: #{d_forward.6} parent=5 // pred_fallthru
      _
    %p1100 = scmp.le.s32.totalorder 2, %s8
    // Predicated region
    $region33: #{d_forward.6} parent=5 // pred_check
      %p1101 = pneg %p1100
    $region34: #{d_forward.6} parent=5 // pred_check_branch
      %1103 = sbr.rel (%p1101) target = $region36
    $region35: #{d_forward.6} parent=5 // pred_region
      %s1104 = ssub.s32 %s8, 2
      // Predicated region
      $region37: #{d_forward.6} parent=35 // pred_check
        %p1105 = pneg %p84
      $region38: #{d_forward.6} parent=35 // pred_check_branch
        %1107 = sbr.rel (%p1105) target = $region40
      $region39: #{d_forward.6} parent=35 // pred_region
        %p1108 = scmp.lt.s32.totalorder %s14, 1
        %s1109 = scalar_select %p1108, %s14, 1
        %s1110 = smul.addr %s1109, 4
        %s1111 = smul.addr %s1110, 2
        %s1112 = scalar_lea.vmem %s2, %s1111
      $region40: #{d_forward.6} parent=35 // pred_fallthru
        _
    $region36: #{d_forward.6} parent=5 // pred_fallthru
      _
  $region6: #{d_forward.6} parent=0 // loop_footer
    %s12 = sadd.s32 1, %s8
  $region7: #{d_forward.6} parent=0 // loop_footer_branch
    %7 = sbr.rel target = $region3
  $region8: #{d_forward.6} parent=0 // loop_exit
    _

// kernel: d_forward.5
$region0: #{d_forward.5}
  #allocation0 [shape = 'u32[]', space=smem, size = 0x4, offset = 0x4, fixed_abs, tag = 'smem constant byte address 0x4 - core index']
  #allocation1 [shape = 'u32[144,128]{1,0:T(1,128)}', space=vmem, size = 0x12000, scoped, tag = 'internal scratch']
  %s0 = inlined_call_operand.vmem [shape: bf16[2,9,2,8,64], index: 0, kind: input, shape index: {}]
  %s1 = inlined_call_operand.vmem [shape: bf16[4,64,32], index: 1, kind: input, shape index: {}]
  %s2 = inlined_call_operand.vmem [shape: bf16[2,8,8,32], index: 2, kind: output, shape index: {}]
  %s3 = sld [smem:[#allocation0]]
  $region41: #{d_forward.5} parent=0
    _
  %s5 = ssub.s32 1, %s3
  %s6 = scalar_select 0, %s5, %s3
  loop: start=0, step=1, limit=4
  $region2: #{d_forward.5} parent=0 // loop_pre_header
    _
  $region3: #{d_forward.5} parent=0 // loop_header
    %s8 = sphi 0, %s12
    %p9 = scmp.ge.s32.totalorder %s8, 4
    %s18 = sphi 0, %s20
    %s21 = sphi 0, %s18
    %s22 = sphi 0, %s21
    %s38 = sphi 0, %s22
    %s42 = sphi 0, %s42
    %s44 = sphi 0, %s42
    %s45 = sphi 0, %s44
    %s59 = sphi 0, %s45
    %s65 = sphi 0, %s67
    %s68 = sphi 0, %s65
    %s69 = sphi 0, %s68
    %s85 = sphi 0, %s69
  $region4: #{d_forward.5} parent=0 // loop_header_branch
    %11 = sbr.rel (%p9) target = $region8
  $region5: #{d_forward.5} parent=0 // loop_body
    %s13 = ssub.s32 %s8, 1
    %s14 = ssub.s32 %s8, 2
    %s15 = sadd.s32 %s8, 1
    %s16 = ssub.s32 %s8, %s15
    %p17 = scmp.eq.s32.totalorder %s16, 0
    %s19 = sadd.s32 %s18, 1
    %s20 = scalar_select %p17, %s18, %s19
    %p23 = pneg %p17
    %p24 = scmp.eq.s32.totalorder %s8, 1
    %p25 = por %p23, %p24
    %p26 = scmp.ne.s32.totalorder %s18, %s21
    %p27 = scmp.eq.s32.totalorder %s8, 0
    %p28 = por %p26, %p27
    %p29 = scmp.ne.s32.totalorder %s18, %s21
    %p30 = scmp.eq.s32.totalorder %s13, 1
    %p31 = por %p29, %p30
    %p32 = scmp.ne.s32.totalorder %s21, %s22
    %p33 = scmp.eq.s32.totalorder %s13, 0
    %p34 = por %p32, %p33
    %p35 = scmp.ne.s32.totalorder %s21, %s22
    %p36 = scmp.eq.s32.totalorder %s14, 1
    %p37 = por %p35, %p36
    %p39 = scmp.ne.s32.totalorder %s22, %s38
    %p40 = scmp.eq.s32.totalorder %s14, 0
    %p41 = por %p39, %p40
    %s43 = sadd.s32 %s42, 1
    %p46 = scmp.eq.s32.totalorder %s8, 1
    %p47 = scmp.ne.s32.totalorder %s42, %s44
    %p48 = scmp.eq.s32.totalorder %s8, 0
    %p49 = por %p47, %p48
    %p50 = scmp.ne.s32.totalorder %s42, %s44
    %p51 = scmp.eq.s32.totalorder %s13, 1
    %p52 = por %p50, %p51
    %p53 = scmp.ne.s32.totalorder %s44, %s45
    %p54 = scmp.eq.s32.totalorder %s13, 0
    %p55 = por %p53, %p54
    %p56 = scmp.ne.s32.totalorder %s44, %s45
    %p57 = scmp.eq.s32.totalorder %s14, 1
    %p58 = por %p56, %p57
    %p60 = scmp.ne.s32.totalorder %s45, %s59
    %p61 = scmp.eq.s32.totalorder %s14, 0
    %p62 = por %p60, %p61
    %s63 = ssub.s32 %s8, %s15
    %p64 = scmp.eq.s32.totalorder %s63, 0
    %s66 = sadd.s32 %s65, 1
    %s67 = scalar_select %p64, %s65, %s66
    %p70 = pneg %p64
    %p71 = scmp.eq.s32.totalorder %s8, 1
    %p72 = por %p70, %p71
    %p73 = scmp.ne.s32.totalorder %s65, %s68
    %p74 = scmp.eq.s32.totalorder %s8, 0
    %p75 = por %p73, %p74
    %p76 = scmp.ne.s32.totalorder %s65, %s68
    %p77 = scmp.eq.s32.totalorder %s13, 1
    %p78 = por %p76, %p77
    %p79 = scmp.ne.s32.totalorder %s68, %s69
    %p80 = scmp.eq.s32.totalorder %s13, 0
    %p81 = por %p79, %p80
    %p82 = scmp.ne.s32.totalorder %s68, %s69
    %p83 = scmp.eq.s32.totalorder %s14, 1
    %p84 = por %p82, %p83
    %p86 = scmp.ne.s32.totalorder %s69, %s85
    %p87 = scmp.eq.s32.totalorder %s14, 0
    %p88 = por %p86, %p87
    %p89 = scmp.le.s32.totalorder 1, %s8
    %p90 = scmp.lt.s32.totalorder %s8, 3
    %p91 = pnand %p89, %p90
    %p92 = pneg %p91
    // Predicated region
    $region9: #{d_forward.5} parent=5 // pred_check
      _
    $region10: #{d_forward.5} parent=5 // pred_check_branch
      %94 = sbr.rel (%p91) target = $region12
    $region11: #{d_forward.5} parent=5 // pred_region
      %s95 = ssub.s32 %s8, 1
      // Predicated region
      $region13: #{d_forward.5} parent=11 // pred_check
        %p96 = pneg %p55
      $region14: #{d_forward.5} parent=11 // pred_check_branch
        %98 = sbr.rel (%p96) target = $region16
      $region15: #{d_forward.5} parent=11 // pred_region
        _
      $region16: #{d_forward.5} parent=11 // pred_fallthru
        _
    $region12: #{d_forward.5} parent=5 // pred_fallthru
      _
    %p99 = scmp.lt.s32.totalorder %s8, 2
    // Predicated region
    $region17: #{d_forward.5} parent=5 // pred_check
      %p100 = pneg %p99
    $region18: #{d_forward.5} parent=5 // pred_check_branch
      %102 = sbr.rel (%p100) target = $region20
    $region19: #{d_forward.5} parent=5 // pred_region
      // Predicated region
      $region21: #{d_forward.5} parent=19 // pred_check
        %p103 = pneg %p28
      $region22: #{d_forward.5} parent=19 // pred_check_branch
        %105 = sbr.rel (%p103) target = $region24
      $region23: #{d_forward.5} parent=19 // pred_region
        %p106 = scmp.lt.s32.totalorder %s8, 1
        %s107 = scalar_select %p106, %s8, 1
        %s108 = smul.addr %s107, 18
        %s109 = smul.addr %s108, 4
        %s110 = scalar_lea.vmem %s0, %s109
      $region24: #{d_forward.5} parent=19 // pred_fallthru
        _
    $region20: #{d_forward.5} parent=5 // pred_fallthru
      _
    %p111 = scmp.le.s32.totalorder 1, %s8
    %p112 = scmp.lt.s32.totalorder %s8, 3
    %p113 = pnand %p111, %p112
    %p114 = pneg %p113
    // Predicated region
    $region25: #{d_forward.5} parent=5 // pred_check
      _
    $region26: #{d_forward.5} parent=5 // pred_check_branch
      %116 = sbr.rel (%p113) target = $region28
    $region27: #{d_forward.5} parent=5 // pred_region
      %s117 = ssub.s32 %s8, 1
      %p118 = scmp.lt.s32.totalorder %s13, 1
      %s119 = scalar_select %p118, %s13, 1
      %s120 = smul.addr %s119, 18
      %s121 = smul.addr %s120, 4
      %s122 = scalar_lea.vmem %s0, %s121
      %p123 = pneg %p34
      %p124 = pneg %p31
      %p125 = pneg %p55
      %p126 = pneg %p52
      %p127 = pneg %p81
      %p128 = pneg %p78
      %p129 = scmp.lt.s32.totalorder %s13, 1
      %s130 = scalar_select %p129, %s13, 1
      %s131 = smul.addr %s130, 8
      %s132 = smul.addr %s131, 4
      %s133 = scalar_lea.vmem %s2, %s132
      %p134 = scmp.lt.s32.totalorder %s13, 1
      %s135 = scalar_select %p134, %s13, 1
      %s136 = smul.addr %s135, 18
      %s137 = smul.addr %s136, 4
      %s138 = scalar_lea.vmem %s0, %s137
      %p139 = scmp.lt.s32.totalorder %s13, 1
      %s140 = scalar_select %p139, %s13, 1
      %s141 = smul.addr %s140, 8
      %s142 = smul.addr %s141, 4
      %s143 = scalar_lea.vmem %s2, %s142
      %v145 = vld [vmem:[%s138] sm:$0xf]
      %v146 = vld [vmem:[%s138 + $0x8] sm:$0xf]
      %v147 = vld [vmem:[%s138 + $0x10] sm:$0xf]
      %v148 = vld [vmem:[%s138 + $0x18] sm:$0xf]
      %v149 = vld [vmem:[%s138 + $0x20] sm:$0xf]
      %v150 = vld [vmem:[%s138 + $0x28] sm:$0xf]
      %v151 = vld [vmem:[%s138 + $0x30] sm:$0xf]
      %v152 = vld [vmem:[%s138 + $0x38] sm:$0xf]
      %v153 = vld [vmem:[%s1] sm:$0xf]
      %v154 = vld [vmem:[%s1 + $0x4] sm:$0xf]
      %v155 = vld [vmem:[%s1 + $0x8] sm:$0xf]
      %v156 = vld [vmem:[%s1 + $0xc] sm:$0xf]
      %v157 = vld [vmem:[%s1 + $0x10] sm:$0xf]
      %v158 = vld [vmem:[%s1 + $0x14] sm:$0xf]
      %v159 = vld [vmem:[%s1 + $0x18] sm:$0xf]
      %v160 = vld [vmem:[%s1 + $0x1c] sm:$0xf]
      %s161 = scalar_lea.vmem %s138, 4
      %v162 = vld [vmem:[%s161] sm:$0xf]
      %v163 = vld [vmem:[%s161 + $0x8] sm:$0xf]
      %v164 = vld [vmem:[%s161 + $0x10] sm:$0xf]
      %v165 = vld [vmem:[%s161 + $0x18] sm:$0xf]
      %v166 = vld [vmem:[%s161 + $0x20] sm:$0xf]
      %v167 = vld [vmem:[%s161 + $0x28] sm:$0xf]
      %v168 = vld [vmem:[%s161 + $0x30] sm:$0xf]
      %v169 = vld [vmem:[%s161 + $0x38] sm:$0xf]
      %s170 = scalar_lea.vmem %s1, 32
      %v171 = vld [vmem:[%s170] sm:$0xf]
      %v172 = vld [vmem:[%s170 + $0x4] sm:$0xf]
      %v173 = vld [vmem:[%s170 + $0x8] sm:$0xf]
      %v174 = vld [vmem:[%s170 + $0xc] sm:$0xf]
      %v175 = vld [vmem:[%s170 + $0x10] sm:$0xf]
      %v176 = vld [vmem:[%s170 + $0x14] sm:$0xf]
      %v177 = vld [vmem:[%s170 + $0x18] sm:$0xf]
      %v178 = vld [vmem:[%s170 + $0x1c] sm:$0xf]
      %v187 = vunpack.c.l.b16 %v171
      %v188 = vunpack.c.l.b16 %v172
      %v189 = vunpack.c.l.b16 %v173
      %v190 = vunpack.c.l.b16 %v174
      %v191 = vunpack.c.l.b16 %v175
      %v192 = vunpack.c.l.b16 %v176
      %v193 = vunpack.c.l.b16 %v177
      %v194 = vunpack.c.l.b16 %v178
      %v195 = vpack.c.b16 %v188, %v187
      %v196 = vpack.c.b16 %v190, %v189
      %v197 = vpack.c.b16 %v192, %v191
      %v198 = vpack.c.b16 %v194, %v193
      %vm203 = vcmask 523264
      %v205 = vsel %vm203, %v162, 0
      %207 = vmatprep.subr.bf16.mxu0 0
      %208 = vmatpush1.bf16.msra.mxu0 %v195
      %209 = vmatprep.subr.bf16.mxu0 0
      %210 = vmatpush1.bf16.msra.mxu0 %v196
      %211 = vmatprep.subr.bf16.mxu0 0
      %212 = vmatpush1.bf16.msra.mxu0 %v197
      %213 = vmatprep.subr.bf16.mxu0 0
      %214 = vmatpush1.bf16.msra.mxu0 %v198
      %215 = vmatprep.subr.bf16.mxu0 0
      %216 = vmatpush1.bf16.msra.mxu0 0
      %217 = vmatprep.subr.bf16.mxu0 0
      %218 = vmatpush1.bf16.msra.mxu0 0
      %219 = vmatprep.subr.bf16.mxu0 0
      %220 = vmatpush1.bf16.msra.mxu0 0
      %221 = vmatprep.subr.bf16.mxu0 0
      %222 = vmatpush1.bf16.msra.mxu0 0
      %223 = vmatprep.subr.bf16.mxu0 0
      %224 = vmatpush1.bf16.msra.mxu0 0
      %225 = vmatprep.subr.bf16.mxu0 0
      %226 = vmatpush1.bf16.msra.mxu0 0
      %227 = vmatprep.subr.bf16.mxu0 0
      %228 = vmatpush1.bf16.msra.mxu0 0
      %229 = vmatprep.subr.bf16.mxu0 0
      %230 = vmatpush1.bf16.msra.mxu0 0
      %231 = vmatprep.subr.bf16.mxu0 0
      %232 = vmatpush1.bf16.msra.mxu0 0
      %233 = vmatprep.subr.bf16.mxu0 0
      %234 = vmatpush1.bf16.msra.mxu0 0
      %235 = vmatprep.subr.bf16.mxu0 0
      %236 = vmatpush1.bf16.msra.mxu0 0
      %237 = vmatprep.subr.bf16.mxu0 0
      %238 = vmatpush1.bf16.msra.mxu0 0
      %239 = vmatprep.mubr.bf16.mxu0 0
      %240 = vmatmul.mubr.bf16.gmra.mrb[0].mxu0 %v205
      %v241 = vpop.f32.mrb[0].mxu0
      %v242 = vadd.f32 0.0, %v241
      %v243 = vpop.f32.mrb[0].mxu0
      %v244 = vpop.f32.mrb[0].mxu0
      %v245 = vpop.f32.mrb[0].mxu0
      %246 = vdwg.mxu0
      %v248 = vsel %vm203, %v163, 0
      %250 = vmatprep.subr.bf16.mxu0 0
      %251 = vmatpush1.bf16.msra.mxu0 %v195
      %252 = vmatprep.subr.bf16.mxu0 0
      %253 = vmatpush1.bf16.msra.mxu0 %v196
      %254 = vmatprep.subr.bf16.mxu0 0
      %255 = vmatpush1.bf16.msra.mxu0 %v197
      %256 = vmatprep.subr.bf16.mxu0 0
      %257 = vmatpush1.bf16.msra.mxu0 %v198
      %258 = vmatprep.subr.bf16.mxu0 0
      %259 = vmatpush1.bf16.msra.mxu0 0
      %260 = vmatprep.subr.bf16.mxu0 0
      %261 = vmatpush1.bf16.msra.mxu0 0
      %262 = vmatprep.subr.bf16.mxu0 0
      %263 = vmatpush1.bf16.msra.mxu0 0
      %264 = vmatprep.subr.bf16.mxu0 0
      %265 = vmatpush1.bf16.msra.mxu0 0
      %266 = vmatprep.subr.bf16.mxu0 0
      %267 = vmatpush1.bf16.msra.mxu0 0
      %268 = vmatprep.subr.bf16.mxu0 0
      %269 = vmatpush1.bf16.msra.mxu0 0
      %270 = vmatprep.subr.bf16.mxu0 0
      %271 = vmatpush1.bf16.msra.mxu0 0
      %272 = vmatprep.subr.bf16.mxu0 0
      %273 = vmatpush1.bf16.msra.mxu0 0
      %274 = vmatprep.subr.bf16.mxu0 0
      %275 = vmatpush1.bf16.msra.mxu0 0
      %276 = vmatprep.subr.bf16.mxu0 0
      %277 = vmatpush1.bf16.msra.mxu0 0
      %278 = vmatprep.subr.bf16.mxu0 0
      %279 = vmatpush1.bf16.msra.mxu0 0
      %280 = vmatprep.subr.bf16.mxu0 0
      %281 = vmatpush1.bf16.msra.mxu0 0
      %282 = vmatprep.mubr.bf16.mxu0 0
      %283 = vmatmul.mubr.bf16.gmra.mrb[0].mxu0 %v248
      %v284 = vpop.f32.mrb[0].mxu0
      %v285 = vadd.f32 0.0, %v284
      %v286 = vpop.f32.mrb[0].mxu0
      %v287 = vpop.f32.mrb[0].mxu0
      %v288 = vpop.f32.mrb[0].mxu0
      %289 = vdwg.mxu0
      %v291 = vsel %vm203, %v164, 0
      %293 = vmatprep.subr.bf16.mxu0 0
      %294 = vmatpush1.bf16.msra.mxu0 %v195
      %295 = vmatprep.subr.bf16.mxu0 0
      %296 = vmatpush1.bf16.msra.mxu0 %v196
      %297 = vmatprep.subr.bf16.mxu0 0
      %298 = vmatpush1.bf16.msra.mxu0 %v197
      %299 = vmatprep.subr.bf16.mxu0 0
      %300 = vmatpush1.bf16.msra.mxu0 %v198
      %301 = vmatprep.subr.bf16.mxu0 0
      %302 = vmatpush1.bf16.msra.mxu0 0
      %303 = vmatprep.subr.bf16.mxu0 0
      %304 = vmatpush1.bf16.msra.mxu0 0
      %305 = vmatprep.subr.bf16.mxu0 0
      %306 = vmatpush1.bf16.msra.mxu0 0
      %307 = vmatprep.subr.bf16.mxu0 0
      %308 = vmatpush1.bf16.msra.mxu0 0
      %309 = vmatprep.subr.bf16.mxu0 0
      %310 = vmatpush1.bf16.msra.mxu0 0
      %311 = vmatprep.subr.bf16.mxu0 0
      %312 = vmatpush1.bf16.msra.mxu0 0
      %313 = vmatprep.subr.bf16.mxu0 0
      %314 = vmatpush1.bf16.msra.mxu0 0
      %315 = vmatprep.subr.bf16.mxu0 0
      %316 = vmatpush1.bf16.msra.mxu0 0
      %317 = vmatprep.subr.bf16.mxu0 0
      %318 = vmatpush1.bf16.msra.mxu0 0
      %319 = vmatprep.subr.bf16.mxu0 0
      %320 = vmatpush1.bf16.msra.mxu0 0
      %321 = vmatprep.subr.bf16.mxu0 0
      %322 = vmatpush1.bf16.msra.mxu0 0
      %323 = vmatprep.subr.bf16.mxu0 0
      %324 = vmatpush1.bf16.msra.mxu0 0
      %325 = vmatprep.mubr.bf16.mxu0 0
      %326 = vmatmul.mubr.bf16.gmra.mrb[0].mxu0 %v291
      %v327 = vpop.f32.mrb[0].mxu0
      %v328 = vadd.f32 0.0, %v327
      %v329 = vpop.f32.mrb[0].mxu0
      %v330 = vpop.f32.mrb[0].mxu0
      %v331 = vpop.f32.mrb[0].mxu0
      %332 = vdwg.mxu0
      %v334 = vsel %vm203, %v165, 0
      %336 = vmatprep.subr.bf16.mxu0 0
      %337 = vmatpush1.bf16.msra.mxu0 %v195
      %338 = vmatprep.subr.bf16.mxu0 0
      %339 = vmatpush1.bf16.msra.mxu0 %v196
      %340 = vmatprep.subr.bf16.mxu0 0
      %341 = vmatpush1.bf16.msra.mxu0 %v197
      %342 = vmatprep.subr.bf16.mxu0 0
      %343 = vmatpush1.bf16.msra.mxu0 %v198
      %344 = vmatprep.subr.bf16.mxu0 0
      %345 = vmatpush1.bf16.msra.mxu0 0
      %346 = vmatprep.subr.bf16.mxu0 0
      %347 = vmatpush1.bf16.msra.mxu0 0
      %348 = vmatprep.subr.bf16.mxu0 0
      %349 = vmatpush1.bf16.msra.mxu0 0
      %350 = vmatprep.subr.bf16.mxu0 0
      %351 = vmatpush1.bf16.msra.mxu0 0
      %352 = vmatprep.subr.bf16.mxu0 0
      %353 = vmatpush1.bf16.msra.mxu0 0
      %354 = vmatprep.subr.bf16.mxu0 0
      %355 = vmatpush1.bf16.msra.mxu0 0
      %356 = vmatprep.subr.bf16.mxu0 0
      %357 = vmatpush1.bf16.msra.mxu0 0
      %358 = vmatprep.subr.bf16.mxu0 0
      %359 = vmatpush1.bf16.msra.mxu0 0
      %360 = vmatprep.subr.bf16.mxu0 0
      %361 = vmatpush1.bf16.msra.mxu0 0
      %362 = vmatprep.subr.bf16.mxu0 0
      %363 = vmatpush1.bf16.msra.mxu0 0
      %364 = vmatprep.subr.bf16.mxu0 0
      %365 = vmatpush1.bf16.msra.mxu0 0
      %366 = vmatprep.subr.bf16.mxu0 0
      %367 = vmatpush1.bf16.msra.mxu0 0
      %368 = vmatprep.mubr.bf16.mxu0 0
      %369 = vmatmul.mubr.bf16.gmra.mrb[0].mxu0 %v334
      %v370 = vpop.f32.mrb[0].mxu0
      %v371 = vadd.f32 0.0, %v370
      %v372 = vpop.f32.mrb[0].mxu0
      %v373 = vpop.f32.mrb[0].mxu0
      %v374 = vpop.f32.mrb[0].mxu0
      %375 = vdwg.mxu0
      %v377 = vsel %vm203, %v166, 0
      %379 = vmatprep.subr.bf16.mxu0 0
      %380 = vmatpush1.bf16.msra.mxu0 %v195
      %381 = vmatprep.subr.bf16.mxu0 0
      %382 = vmatpush1.bf16.msra.mxu0 %v196
      %383 = vmatprep.subr.bf16.mxu0 0
      %384 = vmatpush1.bf16.msra.mxu0 %v197
      %385 = vmatprep.subr.bf16.mxu0 0
      %386 = vmatpush1.bf16.msra.mxu0 %v198
      %387 = vmatprep.subr.bf16.mxu0 0
      %388 = vmatpush1.bf16.msra.mxu0 0
      %389 = vmatprep.subr.bf16.mxu0 0
      %390 = vmatpush1.bf16.msra.mxu0 0
      %391 = vmatprep.subr.bf16.mxu0 0
      %392 = vmatpush1.bf16.msra.mxu0 0
      %393 = vmatprep.subr.bf16.mxu0 0
      %394 = vmatpush1.bf16.msra.mxu0 0
      %395 = vmatprep.subr.bf16.mxu0 0
      %396 = vmatpush1.bf16.msra.mxu0 0
      %397 = vmatprep.subr.bf16.mxu0 0
      %398 = vmatpush1.bf16.msra.mxu0 0
      %399 = vmatprep.subr.bf16.mxu0 0
      %400 = vmatpush1.bf16.msra.mxu0 0
      %401 = vmatprep.subr.bf16.mxu0 0
      %402 = vmatpush1.bf16.msra.mxu0 0
      %403 = vmatprep.subr.bf16.mxu0 0
      %404 = vmatpush1.bf16.msra.mxu0 0
      %405 = vmatprep.subr.bf16.mxu0 0
      %406 = vmatpush1.bf16.msra.mxu0 0
      %407 = vmatprep.subr.bf16.mxu0 0
      %408 = vmatpush1.bf16.msra.mxu0 0
      %409 = vmatprep.subr.bf16.mxu0 0
      %410 = vmatpush1.bf16.msra.mxu0 0
      %411 = vmatprep.mubr.bf16.mxu0 0
      %412 = vmatmul.mubr.bf16.gmra.mrb[0].mxu0 %v377
      %v413 = vpop.f32.mrb[0].mxu0
      %v414 = vadd.f32 0.0, %v413
      %v415 = vpop.f32.mrb[0].mxu0
      %v416 = vpop.f32.mrb[0].mxu0
      %v417 = vpop.f32.mrb[0].mxu0
      %418 = vdwg.mxu0
      %v420 = vsel %vm203, %v167, 0
      %422 = vmatprep.subr.bf16.mxu0 0
      %423 = vmatpush1.bf16.msra.mxu0 %v195
      %424 = vmatprep.subr.bf16.mxu0 0
      %425 = vmatpush1.bf16.msra.mxu0 %v196
      %426 = vmatprep.subr.bf16.mxu0 0
      %427 = vmatpush1.bf16.msra.mxu0 %v197
      %428 = vmatprep.subr.bf16.mxu0 0
      %429 = vmatpush1.bf16.msra.mxu0 %v198
      %430 = vmatprep.subr.bf16.mxu0 0
      %431 = vmatpush1.bf16.msra.mxu0 0
      %432 = vmatprep.subr.bf16.mxu0 0
      %433 = vmatpush1.bf16.msra.mxu0 0
      %434 = vmatprep.subr.bf16.mxu0 0
      %435 = vmatpush1.bf16.msra.mxu0 0
      %436 = vmatprep.subr.bf16.mxu0 0
      %437 = vmatpush1.bf16.msra.mxu0 0
      %438 = vmatprep.subr.bf16.mxu0 0
      %439 = vmatpush1.bf16.msra.mxu0 0
      %440 = vmatprep.subr.bf16.mxu0 0
      %441 = vmatpush1.bf16.msra.mxu0 0
      %442 = vmatprep.subr.bf16.mxu0 0
      %443 = vmatpush1.bf16.msra.mxu0 0
      %444 = vmatprep.subr.bf16.mxu0 0
      %445 = vmatpush1.bf16.msra.mxu0 0
      %446 = vmatprep.subr.bf16.mxu0 0
      %447 = vmatpush1.bf16.msra.mxu0 0
      %448 = vmatprep.subr.bf16.mxu0 0
      %449 = vmatpush1.bf16.msra.mxu0 0
      %450 = vmatprep.subr.bf16.mxu0 0
      %451 = vmatpush1.bf16.msra.mxu0 0
      %452 = vmatprep.subr.bf16.mxu0 0
      %453 = vmatpush1.bf16.msra.mxu0 0
      %454 = vmatprep.mubr.bf16.mxu0 0
      %455 = vmatmul.mubr.bf16.gmra.mrb[0].mxu0 %v420
      %v456 = vpop.f32.mrb[0].mxu0
      %v457 = vadd.f32 0.0, %v456
      %v458 = vpop.f32.mrb[0].mxu0
      %v459 = vpop.f32.mrb[0].mxu0
      %v460 = vpop.f32.mrb[0].mxu0
      %461 = vdwg.mxu0
      %v463 = vsel %vm203, %v168, 0
      %465 = vmatprep.subr.bf16.mxu0 0
      %466 = vmatpush1.bf16.msra.mxu0 %v195
      %467 = vmatprep.subr.bf16.mxu0 0
      %468 = vmatpush1.bf16.msra.mxu0 %v196
      %469 = vmatprep.subr.bf16.mxu0 0
      %470 = vmatpush1.bf16.msra.mxu0 %v197
      %471 = vmatprep.subr.bf16.mxu0 0
      %472 = vmatpush1.bf16.msra.mxu0 %v198
      %473 = vmatprep.subr.bf16.mxu0 0
      %474 = vmatpush1.bf16.msra.mxu0 0
      %475 = vmatprep.subr.bf16.mxu0 0
      %476 = vmatpush1.bf16.msra.mxu0 0
      %477 = vmatprep.subr.bf16.mxu0 0
      %478 = vmatpush1.bf16.msra.mxu0 0
      %479 = vmatprep.subr.bf16.mxu0 0
      %480 = vmatpush1.bf16.msra.mxu0 0
      %481 = vmatprep.subr.bf16.mxu0 0
      %482 = vmatpush1.bf16.msra.mxu0 0
      %483 = vmatprep.subr.bf16.mxu0 0
      %484 = vmatpush1.bf16.msra.mxu0 0
      %485 = vmatprep.subr.bf16.mxu0 0
      %486 = vmatpush1.bf16.msra.mxu0 0
      %487 = vmatprep.subr.bf16.mxu0 0
      %488 = vmatpush1.bf16.msra.mxu0 0
      %489 = vmatprep.subr.bf16.mxu0 0
      %490 = vmatpush1.bf16.msra.mxu0 0
      %491 = vmatprep.subr.bf16.mxu0 0
      %492 = vmatpush1.bf16.msra.mxu0 0
      %493 = vmatprep.subr.bf16.mxu0 0
      %494 = vmatpush1.bf16.msra.mxu0 0
      %495 = vmatprep.subr.bf16.mxu0 0
      %496 = vmatpush1.bf16.msra.mxu0 0
      %497 = vmatprep.mubr.bf16.mxu0 0
      %498 = vmatmul.mubr.bf16.gmra.mrb[0].mxu0 %v463
      %v499 = vpop.f32.mrb[0].mxu0
      %v500 = vadd.f32 0.0, %v499
      %v501 = vpop.f32.mrb[0].mxu0
      %v502 = vpop.f32.mrb[0].mxu0
      %v503 = vpop.f32.mrb[0].mxu0
      %504 = vdwg.mxu0
      %v506 = vsel %vm203, %v169, 0
      %508 = vmatprep.subr.bf16.mxu0 0
      %509 = vmatpush1.bf16.msra.mxu0 %v195
      %510 = vmatprep.subr.bf16.mxu0 0
      %511 = vmatpush1.bf16.msra.mxu0 %v196
      %512 = vmatprep.subr.bf16.mxu0 0
      %513 = vmatpush1.bf16.msra.mxu0 %v197
      %514 = vmatprep.subr.bf16.mxu0 0
      %515 = vmatpush1.bf16.msra.mxu0 %v198
      %516 = vmatprep.subr.bf16.mxu0 0
      %517 = vmatpush1.bf16.msra.mxu0 0
      %518 = vmatprep.subr.bf16.mxu0 0
      %519 = vmatpush1.bf16.msra.mxu0 0
      %520 = vmatprep.subr.bf16.mxu0 0
      %521 = vmatpush1.bf16.msra.mxu0 0
      %522 = vmatprep.subr.bf16.mxu0 0
      %523 = vmatpush1.bf16.msra.mxu0 0
      %524 = vmatprep.subr.bf16.mxu0 0
      %525 = vmatpush1.bf16.msra.mxu0 0
      %526 = vmatprep.subr.bf16.mxu0 0
      %527 = vmatpush1.bf16.msra.mxu0 0
      %528 = vmatprep.subr.bf16.mxu0 0
      %529 = vmatpush1.bf16.msra.mxu0 0
      %530 = vmatprep.subr.bf16.mxu0 0
      %531 = vmatpush1.bf16.msra.mxu0 0
      %532 = vmatprep.subr.bf16.mxu0 0
      %533 = vmatpush1.bf16.msra.mxu0 0
      %534 = vmatprep.subr.bf16.mxu0 0
      %535 = vmatpush1.bf16.msra.mxu0 0
      %536 = vmatprep.subr.bf16.mxu0 0
      %537 = vmatpush1.bf16.msra.mxu0 0
      %538 = vmatprep.subr.bf16.mxu0 0
      %539 = vmatpush1.bf16.msra.mxu0 0
      %540 = vmatprep.mubr.bf16.mxu0 0
      %541 = vmatmul.mubr.bf16.gmra.mrb[0].mxu0 %v506
      %v542 = vpop.f32.mrb[0].mxu0
      %v543 = vadd.f32 0.0, %v542
      %v544 = vpop.f32.mrb[0].mxu0
      %v545 = vpop.f32.mrb[0].mxu0
      %v546 = vpop.f32.mrb[0].mxu0
      %547 = vdwg.mxu0
      %v556 = vunpack.c.l.b16 %v153
      %v557 = vunpack.c.l.b16 %v154
      %v558 = vunpack.c.l.b16 %v155
      %v559 = vunpack.c.l.b16 %v156
      %v560 = vunpack.c.l.b16 %v157
      %v561 = vunpack.c.l.b16 %v158
      %v562 = vunpack.c.l.b16 %v159
      %v563 = vunpack.c.l.b16 %v160
      %v564 = vpack.c.b16 %v557, %v556
      %v565 = vpack.c.b16 %v559, %v558
      %v566 = vpack.c.b16 %v561, %v560
      %v567 = vpack.c.b16 %v563, %v562
      %v573 = vsel %vm203, %v145, 0
      %575 = vmatprep.subr.bf16.mxu0 0
      %576 = vmatpush1.bf16.msra.mxu0 %v564
      %577 = vmatprep.subr.bf16.mxu0 0
      %578 = vmatpush1.bf16.msra.mxu0 %v565
      %579 = vmatprep.subr.bf16.mxu0 0
      %580 = vmatpush1.bf16.msra.mxu0 %v566
      %581 = vmatprep.subr.bf16.mxu0 0
      %582 = vmatpush1.bf16.msra.mxu0 %v567
      %583 = vmatprep.subr.bf16.mxu0 0
      %584 = vmatpush1.bf16.msra.mxu0 0
      %585 = vmatprep.subr.bf16.mxu0 0
      %586 = vmatpush1.bf16.msra.mxu0 0
      %587 = vmatprep.subr.bf16.mxu0 0
      %588 = vmatpush1.bf16.msra.mxu0 0
      %589 = vmatprep.subr.bf16.mxu0 0
      %590 = vmatpush1.bf16.msra.mxu0 0
      %591 = vmatprep.subr.bf16.mxu0 0
      %592 = vmatpush1.bf16.msra.mxu0 0
      %593 = vmatprep.subr.bf16.mxu0 0
      %594 = vmatpush1.bf16.msra.mxu0 0
      %595 = vmatprep.subr.bf16.mxu0 0
      %596 = vmatpush1.bf16.msra.mxu0 0
      %597 = vmatprep.subr.bf16.mxu0 0
      %598 = vmatpush1.bf16.msra.mxu0 0
      %599 = vmatprep.subr.bf16.mxu0 0
      %600 = vmatpush1.bf16.msra.mxu0 0
      %601 = vmatprep.subr.bf16.mxu0 0
      %602 = vmatpush1.bf16.msra.mxu0 0
      %603 = vmatprep.subr.bf16.mxu0 0
      %604 = vmatpush1.bf16.msra.mxu0 0
      %605 = vmatprep.subr.bf16.mxu0 0
      %606 = vmatpush1.bf16.msra.mxu0 0
      %607 = vmatprep.mubr.bf16.mxu0 0
      %608 = vmatmul.mubr.bf16.gmra.mrb[0].mxu0 %v573
      %v609 = vpop.f32.mrb[0].mxu0
      %v610 = vadd.f32 %v242, %v609
      %v611 = vpop.f32.mrb[0].mxu0
      %v612 = vpop.f32.mrb[0].mxu0
      %v613 = vpop.f32.mrb[0].mxu0
      %614 = vdwg.mxu0
      %v616 = vsel %vm203, %v146, 0
      %618 = vmatprep.subr.bf16.mxu0 0
      %619 = vmatpush1.bf16.msra.mxu0 %v564
      %620 = vmatprep.subr.bf16.mxu0 0
      %621 = vmatpush1.bf16.msra.mxu0 %v565
      %622 = vmatprep.subr.bf16.mxu0 0
      %623 = vmatpush1.bf16.msra.mxu0 %v566
      %624 = vmatprep.subr.bf16.mxu0 0
      %625 = vmatpush1.bf16.msra.mxu0 %v567
      %626 = vmatprep.subr.bf16.mxu0 0
      %627 = vmatpush1.bf16.msra.mxu0 0
      %628 = vmatprep.subr.bf16.mxu0 0
      %629 = vmatpush1.bf16.msra.mxu0 0
      %630 = vmatprep.subr.bf16.mxu0 0
      %631 = vmatpush1.bf16.msra.mxu0 0
      %632 = vmatprep.subr.bf16.mxu0 0
      %633 = vmatpush1.bf16.msra.mxu0 0
      %634 = vmatprep.subr.bf16.mxu0 0
      %635 = vmatpush1.bf16.msra.mxu0 0
      %636 = vmatprep.subr.bf16.mxu0 0
      %637 = vmatpush1.bf16.msra.mxu0 0
      %638 = vmatprep.subr.bf16.mxu0 0
      %639 = vmatpush1.bf16.msra.mxu0 0
      %640 = vmatprep.subr.bf16.mxu0 0
      %641 = vmatpush1.bf16.msra.mxu0 0
      %642 = vmatprep.subr.bf16.mxu0 0
      %643 = vmatpush1.bf16.msra.mxu0 0
      %644 = vmatprep.subr.bf16.mxu0 0
      %645 = vmatpush1.bf16.msra.mxu0 0
      %646 = vmatprep.subr.bf16.mxu0 0
      %647 = vmatpush1.bf16.msra.mxu0 0
      %648 = vmatprep.subr.bf16.mxu0 0
      %649 = vmatpush1.bf16.msra.mxu0 0
      %650 = vmatprep.mubr.bf16.mxu0 0
      %651 = vmatmul.mubr.bf16.gmra.mrb[0].mxu0 %v616
      %v652 = vpop.f32.mrb[0].mxu0
      %v653 = vadd.f32 %v285, %v652
      %v654 = vpop.f32.mrb[0].mxu0
      %v655 = vpop.f32.mrb[0].mxu0
      %v656 = vpop.f32.mrb[0].mxu0
      %657 = vdwg.mxu0
      %v659 = vsel %vm203, %v147, 0
      %661 = vmatprep.subr.bf16.mxu0 0
      %662 = vmatpush1.bf16.msra.mxu0 %v564
      %663 = vmatprep.subr.bf16.mxu0 0
      %664 = vmatpush1.bf16.msra.mxu0 %v565
      %665 = vmatprep.subr.bf16.mxu0 0
      %666 = vmatpush1.bf16.msra.mxu0 %v566
      %667 = vmatprep.subr.bf16.mxu0 0
      %668 = vmatpush1.bf16.msra.mxu0 %v567
      %669 = vmatprep.subr.bf16.mxu0 0
      %670 = vmatpush1.bf16.msra.mxu0 0
      %671 = vmatprep.subr.bf16.mxu0 0
      %672 = vmatpush1.bf16.msra.mxu0 0
      %673 = vmatprep.subr.bf16.mxu0 0
      %674 = vmatpush1.bf16.msra.mxu0 0
      %675 = vmatprep.subr.bf16.mxu0 0
      %676 = vmatpush1.bf16.msra.mxu0 0
      %677 = vmatprep.subr.bf16.mxu0 0
      %678 = vmatpush1.bf16.msra.mxu0 0
      %679 = vmatprep.subr.bf16.mxu0 0
      %680 = vmatpush1.bf16.msra.mxu0 0
      %681 = vmatprep.subr.bf16.mxu0 0
      %682 = vmatpush1.bf16.msra.mxu0 0
      %683 = vmatprep.subr.bf16.mxu0 0
      %684 = vmatpush1.bf16.msra.mxu0 0
      %685 = vmatprep.subr.bf16.mxu0 0
      %686 = vmatpush1.bf16.msra.mxu0 0
      %687 = vmatprep.subr.bf16.mxu0 0
      %688 = vmatpush1.bf16.msra.mxu0 0
      %689 = vmatprep.subr.bf16.mxu0 0
      %690 = vmatpush1.bf16.msra.mxu0 0
      %691 = vmatprep.subr.bf16.mxu0 0
      %692 = vmatpush1.bf16.msra.mxu0 0
      %693 = vmatprep.mubr.bf16.mxu0 0
      %694 = vmatmul.mubr.bf16.gmra.mrb[0].mxu0 %v659
      %v695 = vpop.f32.mrb[0].mxu0
      %v696 = vadd.f32 %v328, %v695
      %v697 = vpop.f32.mrb[0].mxu0
      %v698 = vpop.f32.mrb[0].mxu0
      %v699 = vpop.f32.mrb[0].mxu0
      %700 = vdwg.mxu0
      %v702 = vsel %vm203, %v148, 0
      %704 = vmatprep.subr.bf16.mxu0 0
      %705 = vmatpush1.bf16.msra.mxu0 %v564
      %706 = vmatprep.subr.bf16.mxu0 0
      %707 = vmatpush1.bf16.msra.mxu0 %v565
      %708 = vmatprep.subr.bf16.mxu0 0
      %709 = vmatpush1.bf16.msra.mxu0 %v566
      %710 = vmatprep.subr.bf16.mxu0 0
      %711 = vmatpush1.bf16.msra.mxu0 %v567
      %712 = vmatprep.subr.bf16.mxu0 0
      %713 = vmatpush1.bf16.msra.mxu0 0
      %714 = vmatprep.subr.bf16.mxu0 0
      %715 = vmatpush1.bf16.msra.mxu0 0
      %716 = vmatprep.subr.bf16.mxu0 0
      %717 = vmatpush1.bf16.msra.mxu0 0
      %718 = vmatprep.subr.bf16.mxu0 0
      %719 = vmatpush1.bf16.msra.mxu0 0
      %720 = vmatprep.subr.bf16.mxu0 0
      %721 = vmatpush1.bf16.msra.mxu0 0
      %722 = vmatprep.subr.bf16.mxu0 0
      %723 = vmatpush1.bf16.msra.mxu0 0
      %724 = vmatprep.subr.bf16.mxu0 0
      %725 = vmatpush1.bf16.msra.mxu0 0
      %726 = vmatprep.subr.bf16.mxu0 0
      %727 = vmatpush1.bf16.msra.mxu0 0
      %728 = vmatprep.subr.bf16.mxu0 0
      %729 = vmatpush1.bf16.msra.mxu0 0
      %730 = vmatprep.subr.bf16.mxu0 0
      %731 = vmatpush1.bf16.msra.mxu0 0
      %732 = vmatprep.subr.bf16.mxu0 0
      %733 = vmatpush1.bf16.msra.mxu0 0
      %734 = vmatprep.subr.bf16.mxu0 0
      %735 = vmatpush1.bf16.msra.mxu0 0
      %736 = vmatprep.mubr.bf16.mxu0 0
      %737 = vmatmul.mubr.bf16.gmra.mrb[0].mxu0 %v702
      %v738 = vpop.f32.mrb[0].mxu0
      %v739 = vadd.f32 %v371, %v738
      %v740 = vpop.f32.mrb[0].mxu0
      %v741 = vpop.f32.mrb[0].mxu0
      %v742 = vpop.f32.mrb[0].mxu0
      %743 = vdwg.mxu0
      %v745 = vsel %vm203, %v149, 0
      %747 = vmatprep.subr.bf16.mxu0 0
      %748 = vmatpush1.bf16.msra.mxu0 %v564
      %749 = vmatprep.subr.bf16.mxu0 0
      %750 = vmatpush1.bf16.msra.mxu0 %v565
      %751 = vmatprep.subr.bf16.mxu0 0
      %752 = vmatpush1.bf16.msra.mxu0 %v566
      %753 = vmatprep.subr.bf16.mxu0 0
      %754 = vmatpush1.bf16.msra.mxu0 %v567
      %755 = vmatprep.subr.bf16.mxu0 0
      %756 = vmatpush1.bf16.msra.mxu0 0
      %757 = vmatprep.subr.bf16.mxu0 0
      %758 = vmatpush1.bf16.msra.mxu0 0
      %759 = vmatprep.subr.bf16.mxu0 0
      %760 = vmatpush1.bf16.msra.mxu0 0
      %761 = vmatprep.subr.bf16.mxu0 0
      %762 = vmatpush1.bf16.msra.mxu0 0
      %763 = vmatprep.subr.bf16.mxu0 0
      %764 = vmatpush1.bf16.msra.mxu0 0
      %765 = vmatprep.subr.bf16.mxu0 0
      %766 = vmatpush1.bf16.msra.mxu0 0
      %767 = vmatprep.subr.bf16.mxu0 0
      %768 = vmatpush1.bf16.msra.mxu0 0
      %769 = vmatprep.subr.bf16.mxu0 0
      %770 = vmatpush1.bf16.msra.mxu0 0
      %771 = vmatprep.subr.bf16.mxu0 0
      %772 = vmatpush1.bf16.msra.mxu0 0
      %773 = vmatprep.subr.bf16.mxu0 0
      %774 = vmatpush1.bf16.msra.mxu0 0
      %775 = vmatprep.subr.bf16.mxu0 0
      %776 = vmatpush1.bf16.msra.mxu0 0
      %777 = vmatprep.subr.bf16.mxu0 0
      %778 = vmatpush1.bf16.msra.mxu0 0
      %779 = vmatprep.mubr.bf16.mxu0 0
      %780 = vmatmul.mubr.bf16.gmra.mrb[0].mxu0 %v745
      %v781 = vpop.f32.mrb[0].mxu0
      %v782 = vadd.f32 %v414, %v781
      %v783 = vpop.f32.mrb[0].mxu0
      %v784 = vpop.f32.mrb[0].mxu0
      %v785 = vpop.f32.mrb[0].mxu0
      %786 = vdwg.mxu0
      %v788 = vsel %vm203, %v150, 0
      %790 = vmatprep.subr.bf16.mxu0 0
      %791 = vmatpush1.bf16.msra.mxu0 %v564
      %792 = vmatprep.subr.bf16.mxu0 0
      %793 = vmatpush1.bf16.msra.mxu0 %v565
      %794 = vmatprep.subr.bf16.mxu0 0
      %795 = vmatpush1.bf16.msra.mxu0 %v566
      %796 = vmatprep.subr.bf16.mxu0 0
      %797 = vmatpush1.bf16.msra.mxu0 %v567
      %798 = vmatprep.subr.bf16.mxu0 0
      %799 = vmatpush1.bf16.msra.mxu0 0
      %800 = vmatprep.subr.bf16.mxu0 0
      %801 = vmatpush1.bf16.msra.mxu0 0
      %802 = vmatprep.subr.bf16.mxu0 0
      %803 = vmatpush1.bf16.msra.mxu0 0
      %804 = vmatprep.subr.bf16.mxu0 0
      %805 = vmatpush1.bf16.msra.mxu0 0
      %806 = vmatprep.subr.bf16.mxu0 0
      %807 = vmatpush1.bf16.msra.mxu0 0
      %808 = vmatprep.subr.bf16.mxu0 0
      %809 = vmatpush1.bf16.msra.mxu0 0
      %810 = vmatprep.subr.bf16.mxu0 0
      %811 = vmatpush1.bf16.msra.mxu0 0
      %812 = vmatprep.subr.bf16.mxu0 0
      %813 = vmatpush1.bf16.msra.mxu0 0
      %814 = vmatprep.subr.bf16.mxu0 0
      %815 = vmatpush1.bf16.msra.mxu0 0
      %816 = vmatprep.subr.bf16.mxu0 0
      %817 = vmatpush1.bf16.msra.mxu0 0
      %818 = vmatprep.subr.bf16.mxu0 0
      %819 = vmatpush1.bf16.msra.mxu0 0
      %820 = vmatprep.subr.bf16.mxu0 0
      %821 = vmatpush1.bf16.msra.mxu0 0
      %822 = vmatprep.mubr.bf16.mxu0 0
      %823 = vmatmul.mubr.bf16.gmra.mrb[0].mxu0 %v788
      %v824 = vpop.f32.mrb[0].mxu0
      %v825 = vadd.f32 %v457, %v824
      %v826 = vpop.f32.mrb[0].mxu0
      %v827 = vpop.f32.mrb[0].mxu0
      %v828 = vpop.f32.mrb[0].mxu0
      %829 = vdwg.mxu0
      %v831 = vsel %vm203, %v151, 0
      %833 = vmatprep.subr.bf16.mxu0 0
      %834 = vmatpush1.bf16.msra.mxu0 %v564
      %835 = vmatprep.subr.bf16.mxu0 0
      %836 = vmatpush1.bf16.msra.mxu0 %v565
      %837 = vmatprep.subr.bf16.mxu0 0
      %838 = vmatpush1.bf16.msra.mxu0 %v566
      %839 = vmatprep.subr.bf16.mxu0 0
      %840 = vmatpush1.bf16.msra.mxu0 %v567
      %841 = vmatprep.subr.bf16.mxu0 0
      %842 = vmatpush1.bf16.msra.mxu0 0
      %843 = vmatprep.subr.bf16.mxu0 0
      %844 = vmatpush1.bf16.msra.mxu0 0
      %845 = vmatprep.subr.bf16.mxu0 0
      %846 = vmatpush1.bf16.msra.mxu0 0
      %847 = vmatprep.subr.bf16.mxu0 0
      %848 = vmatpush1.bf16.msra.mxu0 0
      %849 = vmatprep.subr.bf16.mxu0 0
      %850 = vmatpush1.bf16.msra.mxu0 0
      %851 = vmatprep.subr.bf16.mxu0 0
      %852 = vmatpush1.bf16.msra.mxu0 0
      %853 = vmatprep.subr.bf16.mxu0 0
      %854 = vmatpush1.bf16.msra.mxu0 0
      %855 = vmatprep.subr.bf16.mxu0 0
      %856 = vmatpush1.bf16.msra.mxu0 0
      %857 = vmatprep.subr.bf16.mxu0 0
      %858 = vmatpush1.bf16.msra.mxu0 0
      %859 = vmatprep.subr.bf16.mxu0 0
      %860 = vmatpush1.bf16.msra.mxu0 0
      %861 = vmatprep.subr.bf16.mxu0 0
      %862 = vmatpush1.bf16.msra.mxu0 0
      %863 = vmatprep.subr.bf16.mxu0 0
      %864 = vmatpush1.bf16.msra.mxu0 0
      %865 = vmatprep.mubr.bf16.mxu0 0
      %866 = vmatmul.mubr.bf16.gmra.mrb[0].mxu0 %v831
      %v867 = vpop.f32.mrb[0].mxu0
      %v868 = vadd.f32 %v500, %v867
      %v869 = vpop.f32.mrb[0].mxu0
      %v870 = vpop.f32.mrb[0].mxu0
      %v871 = vpop.f32.mrb[0].mxu0
      %872 = vdwg.mxu0
      %v874 = vsel %vm203, %v152, 0
      %876 = vmatprep.subr.bf16.mxu0 0
      %877 = vmatpush1.bf16.msra.mxu0 %v564
      %878 = vmatprep.subr.bf16.mxu0 0
      %879 = vmatpush1.bf16.msra.mxu0 %v565
      %880 = vmatprep.subr.bf16.mxu0 0
      %881 = vmatpush1.bf16.msra.mxu0 %v566
      %882 = vmatprep.subr.bf16.mxu0 0
      %883 = vmatpush1.bf16.msra.mxu0 %v567
      %884 = vmatprep.subr.bf16.mxu0 0
      %885 = vmatpush1.bf16.msra.mxu0 0
      %886 = vmatprep.subr.bf16.mxu0 0
      %887 = vmatpush1.bf16.msra.mxu0 0
      %888 = vmatprep.subr.bf16.mxu0 0
      %889 = vmatpush1.bf16.msra.mxu0 0
      %890 = vmatprep.subr.bf16.mxu0 0
      %891 = vmatpush1.bf16.msra.mxu0 0
      %892 = vmatprep.subr.bf16.mxu0 0
      %893 = vmatpush1.bf16.msra.mxu0 0
      %894 = vmatprep.subr.bf16.mxu0 0
      %895 = vmatpush1.bf16.msra.mxu0 0
      %896 = vmatprep.subr.bf16.mxu0 0
      %897 = vmatpush1.bf16.msra.mxu0 0
      %898 = vmatprep.subr.bf16.mxu0 0
      %899 = vmatpush1.bf16.msra.mxu0 0
      %900 = vmatprep.subr.bf16.mxu0 0
      %901 = vmatpush1.bf16.msra.mxu0 0
      %902 = vmatprep.subr.bf16.mxu0 0
      %903 = vmatpush1.bf16.msra.mxu0 0
      %904 = vmatprep.subr.bf16.mxu0 0
      %905 = vmatpush1.bf16.msra.mxu0 0
      %906 = vmatprep.subr.bf16.mxu0 0
      %907 = vmatpush1.bf16.msra.mxu0 0
      %908 = vmatprep.mubr.bf16.mxu0 0
      %909 = vmatmul.mubr.bf16.gmra.mrb[0].mxu0 %v874
      %v910 = vpop.f32.mrb[0].mxu0
      %v911 = vadd.f32 %v543, %v910
      %v912 = vpop.f32.mrb[0].mxu0
      %v913 = vpop.f32.mrb[0].mxu0
      %v914 = vpop.f32.mrb[0].mxu0
      %915 = vdwg.mxu0
      %s916 = scalar_lea.vmem %s138, 8
      %v917 = vld [vmem:[%s916] sm:$0xf]
      %v918 = vld [vmem:[%s916 + $0x8] sm:$0xf]
      %v919 = vld [vmem:[%s916 + $0x10] sm:$0xf]
      %v920 = vld [vmem:[%s916 + $0x18] sm:$0xf]
      %v921 = vld [vmem:[%s916 + $0x20] sm:$0xf]
      %v922 = vld [vmem:[%s916 + $0x28] sm:$0xf]
      %v923 = vld [vmem:[%s916 + $0x30] sm:$0xf]
      %v924 = vld [vmem:[%s916 + $0x38] sm:$0xf]
      %s925 = scalar_lea.vmem %s1, 64
      %v926 = vld [vmem:[%s925] sm:$0xf]
      %v927 = vld [vmem:[%s925 + $0x4] sm:$0xf]
      %v928 = vld [vmem:[%s925 + $0x8] sm:$0xf]
      %v929 = vld [vmem:[%s925 + $0xc] sm:$0xf]
      %v930 = vld [vmem:[%s925 + $0x10] sm:$0xf]
      %v931 = vld [vmem:[%s925 + $0x14] sm:$0xf]
      %v932 = vld [vmem:[%s925 + $0x18] sm:$0xf]
      %v933 = vld [vmem:[%s925 + $0x1c] sm:$0xf]
      %v942 = vunpack.c.l.b16 %v926
      %v943 = vunpack.c.l.b16 %v927
      %v944 = vunpack.c.l.b16 %v928
      %v945 = vunpack.c.l.b16 %v929
      %v946 = vunpack.c.l.b16 %v930
      %v947 = vunpack.c.l.b16 %v931
      %v948 = vunpack.c.l.b16 %v932
      %v949 = vunpack.c.l.b16 %v933
      %v950 = vpack.c.b16 %v943, %v942
      %v951 = vpack.c.b16 %v945, %v944
      %v952 = vpack.c.b16 %v947, %v946
      %v953 = vpack.c.b16 %v949, %v948
      %v959 = vsel %vm203, %v917, 0
      %961 = vmatprep.subr.bf16.mxu0 0
      %962 = vmatpush1.bf16.msra.mxu0 %v950
      %963 = vmatprep.subr.bf16.mxu0 0
      %964 = vmatpush1.bf16.msra.mxu0 %v951
      %965 = vmatprep.subr.bf16.mxu0 0
      %966 = vmatpush1.bf16.msra.mxu0 %v952
      %967 = vmatprep.subr.bf16.mxu0 0
      %968 = vmatpush1.bf16.msra.mxu0 %v953
      %969 = vmatprep.subr.bf16.mxu0 0
      %970 = vmatpush1.bf16.msra.mxu0 0
      %971 = vmatprep.subr.bf16.mxu0 0
      %972 = vmatpush1.bf16.msra.mxu0 0
      %973 = vmatprep.subr.bf16.mxu0 0
      %974 = vmatpush1.bf16.msra.mxu0 0
      %975 = vmatprep.subr.bf16.mxu0 0
      %976 = vmatpush1.bf16.msra.mxu0 0
      %977 = vmatprep.subr.bf16.mxu0 0
      %978 = vmatpush1.bf16.msra.mxu0 0
      %979 = vmatprep.subr.bf16.mxu0 0
      %980 = vmatpush1.bf16.msra.mxu0 0
      %981 = vmatprep.subr.bf16.mxu0 0
      %982 = vmatpush1.bf16.msra.mxu0 0
      %983 = vmatprep.subr.bf16.mxu0 0
      %984 = vmatpush1.bf16.msra.mxu0 0
      %985 = vmatprep.subr.bf16.mxu0 0
      %986 = vmatpush1.bf16.msra.mxu0 0
      %987 = vmatprep.subr.bf16.mxu0 0
      %988 = vmatpush1.bf16.msra.mxu0 0
      %989 = vmatprep.subr.bf16.mxu0 0
      %990 = vmatpush1.bf16.msra.mxu0 0
      %991 = vmatprep.subr.bf16.mxu0 0
      %992 = vmatpush1.bf16.msra.mxu0 0
      %993 = vmatprep.mubr.bf16.mxu0 0
      %994 = vmatmul.mubr.bf16.gmra.mrb[0].mxu0 %v959
      %v995 = vpop.f32.mrb[0].mxu0
      %v996 = vadd.f32 0.0, %v995
      %v997 = vpop.f32.mrb[0].mxu0
      %v998 = vpop.f32.mrb[0].mxu0
      %v999 = vpop.f32.mrb[0].mxu0
      %1000 = vdwg.mxu0
      %v1002 = vsel %vm203, %v918, 0
      %1004 = vmatprep.subr.bf16.mxu0 0
      %1005 = vmatpush1.bf16.msra.mxu0 %v950
      %1006 = vmatprep.subr.bf16.mxu0 0
      %1007 = vmatpush1.bf16.msra.mxu0 %v951
      %1008 = vmatprep.subr.bf16.mxu0 0
      %1009 = vmatpush1.bf16.msra.mxu0 %v952
      %1010 = vmatprep.subr.bf16.mxu0 0
      %1011 = vmatpush1.bf16.msra.mxu0 %v953
      %1012 = vmatprep.subr.bf16.mxu0 0
      %1013 = vmatpush1.bf16.msra.mxu0 0
      %1014 = vmatprep.subr.bf16.mxu0 0
      %1015 = vmatpush1.bf16.msra.mxu0 0
      %1016 = vmatprep.subr.bf16.mxu0 0
      %1017 = vmatpush1.bf16.msra.mxu0 0
      %1018 = vmatprep.subr.bf16.mxu0 0
      %1019 = vmatpush1.bf16.msra.mxu0 0
      %1020 = vmatprep.subr.bf16.mxu0 0
      %1021 = vmatpush1.bf16.msra.mxu0 0
      %1022 = vmatprep.subr.bf16.mxu0 0
      %1023 = vmatpush1.bf16.msra.mxu0 0
      %1024 = vmatprep.subr.bf16.mxu0 0
      %1025 = vmatpush1.bf16.msra.mxu0 0
      %1026 = vmatprep.subr.bf16.mxu0 0
      %1027 = vmatpush1.bf16.msra.mxu0 0
      %1028 = vmatprep.subr.bf16.mxu0 0
      %1029 = vmatpush1.bf16.msra.mxu0 0
      %1030 = vmatprep.subr.bf16.mxu0 0
      %1031 = vmatpush1.bf16.msra.mxu0 0
      %1032 = vmatprep.subr.bf16.mxu0 0
      %1033 = vmatpush1.bf16.msra.mxu0 0
      %1034 = vmatprep.subr.bf16.mxu0 0
      %1035 = vmatpush1.bf16.msra.mxu0 0
      %1036 = vmatprep.mubr.bf16.mxu0 0
      %1037 = vmatmul.mubr.bf16.gmra.mrb[0].mxu0 %v1002
      %v1038 = vpop.f32.mrb[0].mxu0
      %v1039 = vadd.f32 0.0, %v1038
      %v1040 = vpop.f32.mrb[0].mxu0
      %v1041 = vpop.f32.mrb[0].mxu0
      %v1042 = vpop.f32.mrb[0].mxu0
      %1043 = vdwg.mxu0
      %v1045 = vsel %vm203, %v919, 0
      %1047 = vmatprep.subr.bf16.mxu0 0
      %1048 = vmatpush1.bf16.msra.mxu0 %v950
      %1049 = vmatprep.subr.bf16.mxu0 0
      %1050 = vmatpush1.bf16.msra.mxu0 %v951
      %1051 = vmatprep.subr.bf16.mxu0 0
      %1052 = vmatpush1.bf16.msra.mxu0 %v952
      %1053 = vmatprep.subr.bf16.mxu0 0
      %1054 = vmatpush1.bf16.msra.mxu0 %v953
      %1055 = vmatprep.subr.bf16.mxu0 0
      %1056 = vmatpush1.bf16.msra.mxu0 0
      %1057 = vmatprep.subr.bf16.mxu0 0
      %1058 = vmatpush1.bf16.msra.mxu0 0
      %1059 = vmatprep.subr.bf16.mxu0 0
      %1060 = vmatpush1.bf16.msra.mxu0 0
      %1061 = vmatprep.subr.bf16.mxu0 0
      %1062 = vmatpush1.bf16.msra.mxu0 0
      %1063 = vmatprep.subr.bf16.mxu0 0
      %1064 = vmatpush1.bf16.msra.mxu0 0
      %1065 = vmatprep.subr.bf16.mxu0 0
      %1066 = vmatpush1.bf16.msra.mxu0 0
      %1067 = vmatprep.subr.bf16.mxu0 0
      %1068 = vmatpush1.bf16.msra.mxu0 0
      %1069 = vmatprep.subr.bf16.mxu0 0
      %1070 = vmatpush1.bf16.msra.mxu0 0
      %1071 = vmatprep.subr.bf16.mxu0 0
      %1072 = vmatpush1.bf16.msra.mxu0 0
      %1073 = vmatprep.subr.bf16.mxu0 0
      %1074 = vmatpush1.bf16.msra.mxu0 0
      %1075 = vmatprep.subr.bf16.mxu0 0
      %1076 = vmatpush1.bf16.msra.mxu0 0
      %1077 = vmatprep.subr.bf16.mxu0 0
      %1078 = vmatpush1.bf16.msra.mxu0 0
      %1079 = vmatprep.mubr.bf16.mxu0 0
      %1080 = vmatmul.mubr.bf16.gmra.mrb[0].mxu0 %v1045
      %v1081 = vpop.f32.mrb[0].mxu0
      %v1082 = vadd.f32 0.0, %v1081
      %v1083 = vpop.f32.mrb[0].mxu0
      %v1084 = vpop.f32.mrb[0].mxu0
      %v1085 = vpop.f32.mrb[0].mxu0
      %1086 = vdwg.mxu0
      %v1088 = vsel %vm203, %v920, 0
      %1090 = vmatprep.subr.bf16.mxu0 0
      %1091 = vmatpush1.bf16.msra.mxu0 %v950
      %1092 = vmatprep.subr.bf16.mxu0 0
      %1093 = vmatpush1.bf16.msra.mxu0 %v951
      %1094 = vmatprep.subr.bf16.mxu0 0
      %1095 = vmatpush1.bf16.msra.mxu0 %v952
      %1096 = vmatprep.subr.bf16.mxu0 0
      %1097 = vmatpush1.bf16.msra.mxu0 %v953
      %1098 = vmatprep.subr.bf16.mxu0 0
      %1099 = vmatpush1.bf16.msra.mxu0 0
      %1100 = vmatprep.subr.bf16.mxu0 0
      %1101 = vmatpush1.bf16.msra.mxu0 0
      %1102 = vmatprep.subr.bf16.mxu0 0
      %1103 = vmatpush1.bf16.msra.mxu0 0
      %1104 = vmatprep.subr.bf16.mxu0 0
      %1105 = vmatpush1.bf16.msra.mxu0 0
      %1106 = vmatprep.subr.bf16.mxu0 0
      %1107 = vmatpush1.bf16.msra.mxu0 0
      %1108 = vmatprep.subr.bf16.mxu0 0
      %1109 = vmatpush1.bf16.msra.mxu0 0
      %1110 = vmatprep.subr.bf16.mxu0 0
      %1111 = vmatpush1.bf16.msra.mxu0 0
      %1112 = vmatprep.subr.bf16.mxu0 0
      %1113 = vmatpush1.bf16.msra.mxu0 0
      %1114 = vmatprep.subr.bf16.mxu0 0
      %1115 = vmatpush1.bf16.msra.mxu0 0
      %1116 = vmatprep.subr.bf16.mxu0 0
      %1117 = vmatpush1.bf16.msra.mxu0 0
      %1118 = vmatprep.subr.bf16.mxu0 0
      %1119 = vmatpush1.bf16.msra.mxu0 0
      %1120 = vmatprep.subr.bf16.mxu0 0
      %1121 = vmatpush1.bf16.msra.mxu0 0
      %1122 = vmatprep.mubr.bf16.mxu0 0
      %1123 = vmatmul.mubr.bf16.gmra.mrb[0].mxu0 %v1088
      %v1124 = vpop.f32.mrb[0].mxu0
      %v1125 = vadd.f32 0.0, %v1124
      %v1126 = vpop.f32.mrb[0].mxu0
      %v1127 = vpop.f32.mrb[0].mxu0
      %v1128 = vpop.f32.mrb[0].mxu0
      %1129 = vdwg.mxu0
      %v1131 = vsel %vm203, %v921, 0
      %1133 = vmatprep.subr.bf16.mxu0 0
      %1134 = vmatpush1.bf16.msra.mxu0 %v950
      %1135 = vmatprep.subr.bf16.mxu0 0
      %1136 = vmatpush1.bf16.msra.mxu0 %v951
      %1137 = vmatprep.subr.bf16.mxu0 0
      %1138 = vmatpush1.bf16.msra.mxu0 %v952
      %1139 = vmatprep.subr.bf16.mxu0 0
      %1140 = vmatpush1.bf16.msra.mxu0 %v953
      %1141 = vmatprep.subr.bf16.mxu0 0
      %1142 = vmatpush1.bf16.msra.mxu0 0
      %1143 = vmatprep.subr.bf16.mxu0 0
      %1144 = vmatpush1.bf16.msra.mxu0 0
      %1145 = vmatprep.subr.bf16.mxu0 0
      %1146 = vmatpush1.bf16.msra.mxu0 0
      %1147 = vmatprep.subr.bf16.mxu0 0
      %1148 = vmatpush1.bf16.msra.mxu0 0
      %1149 = vmatprep.subr.bf16.mxu0 0
      %1150 = vmatpush1.bf16.msra.mxu0 0
      %1151 = vmatprep.subr.bf16.mxu0 0
      %1152 = vmatpush1.bf16.msra.mxu0 0
      %1153 = vmatprep.subr.bf16.mxu0 0
      %1154 = vmatpush1.bf16.msra.mxu0 0
      %1155 = vmatprep.subr.bf16.mxu0 0
      %1156 = vmatpush1.bf16.msra.mxu0 0
      %1157 = vmatprep.subr.bf16.mxu0 0
      %1158 = vmatpush1.bf16.msra.mxu0 0
      %1159 = vmatprep.subr.bf16.mxu0 0
      %1160 = vmatpush1.bf16.msra.mxu0 0
      %1161 = vmatprep.subr.bf16.mxu0 0
      %1162 = vmatpush1.bf16.msra.mxu0 0
      %1163 = vmatprep.subr.bf16.mxu0 0
      %1164 = vmatpush1.bf16.msra.mxu0 0
      %1165 = vmatprep.mubr.bf16.mxu0 0
      %1166 = vmatmul.mubr.bf16.gmra.mrb[0].mxu0 %v1131
      %v1167 = vpop.f32.mrb[0].mxu0
      %v1168 = vadd.f32 0.0, %v1167
      %v1169 = vpop.f32.mrb[0].mxu0
      %v1170 = vpop.f32.mrb[0].mxu0
      %v1171 = vpop.f32.mrb[0].mxu0
      %1172 = vdwg.mxu0
      %v1174 = vsel %vm203, %v922, 0
      %1176 = vmatprep.subr.bf16.mxu0 0
      %1177 = vmatpush1.bf16.msra.mxu0 %v950
      %1178 = vmatprep.subr.bf16.mxu0 0
      %1179 = vmatpush1.bf16.msra.mxu0 %v951
      %1180 = vmatprep.subr.bf16.mxu0 0
      %1181 = vmatpush1.bf16.msra.mxu0 %v952
      %1182 = vmatprep.subr.bf16.mxu0 0
      %1183 = vmatpush1.bf16.msra.mxu0 %v953
      %1184 = vmatprep.subr.bf16.mxu0 0
      %1185 = vmatpush1.bf16.msra.mxu0 0
      %1186 = vmatprep.subr.bf16.mxu0 0
      %1187 = vmatpush1.bf16.msra.mxu0 0
      %1188 = vmatprep.subr.bf16.mxu0 0
      %1189 = vmatpush1.bf16.msra.mxu0 0
      %1190 = vmatprep.subr.bf16.mxu0 0
      %1191 = vmatpush1.bf16.msra.mxu0 0
      %1192 = vmatprep.subr.bf16.mxu0 0
      %1193 = vmatpush1.bf16.msra.mxu0 0
      %1194 = vmatprep.subr.bf16.mxu0 0
      %1195 = vmatpush1.bf16.msra.mxu0 0
      %1196 = vmatprep.subr.bf16.mxu0 0
      %1197 = vmatpush1.bf16.msra.mxu0 0
      %1198 = vmatprep.subr.bf16.mxu0 0
      %1199 = vmatpush1.bf16.msra.mxu0 0
      %1200 = vmatprep.subr.bf16.mxu0 0
      %1201 = vmatpush1.bf16.msra.mxu0 0
      %1202 = vmatprep.subr.bf16.mxu0 0
      %1203 = vmatpush1.bf16.msra.mxu0 0
      %1204 = vmatprep.subr.bf16.mxu0 0
      %1205 = vmatpush1.bf16.msra.mxu0 0
      %1206 = vmatprep.subr.bf16.mxu0 0
      %1207 = vmatpush1.bf16.msra.mxu0 0
      %1208 = vmatprep.mubr.bf16.mxu0 0
      %1209 = vmatmul.mubr.bf16.gmra.mrb[0].mxu0 %v1174
      %v1210 = vpop.f32.mrb[0].mxu0
      %v1211 = vadd.f32 0.0, %v1210
      %v1212 = vpop.f32.mrb[0].mxu0
      %v1213 = vpop.f32.mrb[0].mxu0
      %v1214 = vpop.f32.mrb[0].mxu0
      %1215 = vdwg.mxu0
      %v1217 = vsel %vm203, %v923, 0
      %1219 = vmatprep.subr.bf16.mxu0 0
      %1220 = vmatpush1.bf16.msra.mxu0 %v950
      %1221 = vmatprep.subr.bf16.mxu0 0
      %1222 = vmatpush1.bf16.msra.mxu0 %v951
      %1223 = vmatprep.subr.bf16.mxu0 0
      %1224 = vmatpush1.bf16.msra.mxu0 %v952
      %1225 = vmatprep.subr.bf16.mxu0 0
      %1226 = vmatpush1.bf16.msra.mxu0 %v953
      %1227 = vmatprep.subr.bf16.mxu0 0
      %1228 = vmatpush1.bf16.msra.mxu0 0
      %1229 = vmatprep.subr.bf16.mxu0 0
      %1230 = vmatpush1.bf16.msra.mxu0 0
      %1231 = vmatprep.subr.bf16.mxu0 0
      %1232 = vmatpush1.bf16.msra.mxu0 0
      %1233 = vmatprep.subr.bf16.mxu0 0
      %1234 = vmatpush1.bf16.msra.mxu0 0
      %1235 = vmatprep.subr.bf16.mxu0 0
      %1236 = vmatpush1.bf16.msra.mxu0 0
      %1237 = vmatprep.subr.bf16.mxu0 0
      %1238 = vmatpush1.bf16.msra.mxu0 0
      %1239 = vmatprep.subr.bf16.mxu0 0
      %1240 = vmatpush1.bf16.msra.mxu0 0
      %1241 = vmatprep.subr.bf16.mxu0 0
      %1242 = vmatpush1.bf16.msra.mxu0 0
      %1243 = vmatprep.subr.bf16.mxu0 0
      %1244 = vmatpush1.bf16.msra.mxu0 0
      %1245 = vmatprep.subr.bf16.mxu0 0
      %1246 = vmatpush1.bf16.msra.mxu0 0
      %1247 = vmatprep.subr.bf16.mxu0 0
      %1248 = vmatpush1.bf16.msra.mxu0 0
      %1249 = vmatprep.subr.bf16.mxu0 0
      %1250 = vmatpush1.bf16.msra.mxu0 0
      %1251 = vmatprep.mubr.bf16.mxu0 0
      %1252 = vmatmul.mubr.bf16.gmra.mrb[0].mxu0 %v1217
      %v1253 = vpop.f32.mrb[0].mxu0
      %v1254 = vadd.f32 0.0, %v1253
      %v1255 = vpop.f32.mrb[0].mxu0
      %v1256 = vpop.f32.mrb[0].mxu0
      %v1257 = vpop.f32.mrb[0].mxu0
      %1258 = vdwg.mxu0
      %v1260 = vsel %vm203, %v924, 0
      %1262 = vmatprep.subr.bf16.mxu0 0
      %1263 = vmatpush1.bf16.msra.mxu0 %v950
      %1264 = vmatprep.subr.bf16.mxu0 0
      %1265 = vmatpush1.bf16.msra.mxu0 %v951
      %1266 = vmatprep.subr.bf16.mxu0 0
      %1267 = vmatpush1.bf16.msra.mxu0 %v952
      %1268 = vmatprep.subr.bf16.mxu0 0
      %1269 = vmatpush1.bf16.msra.mxu0 %v953
      %1270 = vmatprep.subr.bf16.mxu0 0
      %1271 = vmatpush1.bf16.msra.mxu0 0
      %1272 = vmatprep.subr.bf16.mxu0 0
      %1273 = vmatpush1.bf16.msra.mxu0 0
      %1274 = vmatprep.subr.bf16.mxu0 0
      %1275 = vmatpush1.bf16.msra.mxu0 0
      %1276 = vmatprep.subr.bf16.mxu0 0
      %1277 = vmatpush1.bf16.msra.mxu0 0
      %1278 = vmatprep.subr.bf16.mxu0 0
      %1279 = vmatpush1.bf16.msra.mxu0 0
      %1280 = vmatprep.subr.bf16.mxu0 0
      %1281 = vmatpush1.bf16.msra.mxu0 0
      %1282 = vmatprep.subr.bf16.mxu0 0
      %1283 = vmatpush1.bf16.msra.mxu0 0
      %1284 = vmatprep.subr.bf16.mxu0 0
      %1285 = vmatpush1.bf16.msra.mxu0 0
      %1286 = vmatprep.subr.bf16.mxu0 0
      %1287 = vmatpush1.bf16.msra.mxu0 0
      %1288 = vmatprep.subr.bf16.mxu0 0
      %1289 = vmatpush1.bf16.msra.mxu0 0
      %1290 = vmatprep.subr.bf16.mxu0 0
      %1291 = vmatpush1.bf16.msra.mxu0 0
      %1292 = vmatprep.subr.bf16.mxu0 0
      %1293 = vmatpush1.bf16.msra.mxu0 0
      %1294 = vmatprep.mubr.bf16.mxu0 0
      %1295 = vmatmul.mubr.bf16.gmra.mrb[0].mxu0 %v1260
      %v1296 = vpop.f32.mrb[0].mxu0
      %v1297 = vadd.f32 0.0, %v1296
      %v1298 = vpop.f32.mrb[0].mxu0
      %v1299 = vpop.f32.mrb[0].mxu0
      %v1300 = vpop.f32.mrb[0].mxu0
      %1301 = vdwg.mxu0
      %v1302 = vadd.f32 %v610, %v996
      %v1303 = vadd.f32 %v653, %v1039
      %v1304 = vadd.f32 %v696, %v1082
      %v1305 = vadd.f32 %v739, %v1125
      %v1306 = vadd.f32 %v782, %v1168
      %v1307 = vadd.f32 %v825, %v1211
      %v1308 = vadd.f32 %v868, %v1254
      %v1309 = vadd.f32 %v911, %v1297
      %s1310 = scalar_lea.vmem %s138, 12
      %v1311 = vld [vmem:[%s1310] sm:$0xf]
      %v1312 = vld [vmem:[%s1310 + $0x8] sm:$0xf]
      %v1313 = vld [vmem:[%s1310 + $0x10] sm:$0xf]
      %v1314 = vld [vmem:[%s1310 + $0x18] sm:$0xf]
      %v1315 = vld [vmem:[%s1310 + $0x20] sm:$0xf]
      %v1316 = vld [vmem:[%s1310 + $0x28] sm:$0xf]
      %v1317 = vld [vmem:[%s1310 + $0x30] sm:$0xf]
      %v1318 = vld [vmem:[%s1310 + $0x38] sm:$0xf]
      %s1319 = scalar_lea.vmem %s1, 96
      %v1320 = vld [vmem:[%s1319] sm:$0xf]
      %v1321 = vld [vmem:[%s1319 + $0x4] sm:$0xf]
      %v1322 = vld [vmem:[%s1319 + $0x8] sm:$0xf]
      %v1323 = vld [vmem:[%s1319 + $0xc] sm:$0xf]
      %v1324 = vld [vmem:[%s1319 + $0x10] sm:$0xf]
      %v1325 = vld [vmem:[%s1319 + $0x14] sm:$0xf]
      %v1326 = vld [vmem:[%s1319 + $0x18] sm:$0xf]
      %v1327 = vld [vmem:[%s1319 + $0x1c] sm:$0xf]
      %v1336 = vunpack.c.l.b16 %v1320
      %v1337 = vunpack.c.l.b16 %v1321
      %v1338 = vunpack.c.l.b16 %v1322
      %v1339 = vunpack.c.l.b16 %v1323
      %v1340 = vunpack.c.l.b16 %v1324
      %v1341 = vunpack.c.l.b16 %v1325
      %v1342 = vunpack.c.l.b16 %v1326
      %v1343 = vunpack.c.l.b16 %v1327
      %v1344 = vpack.c.b16 %v1337, %v1336
      %v1345 = vpack.c.b16 %v1339, %v1338
      %v1346 = vpack.c.b16 %v1341, %v1340
      %v1347 = vpack.c.b16 %v1343, %v1342
      %v1353 = vsel %vm203, %v1311, 0
      %1355 = vmatprep.subr.bf16.mxu0 0
      %1356 = vmatpush1.bf16.msra.mxu0 %v1344
      %1357 = vmatprep.subr.bf16.mxu0 0
      %1358 = vmatpush1.bf16.msra.mxu0 %v1345
      %1359 = vmatprep.subr.bf16.mxu0 0
      %1360 = vmatpush1.bf16.msra.mxu0 %v1346
      %1361 = vmatprep.subr.bf16.mxu0 0
      %1362 = vmatpush1.bf16.msra.mxu0 %v1347
      %1363 = vmatprep.subr.bf16.mxu0 0
      %1364 = vmatpush1.bf16.msra.mxu0 0
      %1365 = vmatprep.subr.bf16.mxu0 0
      %1366 = vmatpush1.bf16.msra.mxu0 0
      %1367 = vmatprep.subr.bf16.mxu0 0
      %1368 = vmatpush1.bf16.msra.mxu0 0
      %1369 = vmatprep.subr.bf16.mxu0 0
      %1370 = vmatpush1.bf16.msra.mxu0 0
      %1371 = vmatprep.subr.bf16.mxu0 0
      %1372 = vmatpush1.bf16.msra.mxu0 0
      %1373 = vmatprep.subr.bf16.mxu0 0
      %1374 = vmatpush1.bf16.msra.mxu0 0
      %1375 = vmatprep.subr.bf16.mxu0 0
      %1376 = vmatpush1.bf16.msra.mxu0 0
      %1377 = vmatprep.subr.bf16.mxu0 0
      %1378 = vmatpush1.bf16.msra.mxu0 0
      %1379 = vmatprep.subr.bf16.mxu0 0
      %1380 = vmatpush1.bf16.msra.mxu0 0
      %1381 = vmatprep.subr.bf16.mxu0 0
      %1382 = vmatpush1.bf16.msra.mxu0 0
      %1383 = vmatprep.subr.bf16.mxu0 0
      %1384 = vmatpush1.bf16.msra.mxu0 0
      %1385 = vmatprep.subr.bf16.mxu0 0
      %1386 = vmatpush1.bf16.msra.mxu0 0
      %1387 = vmatprep.mubr.bf16.mxu0 0
      %1388 = vmatmul.mubr.bf16.gmra.mrb[0].mxu0 %v1353
      %v1389 = vpop.f32.mrb[0].mxu0
      %v1390 = vadd.f32 0.0, %v1389
      %v1391 = vpop.f32.mrb[0].mxu0
      %v1392 = vpop.f32.mrb[0].mxu0
      %v1393 = vpop.f32.mrb[0].mxu0
      %1394 = vdwg.mxu0
      %v1396 = vsel %vm203, %v1312, 0
      %1398 = vmatprep.subr.bf16.mxu0 0
      %1399 = vmatpush1.bf16.msra.mxu0 %v1344
      %1400 = vmatprep.subr.bf16.mxu0 0
      %1401 = vmatpush1.bf16.msra.mxu0 %v1345
      %1402 = vmatprep.subr.bf16.mxu0 0
      %1403 = vmatpush1.bf16.msra.mxu0 %v1346
      %1404 = vmatprep.subr.bf16.mxu0 0
      %1405 = vmatpush1.bf16.msra.mxu0 %v1347
      %1406 = vmatprep.subr.bf16.mxu0 0
      %1407 = vmatpush1.bf16.msra.mxu0 0
      %1408 = vmatprep.subr.bf16.mxu0 0
      %1409 = vmatpush1.bf16.msra.mxu0 0
      %1410 = vmatprep.subr.bf16.mxu0 0
      %1411 = vmatpush1.bf16.msra.mxu0 0
      %1412 = vmatprep.subr.bf16.mxu0 0
      %1413 = vmatpush1.bf16.msra.mxu0 0
      %1414 = vmatprep.subr.bf16.mxu0 0
      %1415 = vmatpush1.bf16.msra.mxu0 0
      %1416 = vmatprep.subr.bf16.mxu0 0
      %1417 = vmatpush1.bf16.msra.mxu0 0
      %1418 = vmatprep.subr.bf16.mxu0 0
      %1419 = vmatpush1.bf16.msra.mxu0 0
      %1420 = vmatprep.subr.bf16.mxu0 0
      %1421 = vmatpush1.bf16.msra.mxu0 0
      %1422 = vmatprep.subr.bf16.mxu0 0
      %1423 = vmatpush1.bf16.msra.mxu0 0
      %1424 = vmatprep.subr.bf16.mxu0 0
      %1425 = vmatpush1.bf16.msra.mxu0 0
      %1426 = vmatprep.subr.bf16.mxu0 0
      %1427 = vmatpush1.bf16.msra.mxu0 0
      %1428 = vmatprep.subr.bf16.mxu0 0
      %1429 = vmatpush1.bf16.msra.mxu0 0
      %1430 = vmatprep.mubr.bf16.mxu0 0
      %1431 = vmatmul.mubr.bf16.gmra.mrb[0].mxu0 %v1396
      %v1432 = vpop.f32.mrb[0].mxu0
      %v1433 = vadd.f32 0.0, %v1432
      %v1434 = vpop.f32.mrb[0].mxu0
      %v1435 = vpop.f32.mrb[0].mxu0
      %v1436 = vpop.f32.mrb[0].mxu0
      %1437 = vdwg.mxu0
      %v1439 = vsel %vm203, %v1313, 0
      %1441 = vmatprep.subr.bf16.mxu0 0
      %1442 = vmatpush1.bf16.msra.mxu0 %v1344
      %1443 = vmatprep.subr.bf16.mxu0 0
      %1444 = vmatpush1.bf16.msra.mxu0 %v1345
      %1445 = vmatprep.subr.bf16.mxu0 0
      %1446 = vmatpush1.bf16.msra.mxu0 %v1346
      %1447 = vmatprep.subr.bf16.mxu0 0
      %1448 = vmatpush1.bf16.msra.mxu0 %v1347
      %1449 = vmatprep.subr.bf16.mxu0 0
      %1450 = vmatpush1.bf16.msra.mxu0 0
      %1451 = vmatprep.subr.bf16.mxu0 0
      %1452 = vmatpush1.bf16.msra.mxu0 0
      %1453 = vmatprep.subr.bf16.mxu0 0
      %1454 = vmatpush1.bf16.msra.mxu0 0
      %1455 = vmatprep.subr.bf16.mxu0 0
      %1456 = vmatpush1.bf16.msra.mxu0 0
      %1457 = vmatprep.subr.bf16.mxu0 0
      %1458 = vmatpush1.bf16.msra.mxu0 0
      %1459 = vmatprep.subr.bf16.mxu0 0
      %1460 = vmatpush1.bf16.msra.mxu0 0
      %1461 = vmatprep.subr.bf16.mxu0 0
      %1462 = vmatpush1.bf16.msra.mxu0 0
      %1463 = vmatprep.subr.bf16.mxu0 0
      %1464 = vmatpush1.bf16.msra.mxu0 0
      %1465 = vmatprep.subr.bf16.mxu0 0
      %1466 = vmatpush1.bf16.msra.mxu0 0
      %1467 = vmatprep.subr.bf16.mxu0 0
      %1468 = vmatpush1.bf16.msra.mxu0 0
      %1469 = vmatprep.subr.bf16.mxu0 0
      %1470 = vmatpush1.bf16.msra.mxu0 0
      %1471 = vmatprep.subr.bf16.mxu0 0
      %1472 = vmatpush1.bf16.msra.mxu0 0
      %1473 = vmatprep.mubr.bf16.mxu0 0
      %1474 = vmatmul.mubr.bf16.gmra.mrb[0].mxu0 %v1439
      %v1475 = vpop.f32.mrb[0].mxu0
      %v1476 = vadd.f32 0.0, %v1475
      %v1477 = vpop.f32.mrb[0].mxu0
      %v1478 = vpop.f32.mrb[0].mxu0
      %v1479 = vpop.f32.mrb[0].mxu0
      %1480 = vdwg.mxu0
      %v1482 = vsel %vm203, %v1314, 0
      %1484 = vmatprep.subr.bf16.mxu0 0
      %1485 = vmatpush1.bf16.msra.mxu0 %v1344
      %1486 = vmatprep.subr.bf16.mxu0 0
      %1487 = vmatpush1.bf16.msra.mxu0 %v1345
      %1488 = vmatprep.subr.bf16.mxu0 0
      %1489 = vmatpush1.bf16.msra.mxu0 %v1346
      %1490 = vmatprep.subr.bf16.mxu0 0
      %1491 = vmatpush1.bf16.msra.mxu0 %v1347
      %1492 = vmatprep.subr.bf16.mxu0 0
      %1493 = vmatpush1.bf16.msra.mxu0 0
      %1494 = vmatprep.subr.bf16.mxu0 0
      %1495 = vmatpush1.bf16.msra.mxu0 0
      %1496 = vmatprep.subr.bf16.mxu0 0
      %1497 = vmatpush1.bf16.msra.mxu0 0
      %1498 = vmatprep.subr.bf16.mxu0 0
      %1499 = vmatpush1.bf16.msra.mxu0 0
      %1500 = vmatprep.subr.bf16.mxu0 0
      %1501 = vmatpush1.bf16.msra.mxu0 0
      %1502 = vmatprep.subr.bf16.mxu0 0
      %1503 = vmatpush1.bf16.msra.mxu0 0
      %1504 = vmatprep.subr.bf16.mxu0 0
      %1505 = vmatpush1.bf16.msra.mxu0 0
      %1506 = vmatprep.subr.bf16.mxu0 0
      %1507 = vmatpush1.bf16.msra.mxu0 0
      %1508 = vmatprep.subr.bf16.mxu0 0
      %1509 = vmatpush1.bf16.msra.mxu0 0
      %1510 = vmatprep.subr.bf16.mxu0 0
      %1511 = vmatpush1.bf16.msra.mxu0 0
      %1512 = vmatprep.subr.bf16.mxu0 0
      %1513 = vmatpush1.bf16.msra.mxu0 0
      %1514 = vmatprep.subr.bf16.mxu0 0
      %1515 = vmatpush1.bf16.msra.mxu0 0
      %1516 = vmatprep.mubr.bf16.mxu0 0
      %1517 = vmatmul.mubr.bf16.gmra.mrb[0].mxu0 %v1482
      %v1518 = vpop.f32.mrb[0].mxu0
      %v1519 = vadd.f32 0.0, %v1518
      %v1520 = vpop.f32.mrb[0].mxu0
      %v1521 = vpop.f32.mrb[0].mxu0
      %v1522 = vpop.f32.mrb[0].mxu0
      %1523 = vdwg.mxu0
      %v1525 = vsel %vm203, %v1315, 0
      %1527 = vmatprep.subr.bf16.mxu0 0
      %1528 = vmatpush1.bf16.msra.mxu0 %v1344
      %1529 = vmatprep.subr.bf16.mxu0 0
      %1530 = vmatpush1.bf16.msra.mxu0 %v1345
      %1531 = vmatprep.subr.bf16.mxu0 0
      %1532 = vmatpush1.bf16.msra.mxu0 %v1346
      %1533 = vmatprep.subr.bf16.mxu0 0
      %1534 = vmatpush1.bf16.msra.mxu0 %v1347
      %1535 = vmatprep.subr.bf16.mxu0 0
      %1536 = vmatpush1.bf16.msra.mxu0 0
      %1537 = vmatprep.subr.bf16.mxu0 0
      %1538 = vmatpush1.bf16.msra.mxu0 0
      %1539 = vmatprep.subr.bf16.mxu0 0
      %1540 = vmatpush1.bf16.msra.mxu0 0
      %1541 = vmatprep.subr.bf16.mxu0 0
      %1542 = vmatpush1.bf16.msra.mxu0 0
      %1543 = vmatprep.subr.bf16.mxu0 0
      %1544 = vmatpush1.bf16.msra.mxu0 0
      %1545 = vmatprep.subr.bf16.mxu0 0
      %1546 = vmatpush1.bf16.msra.mxu0 0
      %1547 = vmatprep.subr.bf16.mxu0 0
      %1548 = vmatpush1.bf16.msra.mxu0 0
      %1549 = vmatprep.subr.bf16.mxu0 0
      %1550 = vmatpush1.bf16.msra.mxu0 0
      %1551 = vmatprep.subr.bf16.mxu0 0
      %1552 = vmatpush1.bf16.msra.mxu0 0
      %1553 = vmatprep.subr.bf16.mxu0 0
      %1554 = vmatpush1.bf16.msra.mxu0 0
      %1555 = vmatprep.subr.bf16.mxu0 0
      %1556 = vmatpush1.bf16.msra.mxu0 0
      %1557 = vmatprep.subr.bf16.mxu0 0
      %1558 = vmatpush1.bf16.msra.mxu0 0
      %1559 = vmatprep.mubr.bf16.mxu0 0
      %1560 = vmatmul.mubr.bf16.gmra.mrb[0].mxu0 %v1525
      %v1561 = vpop.f32.mrb[0].mxu0
      %v1562 = vadd.f32 0.0, %v1561
      %v1563 = vpop.f32.mrb[0].mxu0
      %v1564 = vpop.f32.mrb[0].mxu0
      %v1565 = vpop.f32.mrb[0].mxu0
      %1566 = vdwg.mxu0
      %v1568 = vsel %vm203, %v1316, 0
      %1570 = vmatprep.subr.bf16.mxu0 0
      %1571 = vmatpush1.bf16.msra.mxu0 %v1344
      %1572 = vmatprep.subr.bf16.mxu0 0
      %1573 = vmatpush1.bf16.msra.mxu0 %v1345
      %1574 = vmatprep.subr.bf16.mxu0 0
      %1575 = vmatpush1.bf16.msra.mxu0 %v1346
      %1576 = vmatprep.subr.bf16.mxu0 0
      %1577 = vmatpush1.bf16.msra.mxu0 %v1347
      %1578 = vmatprep.subr.bf16.mxu0 0
      %1579 = vmatpush1.bf16.msra.mxu0 0
      %1580 = vmatprep.subr.bf16.mxu0 0
      %1581 = vmatpush1.bf16.msra.mxu0 0
      %1582 = vmatprep.subr.bf16.mxu0 0
      %1583 = vmatpush1.bf16.msra.mxu0 0
      %1584 = vmatprep.subr.bf16.mxu0 0
      %1585 = vmatpush1.bf16.msra.mxu0 0
      %1586 = vmatprep.subr.bf16.mxu0 0
      %1587 = vmatpush1.bf16.msra.mxu0 0
      %1588 = vmatprep.subr.bf16.mxu0 0
      %1589 = vmatpush1.bf16.msra.mxu0 0
      %1590 = vmatprep.subr.bf16.mxu0 0
      %1591 = vmatpush1.bf16.msra.mxu0 0
      %1592 = vmatprep.subr.bf16.mxu0 0
      %1593 = vmatpush1.bf16.msra.mxu0 0
      %1594 = vmatprep.subr.bf16.mxu0 0
      %1595 = vmatpush1.bf16.msra.mxu0 0
      %1596 = vmatprep.subr.bf16.mxu0 0
      %1597 = vmatpush1.bf16.msra.mxu0 0
      %1598 = vmatprep.subr.bf16.mxu0 0
      %1599 = vmatpush1.bf16.msra.mxu0 0
      %1600 = vmatprep.subr.bf16.mxu0 0
      %1601 = vmatpush1.bf16.msra.mxu0 0
      %1602 = vmatprep.mubr.bf16.mxu0 0
      %1603 = vmatmul.mubr.bf16.gmra.mrb[0].mxu0 %v1568
      %v1604 = vpop.f32.mrb[0].mxu0
      %v1605 = vadd.f32 0.0, %v1604
      %v1606 = vpop.f32.mrb[0].mxu0
      %v1607 = vpop.f32.mrb[0].mxu0
      %v1608 = vpop.f32.mrb[0].mxu0
      %1609 = vdwg.mxu0
      %v1611 = vsel %vm203, %v1317, 0
      %1613 = vmatprep.subr.bf16.mxu0 0
      %1614 = vmatpush1.bf16.msra.mxu0 %v1344
      %1615 = vmatprep.subr.bf16.mxu0 0
      %1616 = vmatpush1.bf16.msra.mxu0 %v1345
      %1617 = vmatprep.subr.bf16.mxu0 0
      %1618 = vmatpush1.bf16.msra.mxu0 %v1346
      %1619 = vmatprep.subr.bf16.mxu0 0
      %1620 = vmatpush1.bf16.msra.mxu0 %v1347
      %1621 = vmatprep.subr.bf16.mxu0 0
      %1622 = vmatpush1.bf16.msra.mxu0 0
      %1623 = vmatprep.subr.bf16.mxu0 0
      %1624 = vmatpush1.bf16.msra.mxu0 0
      %1625 = vmatprep.subr.bf16.mxu0 0
      %1626 = vmatpush1.bf16.msra.mxu0 0
      %1627 = vmatprep.subr.bf16.mxu0 0
      %1628 = vmatpush1.bf16.msra.mxu0 0
      %1629 = vmatprep.subr.bf16.mxu0 0
      %1630 = vmatpush1.bf16.msra.mxu0 0
      %1631 = vmatprep.subr.bf16.mxu0 0
      %1632 = vmatpush1.bf16.msra.mxu0 0
      %1633 = vmatprep.subr.bf16.mxu0 0
      %1634 = vmatpush1.bf16.msra.mxu0 0
      %1635 = vmatprep.subr.bf16.mxu0 0
      %1636 = vmatpush1.bf16.msra.mxu0 0
      %1637 = vmatprep.subr.bf16.mxu0 0
      %1638 = vmatpush1.bf16.msra.mxu0 0
      %1639 = vmatprep.subr.bf16.mxu0 0
      %1640 = vmatpush1.bf16.msra.mxu0 0
      %1641 = vmatprep.subr.bf16.mxu0 0
      %1642 = vmatpush1.bf16.msra.mxu0 0
      %1643 = vmatprep.subr.bf16.mxu0 0
      %1644 = vmatpush1.bf16.msra.mxu0 0
      %1645 = vmatprep.mubr.bf16.mxu0 0
      %1646 = vmatmul.mubr.bf16.gmra.mrb[0].mxu0 %v1611
      %v1647 = vpop.f32.mrb[0].mxu0
      %v1648 = vadd.f32 0.0, %v1647
      %v1649 = vpop.f32.mrb[0].mxu0
      %v1650 = vpop.f32.mrb[0].mxu0
      %v1651 = vpop.f32.mrb[0].mxu0
      %1652 = vdwg.mxu0
      %v1654 = vsel %vm203, %v1318, 0
      %1656 = vmatprep.subr.bf16.mxu0 0
      %1657 = vmatpush1.bf16.msra.mxu0 %v1344
      %1658 = vmatprep.subr.bf16.mxu0 0
      %1659 = vmatpush1.bf16.msra.mxu0 %v1345
      %1660 = vmatprep.subr.bf16.mxu0 0
      %1661 = vmatpush1.bf16.msra.mxu0 %v1346
      %1662 = vmatprep.subr.bf16.mxu0 0
      %1663 = vmatpush1.bf16.msra.mxu0 %v1347
      %1664 = vmatprep.subr.bf16.mxu0 0
      %1665 = vmatpush1.bf16.msra.mxu0 0
      %1666 = vmatprep.subr.bf16.mxu0 0
      %1667 = vmatpush1.bf16.msra.mxu0 0
      %1668 = vmatprep.subr.bf16.mxu0 0
      %1669 = vmatpush1.bf16.msra.mxu0 0
      %1670 = vmatprep.subr.bf16.mxu0 0
      %1671 = vmatpush1.bf16.msra.mxu0 0
      %1672 = vmatprep.subr.bf16.mxu0 0
      %1673 = vmatpush1.bf16.msra.mxu0 0
      %1674 = vmatprep.subr.bf16.mxu0 0
      %1675 = vmatpush1.bf16.msra.mxu0 0
      %1676 = vmatprep.subr.bf16.mxu0 0
      %1677 = vmatpush1.bf16.msra.mxu0 0
      %1678 = vmatprep.subr.bf16.mxu0 0
      %1679 = vmatpush1.bf16.msra.mxu0 0
      %1680 = vmatprep.subr.bf16.mxu0 0
      %1681 = vmatpush1.bf16.msra.mxu0 0
      %1682 = vmatprep.subr.bf16.mxu0 0
      %1683 = vmatpush1.bf16.msra.mxu0 0
      %1684 = vmatprep.subr.bf16.mxu0 0
      %1685 = vmatpush1.bf16.msra.mxu0 0
      %1686 = vmatprep.subr.bf16.mxu0 0
      %1687 = vmatpush1.bf16.msra.mxu0 0
      %1688 = vmatprep.mubr.bf16.mxu0 0
      %1689 = vmatmul.mubr.bf16.gmra.mrb[0].mxu0 %v1654
      %v1690 = vpop.f32.mrb[0].mxu0
      %v1691 = vadd.f32 0.0, %v1690
      %v1692 = vpop.f32.mrb[0].mxu0
      %v1693 = vpop.f32.mrb[0].mxu0
      %v1694 = vpop.f32.mrb[0].mxu0
      %1695 = vdwg.mxu0
      %v1696 = vadd.f32 %v1302, %v1390
      %v1697 = vadd.f32 %v1303, %v1433
      %v1698 = vadd.f32 %v1304, %v1476
      %v1699 = vadd.f32 %v1305, %v1519
      %v1700 = vadd.f32 %v1306, %v1562
      %v1701 = vadd.f32 %v1307, %v1605
      %v1702 = vadd.f32 %v1308, %v1648
      %v1703 = vadd.f32 %v1309, %v1691
      %vm1704 = vcmp.ge.f32.partialorder %v1696, 0.0
      %vm1705 = vcmp.ge.f32.partialorder %v1697, 0.0
      %vm1706 = vcmp.ge.f32.partialorder %v1698, 0.0
      %vm1707 = vcmp.ge.f32.partialorder %v1699, 0.0
      %vm1708 = vcmp.ge.f32.partialorder %v1700, 0.0
      %vm1709 = vcmp.ge.f32.partialorder %v1701, 0.0
      %vm1710 = vcmp.ge.f32.partialorder %v1702, 0.0
      %vm1711 = vcmp.ge.f32.partialorder %v1703, 0.0
      %v1712 = vmul.f32 %v1696, 0.2
      %v1713 = vmul.f32 %v1697, 0.2
      %v1714 = vmul.f32 %v1698, 0.2
      %v1715 = vmul.f32 %v1699, 0.2
      %v1716 = vmul.f32 %v1700, 0.2
      %v1717 = vmul.f32 %v1701, 0.2
      %v1718 = vmul.f32 %v1702, 0.2
      %v1719 = vmul.f32 %v1703, 0.2
      %v1720 = vsel %vm1704, %v1696, %v1712
      %v1721 = vsel %vm1705, %v1697, %v1713
      %v1722 = vsel %vm1706, %v1698, %v1714
      %v1723 = vsel %vm1707, %v1699, %v1715
      %v1724 = vsel %vm1708, %v1700, %v1716
      %v1725 = vsel %vm1709, %v1701, %v1717
      %v1726 = vsel %vm1710, %v1702, %v1718
      %v1727 = vsel %vm1711, %v1703, %v1719
      %v1728 = vpack.c.bf16 %v1720, %v1720
      %v1729 = vpack.c.bf16 %v1721, %v1721
      %v1730 = vpack.c.bf16 %v1722, %v1722
      %v1731 = vpack.c.bf16 %v1723, %v1723
      %v1732 = vpack.c.bf16 %v1724, %v1724
      %v1733 = vpack.c.bf16 %v1725, %v1725
      %v1734 = vpack.c.bf16 %v1726, %v1726
      %v1735 = vpack.c.bf16 %v1727, %v1727
      %vm1736 = vcmask 257024
      %1737 = vst.msk [vmem:[%s143] sm:$0xf] %vm1736, %v1728
      %1738 = vst.msk [vmem:[%s143 + $0x4] sm:$0xf] %vm1736, %v1729
      %1739 = vst.msk [vmem:[%s143 + $0x8] sm:$0xf] %vm1736, %v1730
      %1740 = vst.msk [vmem:[%s143 + $0xc] sm:$0xf] %vm1736, %v1731
      %1741 = vst.msk [vmem:[%s143 + $0x10] sm:$0xf] %vm1736, %v1732
      %1742 = vst.msk [vmem:[%s143 + $0x14] sm:$0xf] %vm1736, %v1733
      %1743 = vst.msk [vmem:[%s143 + $0x18] sm:$0xf] %vm1736, %v1734
      %1744 = vst.msk [vmem:[%s143 + $0x1c] sm:$0xf] %vm1736, %v1735
      %p1745 = scmp.lt.s32.totalorder %s13, 1
      %s1746 = scalar_select %p1745, %s13, 1
      %s1747 = smul.addr %s1746, 8
      %s1748 = smul.addr %s1747, 4
      %s1749 = scalar_lea.vmem %s2, %s1748
      // Predicated region
      $region29: #{d_forward.5} parent=27 // pred_check
        %p1750 = pneg %p78
      $region30: #{d_forward.5} parent=27 // pred_check_branch
        %1752 = sbr.rel (%p1750) target = $region32
      $region31: #{d_forward.5} parent=27 // pred_region
        _
      $region32: #{d_forward.5} parent=27 // pred_fallthru
        _
    $region28: #{d_forward.5} parent=5 // pred_fallthru
      _
    %p1753 = scmp.le.s32.totalorder 2, %s8
    // Predicated region
    $region33: #{d_forward.5} parent=5 // pred_check
      %p1754 = pneg %p1753
    $region34: #{d_forward.5} parent=5 // pred_check_branch
      %1756 = sbr.rel (%p1754) target = $region36
    $region35: #{d_forward.5} parent=5 // pred_region
      %s1757 = ssub.s32 %s8, 2
      // Predicated region
      $region37: #{d_forward.5} parent=35 // pred_check
        %p1758 = pneg %p84
      $region38: #{d_forward.5} parent=35 // pred_check_branch
        %1760 = sbr.rel (%p1758) target = $region40
      $region39: #{d_forward.5} parent=35 // pred_region
        %p1761 = scmp.lt.s32.totalorder %s14, 1
        %s1762 = scalar_select %p1761, %s14, 1
        %s1763 = smul.addr %s1762, 8
        %s1764 = smul.addr %s1763, 4
        %s1765 = scalar_lea.vmem %s2, %s1764
      $region40: #{d_forward.5} parent=35 // pred_fallthru
        _
    $region36: #{d_forward.5} parent=5 // pred_fallthru
      _
  $region6: #{d_forward.5} parent=0 // loop_footer
    %s12 = sadd.s32 1, %s8
  $region7: #{d_forward.5} parent=0 // loop_footer_branch
    %7 = sbr.rel target = $region3
  $region8: #{d_forward.5} parent=0 // loop_exit
    _

// kernel: d_forward.4
$region0: #{d_forward.4}
  #allocation0 [shape = 'u32[]', space=smem, size = 0x4, offset = 0x4, fixed_abs, tag = 'smem constant byte address 0x4 - core index']
  #allocation1 [shape = 'u32[144,128]{1,0:T(1,128)}', space=vmem, size = 0x12000, scoped, tag = 'internal scratch']
  %s0 = inlined_call_operand.vmem [shape: bf16[2,17,2,16,12], index: 0, kind: input, shape index: {}]
  %s1 = inlined_call_operand.vmem [shape: bf16[4,12,16], index: 1, kind: input, shape index: {}]
  %s2 = inlined_call_operand.vmem [shape: bf16[2,16,16,16], index: 2, kind: output, shape index: {}]
  %s3 = sld [smem:[#allocation0]]
  $region41: #{d_forward.4} parent=0
    _
  %s5 = ssub.s32 1, %s3
  %s6 = scalar_select 0, %s5, %s3
  loop: start=0, step=1, limit=4
  $region2: #{d_forward.4} parent=0 // loop_pre_header
    _
  $region3: #{d_forward.4} parent=0 // loop_header
    %s8 = sphi 0, %s12
    %p9 = scmp.ge.s32.totalorder %s8, 4
    %s18 = sphi 0, %s20
    %s21 = sphi 0, %s18
    %s22 = sphi 0, %s21
    %s38 = sphi 0, %s22
    %s42 = sphi 0, %s42
    %s44 = sphi 0, %s42
    %s45 = sphi 0, %s44
    %s59 = sphi 0, %s45
    %s65 = sphi 0, %s67
    %s68 = sphi 0, %s65
    %s69 = sphi 0, %s68
    %s85 = sphi 0, %s69
  $region4: #{d_forward.4} parent=0 // loop_header_branch
    %11 = sbr.rel (%p9) target = $region8
  $region5: #{d_forward.4} parent=0 // loop_body
    %s13 = ssub.s32 %s8, 1
    %s14 = ssub.s32 %s8, 2
    %s15 = sadd.s32 %s8, 1
    %s16 = ssub.s32 %s8, %s15
    %p17 = scmp.eq.s32.totalorder %s16, 0
    %s19 = sadd.s32 %s18, 1
    %s20 = scalar_select %p17, %s18, %s19
    %p23 = pneg %p17
    %p24 = scmp.eq.s32.totalorder %s8, 1
    %p25 = por %p23, %p24
    %p26 = scmp.ne.s32.totalorder %s18, %s21
    %p27 = scmp.eq.s32.totalorder %s8, 0
    %p28 = por %p26, %p27
    %p29 = scmp.ne.s32.totalorder %s18, %s21
    %p30 = scmp.eq.s32.totalorder %s13, 1
    %p31 = por %p29, %p30
    %p32 = scmp.ne.s32.totalorder %s21, %s22
    %p33 = scmp.eq.s32.totalorder %s13, 0
    %p34 = por %p32, %p33
    %p35 = scmp.ne.s32.totalorder %s21, %s22
    %p36 = scmp.eq.s32.totalorder %s14, 1
    %p37 = por %p35, %p36
    %p39 = scmp.ne.s32.totalorder %s22, %s38
    %p40 = scmp.eq.s32.totalorder %s14, 0
    %p41 = por %p39, %p40
    %s43 = sadd.s32 %s42, 1
    %p46 = scmp.eq.s32.totalorder %s8, 1
    %p47 = scmp.ne.s32.totalorder %s42, %s44
    %p48 = scmp.eq.s32.totalorder %s8, 0
    %p49 = por %p47, %p48
    %p50 = scmp.ne.s32.totalorder %s42, %s44
    %p51 = scmp.eq.s32.totalorder %s13, 1
    %p52 = por %p50, %p51
    %p53 = scmp.ne.s32.totalorder %s44, %s45
    %p54 = scmp.eq.s32.totalorder %s13, 0
    %p55 = por %p53, %p54
    %p56 = scmp.ne.s32.totalorder %s44, %s45
    %p57 = scmp.eq.s32.totalorder %s14, 1
    %p58 = por %p56, %p57
    %p60 = scmp.ne.s32.totalorder %s45, %s59
    %p61 = scmp.eq.s32.totalorder %s14, 0
    %p62 = por %p60, %p61
    %s63 = ssub.s32 %s8, %s15
    %p64 = scmp.eq.s32.totalorder %s63, 0
    %s66 = sadd.s32 %s65, 1
    %s67 = scalar_select %p64, %s65, %s66
    %p70 = pneg %p64
    %p71 = scmp.eq.s32.totalorder %s8, 1
    %p72 = por %p70, %p71
    %p73 = scmp.ne.s32.totalorder %s65, %s68
    %p74 = scmp.eq.s32.totalorder %s8, 0
    %p75 = por %p73, %p74
    %p76 = scmp.ne.s32.totalorder %s65, %s68
    %p77 = scmp.eq.s32.totalorder %s13, 1
    %p78 = por %p76, %p77
    %p79 = scmp.ne.s32.totalorder %s68, %s69
    %p80 = scmp.eq.s32.totalorder %s13, 0
    %p81 = por %p79, %p80
    %p82 = scmp.ne.s32.totalorder %s68, %s69
    %p83 = scmp.eq.s32.totalorder %s14, 1
    %p84 = por %p82, %p83
    %p86 = scmp.ne.s32.totalorder %s69, %s85
    %p87 = scmp.eq.s32.totalorder %s14, 0
    %p88 = por %p86, %p87
    %p89 = scmp.le.s32.totalorder 1, %s8
    %p90 = scmp.lt.s32.totalorder %s8, 3
    %p91 = pnand %p89, %p90
    %p92 = pneg %p91
    // Predicated region
    $region9: #{d_forward.4} parent=5 // pred_check
      _
    $region10: #{d_forward.4} parent=5 // pred_check_branch
      %94 = sbr.rel (%p91) target = $region12
    $region11: #{d_forward.4} parent=5 // pred_region
      %s95 = ssub.s32 %s8, 1
      // Predicated region
      $region13: #{d_forward.4} parent=11 // pred_check
        %p96 = pneg %p55
      $region14: #{d_forward.4} parent=11 // pred_check_branch
        %98 = sbr.rel (%p96) target = $region16
      $region15: #{d_forward.4} parent=11 // pred_region
        _
      $region16: #{d_forward.4} parent=11 // pred_fallthru
        _
    $region12: #{d_forward.4} parent=5 // pred_fallthru
      _
    %p99 = scmp.lt.s32.totalorder %s8, 2
    // Predicated region
    $region17: #{d_forward.4} parent=5 // pred_check
      %p100 = pneg %p99
    $region18: #{d_forward.4} parent=5 // pred_check_branch
      %102 = sbr.rel (%p100) target = $region20
    $region19: #{d_forward.4} parent=5 // pred_region
      // Predicated region
      $region21: #{d_forward.4} parent=19 // pred_check
        %p103 = pneg %p28
      $region22: #{d_forward.4} parent=19 // pred_check_branch
        %105 = sbr.rel (%p103) target = $region24
      $region23: #{d_forward.4} parent=19 // pred_region
        %p106 = scmp.lt.s32.totalorder %s8, 1
        %s107 = scalar_select %p106, %s8, 1
        %s108 = smul.addr %s107, 68
        %s109 = smul.addr %s108, 4
        %s110 = scalar_lea.vmem %s0, %s109
      $region24: #{d_forward.4} parent=19 // pred_fallthru
        _
    $region20: #{d_forward.4} parent=5 // pred_fallthru
      _
    %p111 = scmp.le.s32.totalorder 1, %s8
    %p112 = scmp.lt.s32.totalorder %s8, 3
    %p113 = pnand %p111, %p112
    %p114 = pneg %p113
    // Predicated region
    $region25: #{d_forward.4} parent=5 // pred_check
      _
    $region26: #{d_forward.4} parent=5 // pred_check_branch
      %116 = sbr.rel (%p113) target = $region28
    $region27: #{d_forward.4} parent=5 // pred_region
      %s117 = ssub.s32 %s8, 1
      %p118 = scmp.lt.s32.totalorder %s13, 1
      %s119 = scalar_select %p118, %s13, 1
      %s120 = smul.addr %s119, 68
      %s121 = smul.addr %s120, 4
      %s122 = scalar_lea.vmem %s0, %s121
      %p123 = pneg %p34
      %p124 = pneg %p31
      %p125 = pneg %p55
      %p126 = pneg %p52
      %p127 = pneg %p81
      %p128 = pneg %p78
      %p129 = scmp.lt.s32.totalorder %s13, 1
      %s130 = scalar_select %p129, %s13, 1
      %s131 = smul.addr %s130, 32
      %s132 = smul.addr %s131, 4
      %s133 = scalar_lea.vmem %s2, %s132
      %p134 = scmp.lt.s32.totalorder %s13, 1
      %s135 = scalar_select %p134, %s13, 1
      %s136 = smul.addr %s135, 68
      %s137 = smul.addr %s136, 4
      %s138 = scalar_lea.vmem %s0, %s137
      %p139 = scmp.lt.s32.totalorder %s13, 1
      %s140 = scalar_select %p139, %s13, 1
      %s141 = smul.addr %s140, 32
      %s142 = smul.addr %s141, 4
      %s143 = scalar_lea.vmem %s2, %s142
      %v145 = vld [vmem:[%s138] sm:$0xf]
      %v146 = vld [vmem:[%s138 + $0x4] sm:$0xf]
      %v147 = vld [vmem:[%s138 + $0x10] sm:$0xf]
      %v148 = vld [vmem:[%s138 + $0x14] sm:$0xf]
      %v149 = vld [vmem:[%s138 + $0x20] sm:$0xf]
      %v150 = vld [vmem:[%s138 + $0x24] sm:$0xf]
      %v151 = vld [vmem:[%s138 + $0x30] sm:$0xf]
      %v152 = vld [vmem:[%s138 + $0x34] sm:$0xf]
      %v153 = vld [vmem:[%s138 + $0x40] sm:$0xf]
      %v154 = vld [vmem:[%s138 + $0x44] sm:$0xf]
      %v155 = vld [vmem:[%s138 + $0x50] sm:$0xf]
      %v156 = vld [vmem:[%s138 + $0x54] sm:$0xf]
      %v157 = vld [vmem:[%s138 + $0x60] sm:$0xf]
      %v158 = vld [vmem:[%s138 + $0x64] sm:$0xf]
      %v159 = vld [vmem:[%s138 + $0x70] sm:$0xf]
      %v160 = vld [vmem:[%s138 + $0x74] sm:$0xf]
      %v161 = vld [vmem:[%s138 + $0x80] sm:$0xf]
      %v162 = vld [vmem:[%s138 + $0x84] sm:$0xf]
      %v163 = vld [vmem:[%s138 + $0x90] sm:$0xf]
      %v164 = vld [vmem:[%s138 + $0x94] sm:$0xf]
      %v165 = vld [vmem:[%s138 + $0xa0] sm:$0xf]
      %v166 = vld [vmem:[%s138 + $0xa4] sm:$0xf]
      %v167 = vld [vmem:[%s138 + $0xb0] sm:$0xf]
      %v168 = vld [vmem:[%s138 + $0xb4] sm:$0xf]
      %v169 = vld [vmem:[%s138 + $0xc0] sm:$0xf]
      %v170 = vld [vmem:[%s138 + $0xc4] sm:$0xf]
      %v171 = vld [vmem:[%s138 + $0xd0] sm:$0xf]
      %v172 = vld [vmem:[%s138 + $0xd4] sm:$0xf]
      %v173 = vld [vmem:[%s138 + $0xe0] sm:$0xf]
      %v174 = vld [vmem:[%s138 + $0xe4] sm:$0xf]
      %v175 = vld [vmem:[%s138 + $0xf0] sm:$0xf]
      %v176 = vld [vmem:[%s138 + $0xf4] sm:$0xf]
      %v177 = vld [vmem:[%s1] sm:$0xf]
      %v178 = vld [vmem:[%s1 + $0x4] sm:$0x3]
      %s179 = scalar_lea.vmem %s138, 8
      %v180 = vld [vmem:[%s179] sm:$0xf]
      %v181 = vld [vmem:[%s179 + $0x4] sm:$0xf]
      %v182 = vld [vmem:[%s179 + $0x10] sm:$0xf]
      %v183 = vld [vmem:[%s179 + $0x14] sm:$0xf]
      %v184 = vld [vmem:[%s179 + $0x20] sm:$0xf]
      %v185 = vld [vmem:[%s179 + $0x24] sm:$0xf]
      %v186 = vld [vmem:[%s179 + $0x30] sm:$0xf]
      %v187 = vld [vmem:[%s179 + $0x34] sm:$0xf]
      %v188 = vld [vmem:[%s179 + $0x40] sm:$0xf]
      %v189 = vld [vmem:[%s179 + $0x44] sm:$0xf]
      %v190 = vld [vmem:[%s179 + $0x50] sm:$0xf]
      %v191 = vld [vmem:[%s179 + $0x54] sm:$0xf]
      %v192 = vld [vmem:[%s179 + $0x60] sm:$0xf]
      %v193 = vld [vmem:[%s179 + $0x64] sm:$0xf]
      %v194 = vld [vmem:[%s179 + $0x70] sm:$0xf]
      %v195 = vld [vmem:[%s179 + $0x74] sm:$0xf]
      %v196 = vld [vmem:[%s179 + $0x80] sm:$0xf]
      %v197 = vld [vmem:[%s179 + $0x84] sm:$0xf]
      %v198 = vld [vmem:[%s179 + $0x90] sm:$0xf]
      %v199 = vld [vmem:[%s179 + $0x94] sm:$0xf]
      %v200 = vld [vmem:[%s179 + $0xa0] sm:$0xf]
      %v201 = vld [vmem:[%s179 + $0xa4] sm:$0xf]
      %v202 = vld [vmem:[%s179 + $0xb0] sm:$0xf]
      %v203 = vld [vmem:[%s179 + $0xb4] sm:$0xf]
      %v204 = vld [vmem:[%s179 + $0xc0] sm:$0xf]
      %v205 = vld [vmem:[%s179 + $0xc4] sm:$0xf]
      %v206 = vld [vmem:[%s179 + $0xd0] sm:$0xf]
      %v207 = vld [vmem:[%s179 + $0xd4] sm:$0xf]
      %v208 = vld [vmem:[%s179 + $0xe0] sm:$0xf]
      %v209 = vld [vmem:[%s179 + $0xe4] sm:$0xf]
      %v210 = vld [vmem:[%s179 + $0xf0] sm:$0xf]
      %v211 = vld [vmem:[%s179 + $0xf4] sm:$0xf]
      %s212 = scalar_lea.vmem %s1, 8
      %v213 = vld [vmem:[%s212] sm:$0xf]
      %v214 = vld [vmem:[%s212 + $0x4] sm:$0x3]
      %v217 = vunpack.c.l.b16 %v180
      %v218 = vunpack.c.l.b16 %v181
      %v219 = vpack.c.b16 %v218, %v217
      %v222 = vunpack.c.l.b16 %v213
      %v223 = vunpack.c.l.b16 %v214
      %v224 = vpack.c.b16 %v223, %v222
      %vm225 = vcmask 97280
      %v227 = vsel %vm225, %v219, 0
      %vm229 = vcmask 1045504
      %v231 = vsel %vm229, %v224, 0
      %233 = vmatprep.subr.bf16.mxu0 0
      %234 = vmatpush1.bf16.msra.mxu0 %v231
      %235 = vmatprep.subr.bf16.mxu0 0
      %236 = vmatpush1.bf16.msra.mxu0 0
      %237 = vmatprep.subr.bf16.mxu0 0
      %238 = vmatpush1.bf16.msra.mxu0 0
      %239 = vmatprep.subr.bf16.mxu0 0
      %240 = vmatpush1.bf16.msra.mxu0 0
      %241 = vmatprep.subr.bf16.mxu0 0
      %242 = vmatpush1.bf16.msra.mxu0 0
      %243 = vmatprep.subr.bf16.mxu0 0
      %244 = vmatpush1.bf16.msra.mxu0 0
      %245 = vmatprep.subr.bf16.mxu0 0
      %246 = vmatpush1.bf16.msra.mxu0 0
      %247 = vmatprep.subr.bf16.mxu0 0
      %248 = vmatpush1.bf16.msra.mxu0 0
      %249 = vmatprep.subr.bf16.mxu0 0
      %250 = vmatpush1.bf16.msra.mxu0 0
      %251 = vmatprep.subr.bf16.mxu0 0
      %252 = vmatpush1.bf16.msra.mxu0 0
      %253 = vmatprep.subr.bf16.mxu0 0
      %254 = vmatpush1.bf16.msra.mxu0 0
      %255 = vmatprep.subr.bf16.mxu0 0
      %256 = vmatpush1.bf16.msra.mxu0 0
      %257 = vmatprep.subr.bf16.mxu0 0
      %258 = vmatpush1.bf16.msra.mxu0 0
      %259 = vmatprep.subr.bf16.mxu0 0
      %260 = vmatpush1.bf16.msra.mxu0 0
      %261 = vmatprep.subr.bf16.mxu0 0
      %262 = vmatpush1.bf16.msra.mxu0 0
      %263 = vmatprep.subr.bf16.mxu0 0
      %264 = vmatpush1.bf16.msra.mxu0 0
      %265 = vmatprep.mubr.bf16.mxu0 0
      %266 = vmatmul.mubr.bf16.gmra.mrb[0].mxu0 %v227
      %v267 = vpop.f32.mrb[0].mxu0
      %v268 = vadd.f32 0.0, %v267
      %v269 = vpop.f32.mrb[0].mxu0
      %v270 = vpop.f32.mrb[0].mxu0
      %v271 = vadd.f32 0.0, %v270
      %v272 = vpop.f32.mrb[0].mxu0
      %273 = vdwg.mxu0
      %v276 = vunpack.c.l.b16 %v182
      %v277 = vunpack.c.l.b16 %v183
      %v278 = vpack.c.b16 %v277, %v276
      %v280 = vsel %vm225, %v278, 0
      %282 = vmatprep.subr.bf16.mxu0 0
      %283 = vmatpush1.bf16.msra.mxu0 %v231
      %284 = vmatprep.subr.bf16.mxu0 0
      %285 = vmatpush1.bf16.msra.mxu0 0
      %286 = vmatprep.subr.bf16.mxu0 0
      %287 = vmatpush1.bf16.msra.mxu0 0
      %288 = vmatprep.subr.bf16.mxu0 0
      %289 = vmatpush1.bf16.msra.mxu0 0
      %290 = vmatprep.subr.bf16.mxu0 0
      %291 = vmatpush1.bf16.msra.mxu0 0
      %292 = vmatprep.subr.bf16.mxu0 0
      %293 = vmatpush1.bf16.msra.mxu0 0
      %294 = vmatprep.subr.bf16.mxu0 0
      %295 = vmatpush1.bf16.msra.mxu0 0
      %296 = vmatprep.subr.bf16.mxu0 0
      %297 = vmatpush1.bf16.msra.mxu0 0
      %298 = vmatprep.subr.bf16.mxu0 0
      %299 = vmatpush1.bf16.msra.mxu0 0
      %300 = vmatprep.subr.bf16.mxu0 0
      %301 = vmatpush1.bf16.msra.mxu0 0
      %302 = vmatprep.subr.bf16.mxu0 0
      %303 = vmatpush1.bf16.msra.mxu0 0
      %304 = vmatprep.subr.bf16.mxu0 0
      %305 = vmatpush1.bf16.msra.mxu0 0
      %306 = vmatprep.subr.bf16.mxu0 0
      %307 = vmatpush1.bf16.msra.mxu0 0
      %308 = vmatprep.subr.bf16.mxu0 0
      %309 = vmatpush1.bf16.msra.mxu0 0
      %310 = vmatprep.subr.bf16.mxu0 0
      %311 = vmatpush1.bf16.msra.mxu0 0
      %312 = vmatprep.subr.bf16.mxu0 0
      %313 = vmatpush1.bf16.msra.mxu0 0
      %314 = vmatprep.mubr.bf16.mxu0 0
      %315 = vmatmul.mubr.bf16.gmra.mrb[0].mxu0 %v280
      %v316 = vpop.f32.mrb[0].mxu0
      %v317 = vadd.f32 0.0, %v316
      %v318 = vpop.f32.mrb[0].mxu0
      %v319 = vpop.f32.mrb[0].mxu0
      %v320 = vadd.f32 0.0, %v319
      %v321 = vpop.f32.mrb[0].mxu0
      %322 = vdwg.mxu0
      %v325 = vunpack.c.l.b16 %v184
      %v326 = vunpack.c.l.b16 %v185
      %v327 = vpack.c.b16 %v326, %v325
      %v329 = vsel %vm225, %v327, 0
      %331 = vmatprep.subr.bf16.mxu0 0
      %332 = vmatpush1.bf16.msra.mxu0 %v231
      %333 = vmatprep.subr.bf16.mxu0 0
      %334 = vmatpush1.bf16.msra.mxu0 0
      %335 = vmatprep.subr.bf16.mxu0 0
      %336 = vmatpush1.bf16.msra.mxu0 0
      %337 = vmatprep.subr.bf16.mxu0 0
      %338 = vmatpush1.bf16.msra.mxu0 0
      %339 = vmatprep.subr.bf16.mxu0 0
      %340 = vmatpush1.bf16.msra.mxu0 0
      %341 = vmatprep.subr.bf16.mxu0 0
      %342 = vmatpush1.bf16.msra.mxu0 0
      %343 = vmatprep.subr.bf16.mxu0 0
      %344 = vmatpush1.bf16.msra.mxu0 0
      %345 = vmatprep.subr.bf16.mxu0 0
      %346 = vmatpush1.bf16.msra.mxu0 0
      %347 = vmatprep.subr.bf16.mxu0 0
      %348 = vmatpush1.bf16.msra.mxu0 0
      %349 = vmatprep.subr.bf16.mxu0 0
      %350 = vmatpush1.bf16.msra.mxu0 0
      %351 = vmatprep.subr.bf16.mxu0 0
      %352 = vmatpush1.bf16.msra.mxu0 0
      %353 = vmatprep.subr.bf16.mxu0 0
      %354 = vmatpush1.bf16.msra.mxu0 0
      %355 = vmatprep.subr.bf16.mxu0 0
      %356 = vmatpush1.bf16.msra.mxu0 0
      %357 = vmatprep.subr.bf16.mxu0 0
      %358 = vmatpush1.bf16.msra.mxu0 0
      %359 = vmatprep.subr.bf16.mxu0 0
      %360 = vmatpush1.bf16.msra.mxu0 0
      %361 = vmatprep.subr.bf16.mxu0 0
      %362 = vmatpush1.bf16.msra.mxu0 0
      %363 = vmatprep.mubr.bf16.mxu0 0
      %364 = vmatmul.mubr.bf16.gmra.mrb[0].mxu0 %v329
      %v365 = vpop.f32.mrb[0].mxu0
      %v366 = vadd.f32 0.0, %v365
      %v367 = vpop.f32.mrb[0].mxu0
      %v368 = vpop.f32.mrb[0].mxu0
      %v369 = vadd.f32 0.0, %v368
      %v370 = vpop.f32.mrb[0].mxu0
      %371 = vdwg.mxu0
      %v374 = vunpack.c.l.b16 %v186
      %v375 = vunpack.c.l.b16 %v187
      %v376 = vpack.c.b16 %v375, %v374
      %v378 = vsel %vm225, %v376, 0
      %380 = vmatprep.subr.bf16.mxu0 0
      %381 = vmatpush1.bf16.msra.mxu0 %v231
      %382 = vmatprep.subr.bf16.mxu0 0
      %383 = vmatpush1.bf16.msra.mxu0 0
      %384 = vmatprep.subr.bf16.mxu0 0
      %385 = vmatpush1.bf16.msra.mxu0 0
      %386 = vmatprep.subr.bf16.mxu0 0
      %387 = vmatpush1.bf16.msra.mxu0 0
      %388 = vmatprep.subr.bf16.mxu0 0
      %389 = vmatpush1.bf16.msra.mxu0 0
      %390 = vmatprep.subr.bf16.mxu0 0
      %391 = vmatpush1.bf16.msra.mxu0 0
      %392 = vmatprep.subr.bf16.mxu0 0
      %393 = vmatpush1.bf16.msra.mxu0 0
      %394 = vmatprep.subr.bf16.mxu0 0
      %395 = vmatpush1.bf16.msra.mxu0 0
      %396 = vmatprep.subr.bf16.mxu0 0
      %397 = vmatpush1.bf16.msra.mxu0 0
      %398 = vmatprep.subr.bf16.mxu0 0
      %399 = vmatpush1.bf16.msra.mxu0 0
      %400 = vmatprep.subr.bf16.mxu0 0
      %401 = vmatpush1.bf16.msra.mxu0 0
      %402 = vmatprep.subr.bf16.mxu0 0
      %403 = vmatpush1.bf16.msra.mxu0 0
      %404 = vmatprep.subr.bf16.mxu0 0
      %405 = vmatpush1.bf16.msra.mxu0 0
      %406 = vmatprep.subr.bf16.mxu0 0
      %407 = vmatpush1.bf16.msra.mxu0 0
      %408 = vmatprep.subr.bf16.mxu0 0
      %409 = vmatpush1.bf16.msra.mxu0 0
      %410 = vmatprep.subr.bf16.mxu0 0
      %411 = vmatpush1.bf16.msra.mxu0 0
      %412 = vmatprep.mubr.bf16.mxu0 0
      %413 = vmatmul.mubr.bf16.gmra.mrb[0].mxu0 %v378
      %v414 = vpop.f32.mrb[0].mxu0
      %v415 = vadd.f32 0.0, %v414
      %v416 = vpop.f32.mrb[0].mxu0
      %v417 = vpop.f32.mrb[0].mxu0
      %v418 = vadd.f32 0.0, %v417
      %v419 = vpop.f32.mrb[0].mxu0
      %420 = vdwg.mxu0
      %v423 = vunpack.c.l.b16 %v188
      %v424 = vunpack.c.l.b16 %v189
      %v425 = vpack.c.b16 %v424, %v423
      %v427 = vsel %vm225, %v425, 0
      %429 = vmatprep.subr.bf16.mxu0 0
      %430 = vmatpush1.bf16.msra.mxu0 %v231
      %431 = vmatprep.subr.bf16.mxu0 0
      %432 = vmatpush1.bf16.msra.mxu0 0
      %433 = vmatprep.subr.bf16.mxu0 0
      %434 = vmatpush1.bf16.msra.mxu0 0
      %435 = vmatprep.subr.bf16.mxu0 0
      %436 = vmatpush1.bf16.msra.mxu0 0
      %437 = vmatprep.subr.bf16.mxu0 0
      %438 = vmatpush1.bf16.msra.mxu0 0
      %439 = vmatprep.subr.bf16.mxu0 0
      %440 = vmatpush1.bf16.msra.mxu0 0
      %441 = vmatprep.subr.bf16.mxu0 0
      %442 = vmatpush1.bf16.msra.mxu0 0
      %443 = vmatprep.subr.bf16.mxu0 0
      %444 = vmatpush1.bf16.msra.mxu0 0
      %445 = vmatprep.subr.bf16.mxu0 0
      %446 = vmatpush1.bf16.msra.mxu0 0
      %447 = vmatprep.subr.bf16.mxu0 0
      %448 = vmatpush1.bf16.msra.mxu0 0
      %449 = vmatprep.subr.bf16.mxu0 0
      %450 = vmatpush1.bf16.msra.mxu0 0
      %451 = vmatprep.subr.bf16.mxu0 0
      %452 = vmatpush1.bf16.msra.mxu0 0
      %453 = vmatprep.subr.bf16.mxu0 0
      %454 = vmatpush1.bf16.msra.mxu0 0
      %455 = vmatprep.subr.bf16.mxu0 0
      %456 = vmatpush1.bf16.msra.mxu0 0
      %457 = vmatprep.subr.bf16.mxu0 0
      %458 = vmatpush1.bf16.msra.mxu0 0
      %459 = vmatprep.subr.bf16.mxu0 0
      %460 = vmatpush1.bf16.msra.mxu0 0
      %461 = vmatprep.mubr.bf16.mxu0 0
      %462 = vmatmul.mubr.bf16.gmra.mrb[0].mxu0 %v427
      %v463 = vpop.f32.mrb[0].mxu0
      %v464 = vadd.f32 0.0, %v463
      %v465 = vpop.f32.mrb[0].mxu0
      %v466 = vpop.f32.mrb[0].mxu0
      %v467 = vadd.f32 0.0, %v466
      %v468 = vpop.f32.mrb[0].mxu0
      %469 = vdwg.mxu0
      %v472 = vunpack.c.l.b16 %v190
      %v473 = vunpack.c.l.b16 %v191
      %v474 = vpack.c.b16 %v473, %v472
      %v476 = vsel %vm225, %v474, 0
      %478 = vmatprep.subr.bf16.mxu0 0
      %479 = vmatpush1.bf16.msra.mxu0 %v231
      %480 = vmatprep.subr.bf16.mxu0 0
      %481 = vmatpush1.bf16.msra.mxu0 0
      %482 = vmatprep.subr.bf16.mxu0 0
      %483 = vmatpush1.bf16.msra.mxu0 0
      %484 = vmatprep.subr.bf16.mxu0 0
      %485 = vmatpush1.bf16.msra.mxu0 0
      %486 = vmatprep.subr.bf16.mxu0 0
      %487 = vmatpush1.bf16.msra.mxu0 0
      %488 = vmatprep.subr.bf16.mxu0 0
      %489 = vmatpush1.bf16.msra.mxu0 0
      %490 = vmatprep.subr.bf16.mxu0 0
      %491 = vmatpush1.bf16.msra.mxu0 0
      %492 = vmatprep.subr.bf16.mxu0 0
      %493 = vmatpush1.bf16.msra.mxu0 0
      %494 = vmatprep.subr.bf16.mxu0 0
      %495 = vmatpush1.bf16.msra.mxu0 0
      %496 = vmatprep.subr.bf16.mxu0 0
      %497 = vmatpush1.bf16.msra.mxu0 0
      %498 = vmatprep.subr.bf16.mxu0 0
      %499 = vmatpush1.bf16.msra.mxu0 0
      %500 = vmatprep.subr.bf16.mxu0 0
      %501 = vmatpush1.bf16.msra.mxu0 0
      %502 = vmatprep.subr.bf16.mxu0 0
      %503 = vmatpush1.bf16.msra.mxu0 0
      %504 = vmatprep.subr.bf16.mxu0 0
      %505 = vmatpush1.bf16.msra.mxu0 0
      %506 = vmatprep.subr.bf16.mxu0 0
      %507 = vmatpush1.bf16.msra.mxu0 0
      %508 = vmatprep.subr.bf16.mxu0 0
      %509 = vmatpush1.bf16.msra.mxu0 0
      %510 = vmatprep.mubr.bf16.mxu0 0
      %511 = vmatmul.mubr.bf16.gmra.mrb[0].mxu0 %v476
      %v512 = vpop.f32.mrb[0].mxu0
      %v513 = vadd.f32 0.0, %v512
      %v514 = vpop.f32.mrb[0].mxu0
      %v515 = vpop.f32.mrb[0].mxu0
      %v516 = vadd.f32 0.0, %v515
      %v517 = vpop.f32.mrb[0].mxu0
      %518 = vdwg.mxu0
      %v521 = vunpack.c.l.b16 %v192
      %v522 = vunpack.c.l.b16 %v193
      %v523 = vpack.c.b16 %v522, %v521
      %v525 = vsel %vm225, %v523, 0
      %527 = vmatprep.subr.bf16.mxu0 0
      %528 = vmatpush1.bf16.msra.mxu0 %v231
      %529 = vmatprep.subr.bf16.mxu0 0
      %530 = vmatpush1.bf16.msra.mxu0 0
      %531 = vmatprep.subr.bf16.mxu0 0
      %532 = vmatpush1.bf16.msra.mxu0 0
      %533 = vmatprep.subr.bf16.mxu0 0
      %534 = vmatpush1.bf16.msra.mxu0 0
      %535 = vmatprep.subr.bf16.mxu0 0
      %536 = vmatpush1.bf16.msra.mxu0 0
      %537 = vmatprep.subr.bf16.mxu0 0
      %538 = vmatpush1.bf16.msra.mxu0 0
      %539 = vmatprep.subr.bf16.mxu0 0
      %540 = vmatpush1.bf16.msra.mxu0 0
      %541 = vmatprep.subr.bf16.mxu0 0
      %542 = vmatpush1.bf16.msra.mxu0 0
      %543 = vmatprep.subr.bf16.mxu0 0
      %544 = vmatpush1.bf16.msra.mxu0 0
      %545 = vmatprep.subr.bf16.mxu0 0
      %546 = vmatpush1.bf16.msra.mxu0 0
      %547 = vmatprep.subr.bf16.mxu0 0
      %548 = vmatpush1.bf16.msra.mxu0 0
      %549 = vmatprep.subr.bf16.mxu0 0
      %550 = vmatpush1.bf16.msra.mxu0 0
      %551 = vmatprep.subr.bf16.mxu0 0
      %552 = vmatpush1.bf16.msra.mxu0 0
      %553 = vmatprep.subr.bf16.mxu0 0
      %554 = vmatpush1.bf16.msra.mxu0 0
      %555 = vmatprep.subr.bf16.mxu0 0
      %556 = vmatpush1.bf16.msra.mxu0 0
      %557 = vmatprep.subr.bf16.mxu0 0
      %558 = vmatpush1.bf16.msra.mxu0 0
      %559 = vmatprep.mubr.bf16.mxu0 0
      %560 = vmatmul.mubr.bf16.gmra.mrb[0].mxu0 %v525
      %v561 = vpop.f32.mrb[0].mxu0
      %v562 = vadd.f32 0.0, %v561
      %v563 = vpop.f32.mrb[0].mxu0
      %v564 = vpop.f32.mrb[0].mxu0
      %v565 = vadd.f32 0.0, %v564
      %v566 = vpop.f32.mrb[0].mxu0
      %567 = vdwg.mxu0
      %v570 = vunpack.c.l.b16 %v194
      %v571 = vunpack.c.l.b16 %v195
      %v572 = vpack.c.b16 %v571, %v570
      %v574 = vsel %vm225, %v572, 0
      %576 = vmatprep.subr.bf16.mxu0 0
      %577 = vmatpush1.bf16.msra.mxu0 %v231
      %578 = vmatprep.subr.bf16.mxu0 0
      %579 = vmatpush1.bf16.msra.mxu0 0
      %580 = vmatprep.subr.bf16.mxu0 0
      %581 = vmatpush1.bf16.msra.mxu0 0
      %582 = vmatprep.subr.bf16.mxu0 0
      %583 = vmatpush1.bf16.msra.mxu0 0
      %584 = vmatprep.subr.bf16.mxu0 0
      %585 = vmatpush1.bf16.msra.mxu0 0
      %586 = vmatprep.subr.bf16.mxu0 0
      %587 = vmatpush1.bf16.msra.mxu0 0
      %588 = vmatprep.subr.bf16.mxu0 0
      %589 = vmatpush1.bf16.msra.mxu0 0
      %590 = vmatprep.subr.bf16.mxu0 0
      %591 = vmatpush1.bf16.msra.mxu0 0
      %592 = vmatprep.subr.bf16.mxu0 0
      %593 = vmatpush1.bf16.msra.mxu0 0
      %594 = vmatprep.subr.bf16.mxu0 0
      %595 = vmatpush1.bf16.msra.mxu0 0
      %596 = vmatprep.subr.bf16.mxu0 0
      %597 = vmatpush1.bf16.msra.mxu0 0
      %598 = vmatprep.subr.bf16.mxu0 0
      %599 = vmatpush1.bf16.msra.mxu0 0
      %600 = vmatprep.subr.bf16.mxu0 0
      %601 = vmatpush1.bf16.msra.mxu0 0
      %602 = vmatprep.subr.bf16.mxu0 0
      %603 = vmatpush1.bf16.msra.mxu0 0
      %604 = vmatprep.subr.bf16.mxu0 0
      %605 = vmatpush1.bf16.msra.mxu0 0
      %606 = vmatprep.subr.bf16.mxu0 0
      %607 = vmatpush1.bf16.msra.mxu0 0
      %608 = vmatprep.mubr.bf16.mxu0 0
      %609 = vmatmul.mubr.bf16.gmra.mrb[0].mxu0 %v574
      %v610 = vpop.f32.mrb[0].mxu0
      %v611 = vadd.f32 0.0, %v610
      %v612 = vpop.f32.mrb[0].mxu0
      %v613 = vpop.f32.mrb[0].mxu0
      %v614 = vadd.f32 0.0, %v613
      %v615 = vpop.f32.mrb[0].mxu0
      %616 = vdwg.mxu0
      %v619 = vunpack.c.l.b16 %v196
      %v620 = vunpack.c.l.b16 %v197
      %v621 = vpack.c.b16 %v620, %v619
      %v623 = vsel %vm225, %v621, 0
      %625 = vmatprep.subr.bf16.mxu0 0
      %626 = vmatpush1.bf16.msra.mxu0 %v231
      %627 = vmatprep.subr.bf16.mxu0 0
      %628 = vmatpush1.bf16.msra.mxu0 0
      %629 = vmatprep.subr.bf16.mxu0 0
      %630 = vmatpush1.bf16.msra.mxu0 0
      %631 = vmatprep.subr.bf16.mxu0 0
      %632 = vmatpush1.bf16.msra.mxu0 0
      %633 = vmatprep.subr.bf16.mxu0 0
      %634 = vmatpush1.bf16.msra.mxu0 0
      %635 = vmatprep.subr.bf16.mxu0 0
      %636 = vmatpush1.bf16.msra.mxu0 0
      %637 = vmatprep.subr.bf16.mxu0 0
      %638 = vmatpush1.bf16.msra.mxu0 0
      %639 = vmatprep.subr.bf16.mxu0 0
      %640 = vmatpush1.bf16.msra.mxu0 0
      %641 = vmatprep.subr.bf16.mxu0 0
      %642 = vmatpush1.bf16.msra.mxu0 0
      %643 = vmatprep.subr.bf16.mxu0 0
      %644 = vmatpush1.bf16.msra.mxu0 0
      %645 = vmatprep.subr.bf16.mxu0 0
      %646 = vmatpush1.bf16.msra.mxu0 0
      %647 = vmatprep.subr.bf16.mxu0 0
      %648 = vmatpush1.bf16.msra.mxu0 0
      %649 = vmatprep.subr.bf16.mxu0 0
      %650 = vmatpush1.bf16.msra.mxu0 0
      %651 = vmatprep.subr.bf16.mxu0 0
      %652 = vmatpush1.bf16.msra.mxu0 0
      %653 = vmatprep.subr.bf16.mxu0 0
      %654 = vmatpush1.bf16.msra.mxu0 0
      %655 = vmatprep.subr.bf16.mxu0 0
      %656 = vmatpush1.bf16.msra.mxu0 0
      %657 = vmatprep.mubr.bf16.mxu0 0
      %658 = vmatmul.mubr.bf16.gmra.mrb[0].mxu0 %v623
      %v659 = vpop.f32.mrb[0].mxu0
      %v660 = vadd.f32 0.0, %v659
      %v661 = vpop.f32.mrb[0].mxu0
      %v662 = vpop.f32.mrb[0].mxu0
      %v663 = vadd.f32 0.0, %v662
      %v664 = vpop.f32.mrb[0].mxu0
      %665 = vdwg.mxu0
      %v668 = vunpack.c.l.b16 %v198
      %v669 = vunpack.c.l.b16 %v199
      %v670 = vpack.c.b16 %v669, %v668
      %v672 = vsel %vm225, %v670, 0
      %674 = vmatprep.subr.bf16.mxu0 0
      %675 = vmatpush1.bf16.msra.mxu0 %v231
      %676 = vmatprep.subr.bf16.mxu0 0
      %677 = vmatpush1.bf16.msra.mxu0 0
      %678 = vmatprep.subr.bf16.mxu0 0
      %679 = vmatpush1.bf16.msra.mxu0 0
      %680 = vmatprep.subr.bf16.mxu0 0
      %681 = vmatpush1.bf16.msra.mxu0 0
      %682 = vmatprep.subr.bf16.mxu0 0
      %683 = vmatpush1.bf16.msra.mxu0 0
      %684 = vmatprep.subr.bf16.mxu0 0
      %685 = vmatpush1.bf16.msra.mxu0 0
      %686 = vmatprep.subr.bf16.mxu0 0
      %687 = vmatpush1.bf16.msra.mxu0 0
      %688 = vmatprep.subr.bf16.mxu0 0
      %689 = vmatpush1.bf16.msra.mxu0 0
      %690 = vmatprep.subr.bf16.mxu0 0
      %691 = vmatpush1.bf16.msra.mxu0 0
      %692 = vmatprep.subr.bf16.mxu0 0
      %693 = vmatpush1.bf16.msra.mxu0 0
      %694 = vmatprep.subr.bf16.mxu0 0
      %695 = vmatpush1.bf16.msra.mxu0 0
      %696 = vmatprep.subr.bf16.mxu0 0
      %697 = vmatpush1.bf16.msra.mxu0 0
      %698 = vmatprep.subr.bf16.mxu0 0
      %699 = vmatpush1.bf16.msra.mxu0 0
      %700 = vmatprep.subr.bf16.mxu0 0
      %701 = vmatpush1.bf16.msra.mxu0 0
      %702 = vmatprep.subr.bf16.mxu0 0
      %703 = vmatpush1.bf16.msra.mxu0 0
      %704 = vmatprep.subr.bf16.mxu0 0
      %705 = vmatpush1.bf16.msra.mxu0 0
      %706 = vmatprep.mubr.bf16.mxu0 0
      %707 = vmatmul.mubr.bf16.gmra.mrb[0].mxu0 %v672
      %v708 = vpop.f32.mrb[0].mxu0
      %v709 = vadd.f32 0.0, %v708
      %v710 = vpop.f32.mrb[0].mxu0
      %v711 = vpop.f32.mrb[0].mxu0
      %v712 = vadd.f32 0.0, %v711
      %v713 = vpop.f32.mrb[0].mxu0
      %714 = vdwg.mxu0
      %v717 = vunpack.c.l.b16 %v200
      %v718 = vunpack.c.l.b16 %v201
      %v719 = vpack.c.b16 %v718, %v717
      %v721 = vsel %vm225, %v719, 0
      %723 = vmatprep.subr.bf16.mxu0 0
      %724 = vmatpush1.bf16.msra.mxu0 %v231
      %725 = vmatprep.subr.bf16.mxu0 0
      %726 = vmatpush1.bf16.msra.mxu0 0
      %727 = vmatprep.subr.bf16.mxu0 0
      %728 = vmatpush1.bf16.msra.mxu0 0
      %729 = vmatprep.subr.bf16.mxu0 0
      %730 = vmatpush1.bf16.msra.mxu0 0
      %731 = vmatprep.subr.bf16.mxu0 0
      %732 = vmatpush1.bf16.msra.mxu0 0
      %733 = vmatprep.subr.bf16.mxu0 0
      %734 = vmatpush1.bf16.msra.mxu0 0
      %735 = vmatprep.subr.bf16.mxu0 0
      %736 = vmatpush1.bf16.msra.mxu0 0
      %737 = vmatprep.subr.bf16.mxu0 0
      %738 = vmatpush1.bf16.msra.mxu0 0
      %739 = vmatprep.subr.bf16.mxu0 0
      %740 = vmatpush1.bf16.msra.mxu0 0
      %741 = vmatprep.subr.bf16.mxu0 0
      %742 = vmatpush1.bf16.msra.mxu0 0
      %743 = vmatprep.subr.bf16.mxu0 0
      %744 = vmatpush1.bf16.msra.mxu0 0
      %745 = vmatprep.subr.bf16.mxu0 0
      %746 = vmatpush1.bf16.msra.mxu0 0
      %747 = vmatprep.subr.bf16.mxu0 0
      %748 = vmatpush1.bf16.msra.mxu0 0
      %749 = vmatprep.subr.bf16.mxu0 0
      %750 = vmatpush1.bf16.msra.mxu0 0
      %751 = vmatprep.subr.bf16.mxu0 0
      %752 = vmatpush1.bf16.msra.mxu0 0
      %753 = vmatprep.subr.bf16.mxu0 0
      %754 = vmatpush1.bf16.msra.mxu0 0
      %755 = vmatprep.mubr.bf16.mxu0 0
      %756 = vmatmul.mubr.bf16.gmra.mrb[0].mxu0 %v721
      %v757 = vpop.f32.mrb[0].mxu0
      %v758 = vadd.f32 0.0, %v757
      %v759 = vpop.f32.mrb[0].mxu0
      %v760 = vpop.f32.mrb[0].mxu0
      %v761 = vadd.f32 0.0, %v760
      %v762 = vpop.f32.mrb[0].mxu0
      %763 = vdwg.mxu0
      %v766 = vunpack.c.l.b16 %v202
      %v767 = vunpack.c.l.b16 %v203
      %v768 = vpack.c.b16 %v767, %v766
      %v770 = vsel %vm225, %v768, 0
      %772 = vmatprep.subr.bf16.mxu0 0
      %773 = vmatpush1.bf16.msra.mxu0 %v231
      %774 = vmatprep.subr.bf16.mxu0 0
      %775 = vmatpush1.bf16.msra.mxu0 0
      %776 = vmatprep.subr.bf16.mxu0 0
      %777 = vmatpush1.bf16.msra.mxu0 0
      %778 = vmatprep.subr.bf16.mxu0 0
      %779 = vmatpush1.bf16.msra.mxu0 0
      %780 = vmatprep.subr.bf16.mxu0 0
      %781 = vmatpush1.bf16.msra.mxu0 0
      %782 = vmatprep.subr.bf16.mxu0 0
      %783 = vmatpush1.bf16.msra.mxu0 0
      %784 = vmatprep.subr.bf16.mxu0 0
      %785 = vmatpush1.bf16.msra.mxu0 0
      %786 = vmatprep.subr.bf16.mxu0 0
      %787 = vmatpush1.bf16.msra.mxu0 0
      %788 = vmatprep.subr.bf16.mxu0 0
      %789 = vmatpush1.bf16.msra.mxu0 0
      %790 = vmatprep.subr.bf16.mxu0 0
      %791 = vmatpush1.bf16.msra.mxu0 0
      %792 = vmatprep.subr.bf16.mxu0 0
      %793 = vmatpush1.bf16.msra.mxu0 0
      %794 = vmatprep.subr.bf16.mxu0 0
      %795 = vmatpush1.bf16.msra.mxu0 0
      %796 = vmatprep.subr.bf16.mxu0 0
      %797 = vmatpush1.bf16.msra.mxu0 0
      %798 = vmatprep.subr.bf16.mxu0 0
      %799 = vmatpush1.bf16.msra.mxu0 0
      %800 = vmatprep.subr.bf16.mxu0 0
      %801 = vmatpush1.bf16.msra.mxu0 0
      %802 = vmatprep.subr.bf16.mxu0 0
      %803 = vmatpush1.bf16.msra.mxu0 0
      %804 = vmatprep.mubr.bf16.mxu0 0
      %805 = vmatmul.mubr.bf16.gmra.mrb[0].mxu0 %v770
      %v806 = vpop.f32.mrb[0].mxu0
      %v807 = vadd.f32 0.0, %v806
      %v808 = vpop.f32.mrb[0].mxu0
      %v809 = vpop.f32.mrb[0].mxu0
      %v810 = vadd.f32 0.0, %v809
      %v811 = vpop.f32.mrb[0].mxu0
      %812 = vdwg.mxu0
      %v815 = vunpack.c.l.b16 %v204
      %v816 = vunpack.c.l.b16 %v205
      %v817 = vpack.c.b16 %v816, %v815
      %v819 = vsel %vm225, %v817, 0
      %821 = vmatprep.subr.bf16.mxu0 0
      %822 = vmatpush1.bf16.msra.mxu0 %v231
      %823 = vmatprep.subr.bf16.mxu0 0
      %824 = vmatpush1.bf16.msra.mxu0 0
      %825 = vmatprep.subr.bf16.mxu0 0
      %826 = vmatpush1.bf16.msra.mxu0 0
      %827 = vmatprep.subr.bf16.mxu0 0
      %828 = vmatpush1.bf16.msra.mxu0 0
      %829 = vmatprep.subr.bf16.mxu0 0
      %830 = vmatpush1.bf16.msra.mxu0 0
      %831 = vmatprep.subr.bf16.mxu0 0
      %832 = vmatpush1.bf16.msra.mxu0 0
      %833 = vmatprep.subr.bf16.mxu0 0
      %834 = vmatpush1.bf16.msra.mxu0 0
      %835 = vmatprep.subr.bf16.mxu0 0
      %836 = vmatpush1.bf16.msra.mxu0 0
      %837 = vmatprep.subr.bf16.mxu0 0
      %838 = vmatpush1.bf16.msra.mxu0 0
      %839 = vmatprep.subr.bf16.mxu0 0
      %840 = vmatpush1.bf16.msra.mxu0 0
      %841 = vmatprep.subr.bf16.mxu0 0
      %842 = vmatpush1.bf16.msra.mxu0 0
      %843 = vmatprep.subr.bf16.mxu0 0
      %844 = vmatpush1.bf16.msra.mxu0 0
      %845 = vmatprep.subr.bf16.mxu0 0
      %846 = vmatpush1.bf16.msra.mxu0 0
      %847 = vmatprep.subr.bf16.mxu0 0
      %848 = vmatpush1.bf16.msra.mxu0 0
      %849 = vmatprep.subr.bf16.mxu0 0
      %850 = vmatpush1.bf16.msra.mxu0 0
      %851 = vmatprep.subr.bf16.mxu0 0
      %852 = vmatpush1.bf16.msra.mxu0 0
      %853 = vmatprep.mubr.bf16.mxu0 0
      %854 = vmatmul.mubr.bf16.gmra.mrb[0].mxu0 %v819
      %v855 = vpop.f32.mrb[0].mxu0
      %v856 = vadd.f32 0.0, %v855
      %v857 = vpop.f32.mrb[0].mxu0
      %v858 = vpop.f32.mrb[0].mxu0
      %v859 = vadd.f32 0.0, %v858
      %v860 = vpop.f32.mrb[0].mxu0
      %861 = vdwg.mxu0
      %v864 = vunpack.c.l.b16 %v206
      %v865 = vunpack.c.l.b16 %v207
      %v866 = vpack.c.b16 %v865, %v864
      %v868 = vsel %vm225, %v866, 0
      %870 = vmatprep.subr.bf16.mxu0 0
      %871 = vmatpush1.bf16.msra.mxu0 %v231
      %872 = vmatprep.subr.bf16.mxu0 0
      %873 = vmatpush1.bf16.msra.mxu0 0
      %874 = vmatprep.subr.bf16.mxu0 0
      %875 = vmatpush1.bf16.msra.mxu0 0
      %876 = vmatprep.subr.bf16.mxu0 0
      %877 = vmatpush1.bf16.msra.mxu0 0
      %878 = vmatprep.subr.bf16.mxu0 0
      %879 = vmatpush1.bf16.msra.mxu0 0
      %880 = vmatprep.subr.bf16.mxu0 0
      %881 = vmatpush1.bf16.msra.mxu0 0
      %882 = vmatprep.subr.bf16.mxu0 0
      %883 = vmatpush1.bf16.msra.mxu0 0
      %884 = vmatprep.subr.bf16.mxu0 0
      %885 = vmatpush1.bf16.msra.mxu0 0
      %886 = vmatprep.subr.bf16.mxu0 0
      %887 = vmatpush1.bf16.msra.mxu0 0
      %888 = vmatprep.subr.bf16.mxu0 0
      %889 = vmatpush1.bf16.msra.mxu0 0
      %890 = vmatprep.subr.bf16.mxu0 0
      %891 = vmatpush1.bf16.msra.mxu0 0
      %892 = vmatprep.subr.bf16.mxu0 0
      %893 = vmatpush1.bf16.msra.mxu0 0
      %894 = vmatprep.subr.bf16.mxu0 0
      %895 = vmatpush1.bf16.msra.mxu0 0
      %896 = vmatprep.subr.bf16.mxu0 0
      %897 = vmatpush1.bf16.msra.mxu0 0
      %898 = vmatprep.subr.bf16.mxu0 0
      %899 = vmatpush1.bf16.msra.mxu0 0
      %900 = vmatprep.subr.bf16.mxu0 0
      %901 = vmatpush1.bf16.msra.mxu0 0
      %902 = vmatprep.mubr.bf16.mxu0 0
      %903 = vmatmul.mubr.bf16.gmra.mrb[0].mxu0 %v868
      %v904 = vpop.f32.mrb[0].mxu0
      %v905 = vadd.f32 0.0, %v904
      %v906 = vpop.f32.mrb[0].mxu0
      %v907 = vpop.f32.mrb[0].mxu0
      %v908 = vadd.f32 0.0, %v907
      %v909 = vpop.f32.mrb[0].mxu0
      %910 = vdwg.mxu0
      %v913 = vunpack.c.l.b16 %v208
      %v914 = vunpack.c.l.b16 %v209
      %v915 = vpack.c.b16 %v914, %v913
      %v917 = vsel %vm225, %v915, 0
      %919 = vmatprep.subr.bf16.mxu0 0
      %920 = vmatpush1.bf16.msra.mxu0 %v231
      %921 = vmatprep.subr.bf16.mxu0 0
      %922 = vmatpush1.bf16.msra.mxu0 0
      %923 = vmatprep.subr.bf16.mxu0 0
      %924 = vmatpush1.bf16.msra.mxu0 0
      %925 = vmatprep.subr.bf16.mxu0 0
      %926 = vmatpush1.bf16.msra.mxu0 0
      %927 = vmatprep.subr.bf16.mxu0 0
      %928 = vmatpush1.bf16.msra.mxu0 0
      %929 = vmatprep.subr.bf16.mxu0 0
      %930 = vmatpush1.bf16.msra.mxu0 0
      %931 = vmatprep.subr.bf16.mxu0 0
      %932 = vmatpush1.bf16.msra.mxu0 0
      %933 = vmatprep.subr.bf16.mxu0 0
      %934 = vmatpush1.bf16.msra.mxu0 0
      %935 = vmatprep.subr.bf16.mxu0 0
      %936 = vmatpush1.bf16.msra.mxu0 0
      %937 = vmatprep.subr.bf16.mxu0 0
      %938 = vmatpush1.bf16.msra.mxu0 0
      %939 = vmatprep.subr.bf16.mxu0 0
      %940 = vmatpush1.bf16.msra.mxu0 0
      %941 = vmatprep.subr.bf16.mxu0 0
      %942 = vmatpush1.bf16.msra.mxu0 0
      %943 = vmatprep.subr.bf16.mxu0 0
      %944 = vmatpush1.bf16.msra.mxu0 0
      %945 = vmatprep.subr.bf16.mxu0 0
      %946 = vmatpush1.bf16.msra.mxu0 0
      %947 = vmatprep.subr.bf16.mxu0 0
      %948 = vmatpush1.bf16.msra.mxu0 0
      %949 = vmatprep.subr.bf16.mxu0 0
      %950 = vmatpush1.bf16.msra.mxu0 0
      %951 = vmatprep.mubr.bf16.mxu0 0
      %952 = vmatmul.mubr.bf16.gmra.mrb[0].mxu0 %v917
      %v953 = vpop.f32.mrb[0].mxu0
      %v954 = vadd.f32 0.0, %v953
      %v955 = vpop.f32.mrb[0].mxu0
      %v956 = vpop.f32.mrb[0].mxu0
      %v957 = vadd.f32 0.0, %v956
      %v958 = vpop.f32.mrb[0].mxu0
      %959 = vdwg.mxu0
      %v962 = vunpack.c.l.b16 %v210
      %v963 = vunpack.c.l.b16 %v211
      %v964 = vpack.c.b16 %v963, %v962
      %v966 = vsel %vm225, %v964, 0
      %968 = vmatprep.subr.bf16.mxu0 0
      %969 = vmatpush1.bf16.msra.mxu0 %v231
      %970 = vmatprep.subr.bf16.mxu0 0
      %971 = vmatpush1.bf16.msra.mxu0 0
      %972 = vmatprep.subr.bf16.mxu0 0
      %973 = vmatpush1.bf16.msra.mxu0 0
      %974 = vmatprep.subr.bf16.mxu0 0
      %975 = vmatpush1.bf16.msra.mxu0 0
      %976 = vmatprep.subr.bf16.mxu0 0
      %977 = vmatpush1.bf16.msra.mxu0 0
      %978 = vmatprep.subr.bf16.mxu0 0
      %979 = vmatpush1.bf16.msra.mxu0 0
      %980 = vmatprep.subr.bf16.mxu0 0
      %981 = vmatpush1.bf16.msra.mxu0 0
      %982 = vmatprep.subr.bf16.mxu0 0
      %983 = vmatpush1.bf16.msra.mxu0 0
      %984 = vmatprep.subr.bf16.mxu0 0
      %985 = vmatpush1.bf16.msra.mxu0 0
      %986 = vmatprep.subr.bf16.mxu0 0
      %987 = vmatpush1.bf16.msra.mxu0 0
      %988 = vmatprep.subr.bf16.mxu0 0
      %989 = vmatpush1.bf16.msra.mxu0 0
      %990 = vmatprep.subr.bf16.mxu0 0
      %991 = vmatpush1.bf16.msra.mxu0 0
      %992 = vmatprep.subr.bf16.mxu0 0
      %993 = vmatpush1.bf16.msra.mxu0 0
      %994 = vmatprep.subr.bf16.mxu0 0
      %995 = vmatpush1.bf16.msra.mxu0 0
      %996 = vmatprep.subr.bf16.mxu0 0
      %997 = vmatpush1.bf16.msra.mxu0 0
      %998 = vmatprep.subr.bf16.mxu0 0
      %999 = vmatpush1.bf16.msra.mxu0 0
      %1000 = vmatprep.mubr.bf16.mxu0 0
      %1001 = vmatmul.mubr.bf16.gmra.mrb[0].mxu0 %v966
      %v1002 = vpop.f32.mrb[0].mxu0
      %v1003 = vadd.f32 0.0, %v1002
      %v1004 = vpop.f32.mrb[0].mxu0
      %v1005 = vpop.f32.mrb[0].mxu0
      %v1006 = vadd.f32 0.0, %v1005
      %v1007 = vpop.f32.mrb[0].mxu0
      %1008 = vdwg.mxu0
      %v1011 = vunpack.c.l.b16 %v145
      %v1012 = vunpack.c.l.b16 %v146
      %v1013 = vpack.c.b16 %v1012, %v1011
      %v1016 = vunpack.c.l.b16 %v177
      %v1017 = vunpack.c.l.b16 %v178
      %v1018 = vpack.c.b16 %v1017, %v1016
      %v1020 = vsel %vm225, %v1013, 0
      %v1023 = vsel %vm229, %v1018, 0
      %1025 = vmatprep.subr.bf16.mxu0 0
      %1026 = vmatpush1.bf16.msra.mxu0 %v1023
      %1027 = vmatprep.subr.bf16.mxu0 0
      %1028 = vmatpush1.bf16.msra.mxu0 0
      %1029 = vmatprep.subr.bf16.mxu0 0
      %1030 = vmatpush1.bf16.msra.mxu0 0
      %1031 = vmatprep.subr.bf16.mxu0 0
      %1032 = vmatpush1.bf16.msra.mxu0 0
      %1033 = vmatprep.subr.bf16.mxu0 0
      %1034 = vmatpush1.bf16.msra.mxu0 0
      %1035 = vmatprep.subr.bf16.mxu0 0
      %1036 = vmatpush1.bf16.msra.mxu0 0
      %1037 = vmatprep.subr.bf16.mxu0 0
      %1038 = vmatpush1.bf16.msra.mxu0 0
      %1039 = vmatprep.subr.bf16.mxu0 0
      %1040 = vmatpush1.bf16.msra.mxu0 0
      %1041 = vmatprep.subr.bf16.mxu0 0
      %1042 = vmatpush1.bf16.msra.mxu0 0
      %1043 = vmatprep.subr.bf16.mxu0 0
      %1044 = vmatpush1.bf16.msra.mxu0 0
      %1045 = vmatprep.subr.bf16.mxu0 0
      %1046 = vmatpush1.bf16.msra.mxu0 0
      %1047 = vmatprep.subr.bf16.mxu0 0
      %1048 = vmatpush1.bf16.msra.mxu0 0
      %1049 = vmatprep.subr.bf16.mxu0 0
      %1050 = vmatpush1.bf16.msra.mxu0 0
      %1051 = vmatprep.subr.bf16.mxu0 0
      %1052 = vmatpush1.bf16.msra.mxu0 0
      %1053 = vmatprep.subr.bf16.mxu0 0
      %1054 = vmatpush1.bf16.msra.mxu0 0
      %1055 = vmatprep.subr.bf16.mxu0 0
      %1056 = vmatpush1.bf16.msra.mxu0 0
      %1057 = vmatprep.mubr.bf16.mxu0 0
      %1058 = vmatmul.mubr.bf16.gmra.mrb[0].mxu0 %v1020
      %v1059 = vpop.f32.mrb[0].mxu0
      %v1060 = vadd.f32 %v268, %v1059
      %v1061 = vpop.f32.mrb[0].mxu0
      %v1062 = vpop.f32.mrb[0].mxu0
      %v1063 = vadd.f32 %v271, %v1062
      %v1064 = vpop.f32.mrb[0].mxu0
      %1065 = vdwg.mxu0
      %v1068 = vunpack.c.l.b16 %v147
      %v1069 = vunpack.c.l.b16 %v148
      %v1070 = vpack.c.b16 %v1069, %v1068
      %v1072 = vsel %vm225, %v1070, 0
      %1074 = vmatprep.subr.bf16.mxu0 0
      %1075 = vmatpush1.bf16.msra.mxu0 %v1023
      %1076 = vmatprep.subr.bf16.mxu0 0
      %1077 = vmatpush1.bf16.msra.mxu0 0
      %1078 = vmatprep.subr.bf16.mxu0 0
      %1079 = vmatpush1.bf16.msra.mxu0 0
      %1080 = vmatprep.subr.bf16.mxu0 0
      %1081 = vmatpush1.bf16.msra.mxu0 0
      %1082 = vmatprep.subr.bf16.mxu0 0
      %1083 = vmatpush1.bf16.msra.mxu0 0
      %1084 = vmatprep.subr.bf16.mxu0 0
      %1085 = vmatpush1.bf16.msra.mxu0 0
      %1086 = vmatprep.subr.bf16.mxu0 0
      %1087 = vmatpush1.bf16.msra.mxu0 0
      %1088 = vmatprep.subr.bf16.mxu0 0
      %1089 = vmatpush1.bf16.msra.mxu0 0
      %1090 = vmatprep.subr.bf16.mxu0 0
      %1091 = vmatpush1.bf16.msra.mxu0 0
      %1092 = vmatprep.subr.bf16.mxu0 0
      %1093 = vmatpush1.bf16.msra.mxu0 0
      %1094 = vmatprep.subr.bf16.mxu0 0
      %1095 = vmatpush1.bf16.msra.mxu0 0
      %1096 = vmatprep.subr.bf16.mxu0 0
      %1097 = vmatpush1.bf16.msra.mxu0 0
      %1098 = vmatprep.subr.bf16.mxu0 0
      %1099 = vmatpush1.bf16.msra.mxu0 0
      %1100 = vmatprep.subr.bf16.mxu0 0
      %1101 = vmatpush1.bf16.msra.mxu0 0
      %1102 = vmatprep.subr.bf16.mxu0 0
      %1103 = vmatpush1.bf16.msra.mxu0 0
      %1104 = vmatprep.subr.bf16.mxu0 0
      %1105 = vmatpush1.bf16.msra.mxu0 0
      %1106 = vmatprep.mubr.bf16.mxu0 0
      %1107 = vmatmul.mubr.bf16.gmra.mrb[0].mxu0 %v1072
      %v1108 = vpop.f32.mrb[0].mxu0
      %v1109 = vadd.f32 %v317, %v1108
      %v1110 = vpop.f32.mrb[0].mxu0
      %v1111 = vpop.f32.mrb[0].mxu0
      %v1112 = vadd.f32 %v320, %v1111
      %v1113 = vpop.f32.mrb[0].mxu0
      %1114 = vdwg.mxu0
      %v1117 = vunpack.c.l.b16 %v149
      %v1118 = vunpack.c.l.b16 %v150
      %v1119 = vpack.c.b16 %v1118, %v1117
      %v1121 = vsel %vm225, %v1119, 0
      %1123 = vmatprep.subr.bf16.mxu0 0
      %1124 = vmatpush1.bf16.msra.mxu0 %v1023
      %1125 = vmatprep.subr.bf16.mxu0 0
      %1126 = vmatpush1.bf16.msra.mxu0 0
      %1127 = vmatprep.subr.bf16.mxu0 0
      %1128 = vmatpush1.bf16.msra.mxu0 0
      %1129 = vmatprep.subr.bf16.mxu0 0
      %1130 = vmatpush1.bf16.msra.mxu0 0
      %1131 = vmatprep.subr.bf16.mxu0 0
      %1132 = vmatpush1.bf16.msra.mxu0 0
      %1133 = vmatprep.subr.bf16.mxu0 0
      %1134 = vmatpush1.bf16.msra.mxu0 0
      %1135 = vmatprep.subr.bf16.mxu0 0
      %1136 = vmatpush1.bf16.msra.mxu0 0
      %1137 = vmatprep.subr.bf16.mxu0 0
      %1138 = vmatpush1.bf16.msra.mxu0 0
      %1139 = vmatprep.subr.bf16.mxu0 0
      %1140 = vmatpush1.bf16.msra.mxu0 0
      %1141 = vmatprep.subr.bf16.mxu0 0
      %1142 = vmatpush1.bf16.msra.mxu0 0
      %1143 = vmatprep.subr.bf16.mxu0 0
      %1144 = vmatpush1.bf16.msra.mxu0 0
      %1145 = vmatprep.subr.bf16.mxu0 0
      %1146 = vmatpush1.bf16.msra.mxu0 0
      %1147 = vmatprep.subr.bf16.mxu0 0
      %1148 = vmatpush1.bf16.msra.mxu0 0
      %1149 = vmatprep.subr.bf16.mxu0 0
      %1150 = vmatpush1.bf16.msra.mxu0 0
      %1151 = vmatprep.subr.bf16.mxu0 0
      %1152 = vmatpush1.bf16.msra.mxu0 0
      %1153 = vmatprep.subr.bf16.mxu0 0
      %1154 = vmatpush1.bf16.msra.mxu0 0
      %1155 = vmatprep.mubr.bf16.mxu0 0
      %1156 = vmatmul.mubr.bf16.gmra.mrb[0].mxu0 %v1121
      %v1157 = vpop.f32.mrb[0].mxu0
      %v1158 = vadd.f32 %v366, %v1157
      %v1159 = vpop.f32.mrb[0].mxu0
      %v1160 = vpop.f32.mrb[0].mxu0
      %v1161 = vadd.f32 %v369, %v1160
      %v1162 = vpop.f32.mrb[0].mxu0
      %1163 = vdwg.mxu0
      %v1166 = vunpack.c.l.b16 %v151
      %v1167 = vunpack.c.l.b16 %v152
      %v1168 = vpack.c.b16 %v1167, %v1166
      %v1170 = vsel %vm225, %v1168, 0
      %1172 = vmatprep.subr.bf16.mxu0 0
      %1173 = vmatpush1.bf16.msra.mxu0 %v1023
      %1174 = vmatprep.subr.bf16.mxu0 0
      %1175 = vmatpush1.bf16.msra.mxu0 0
      %1176 = vmatprep.subr.bf16.mxu0 0
      %1177 = vmatpush1.bf16.msra.mxu0 0
      %1178 = vmatprep.subr.bf16.mxu0 0
      %1179 = vmatpush1.bf16.msra.mxu0 0
      %1180 = vmatprep.subr.bf16.mxu0 0
      %1181 = vmatpush1.bf16.msra.mxu0 0
      %1182 = vmatprep.subr.bf16.mxu0 0
      %1183 = vmatpush1.bf16.msra.mxu0 0
      %1184 = vmatprep.subr.bf16.mxu0 0
      %1185 = vmatpush1.bf16.msra.mxu0 0
      %1186 = vmatprep.subr.bf16.mxu0 0
      %1187 = vmatpush1.bf16.msra.mxu0 0
      %1188 = vmatprep.subr.bf16.mxu0 0
      %1189 = vmatpush1.bf16.msra.mxu0 0
      %1190 = vmatprep.subr.bf16.mxu0 0
      %1191 = vmatpush1.bf16.msra.mxu0 0
      %1192 = vmatprep.subr.bf16.mxu0 0
      %1193 = vmatpush1.bf16.msra.mxu0 0
      %1194 = vmatprep.subr.bf16.mxu0 0
      %1195 = vmatpush1.bf16.msra.mxu0 0
      %1196 = vmatprep.subr.bf16.mxu0 0
      %1197 = vmatpush1.bf16.msra.mxu0 0
      %1198 = vmatprep.subr.bf16.mxu0 0
      %1199 = vmatpush1.bf16.msra.mxu0 0
      %1200 = vmatprep.subr.bf16.mxu0 0
      %1201 = vmatpush1.bf16.msra.mxu0 0
      %1202 = vmatprep.subr.bf16.mxu0 0
      %1203 = vmatpush1.bf16.msra.mxu0 0
      %1204 = vmatprep.mubr.bf16.mxu0 0
      %1205 = vmatmul.mubr.bf16.gmra.mrb[0].mxu0 %v1170
      %v1206 = vpop.f32.mrb[0].mxu0
      %v1207 = vadd.f32 %v415, %v1206
      %v1208 = vpop.f32.mrb[0].mxu0
      %v1209 = vpop.f32.mrb[0].mxu0
      %v1210 = vadd.f32 %v418, %v1209
      %v1211 = vpop.f32.mrb[0].mxu0
      %1212 = vdwg.mxu0
      %v1215 = vunpack.c.l.b16 %v153
      %v1216 = vunpack.c.l.b16 %v154
      %v1217 = vpack.c.b16 %v1216, %v1215
      %v1219 = vsel %vm225, %v1217, 0
      %1221 = vmatprep.subr.bf16.mxu0 0
      %1222 = vmatpush1.bf16.msra.mxu0 %v1023
      %1223 = vmatprep.subr.bf16.mxu0 0
      %1224 = vmatpush1.bf16.msra.mxu0 0
      %1225 = vmatprep.subr.bf16.mxu0 0
      %1226 = vmatpush1.bf16.msra.mxu0 0
      %1227 = vmatprep.subr.bf16.mxu0 0
      %1228 = vmatpush1.bf16.msra.mxu0 0
      %1229 = vmatprep.subr.bf16.mxu0 0
      %1230 = vmatpush1.bf16.msra.mxu0 0
      %1231 = vmatprep.subr.bf16.mxu0 0
      %1232 = vmatpush1.bf16.msra.mxu0 0
      %1233 = vmatprep.subr.bf16.mxu0 0
      %1234 = vmatpush1.bf16.msra.mxu0 0
      %1235 = vmatprep.subr.bf16.mxu0 0
      %1236 = vmatpush1.bf16.msra.mxu0 0
      %1237 = vmatprep.subr.bf16.mxu0 0
      %1238 = vmatpush1.bf16.msra.mxu0 0
      %1239 = vmatprep.subr.bf16.mxu0 0
      %1240 = vmatpush1.bf16.msra.mxu0 0
      %1241 = vmatprep.subr.bf16.mxu0 0
      %1242 = vmatpush1.bf16.msra.mxu0 0
      %1243 = vmatprep.subr.bf16.mxu0 0
      %1244 = vmatpush1.bf16.msra.mxu0 0
      %1245 = vmatprep.subr.bf16.mxu0 0
      %1246 = vmatpush1.bf16.msra.mxu0 0
      %1247 = vmatprep.subr.bf16.mxu0 0
      %1248 = vmatpush1.bf16.msra.mxu0 0
      %1249 = vmatprep.subr.bf16.mxu0 0
      %1250 = vmatpush1.bf16.msra.mxu0 0
      %1251 = vmatprep.subr.bf16.mxu0 0
      %1252 = vmatpush1.bf16.msra.mxu0 0
      %1253 = vmatprep.mubr.bf16.mxu0 0
      %1254 = vmatmul.mubr.bf16.gmra.mrb[0].mxu0 %v1219
      %v1255 = vpop.f32.mrb[0].mxu0
      %v1256 = vadd.f32 %v464, %v1255
      %v1257 = vpop.f32.mrb[0].mxu0
      %v1258 = vpop.f32.mrb[0].mxu0
      %v1259 = vadd.f32 %v467, %v1258
      %v1260 = vpop.f32.mrb[0].mxu0
      %1261 = vdwg.mxu0
      %v1264 = vunpack.c.l.b16 %v155
      %v1265 = vunpack.c.l.b16 %v156
      %v1266 = vpack.c.b16 %v1265, %v1264
      %v1268 = vsel %vm225, %v1266, 0
      %1270 = vmatprep.subr.bf16.mxu0 0
      %1271 = vmatpush1.bf16.msra.mxu0 %v1023
      %1272 = vmatprep.subr.bf16.mxu0 0
      %1273 = vmatpush1.bf16.msra.mxu0 0
      %1274 = vmatprep.subr.bf16.mxu0 0
      %1275 = vmatpush1.bf16.msra.mxu0 0
      %1276 = vmatprep.subr.bf16.mxu0 0
      %1277 = vmatpush1.bf16.msra.mxu0 0
      %1278 = vmatprep.subr.bf16.mxu0 0
      %1279 = vmatpush1.bf16.msra.mxu0 0
      %1280 = vmatprep.subr.bf16.mxu0 0
      %1281 = vmatpush1.bf16.msra.mxu0 0
      %1282 = vmatprep.subr.bf16.mxu0 0
      %1283 = vmatpush1.bf16.msra.mxu0 0
      %1284 = vmatprep.subr.bf16.mxu0 0
      %1285 = vmatpush1.bf16.msra.mxu0 0
      %1286 = vmatprep.subr.bf16.mxu0 0
      %1287 = vmatpush1.bf16.msra.mxu0 0
      %1288 = vmatprep.subr.bf16.mxu0 0
      %1289 = vmatpush1.bf16.msra.mxu0 0
      %1290 = vmatprep.subr.bf16.mxu0 0
      %1291 = vmatpush1.bf16.msra.mxu0 0
      %1292 = vmatprep.subr.bf16.mxu0 0
      %1293 = vmatpush1.bf16.msra.mxu0 0
      %1294 = vmatprep.subr.bf16.mxu0 0
      %1295 = vmatpush1.bf16.msra.mxu0 0
      %1296 = vmatprep.subr.bf16.mxu0 0
      %1297 = vmatpush1.bf16.msra.mxu0 0
      %1298 = vmatprep.subr.bf16.mxu0 0
      %1299 = vmatpush1.bf16.msra.mxu0 0
      %1300 = vmatprep.subr.bf16.mxu0 0
      %1301 = vmatpush1.bf16.msra.mxu0 0
      %1302 = vmatprep.mubr.bf16.mxu0 0
      %1303 = vmatmul.mubr.bf16.gmra.mrb[0].mxu0 %v1268
      %v1304 = vpop.f32.mrb[0].mxu0
      %v1305 = vadd.f32 %v513, %v1304
      %v1306 = vpop.f32.mrb[0].mxu0
      %v1307 = vpop.f32.mrb[0].mxu0
      %v1308 = vadd.f32 %v516, %v1307
      %v1309 = vpop.f32.mrb[0].mxu0
      %1310 = vdwg.mxu0
      %v1313 = vunpack.c.l.b16 %v157
      %v1314 = vunpack.c.l.b16 %v158
      %v1315 = vpack.c.b16 %v1314, %v1313
      %v1317 = vsel %vm225, %v1315, 0
      %1319 = vmatprep.subr.bf16.mxu0 0
      %1320 = vmatpush1.bf16.msra.mxu0 %v1023
      %1321 = vmatprep.subr.bf16.mxu0 0
      %1322 = vmatpush1.bf16.msra.mxu0 0
      %1323 = vmatprep.subr.bf16.mxu0 0
      %1324 = vmatpush1.bf16.msra.mxu0 0
      %1325 = vmatprep.subr.bf16.mxu0 0
      %1326 = vmatpush1.bf16.msra.mxu0 0
      %1327 = vmatprep.subr.bf16.mxu0 0
      %1328 = vmatpush1.bf16.msra.mxu0 0
      %1329 = vmatprep.subr.bf16.mxu0 0
      %1330 = vmatpush1.bf16.msra.mxu0 0
      %1331 = vmatprep.subr.bf16.mxu0 0
      %1332 = vmatpush1.bf16.msra.mxu0 0
      %1333 = vmatprep.subr.bf16.mxu0 0
      %1334 = vmatpush1.bf16.msra.mxu0 0
      %1335 = vmatprep.subr.bf16.mxu0 0
      %1336 = vmatpush1.bf16.msra.mxu0 0
      %1337 = vmatprep.subr.bf16.mxu0 0
      %1338 = vmatpush1.bf16.msra.mxu0 0
      %1339 = vmatprep.subr.bf16.mxu0 0
      %1340 = vmatpush1.bf16.msra.mxu0 0
      %1341 = vmatprep.subr.bf16.mxu0 0
      %1342 = vmatpush1.bf16.msra.mxu0 0
      %1343 = vmatprep.subr.bf16.mxu0 0
      %1344 = vmatpush1.bf16.msra.mxu0 0
      %1345 = vmatprep.subr.bf16.mxu0 0
      %1346 = vmatpush1.bf16.msra.mxu0 0
      %1347 = vmatprep.subr.bf16.mxu0 0
      %1348 = vmatpush1.bf16.msra.mxu0 0
      %1349 = vmatprep.subr.bf16.mxu0 0
      %1350 = vmatpush1.bf16.msra.mxu0 0
      %1351 = vmatprep.mubr.bf16.mxu0 0
      %1352 = vmatmul.mubr.bf16.gmra.mrb[0].mxu0 %v1317
      %v1353 = vpop.f32.mrb[0].mxu0
      %v1354 = vadd.f32 %v562, %v1353
      %v1355 = vpop.f32.mrb[0].mxu0
      %v1356 = vpop.f32.mrb[0].mxu0
      %v1357 = vadd.f32 %v565, %v1356
      %v1358 = vpop.f32.mrb[0].mxu0
      %1359 = vdwg.mxu0
      %v1362 = vunpack.c.l.b16 %v159
      %v1363 = vunpack.c.l.b16 %v160
      %v1364 = vpack.c.b16 %v1363, %v1362
      %v1366 = vsel %vm225, %v1364, 0
      %1368 = vmatprep.subr.bf16.mxu0 0
      %1369 = vmatpush1.bf16.msra.mxu0 %v1023
      %1370 = vmatprep.subr.bf16.mxu0 0
      %1371 = vmatpush1.bf16.msra.mxu0 0
      %1372 = vmatprep.subr.bf16.mxu0 0
      %1373 = vmatpush1.bf16.msra.mxu0 0
      %1374 = vmatprep.subr.bf16.mxu0 0
      %1375 = vmatpush1.bf16.msra.mxu0 0
      %1376 = vmatprep.subr.bf16.mxu0 0
      %1377 = vmatpush1.bf16.msra.mxu0 0
      %1378 = vmatprep.subr.bf16.mxu0 0
      %1379 = vmatpush1.bf16.msra.mxu0 0
      %1380 = vmatprep.subr.bf16.mxu0 0
      %1381 = vmatpush1.bf16.msra.mxu0 0
      %1382 = vmatprep.subr.bf16.mxu0 0
      %1383 = vmatpush1.bf16.msra.mxu0 0
      %1384 = vmatprep.subr.bf16.mxu0 0
      %1385 = vmatpush1.bf16.msra.mxu0 0
      %1386 = vmatprep.subr.bf16.mxu0 0
      %1387 = vmatpush1.bf16.msra.mxu0 0
      %1388 = vmatprep.subr.bf16.mxu0 0
      %1389 = vmatpush1.bf16.msra.mxu0 0
      %1390 = vmatprep.subr.bf16.mxu0 0
      %1391 = vmatpush1.bf16.msra.mxu0 0
      %1392 = vmatprep.subr.bf16.mxu0 0
      %1393 = vmatpush1.bf16.msra.mxu0 0
      %1394 = vmatprep.subr.bf16.mxu0 0
      %1395 = vmatpush1.bf16.msra.mxu0 0
      %1396 = vmatprep.subr.bf16.mxu0 0
      %1397 = vmatpush1.bf16.msra.mxu0 0
      %1398 = vmatprep.subr.bf16.mxu0 0
      %1399 = vmatpush1.bf16.msra.mxu0 0
      %1400 = vmatprep.mubr.bf16.mxu0 0
      %1401 = vmatmul.mubr.bf16.gmra.mrb[0].mxu0 %v1366
      %v1402 = vpop.f32.mrb[0].mxu0
      %v1403 = vadd.f32 %v611, %v1402
      %v1404 = vpop.f32.mrb[0].mxu0
      %v1405 = vpop.f32.mrb[0].mxu0
      %v1406 = vadd.f32 %v614, %v1405
      %v1407 = vpop.f32.mrb[0].mxu0
      %1408 = vdwg.mxu0
      %v1411 = vunpack.c.l.b16 %v161
      %v1412 = vunpack.c.l.b16 %v162
      %v1413 = vpack.c.b16 %v1412, %v1411
      %v1415 = vsel %vm225, %v1413, 0
      %1417 = vmatprep.subr.bf16.mxu0 0
      %1418 = vmatpush1.bf16.msra.mxu0 %v1023
      %1419 = vmatprep.subr.bf16.mxu0 0
      %1420 = vmatpush1.bf16.msra.mxu0 0
      %1421 = vmatprep.subr.bf16.mxu0 0
      %1422 = vmatpush1.bf16.msra.mxu0 0
      %1423 = vmatprep.subr.bf16.mxu0 0
      %1424 = vmatpush1.bf16.msra.mxu0 0
      %1425 = vmatprep.subr.bf16.mxu0 0
      %1426 = vmatpush1.bf16.msra.mxu0 0
      %1427 = vmatprep.subr.bf16.mxu0 0
      %1428 = vmatpush1.bf16.msra.mxu0 0
      %1429 = vmatprep.subr.bf16.mxu0 0
      %1430 = vmatpush1.bf16.msra.mxu0 0
      %1431 = vmatprep.subr.bf16.mxu0 0
      %1432 = vmatpush1.bf16.msra.mxu0 0
      %1433 = vmatprep.subr.bf16.mxu0 0
      %1434 = vmatpush1.bf16.msra.mxu0 0
      %1435 = vmatprep.subr.bf16.mxu0 0
      %1436 = vmatpush1.bf16.msra.mxu0 0
      %1437 = vmatprep.subr.bf16.mxu0 0
      %1438 = vmatpush1.bf16.msra.mxu0 0
      %1439 = vmatprep.subr.bf16.mxu0 0
      %1440 = vmatpush1.bf16.msra.mxu0 0
      %1441 = vmatprep.subr.bf16.mxu0 0
      %1442 = vmatpush1.bf16.msra.mxu0 0
      %1443 = vmatprep.subr.bf16.mxu0 0
      %1444 = vmatpush1.bf16.msra.mxu0 0
      %1445 = vmatprep.subr.bf16.mxu0 0
      %1446 = vmatpush1.bf16.msra.mxu0 0
      %1447 = vmatprep.subr.bf16.mxu0 0
      %1448 = vmatpush1.bf16.msra.mxu0 0
      %1449 = vmatprep.mubr.bf16.mxu0 0
      %1450 = vmatmul.mubr.bf16.gmra.mrb[0].mxu0 %v1415
      %v1451 = vpop.f32.mrb[0].mxu0
      %v1452 = vadd.f32 %v660, %v1451
      %v1453 = vpop.f32.mrb[0].mxu0
      %v1454 = vpop.f32.mrb[0].mxu0
      %v1455 = vadd.f32 %v663, %v1454
      %v1456 = vpop.f32.mrb[0].mxu0
      %1457 = vdwg.mxu0
      %v1460 = vunpack.c.l.b16 %v163
      %v1461 = vunpack.c.l.b16 %v164
      %v1462 = vpack.c.b16 %v1461, %v1460
      %v1464 = vsel %vm225, %v1462, 0
      %1466 = vmatprep.subr.bf16.mxu0 0
      %1467 = vmatpush1.bf16.msra.mxu0 %v1023
      %1468 = vmatprep.subr.bf16.mxu0 0
      %1469 = vmatpush1.bf16.msra.mxu0 0
      %1470 = vmatprep.subr.bf16.mxu0 0
      %1471 = vmatpush1.bf16.msra.mxu0 0
      %1472 = vmatprep.subr.bf16.mxu0 0
      %1473 = vmatpush1.bf16.msra.mxu0 0
      %1474 = vmatprep.subr.bf16.mxu0 0
      %1475 = vmatpush1.bf16.msra.mxu0 0
      %1476 = vmatprep.subr.bf16.mxu0 0
      %1477 = vmatpush1.bf16.msra.mxu0 0
      %1478 = vmatprep.subr.bf16.mxu0 0
      %1479 = vmatpush1.bf16.msra.mxu0 0
      %1480 = vmatprep.subr.bf16.mxu0 0
      %1481 = vmatpush1.bf16.msra.mxu0 0
      %1482 = vmatprep.subr.bf16.mxu0 0
      %1483 = vmatpush1.bf16.msra.mxu0 0
      %1484 = vmatprep.subr.bf16.mxu0 0
      %1485 = vmatpush1.bf16.msra.mxu0 0
      %1486 = vmatprep.subr.bf16.mxu0 0
      %1487 = vmatpush1.bf16.msra.mxu0 0
      %1488 = vmatprep.subr.bf16.mxu0 0
      %1489 = vmatpush1.bf16.msra.mxu0 0
      %1490 = vmatprep.subr.bf16.mxu0 0
      %1491 = vmatpush1.bf16.msra.mxu0 0
      %1492 = vmatprep.subr.bf16.mxu0 0
      %1493 = vmatpush1.bf16.msra.mxu0 0
      %1494 = vmatprep.subr.bf16.mxu0 0
      %1495 = vmatpush1.bf16.msra.mxu0 0
      %1496 = vmatprep.subr.bf16.mxu0 0
      %1497 = vmatpush1.bf16.msra.mxu0 0
      %1498 = vmatprep.mubr.bf16.mxu0 0
      %1499 = vmatmul.mubr.bf16.gmra.mrb[0].mxu0 %v1464
      %v1500 = vpop.f32.mrb[0].mxu0
      %v1501 = vadd.f32 %v709, %v1500
      %v1502 = vpop.f32.mrb[0].mxu0
      %v1503 = vpop.f32.mrb[0].mxu0
      %v1504 = vadd.f32 %v712, %v1503
      %v1505 = vpop.f32.mrb[0].mxu0
      %1506 = vdwg.mxu0
      %v1509 = vunpack.c.l.b16 %v165
      %v1510 = vunpack.c.l.b16 %v166
      %v1511 = vpack.c.b16 %v1510, %v1509
      %v1513 = vsel %vm225, %v1511, 0
      %1515 = vmatprep.subr.bf16.mxu0 0
      %1516 = vmatpush1.bf16.msra.mxu0 %v1023
      %1517 = vmatprep.subr.bf16.mxu0 0
      %1518 = vmatpush1.bf16.msra.mxu0 0
      %1519 = vmatprep.subr.bf16.mxu0 0
      %1520 = vmatpush1.bf16.msra.mxu0 0
      %1521 = vmatprep.subr.bf16.mxu0 0
      %1522 = vmatpush1.bf16.msra.mxu0 0
      %1523 = vmatprep.subr.bf16.mxu0 0
      %1524 = vmatpush1.bf16.msra.mxu0 0
      %1525 = vmatprep.subr.bf16.mxu0 0
      %1526 = vmatpush1.bf16.msra.mxu0 0
      %1527 = vmatprep.subr.bf16.mxu0 0
      %1528 = vmatpush1.bf16.msra.mxu0 0
      %1529 = vmatprep.subr.bf16.mxu0 0
      %1530 = vmatpush1.bf16.msra.mxu0 0
      %1531 = vmatprep.subr.bf16.mxu0 0
      %1532 = vmatpush1.bf16.msra.mxu0 0
      %1533 = vmatprep.subr.bf16.mxu0 0
      %1534 = vmatpush1.bf16.msra.mxu0 0
      %1535 = vmatprep.subr.bf16.mxu0 0
      %1536 = vmatpush1.bf16.msra.mxu0 0
      %1537 = vmatprep.subr.bf16.mxu0 0
      %1538 = vmatpush1.bf16.msra.mxu0 0
      %1539 = vmatprep.subr.bf16.mxu0 0
      %1540 = vmatpush1.bf16.msra.mxu0 0
      %1541 = vmatprep.subr.bf16.mxu0 0
      %1542 = vmatpush1.bf16.msra.mxu0 0
      %1543 = vmatprep.subr.bf16.mxu0 0
      %1544 = vmatpush1.bf16.msra.mxu0 0
      %1545 = vmatprep.subr.bf16.mxu0 0
      %1546 = vmatpush1.bf16.msra.mxu0 0
      %1547 = vmatprep.mubr.bf16.mxu0 0
      %1548 = vmatmul.mubr.bf16.gmra.mrb[0].mxu0 %v1513
      %v1549 = vpop.f32.mrb[0].mxu0
      %v1550 = vadd.f32 %v758, %v1549
      %v1551 = vpop.f32.mrb[0].mxu0
      %v1552 = vpop.f32.mrb[0].mxu0
      %v1553 = vadd.f32 %v761, %v1552
      %v1554 = vpop.f32.mrb[0].mxu0
      %1555 = vdwg.mxu0
      %v1558 = vunpack.c.l.b16 %v167
      %v1559 = vunpack.c.l.b16 %v168
      %v1560 = vpack.c.b16 %v1559, %v1558
      %v1562 = vsel %vm225, %v1560, 0
      %1564 = vmatprep.subr.bf16.mxu0 0
      %1565 = vmatpush1.bf16.msra.mxu0 %v1023
      %1566 = vmatprep.subr.bf16.mxu0 0
      %1567 = vmatpush1.bf16.msra.mxu0 0
      %1568 = vmatprep.subr.bf16.mxu0 0
      %1569 = vmatpush1.bf16.msra.mxu0 0
      %1570 = vmatprep.subr.bf16.mxu0 0
      %1571 = vmatpush1.bf16.msra.mxu0 0
      %1572 = vmatprep.subr.bf16.mxu0 0
      %1573 = vmatpush1.bf16.msra.mxu0 0
      %1574 = vmatprep.subr.bf16.mxu0 0
      %1575 = vmatpush1.bf16.msra.mxu0 0
      %1576 = vmatprep.subr.bf16.mxu0 0
      %1577 = vmatpush1.bf16.msra.mxu0 0
      %1578 = vmatprep.subr.bf16.mxu0 0
      %1579 = vmatpush1.bf16.msra.mxu0 0
      %1580 = vmatprep.subr.bf16.mxu0 0
      %1581 = vmatpush1.bf16.msra.mxu0 0
      %1582 = vmatprep.subr.bf16.mxu0 0
      %1583 = vmatpush1.bf16.msra.mxu0 0
      %1584 = vmatprep.subr.bf16.mxu0 0
      %1585 = vmatpush1.bf16.msra.mxu0 0
      %1586 = vmatprep.subr.bf16.mxu0 0
      %1587 = vmatpush1.bf16.msra.mxu0 0
      %1588 = vmatprep.subr.bf16.mxu0 0
      %1589 = vmatpush1.bf16.msra.mxu0 0
      %1590 = vmatprep.subr.bf16.mxu0 0
      %1591 = vmatpush1.bf16.msra.mxu0 0
      %1592 = vmatprep.subr.bf16.mxu0 0
      %1593 = vmatpush1.bf16.msra.mxu0 0
      %1594 = vmatprep.subr.bf16.mxu0 0
      %1595 = vmatpush1.bf16.msra.mxu0 0
      %1596 = vmatprep.mubr.bf16.mxu0 0
      %1597 = vmatmul.mubr.bf16.gmra.mrb[0].mxu0 %v1562
      %v1598 = vpop.f32.mrb[0].mxu0
      %v1599 = vadd.f32 %v807, %v1598
      %v1600 = vpop.f32.mrb[0].mxu0
      %v1601 = vpop.f32.mrb[0].mxu0
      %v1602 = vadd.f32 %v810, %v1601
      %v1603 = vpop.f32.mrb[0].mxu0
      %1604 = vdwg.mxu0
      %v1607 = vunpack.c.l.b16 %v169
      %v1608 = vunpack.c.l.b16 %v170
      %v1609 = vpack.c.b16 %v1608, %v1607
      %v1611 = vsel %vm225, %v1609, 0
      %1613 = vmatprep.subr.bf16.mxu0 0
      %1614 = vmatpush1.bf16.msra.mxu0 %v1023
      %1615 = vmatprep.subr.bf16.mxu0 0
      %1616 = vmatpush1.bf16.msra.mxu0 0
      %1617 = vmatprep.subr.bf16.mxu0 0
      %1618 = vmatpush1.bf16.msra.mxu0 0
      %1619 = vmatprep.subr.bf16.mxu0 0
      %1620 = vmatpush1.bf16.msra.mxu0 0
      %1621 = vmatprep.subr.bf16.mxu0 0
      %1622 = vmatpush1.bf16.msra.mxu0 0
      %1623 = vmatprep.subr.bf16.mxu0 0
      %1624 = vmatpush1.bf16.msra.mxu0 0
      %1625 = vmatprep.subr.bf16.mxu0 0
      %1626 = vmatpush1.bf16.msra.mxu0 0
      %1627 = vmatprep.subr.bf16.mxu0 0
      %1628 = vmatpush1.bf16.msra.mxu0 0
      %1629 = vmatprep.subr.bf16.mxu0 0
      %1630 = vmatpush1.bf16.msra.mxu0 0
      %1631 = vmatprep.subr.bf16.mxu0 0
      %1632 = vmatpush1.bf16.msra.mxu0 0
      %1633 = vmatprep.subr.bf16.mxu0 0
      %1634 = vmatpush1.bf16.msra.mxu0 0
      %1635 = vmatprep.subr.bf16.mxu0 0
      %1636 = vmatpush1.bf16.msra.mxu0 0
      %1637 = vmatprep.subr.bf16.mxu0 0
      %1638 = vmatpush1.bf16.msra.mxu0 0
      %1639 = vmatprep.subr.bf16.mxu0 0
      %1640 = vmatpush1.bf16.msra.mxu0 0
      %1641 = vmatprep.subr.bf16.mxu0 0
      %1642 = vmatpush1.bf16.msra.mxu0 0
      %1643 = vmatprep.subr.bf16.mxu0 0
      %1644 = vmatpush1.bf16.msra.mxu0 0
      %1645 = vmatprep.mubr.bf16.mxu0 0
      %1646 = vmatmul.mubr.bf16.gmra.mrb[0].mxu0 %v1611
      %v1647 = vpop.f32.mrb[0].mxu0
      %v1648 = vadd.f32 %v856, %v1647
      %v1649 = vpop.f32.mrb[0].mxu0
      %v1650 = vpop.f32.mrb[0].mxu0
      %v1651 = vadd.f32 %v859, %v1650
      %v1652 = vpop.f32.mrb[0].mxu0
      %1653 = vdwg.mxu0
      %v1656 = vunpack.c.l.b16 %v171
      %v1657 = vunpack.c.l.b16 %v172
      %v1658 = vpack.c.b16 %v1657, %v1656
      %v1660 = vsel %vm225, %v1658, 0
      %1662 = vmatprep.subr.bf16.mxu0 0
      %1663 = vmatpush1.bf16.msra.mxu0 %v1023
      %1664 = vmatprep.subr.bf16.mxu0 0
      %1665 = vmatpush1.bf16.msra.mxu0 0
      %1666 = vmatprep.subr.bf16.mxu0 0
      %1667 = vmatpush1.bf16.msra.mxu0 0
      %1668 = vmatprep.subr.bf16.mxu0 0
      %1669 = vmatpush1.bf16.msra.mxu0 0
      %1670 = vmatprep.subr.bf16.mxu0 0
      %1671 = vmatpush1.bf16.msra.mxu0 0
      %1672 = vmatprep.subr.bf16.mxu0 0
      %1673 = vmatpush1.bf16.msra.mxu0 0
      %1674 = vmatprep.subr.bf16.mxu0 0
      %1675 = vmatpush1.bf16.msra.mxu0 0
      %1676 = vmatprep.subr.bf16.mxu0 0
      %1677 = vmatpush1.bf16.msra.mxu0 0
      %1678 = vmatprep.subr.bf16.mxu0 0
      %1679 = vmatpush1.bf16.msra.mxu0 0
      %1680 = vmatprep.subr.bf16.mxu0 0
      %1681 = vmatpush1.bf16.msra.mxu0 0
      %1682 = vmatprep.subr.bf16.mxu0 0
      %1683 = vmatpush1.bf16.msra.mxu0 0
      %1684 = vmatprep.subr.bf16.mxu0 0
      %1685 = vmatpush1.bf16.msra.mxu0 0
      %1686 = vmatprep.subr.bf16.mxu0 0
      %1687 = vmatpush1.bf16.msra.mxu0 0
      %1688 = vmatprep.subr.bf16.mxu0 0
      %1689 = vmatpush1.bf16.msra.mxu0 0
      %1690 = vmatprep.subr.bf16.mxu0 0
      %1691 = vmatpush1.bf16.msra.mxu0 0
      %1692 = vmatprep.subr.bf16.mxu0 0
      %1693 = vmatpush1.bf16.msra.mxu0 0
      %1694 = vmatprep.mubr.bf16.mxu0 0
      %1695 = vmatmul.mubr.bf16.gmra.mrb[0].mxu0 %v1660
      %v1696 = vpop.f32.mrb[0].mxu0
      %v1697 = vadd.f32 %v905, %v1696
      %v1698 = vpop.f32.mrb[0].mxu0
      %v1699 = vpop.f32.mrb[0].mxu0
      %v1700 = vadd.f32 %v908, %v1699
      %v1701 = vpop.f32.mrb[0].mxu0
      %1702 = vdwg.mxu0
      %v1705 = vunpack.c.l.b16 %v173
      %v1706 = vunpack.c.l.b16 %v174
      %v1707 = vpack.c.b16 %v1706, %v1705
      %v1709 = vsel %vm225, %v1707, 0
      %1711 = vmatprep.subr.bf16.mxu0 0
      %1712 = vmatpush1.bf16.msra.mxu0 %v1023
      %1713 = vmatprep.subr.bf16.mxu0 0
      %1714 = vmatpush1.bf16.msra.mxu0 0
      %1715 = vmatprep.subr.bf16.mxu0 0
      %1716 = vmatpush1.bf16.msra.mxu0 0
      %1717 = vmatprep.subr.bf16.mxu0 0
      %1718 = vmatpush1.bf16.msra.mxu0 0
      %1719 = vmatprep.subr.bf16.mxu0 0
      %1720 = vmatpush1.bf16.msra.mxu0 0
      %1721 = vmatprep.subr.bf16.mxu0 0
      %1722 = vmatpush1.bf16.msra.mxu0 0
      %1723 = vmatprep.subr.bf16.mxu0 0
      %1724 = vmatpush1.bf16.msra.mxu0 0
      %1725 = vmatprep.subr.bf16.mxu0 0
      %1726 = vmatpush1.bf16.msra.mxu0 0
      %1727 = vmatprep.subr.bf16.mxu0 0
      %1728 = vmatpush1.bf16.msra.mxu0 0
      %1729 = vmatprep.subr.bf16.mxu0 0
      %1730 = vmatpush1.bf16.msra.mxu0 0
      %1731 = vmatprep.subr.bf16.mxu0 0
      %1732 = vmatpush1.bf16.msra.mxu0 0
      %1733 = vmatprep.subr.bf16.mxu0 0
      %1734 = vmatpush1.bf16.msra.mxu0 0
      %1735 = vmatprep.subr.bf16.mxu0 0
      %1736 = vmatpush1.bf16.msra.mxu0 0
      %1737 = vmatprep.subr.bf16.mxu0 0
      %1738 = vmatpush1.bf16.msra.mxu0 0
      %1739 = vmatprep.subr.bf16.mxu0 0
      %1740 = vmatpush1.bf16.msra.mxu0 0
      %1741 = vmatprep.subr.bf16.mxu0 0
      %1742 = vmatpush1.bf16.msra.mxu0 0
      %1743 = vmatprep.mubr.bf16.mxu0 0
      %1744 = vmatmul.mubr.bf16.gmra.mrb[0].mxu0 %v1709
      %v1745 = vpop.f32.mrb[0].mxu0
      %v1746 = vadd.f32 %v954, %v1745
      %v1747 = vpop.f32.mrb[0].mxu0
      %v1748 = vpop.f32.mrb[0].mxu0
      %v1749 = vadd.f32 %v957, %v1748
      %v1750 = vpop.f32.mrb[0].mxu0
      %1751 = vdwg.mxu0
      %v1754 = vunpack.c.l.b16 %v175
      %v1755 = vunpack.c.l.b16 %v176
      %v1756 = vpack.c.b16 %v1755, %v1754
      %v1758 = vsel %vm225, %v1756, 0
      %1760 = vmatprep.subr.bf16.mxu0 0
      %1761 = vmatpush1.bf16.msra.mxu0 %v1023
      %1762 = vmatprep.subr.bf16.mxu0 0
      %1763 = vmatpush1.bf16.msra.mxu0 0
      %1764 = vmatprep.subr.bf16.mxu0 0
      %1765 = vmatpush1.bf16.msra.mxu0 0
      %1766 = vmatprep.subr.bf16.mxu0 0
      %1767 = vmatpush1.bf16.msra.mxu0 0
      %1768 = vmatprep.subr.bf16.mxu0 0
      %1769 = vmatpush1.bf16.msra.mxu0 0
      %1770 = vmatprep.subr.bf16.mxu0 0
      %1771 = vmatpush1.bf16.msra.mxu0 0
      %1772 = vmatprep.subr.bf16.mxu0 0
      %1773 = vmatpush1.bf16.msra.mxu0 0
      %1774 = vmatprep.subr.bf16.mxu0 0
      %1775 = vmatpush1.bf16.msra.mxu0 0
      %1776 = vmatprep.subr.bf16.mxu0 0
      %1777 = vmatpush1.bf16.msra.mxu0 0
      %1778 = vmatprep.subr.bf16.mxu0 0
      %1779 = vmatpush1.bf16.msra.mxu0 0
      %1780 = vmatprep.subr.bf16.mxu0 0
      %1781 = vmatpush1.bf16.msra.mxu0 0
      %1782 = vmatprep.subr.bf16.mxu0 0
      %1783 = vmatpush1.bf16.msra.mxu0 0
      %1784 = vmatprep.subr.bf16.mxu0 0
      %1785 = vmatpush1.bf16.msra.mxu0 0
      %1786 = vmatprep.subr.bf16.mxu0 0
      %1787 = vmatpush1.bf16.msra.mxu0 0
      %1788 = vmatprep.subr.bf16.mxu0 0
      %1789 = vmatpush1.bf16.msra.mxu0 0
      %1790 = vmatprep.subr.bf16.mxu0 0
      %1791 = vmatpush1.bf16.msra.mxu0 0
      %1792 = vmatprep.mubr.bf16.mxu0 0
      %1793 = vmatmul.mubr.bf16.gmra.mrb[0].mxu0 %v1758
      %v1794 = vpop.f32.mrb[0].mxu0
      %v1795 = vadd.f32 %v1003, %v1794
      %v1796 = vpop.f32.mrb[0].mxu0
      %v1797 = vpop.f32.mrb[0].mxu0
      %v1798 = vadd.f32 %v1006, %v1797
      %v1799 = vpop.f32.mrb[0].mxu0
      %1800 = vdwg.mxu0
      %s1801 = scalar_lea.vmem %s138, 16
      %v1802 = vld [vmem:[%s1801] sm:$0xf]
      %v1803 = vld [vmem:[%s1801 + $0x4] sm:$0xf]
      %v1804 = vld [vmem:[%s1801 + $0x10] sm:$0xf]
      %v1805 = vld [vmem:[%s1801 + $0x14] sm:$0xf]
      %v1806 = vld [vmem:[%s1801 + $0x20] sm:$0xf]
      %v1807 = vld [vmem:[%s1801 + $0x24] sm:$0xf]
      %v1808 = vld [vmem:[%s1801 + $0x30] sm:$0xf]
      %v1809 = vld [vmem:[%s1801 + $0x34] sm:$0xf]
      %v1810 = vld [vmem:[%s1801 + $0x40] sm:$0xf]
      %v1811 = vld [vmem:[%s1801 + $0x44] sm:$0xf]
      %v1812 = vld [vmem:[%s1801 + $0x50] sm:$0xf]
      %v1813 = vld [vmem:[%s1801 + $0x54] sm:$0xf]
      %v1814 = vld [vmem:[%s1801 + $0x60] sm:$0xf]
      %v1815 = vld [vmem:[%s1801 + $0x64] sm:$0xf]
      %v1816 = vld [vmem:[%s1801 + $0x70] sm:$0xf]
      %v1817 = vld [vmem:[%s1801 + $0x74] sm:$0xf]
      %v1818 = vld [vmem:[%s1801 + $0x80] sm:$0xf]
      %v1819 = vld [vmem:[%s1801 + $0x84] sm:$0xf]
      %v1820 = vld [vmem:[%s1801 + $0x90] sm:$0xf]
      %v1821 = vld [vmem:[%s1801 + $0x94] sm:$0xf]
      %v1822 = vld [vmem:[%s1801 + $0xa0] sm:$0xf]
      %v1823 = vld [vmem:[%s1801 + $0xa4] sm:$0xf]
      %v1824 = vld [vmem:[%s1801 + $0xb0] sm:$0xf]
      %v1825 = vld [vmem:[%s1801 + $0xb4] sm:$0xf]
      %v1826 = vld [vmem:[%s1801 + $0xc0] sm:$0xf]
      %v1827 = vld [vmem:[%s1801 + $0xc4] sm:$0xf]
      %v1828 = vld [vmem:[%s1801 + $0xd0] sm:$0xf]
      %v1829 = vld [vmem:[%s1801 + $0xd4] sm:$0xf]
      %v1830 = vld [vmem:[%s1801 + $0xe0] sm:$0xf]
      %v1831 = vld [vmem:[%s1801 + $0xe4] sm:$0xf]
      %v1832 = vld [vmem:[%s1801 + $0xf0] sm:$0xf]
      %v1833 = vld [vmem:[%s1801 + $0xf4] sm:$0xf]
      %s1834 = scalar_lea.vmem %s1, 16
      %v1835 = vld [vmem:[%s1834] sm:$0xf]
      %v1836 = vld [vmem:[%s1834 + $0x4] sm:$0x3]
      %v1839 = vunpack.c.l.b16 %v1802
      %v1840 = vunpack.c.l.b16 %v1803
      %v1841 = vpack.c.b16 %v1840, %v1839
      %v1844 = vunpack.c.l.b16 %v1835
      %v1845 = vunpack.c.l.b16 %v1836
      %v1846 = vpack.c.b16 %v1845, %v1844
      %v1848 = vsel %vm225, %v1841, 0
      %v1851 = vsel %vm229, %v1846, 0
      %1853 = vmatprep.subr.bf16.mxu0 0
      %1854 = vmatpush1.bf16.msra.mxu0 %v1851
      %1855 = vmatprep.subr.bf16.mxu0 0
      %1856 = vmatpush1.bf16.msra.mxu0 0
      %1857 = vmatprep.subr.bf16.mxu0 0
      %1858 = vmatpush1.bf16.msra.mxu0 0
      %1859 = vmatprep.subr.bf16.mxu0 0
      %1860 = vmatpush1.bf16.msra.mxu0 0
      %1861 = vmatprep.subr.bf16.mxu0 0
      %1862 = vmatpush1.bf16.msra.mxu0 0
      %1863 = vmatprep.subr.bf16.mxu0 0
      %1864 = vmatpush1.bf16.msra.mxu0 0
      %1865 = vmatprep.subr.bf16.mxu0 0
      %1866 = vmatpush1.bf16.msra.mxu0 0
      %1867 = vmatprep.subr.bf16.mxu0 0
      %1868 = vmatpush1.bf16.msra.mxu0 0
      %1869 = vmatprep.subr.bf16.mxu0 0
      %1870 = vmatpush1.bf16.msra.mxu0 0
      %1871 = vmatprep.subr.bf16.mxu0 0
      %1872 = vmatpush1.bf16.msra.mxu0 0
      %1873 = vmatprep.subr.bf16.mxu0 0
      %1874 = vmatpush1.bf16.msra.mxu0 0
      %1875 = vmatprep.subr.bf16.mxu0 0
      %1876 = vmatpush1.bf16.msra.mxu0 0
      %1877 = vmatprep.subr.bf16.mxu0 0
      %1878 = vmatpush1.bf16.msra.mxu0 0
      %1879 = vmatprep.subr.bf16.mxu0 0
      %1880 = vmatpush1.bf16.msra.mxu0 0
      %1881 = vmatprep.subr.bf16.mxu0 0
      %1882 = vmatpush1.bf16.msra.mxu0 0
      %1883 = vmatprep.subr.bf16.mxu0 0
      %1884 = vmatpush1.bf16.msra.mxu0 0
      %1885 = vmatprep.mubr.bf16.mxu0 0
      %1886 = vmatmul.mubr.bf16.gmra.mrb[0].mxu0 %v1848
      %v1887 = vpop.f32.mrb[0].mxu0
      %v1888 = vadd.f32 0.0, %v1887
      %v1889 = vpop.f32.mrb[0].mxu0
      %v1890 = vpop.f32.mrb[0].mxu0
      %v1891 = vadd.f32 0.0, %v1890
      %v1892 = vpop.f32.mrb[0].mxu0
      %1893 = vdwg.mxu0
      %v1896 = vunpack.c.l.b16 %v1804
      %v1897 = vunpack.c.l.b16 %v1805
      %v1898 = vpack.c.b16 %v1897, %v1896
      %v1900 = vsel %vm225, %v1898, 0
      %1902 = vmatprep.subr.bf16.mxu0 0
      %1903 = vmatpush1.bf16.msra.mxu0 %v1851
      %1904 = vmatprep.subr.bf16.mxu0 0
      %1905 = vmatpush1.bf16.msra.mxu0 0
      %1906 = vmatprep.subr.bf16.mxu0 0
      %1907 = vmatpush1.bf16.msra.mxu0 0
      %1908 = vmatprep.subr.bf16.mxu0 0
      %1909 = vmatpush1.bf16.msra.mxu0 0
      %1910 = vmatprep.subr.bf16.mxu0 0
      %1911 = vmatpush1.bf16.msra.mxu0 0
      %1912 = vmatprep.subr.bf16.mxu0 0
      %1913 = vmatpush1.bf16.msra.mxu0 0
      %1914 = vmatprep.subr.bf16.mxu0 0
      %1915 = vmatpush1.bf16.msra.mxu0 0
      %1916 = vmatprep.subr.bf16.mxu0 0
      %1917 = vmatpush1.bf16.msra.mxu0 0
      %1918 = vmatprep.subr.bf16.mxu0 0
      %1919 = vmatpush1.bf16.msra.mxu0 0
      %1920 = vmatprep.subr.bf16.mxu0 0
      %1921 = vmatpush1.bf16.msra.mxu0 0
      %1922 = vmatprep.subr.bf16.mxu0 0
      %1923 = vmatpush1.bf16.msra.mxu0 0
      %1924 = vmatprep.subr.bf16.mxu0 0
      %1925 = vmatpush1.bf16.msra.mxu0 0
      %1926 = vmatprep.subr.bf16.mxu0 0
      %1927 = vmatpush1.bf16.msra.mxu0 0
      %1928 = vmatprep.subr.bf16.mxu0 0
      %1929 = vmatpush1.bf16.msra.mxu0 0
      %1930 = vmatprep.subr.bf16.mxu0 0
      %1931 = vmatpush1.bf16.msra.mxu0 0
      %1932 = vmatprep.subr.bf16.mxu0 0
      %1933 = vmatpush1.bf16.msra.mxu0 0
      %1934 = vmatprep.mubr.bf16.mxu0 0
      %1935 = vmatmul.mubr.bf16.gmra.mrb[0].mxu0 %v1900
      %v1936 = vpop.f32.mrb[0].mxu0
      %v1937 = vadd.f32 0.0, %v1936
      %v1938 = vpop.f32.mrb[0].mxu0
      %v1939 = vpop.f32.mrb[0].mxu0
      %v1940 = vadd.f32 0.0, %v1939
      %v1941 = vpop.f32.mrb[0].mxu0
      %1942 = vdwg.mxu0
      %v1945 = vunpack.c.l.b16 %v1806
      %v1946 = vunpack.c.l.b16 %v1807
      %v1947 = vpack.c.b16 %v1946, %v1945
      %v1949 = vsel %vm225, %v1947, 0
      %1951 = vmatprep.subr.bf16.mxu0 0
      %1952 = vmatpush1.bf16.msra.mxu0 %v1851
      %1953 = vmatprep.subr.bf16.mxu0 0
      %1954 = vmatpush1.bf16.msra.mxu0 0
      %1955 = vmatprep.subr.bf16.mxu0 0
      %1956 = vmatpush1.bf16.msra.mxu0 0
      %1957 = vmatprep.subr.bf16.mxu0 0
      %1958 = vmatpush1.bf16.msra.mxu0 0
      %1959 = vmatprep.subr.bf16.mxu0 0
      %1960 = vmatpush1.bf16.msra.mxu0 0
      %1961 = vmatprep.subr.bf16.mxu0 0
      %1962 = vmatpush1.bf16.msra.mxu0 0
      %1963 = vmatprep.subr.bf16.mxu0 0
      %1964 = vmatpush1.bf16.msra.mxu0 0
      %1965 = vmatprep.subr.bf16.mxu0 0
      %1966 = vmatpush1.bf16.msra.mxu0 0
      %1967 = vmatprep.subr.bf16.mxu0 0
      %1968 = vmatpush1.bf16.msra.mxu0 0
      %1969 = vmatprep.subr.bf16.mxu0 0
      %1970 = vmatpush1.bf16.msra.mxu0 0
      %1971 = vmatprep.subr.bf16.mxu0 0
      %1972 = vmatpush1.bf16.msra.mxu0 0
      %1973 = vmatprep.subr.bf16.mxu0 0
      %1974 = vmatpush1.bf16.msra.mxu0 0
      %1975 = vmatprep.subr.bf16.mxu0 0
      %1976 = vmatpush1.bf16.msra.mxu0 0
      %1977 = vmatprep.subr.bf16.mxu0 0
      %1978 = vmatpush1.bf16.msra.mxu0 0
      %1979 = vmatprep.subr.bf16.mxu0 0
      %1980 = vmatpush1.bf16.msra.mxu0 0
      %1981 = vmatprep.subr.bf16.mxu0 0
      %1982 = vmatpush1.bf16.msra.mxu0 0
      %1983 = vmatprep.mubr.bf16.mxu0 0
      %1984 = vmatmul.mubr.bf16.gmra.mrb[0].mxu0 %v1949
      %v1985 = vpop.f32.mrb[0].mxu0
      %v1986 = vadd.f32 0.0, %v1985
      %v1987 = vpop.f32.mrb[0].mxu0
      %v1988 = vpop.f32.mrb[0].mxu0
      %v1989 = vadd.f32 0.0, %v1988
      %v1990 = vpop.f32.mrb[0].mxu0
      %1991 = vdwg.mxu0
      %v1994 = vunpack.c.l.b16 %v1808
      %v1995 = vunpack.c.l.b16 %v1809
      %v1996 = vpack.c.b16 %v1995, %v1994
      %v1998 = vsel %vm225, %v1996, 0
      %2000 = vmatprep.subr.bf16.mxu0 0
      %2001 = vmatpush1.bf16.msra.mxu0 %v1851
      %2002 = vmatprep.subr.bf16.mxu0 0
      %2003 = vmatpush1.bf16.msra.mxu0 0
      %2004 = vmatprep.subr.bf16.mxu0 0
      %2005 = vmatpush1.bf16.msra.mxu0 0
      %2006 = vmatprep.subr.bf16.mxu0 0
      %2007 = vmatpush1.bf16.msra.mxu0 0
      %2008 = vmatprep.subr.bf16.mxu0 0
      %2009 = vmatpush1.bf16.msra.mxu0 0
      %2010 = vmatprep.subr.bf16.mxu0 0
      %2011 = vmatpush1.bf16.msra.mxu0 0
      %2012 = vmatprep.subr.bf16.mxu0 0
      %2013 = vmatpush1.bf16.msra.mxu0 0
      %2014 = vmatprep.subr.bf16.mxu0 0
      %2015 = vmatpush1.bf16.msra.mxu0 0
      %2016 = vmatprep.subr.bf16.mxu0 0
      %2017 = vmatpush1.bf16.msra.mxu0 0
      %2018 = vmatprep.subr.bf16.mxu0 0
      %2019 = vmatpush1.bf16.msra.mxu0 0
      %2020 = vmatprep.subr.bf16.mxu0 0
      %2021 = vmatpush1.bf16.msra.mxu0 0
      %2022 = vmatprep.subr.bf16.mxu0 0
      %2023 = vmatpush1.bf16.msra.mxu0 0
      %2024 = vmatprep.subr.bf16.mxu0 0
      %2025 = vmatpush1.bf16.msra.mxu0 0
      %2026 = vmatprep.subr.bf16.mxu0 0
      %2027 = vmatpush1.bf16.msra.mxu0 0
      %2028 = vmatprep.subr.bf16.mxu0 0
      %2029 = vmatpush1.bf16.msra.mxu0 0
      %2030 = vmatprep.subr.bf16.mxu0 0
      %2031 = vmatpush1.bf16.msra.mxu0 0
      %2032 = vmatprep.mubr.bf16.mxu0 0
      %2033 = vmatmul.mubr.bf16.gmra.mrb[0].mxu0 %v1998
      %v2034 = vpop.f32.mrb[0].mxu0
      %v2035 = vadd.f32 0.0, %v2034
      %v2036 = vpop.f32.mrb[0].mxu0
      %v2037 = vpop.f32.mrb[0].mxu0
      %v2038 = vadd.f32 0.0, %v2037
      %v2039 = vpop.f32.mrb[0].mxu0
      %2040 = vdwg.mxu0
      %v2043 = vunpack.c.l.b16 %v1810
      %v2044 = vunpack.c.l.b16 %v1811
      %v2045 = vpack.c.b16 %v2044, %v2043
      %v2047 = vsel %vm225, %v2045, 0
      %2049 = vmatprep.subr.bf16.mxu0 0
      %2050 = vmatpush1.bf16.msra.mxu0 %v1851
      %2051 = vmatprep.subr.bf16.mxu0 0
      %2052 = vmatpush1.bf16.msra.mxu0 0
      %2053 = vmatprep.subr.bf16.mxu0 0
      %2054 = vmatpush1.bf16.msra.mxu0 0
      %2055 = vmatprep.subr.bf16.mxu0 0
      %2056 = vmatpush1.bf16.msra.mxu0 0
      %2057 = vmatprep.subr.bf16.mxu0 0
      %2058 = vmatpush1.bf16.msra.mxu0 0
      %2059 = vmatprep.subr.bf16.mxu0 0
      %2060 = vmatpush1.bf16.msra.mxu0 0
      %2061 = vmatprep.subr.bf16.mxu0 0
      %2062 = vmatpush1.bf16.msra.mxu0 0
      %2063 = vmatprep.subr.bf16.mxu0 0
      %2064 = vmatpush1.bf16.msra.mxu0 0
      %2065 = vmatprep.subr.bf16.mxu0 0
      %2066 = vmatpush1.bf16.msra.mxu0 0
      %2067 = vmatprep.subr.bf16.mxu0 0
      %2068 = vmatpush1.bf16.msra.mxu0 0
      %2069 = vmatprep.subr.bf16.mxu0 0
      %2070 = vmatpush1.bf16.msra.mxu0 0
      %2071 = vmatprep.subr.bf16.mxu0 0
      %2072 = vmatpush1.bf16.msra.mxu0 0
      %2073 = vmatprep.subr.bf16.mxu0 0
      %2074 = vmatpush1.bf16.msra.mxu0 0
      %2075 = vmatprep.subr.bf16.mxu0 0
      %2076 = vmatpush1.bf16.msra.mxu0 0
      %2077 = vmatprep.subr.bf16.mxu0 0
      %2078 = vmatpush1.bf16.msra.mxu0 0
      %2079 = vmatprep.subr.bf16.mxu0 0
      %2080 = vmatpush1.bf16.msra.mxu0 0
      %2081 = vmatprep.mubr.bf16.mxu0 0
      %2082 = vmatmul.mubr.bf16.gmra.mrb[0].mxu0 %v2047
      %v2083 = vpop.f32.mrb[0].mxu0
      %v2084 = vadd.f32 0.0, %v2083
      %v2085 = vpop.f32.mrb[0].mxu0
      %v2086 = vpop.f32.mrb[0].mxu0
      %v2087 = vadd.f32 0.0, %v2086
      %v2088 = vpop.f32.mrb[0].mxu0
      %2089 = vdwg.mxu0
      %v2092 = vunpack.c.l.b16 %v1812
      %v2093 = vunpack.c.l.b16 %v1813
      %v2094 = vpack.c.b16 %v2093, %v2092
      %v2096 = vsel %vm225, %v2094, 0
      %2098 = vmatprep.subr.bf16.mxu0 0
      %2099 = vmatpush1.bf16.msra.mxu0 %v1851
      %2100 = vmatprep.subr.bf16.mxu0 0
      %2101 = vmatpush1.bf16.msra.mxu0 0
      %2102 = vmatprep.subr.bf16.mxu0 0
      %2103 = vmatpush1.bf16.msra.mxu0 0
      %2104 = vmatprep.subr.bf16.mxu0 0
      %2105 = vmatpush1.bf16.msra.mxu0 0
      %2106 = vmatprep.subr.bf16.mxu0 0
      %2107 = vmatpush1.bf16.msra.mxu0 0
      %2108 = vmatprep.subr.bf16.mxu0 0
      %2109 = vmatpush1.bf16.msra.mxu0 0
      %2110 = vmatprep.subr.bf16.mxu0 0
      %2111 = vmatpush1.bf16.msra.mxu0 0
      %2112 = vmatprep.subr.bf16.mxu0 0
      %2113 = vmatpush1.bf16.msra.mxu0 0
      %2114 = vmatprep.subr.bf16.mxu0 0
      %2115 = vmatpush1.bf16.msra.mxu0 0
      %2116 = vmatprep.subr.bf16.mxu0 0
      %2117 = vmatpush1.bf16.msra.mxu0 0
      %2118 = vmatprep.subr.bf16.mxu0 0
      %2119 = vmatpush1.bf16.msra.mxu0 0
      %2120 = vmatprep.subr.bf16.mxu0 0
      %2121 = vmatpush1.bf16.msra.mxu0 0
      %2122 = vmatprep.subr.bf16.mxu0 0
      %2123 = vmatpush1.bf16.msra.mxu0 0
      %2124 = vmatprep.subr.bf16.mxu0 0
      %2125 = vmatpush1.bf16.msra.mxu0 0
      %2126 = vmatprep.subr.bf16.mxu0 0
      %2127 = vmatpush1.bf16.msra.mxu0 0
      %2128 = vmatprep.subr.bf16.mxu0 0
      %2129 = vmatpush1.bf16.msra.mxu0 0
      %2130 = vmatprep.mubr.bf16.mxu0 0
      %2131 = vmatmul.mubr.bf16.gmra.mrb[0].mxu0 %v2096
      %v2132 = vpop.f32.mrb[0].mxu0
      %v2133 = vadd.f32 0.0, %v2132
      %v2134 = vpop.f32.mrb[0].mxu0
      %v2135 = vpop.f32.mrb[0].mxu0
      %v2136 = vadd.f32 0.0, %v2135
      %v2137 = vpop.f32.mrb[0].mxu0
      %2138 = vdwg.mxu0
      %v2141 = vunpack.c.l.b16 %v1814
      %v2142 = vunpack.c.l.b16 %v1815
      %v2143 = vpack.c.b16 %v2142, %v2141
      %v2145 = vsel %vm225, %v2143, 0
      %2147 = vmatprep.subr.bf16.mxu0 0
      %2148 = vmatpush1.bf16.msra.mxu0 %v1851
      %2149 = vmatprep.subr.bf16.mxu0 0
      %2150 = vmatpush1.bf16.msra.mxu0 0
      %2151 = vmatprep.subr.bf16.mxu0 0
      %2152 = vmatpush1.bf16.msra.mxu0 0
      %2153 = vmatprep.subr.bf16.mxu0 0
      %2154 = vmatpush1.bf16.msra.mxu0 0
      %2155 = vmatprep.subr.bf16.mxu0 0
      %2156 = vmatpush1.bf16.msra.mxu0 0
      %2157 = vmatprep.subr.bf16.mxu0 0
      %2158 = vmatpush1.bf16.msra.mxu0 0
      %2159 = vmatprep.subr.bf16.mxu0 0
      %2160 = vmatpush1.bf16.msra.mxu0 0
      %2161 = vmatprep.subr.bf16.mxu0 0
      %2162 = vmatpush1.bf16.msra.mxu0 0
      %2163 = vmatprep.subr.bf16.mxu0 0
      %2164 = vmatpush1.bf16.msra.mxu0 0
      %2165 = vmatprep.subr.bf16.mxu0 0
      %2166 = vmatpush1.bf16.msra.mxu0 0
      %2167 = vmatprep.subr.bf16.mxu0 0
      %2168 = vmatpush1.bf16.msra.mxu0 0
      %2169 = vmatprep.subr.bf16.mxu0 0
      %2170 = vmatpush1.bf16.msra.mxu0 0
      %2171 = vmatprep.subr.bf16.mxu0 0
      %2172 = vmatpush1.bf16.msra.mxu0 0
      %2173 = vmatprep.subr.bf16.mxu0 0
      %2174 = vmatpush1.bf16.msra.mxu0 0
      %2175 = vmatprep.subr.bf16.mxu0 0
      %2176 = vmatpush1.bf16.msra.mxu0 0
      %2177 = vmatprep.subr.bf16.mxu0 0
      %2178 = vmatpush1.bf16.msra.mxu0 0
      %2179 = vmatprep.mubr.bf16.mxu0 0
      %2180 = vmatmul.mubr.bf16.gmra.mrb[0].mxu0 %v2145
      %v2181 = vpop.f32.mrb[0].mxu0
      %v2182 = vadd.f32 0.0, %v2181
      %v2183 = vpop.f32.mrb[0].mxu0
      %v2184 = vpop.f32.mrb[0].mxu0
      %v2185 = vadd.f32 0.0, %v2184
      %v2186 = vpop.f32.mrb[0].mxu0
      %2187 = vdwg.mxu0
      %v2190 = vunpack.c.l.b16 %v1816
      %v2191 = vunpack.c.l.b16 %v1817
      %v2192 = vpack.c.b16 %v2191, %v2190
      %v2194 = vsel %vm225, %v2192, 0
      %2196 = vmatprep.subr.bf16.mxu0 0
      %2197 = vmatpush1.bf16.msra.mxu0 %v1851
      %2198 = vmatprep.subr.bf16.mxu0 0
      %2199 = vmatpush1.bf16.msra.mxu0 0
      %2200 = vmatprep.subr.bf16.mxu0 0
      %2201 = vmatpush1.bf16.msra.mxu0 0
      %2202 = vmatprep.subr.bf16.mxu0 0
      %2203 = vmatpush1.bf16.msra.mxu0 0
      %2204 = vmatprep.subr.bf16.mxu0 0
      %2205 = vmatpush1.bf16.msra.mxu0 0
      %2206 = vmatprep.subr.bf16.mxu0 0
      %2207 = vmatpush1.bf16.msra.mxu0 0
      %2208 = vmatprep.subr.bf16.mxu0 0
      %2209 = vmatpush1.bf16.msra.mxu0 0
      %2210 = vmatprep.subr.bf16.mxu0 0
      %2211 = vmatpush1.bf16.msra.mxu0 0
      %2212 = vmatprep.subr.bf16.mxu0 0
      %2213 = vmatpush1.bf16.msra.mxu0 0
      %2214 = vmatprep.subr.bf16.mxu0 0
      %2215 = vmatpush1.bf16.msra.mxu0 0
      %2216 = vmatprep.subr.bf16.mxu0 0
      %2217 = vmatpush1.bf16.msra.mxu0 0
      %2218 = vmatprep.subr.bf16.mxu0 0
      %2219 = vmatpush1.bf16.msra.mxu0 0
      %2220 = vmatprep.subr.bf16.mxu0 0
      %2221 = vmatpush1.bf16.msra.mxu0 0
      %2222 = vmatprep.subr.bf16.mxu0 0
      %2223 = vmatpush1.bf16.msra.mxu0 0
      %2224 = vmatprep.subr.bf16.mxu0 0
      %2225 = vmatpush1.bf16.msra.mxu0 0
      %2226 = vmatprep.subr.bf16.mxu0 0
      %2227 = vmatpush1.bf16.msra.mxu0 0
      %2228 = vmatprep.mubr.bf16.mxu0 0
      %2229 = vmatmul.mubr.bf16.gmra.mrb[0].mxu0 %v2194
      %v2230 = vpop.f32.mrb[0].mxu0
      %v2231 = vadd.f32 0.0, %v2230
      %v2232 = vpop.f32.mrb[0].mxu0
      %v2233 = vpop.f32.mrb[0].mxu0
      %v2234 = vadd.f32 0.0, %v2233
      %v2235 = vpop.f32.mrb[0].mxu0
      %2236 = vdwg.mxu0
      %v2239 = vunpack.c.l.b16 %v1818
      %v2240 = vunpack.c.l.b16 %v1819
      %v2241 = vpack.c.b16 %v2240, %v2239
      %v2243 = vsel %vm225, %v2241, 0
      %2245 = vmatprep.subr.bf16.mxu0 0
      %2246 = vmatpush1.bf16.msra.mxu0 %v1851
      %2247 = vmatprep.subr.bf16.mxu0 0
      %2248 = vmatpush1.bf16.msra.mxu0 0
      %2249 = vmatprep.subr.bf16.mxu0 0
      %2250 = vmatpush1.bf16.msra.mxu0 0
      %2251 = vmatprep.subr.bf16.mxu0 0
      %2252 = vmatpush1.bf16.msra.mxu0 0
      %2253 = vmatprep.subr.bf16.mxu0 0
      %2254 = vmatpush1.bf16.msra.mxu0 0
      %2255 = vmatprep.subr.bf16.mxu0 0
      %2256 = vmatpush1.bf16.msra.mxu0 0
      %2257 = vmatprep.subr.bf16.mxu0 0
      %2258 = vmatpush1.bf16.msra.mxu0 0
      %2259 = vmatprep.subr.bf16.mxu0 0
      %2260 = vmatpush1.bf16.msra.mxu0 0
      %2261 = vmatprep.subr.bf16.mxu0 0
      %2262 = vmatpush1.bf16.msra.mxu0 0
      %2263 = vmatprep.subr.bf16.mxu0 0
      %2264 = vmatpush1.bf16.msra.mxu0 0
      %2265 = vmatprep.subr.bf16.mxu0 0
      %2266 = vmatpush1.bf16.msra.mxu0 0
      %2267 = vmatprep.subr.bf16.mxu0 0
      %2268 = vmatpush1.bf16.msra.mxu0 0
      %2269 = vmatprep.subr.bf16.mxu0 0
      %2270 = vmatpush1.bf16.msra.mxu0 0
      %2271 = vmatprep.subr.bf16.mxu0 0
      %2272 = vmatpush1.bf16.msra.mxu0 0
      %2273 = vmatprep.subr.bf16.mxu0 0
      %2274 = vmatpush1.bf16.msra.mxu0 0
      %2275 = vmatprep.subr.bf16.mxu0 0
      %2276 = vmatpush1.bf16.msra.mxu0 0
      %2277 = vmatprep.mubr.bf16.mxu0 0
      %2278 = vmatmul.mubr.bf16.gmra.mrb[0].mxu0 %v2243
      %v2279 = vpop.f32.mrb[0].mxu0
      %v2280 = vadd.f32 0.0, %v2279
      %v2281 = vpop.f32.mrb[0].mxu0
      %v2282 = vpop.f32.mrb[0].mxu0
      %v2283 = vadd.f32 0.0, %v2282
      %v2284 = vpop.f32.mrb[0].mxu0
      %2285 = vdwg.mxu0
      %v2288 = vunpack.c.l.b16 %v1820
      %v2289 = vunpack.c.l.b16 %v1821
      %v2290 = vpack.c.b16 %v2289, %v2288
      %v2292 = vsel %vm225, %v2290, 0
      %2294 = vmatprep.subr.bf16.mxu0 0
      %2295 = vmatpush1.bf16.msra.mxu0 %v1851
      %2296 = vmatprep.subr.bf16.mxu0 0
      %2297 = vmatpush1.bf16.msra.mxu0 0
      %2298 = vmatprep.subr.bf16.mxu0 0
      %2299 = vmatpush1.bf16.msra.mxu0 0
      %2300 = vmatprep.subr.bf16.mxu0 0
      %2301 = vmatpush1.bf16.msra.mxu0 0
      %2302 = vmatprep.subr.bf16.mxu0 0
      %2303 = vmatpush1.bf16.msra.mxu0 0
      %2304 = vmatprep.subr.bf16.mxu0 0
      %2305 = vmatpush1.bf16.msra.mxu0 0
      %2306 = vmatprep.subr.bf16.mxu0 0
      %2307 = vmatpush1.bf16.msra.mxu0 0
      %2308 = vmatprep.subr.bf16.mxu0 0
      %2309 = vmatpush1.bf16.msra.mxu0 0
      %2310 = vmatprep.subr.bf16.mxu0 0
      %2311 = vmatpush1.bf16.msra.mxu0 0
      %2312 = vmatprep.subr.bf16.mxu0 0
      %2313 = vmatpush1.bf16.msra.mxu0 0
      %2314 = vmatprep.subr.bf16.mxu0 0
      %2315 = vmatpush1.bf16.msra.mxu0 0
      %2316 = vmatprep.subr.bf16.mxu0 0
      %2317 = vmatpush1.bf16.msra.mxu0 0
      %2318 = vmatprep.subr.bf16.mxu0 0
      %2319 = vmatpush1.bf16.msra.mxu0 0
      %2320 = vmatprep.subr.bf16.mxu0 0
      %2321 = vmatpush1.bf16.msra.mxu0 0
      %2322 = vmatprep.subr.bf16.mxu0 0
      %2323 = vmatpush1.bf16.msra.mxu0 0
      %2324 = vmatprep.subr.bf16.mxu0 0
      %2325 = vmatpush1.bf16.msra.mxu0 0
      %2326 = vmatprep.mubr.bf16.mxu0 0
      %2327 = vmatmul.mubr.bf16.gmra.mrb[0].mxu0 %v2292
      %v2328 = vpop.f32.mrb[0].mxu0
      %v2329 = vadd.f32 0.0, %v2328
      %v2330 = vpop.f32.mrb[0].mxu0
      %v2331 = vpop.f32.mrb[0].mxu0
      %v2332 = vadd.f32 0.0, %v2331
      %v2333 = vpop.f32.mrb[0].mxu0
      %2334 = vdwg.mxu0
      %v2337 = vunpack.c.l.b16 %v1822
      %v2338 = vunpack.c.l.b16 %v1823
      %v2339 = vpack.c.b16 %v2338, %v2337
      %v2341 = vsel %vm225, %v2339, 0
      %2343 = vmatprep.subr.bf16.mxu0 0
      %2344 = vmatpush1.bf16.msra.mxu0 %v1851
      %2345 = vmatprep.subr.bf16.mxu0 0
      %2346 = vmatpush1.bf16.msra.mxu0 0
      %2347 = vmatprep.subr.bf16.mxu0 0
      %2348 = vmatpush1.bf16.msra.mxu0 0
      %2349 = vmatprep.subr.bf16.mxu0 0
      %2350 = vmatpush1.bf16.msra.mxu0 0
      %2351 = vmatprep.subr.bf16.mxu0 0
      %2352 = vmatpush1.bf16.msra.mxu0 0
      %2353 = vmatprep.subr.bf16.mxu0 0
      %2354 = vmatpush1.bf16.msra.mxu0 0
      %2355 = vmatprep.subr.bf16.mxu0 0
      %2356 = vmatpush1.bf16.msra.mxu0 0
      %2357 = vmatprep.subr.bf16.mxu0 0
      %2358 = vmatpush1.bf16.msra.mxu0 0
      %2359 = vmatprep.subr.bf16.mxu0 0
      %2360 = vmatpush1.bf16.msra.mxu0 0
      %2361 = vmatprep.subr.bf16.mxu0 0
      %2362 = vmatpush1.bf16.msra.mxu0 0
      %2363 = vmatprep.subr.bf16.mxu0 0
      %2364 = vmatpush1.bf16.msra.mxu0 0
      %2365 = vmatprep.subr.bf16.mxu0 0
      %2366 = vmatpush1.bf16.msra.mxu0 0
      %2367 = vmatprep.subr.bf16.mxu0 0
      %2368 = vmatpush1.bf16.msra.mxu0 0
      %2369 = vmatprep.subr.bf16.mxu0 0
      %2370 = vmatpush1.bf16.msra.mxu0 0
      %2371 = vmatprep.subr.bf16.mxu0 0
      %2372 = vmatpush1.bf16.msra.mxu0 0
      %2373 = vmatprep.subr.bf16.mxu0 0
      %2374 = vmatpush1.bf16.msra.mxu0 0
      %2375 = vmatprep.mubr.bf16.mxu0 0
      %2376 = vmatmul.mubr.bf16.gmra.mrb[0].mxu0 %v2341
      %v2377 = vpop.f32.mrb[0].mxu0
      %v2378 = vadd.f32 0.0, %v2377
      %v2379 = vpop.f32.mrb[0].mxu0
      %v2380 = vpop.f32.mrb[0].mxu0
      %v2381 = vadd.f32 0.0, %v2380
      %v2382 = vpop.f32.mrb[0].mxu0
      %2383 = vdwg.mxu0
      %v2386 = vunpack.c.l.b16 %v1824
      %v2387 = vunpack.c.l.b16 %v1825
      %v2388 = vpack.c.b16 %v2387, %v2386
      %v2390 = vsel %vm225, %v2388, 0
      %2392 = vmatprep.subr.bf16.mxu0 0
      %2393 = vmatpush1.bf16.msra.mxu0 %v1851
      %2394 = vmatprep.subr.bf16.mxu0 0
      %2395 = vmatpush1.bf16.msra.mxu0 0
      %2396 = vmatprep.subr.bf16.mxu0 0
      %2397 = vmatpush1.bf16.msra.mxu0 0
      %2398 = vmatprep.subr.bf16.mxu0 0
      %2399 = vmatpush1.bf16.msra.mxu0 0
      %2400 = vmatprep.subr.bf16.mxu0 0
      %2401 = vmatpush1.bf16.msra.mxu0 0
      %2402 = vmatprep.subr.bf16.mxu0 0
      %2403 = vmatpush1.bf16.msra.mxu0 0
      %2404 = vmatprep.subr.bf16.mxu0 0
      %2405 = vmatpush1.bf16.msra.mxu0 0
      %2406 = vmatprep.subr.bf16.mxu0 0
      %2407 = vmatpush1.bf16.msra.mxu0 0
      %2408 = vmatprep.subr.bf16.mxu0 0
      %2409 = vmatpush1.bf16.msra.mxu0 0
      %2410 = vmatprep.subr.bf16.mxu0 0
      %2411 = vmatpush1.bf16.msra.mxu0 0
      %2412 = vmatprep.subr.bf16.mxu0 0
      %2413 = vmatpush1.bf16.msra.mxu0 0
      %2414 = vmatprep.subr.bf16.mxu0 0
      %2415 = vmatpush1.bf16.msra.mxu0 0
      %2416 = vmatprep.subr.bf16.mxu0 0
      %2417 = vmatpush1.bf16.msra.mxu0 0
      %2418 = vmatprep.subr.bf16.mxu0 0
      %2419 = vmatpush1.bf16.msra.mxu0 0
      %2420 = vmatprep.subr.bf16.mxu0 0
      %2421 = vmatpush1.bf16.msra.mxu0 0
      %2422 = vmatprep.subr.bf16.mxu0 0
      %2423 = vmatpush1.bf16.msra.mxu0 0
      %2424 = vmatprep.mubr.bf16.mxu0 0
      %2425 = vmatmul.mubr.bf16.gmra.mrb[0].mxu0 %v2390
      %v2426 = vpop.f32.mrb[0].mxu0
      %v2427 = vadd.f32 0.0, %v2426
      %v2428 = vpop.f32.mrb[0].mxu0
      %v2429 = vpop.f32.mrb[0].mxu0
      %v2430 = vadd.f32 0.0, %v2429
      %v2431 = vpop.f32.mrb[0].mxu0
      %2432 = vdwg.mxu0
      %v2435 = vunpack.c.l.b16 %v1826
      %v2436 = vunpack.c.l.b16 %v1827
      %v2437 = vpack.c.b16 %v2436, %v2435
      %v2439 = vsel %vm225, %v2437, 0
      %2441 = vmatprep.subr.bf16.mxu0 0
      %2442 = vmatpush1.bf16.msra.mxu0 %v1851
      %2443 = vmatprep.subr.bf16.mxu0 0
      %2444 = vmatpush1.bf16.msra.mxu0 0
      %2445 = vmatprep.subr.bf16.mxu0 0
      %2446 = vmatpush1.bf16.msra.mxu0 0
      %2447 = vmatprep.subr.bf16.mxu0 0
      %2448 = vmatpush1.bf16.msra.mxu0 0
      %2449 = vmatprep.subr.bf16.mxu0 0
      %2450 = vmatpush1.bf16.msra.mxu0 0
      %2451 = vmatprep.subr.bf16.mxu0 0
      %2452 = vmatpush1.bf16.msra.mxu0 0
      %2453 = vmatprep.subr.bf16.mxu0 0
      %2454 = vmatpush1.bf16.msra.mxu0 0
      %2455 = vmatprep.subr.bf16.mxu0 0
      %2456 = vmatpush1.bf16.msra.mxu0 0
      %2457 = vmatprep.subr.bf16.mxu0 0
      %2458 = vmatpush1.bf16.msra.mxu0 0
      %2459 = vmatprep.subr.bf16.mxu0 0
      %2460 = vmatpush1.bf16.msra.mxu0 0
      %2461 = vmatprep.subr.bf16.mxu0 0
      %2462 = vmatpush1.bf16.msra.mxu0 0
      %2463 = vmatprep.subr.bf16.mxu0 0
      %2464 = vmatpush1.bf16.msra.mxu0 0
      %2465 = vmatprep.subr.bf16.mxu0 0
      %2466 = vmatpush1.bf16.msra.mxu0 0
      %2467 = vmatprep.subr.bf16.mxu0 0
      %2468 = vmatpush1.bf16.msra.mxu0 0
      %2469 = vmatprep.subr.bf16.mxu0 0
      %2470 = vmatpush1.bf16.msra.mxu0 0
      %2471 = vmatprep.subr.bf16.mxu0 0
      %2472 = vmatpush1.bf16.msra.mxu0 0
      %2473 = vmatprep.mubr.bf16.mxu0 0
      %2474 = vmatmul.mubr.bf16.gmra.mrb[0].mxu0 %v2439
      %v2475 = vpop.f32.mrb[0].mxu0
      %v2476 = vadd.f32 0.0, %v2475
      %v2477 = vpop.f32.mrb[0].mxu0
      %v2478 = vpop.f32.mrb[0].mxu0
      %v2479 = vadd.f32 0.0, %v2478
      %v2480 = vpop.f32.mrb[0].mxu0
      %2481 = vdwg.mxu0
      %v2484 = vunpack.c.l.b16 %v1828
      %v2485 = vunpack.c.l.b16 %v1829
      %v2486 = vpack.c.b16 %v2485, %v2484
      %v2488 = vsel %vm225, %v2486, 0
      %2490 = vmatprep.subr.bf16.mxu0 0
      %2491 = vmatpush1.bf16.msra.mxu0 %v1851
      %2492 = vmatprep.subr.bf16.mxu0 0
      %2493 = vmatpush1.bf16.msra.mxu0 0
      %2494 = vmatprep.subr.bf16.mxu0 0
      %2495 = vmatpush1.bf16.msra.mxu0 0
      %2496 = vmatprep.subr.bf16.mxu0 0
      %2497 = vmatpush1.bf16.msra.mxu0 0
      %2498 = vmatprep.subr.bf16.mxu0 0
      %2499 = vmatpush1.bf16.msra.mxu0 0
      %2500 = vmatprep.subr.bf16.mxu0 0
      %2501 = vmatpush1.bf16.msra.mxu0 0
      %2502 = vmatprep.subr.bf16.mxu0 0
      %2503 = vmatpush1.bf16.msra.mxu0 0
      %2504 = vmatprep.subr.bf16.mxu0 0
      %2505 = vmatpush1.bf16.msra.mxu0 0
      %2506 = vmatprep.subr.bf16.mxu0 0
      %2507 = vmatpush1.bf16.msra.mxu0 0
      %2508 = vmatprep.subr.bf16.mxu0 0
      %2509 = vmatpush1.bf16.msra.mxu0 0
      %2510 = vmatprep.subr.bf16.mxu0 0
      %2511 = vmatpush1.bf16.msra.mxu0 0
      %2512 = vmatprep.subr.bf16.mxu0 0
      %2513 = vmatpush1.bf16.msra.mxu0 0
      %2514 = vmatprep.subr.bf16.mxu0 0
      %2515 = vmatpush1.bf16.msra.mxu0 0
      %2516 = vmatprep.subr.bf16.mxu0 0
      %2517 = vmatpush1.bf16.msra.mxu0 0
      %2518 = vmatprep.subr.bf16.mxu0 0
      %2519 = vmatpush1.bf16.msra.mxu0 0
      %2520 = vmatprep.subr.bf16.mxu0 0
      %2521 = vmatpush1.bf16.msra.mxu0 0
      %2522 = vmatprep.mubr.bf16.mxu0 0
      %2523 = vmatmul.mubr.bf16.gmra.mrb[0].mxu0 %v2488
      %v2524 = vpop.f32.mrb[0].mxu0
      %v2525 = vadd.f32 0.0, %v2524
      %v2526 = vpop.f32.mrb[0].mxu0
      %v2527 = vpop.f32.mrb[0].mxu0
      %v2528 = vadd.f32 0.0, %v2527
      %v2529 = vpop.f32.mrb[0].mxu0
      %2530 = vdwg.mxu0
      %v2533 = vunpack.c.l.b16 %v1830
      %v2534 = vunpack.c.l.b16 %v1831
      %v2535 = vpack.c.b16 %v2534, %v2533
      %v2537 = vsel %vm225, %v2535, 0
      %2539 = vmatprep.subr.bf16.mxu0 0
      %2540 = vmatpush1.bf16.msra.mxu0 %v1851
      %2541 = vmatprep.subr.bf16.mxu0 0
      %2542 = vmatpush1.bf16.msra.mxu0 0
      %2543 = vmatprep.subr.bf16.mxu0 0
      %2544 = vmatpush1.bf16.msra.mxu0 0
      %2545 = vmatprep.subr.bf16.mxu0 0
      %2546 = vmatpush1.bf16.msra.mxu0 0
      %2547 = vmatprep.subr.bf16.mxu0 0
      %2548 = vmatpush1.bf16.msra.mxu0 0
      %2549 = vmatprep.subr.bf16.mxu0 0
      %2550 = vmatpush1.bf16.msra.mxu0 0
      %2551 = vmatprep.subr.bf16.mxu0 0
      %2552 = vmatpush1.bf16.msra.mxu0 0
      %2553 = vmatprep.subr.bf16.mxu0 0
      %2554 = vmatpush1.bf16.msra.mxu0 0
      %2555 = vmatprep.subr.bf16.mxu0 0
      %2556 = vmatpush1.bf16.msra.mxu0 0
      %2557 = vmatprep.subr.bf16.mxu0 0
      %2558 = vmatpush1.bf16.msra.mxu0 0
      %2559 = vmatprep.subr.bf16.mxu0 0
      %2560 = vmatpush1.bf16.msra.mxu0 0
      %2561 = vmatprep.subr.bf16.mxu0 0
      %2562 = vmatpush1.bf16.msra.mxu0 0
      %2563 = vmatprep.subr.bf16.mxu0 0
      %2564 = vmatpush1.bf16.msra.mxu0 0
      %2565 = vmatprep.subr.bf16.mxu0 0
      %2566 = vmatpush1.bf16.msra.mxu0 0
      %2567 = vmatprep.subr.bf16.mxu0 0
      %2568 = vmatpush1.bf16.msra.mxu0 0
      %2569 = vmatprep.subr.bf16.mxu0 0
      %2570 = vmatpush1.bf16.msra.mxu0 0
      %2571 = vmatprep.mubr.bf16.mxu0 0
      %2572 = vmatmul.mubr.bf16.gmra.mrb[0].mxu0 %v2537
      %v2573 = vpop.f32.mrb[0].mxu0
      %v2574 = vadd.f32 0.0, %v2573
      %v2575 = vpop.f32.mrb[0].mxu0
      %v2576 = vpop.f32.mrb[0].mxu0
      %v2577 = vadd.f32 0.0, %v2576
      %v2578 = vpop.f32.mrb[0].mxu0
      %2579 = vdwg.mxu0
      %v2582 = vunpack.c.l.b16 %v1832
      %v2583 = vunpack.c.l.b16 %v1833
      %v2584 = vpack.c.b16 %v2583, %v2582
      %v2586 = vsel %vm225, %v2584, 0
      %2588 = vmatprep.subr.bf16.mxu0 0
      %2589 = vmatpush1.bf16.msra.mxu0 %v1851
      %2590 = vmatprep.subr.bf16.mxu0 0
      %2591 = vmatpush1.bf16.msra.mxu0 0
      %2592 = vmatprep.subr.bf16.mxu0 0
      %2593 = vmatpush1.bf16.msra.mxu0 0
      %2594 = vmatprep.subr.bf16.mxu0 0
      %2595 = vmatpush1.bf16.msra.mxu0 0
      %2596 = vmatprep.subr.bf16.mxu0 0
      %2597 = vmatpush1.bf16.msra.mxu0 0
      %2598 = vmatprep.subr.bf16.mxu0 0
      %2599 = vmatpush1.bf16.msra.mxu0 0
      %2600 = vmatprep.subr.bf16.mxu0 0
      %2601 = vmatpush1.bf16.msra.mxu0 0
      %2602 = vmatprep.subr.bf16.mxu0 0
      %2603 = vmatpush1.bf16.msra.mxu0 0
      %2604 = vmatprep.subr.bf16.mxu0 0
      %2605 = vmatpush1.bf16.msra.mxu0 0
      %2606 = vmatprep.subr.bf16.mxu0 0
      %2607 = vmatpush1.bf16.msra.mxu0 0
      %2608 = vmatprep.subr.bf16.mxu0 0
      %2609 = vmatpush1.bf16.msra.mxu0 0
      %2610 = vmatprep.subr.bf16.mxu0 0
      %2611 = vmatpush1.bf16.msra.mxu0 0
      %2612 = vmatprep.subr.bf16.mxu0 0
      %2613 = vmatpush1.bf16.msra.mxu0 0
      %2614 = vmatprep.subr.bf16.mxu0 0
      %2615 = vmatpush1.bf16.msra.mxu0 0
      %2616 = vmatprep.subr.bf16.mxu0 0
      %2617 = vmatpush1.bf16.msra.mxu0 0
      %2618 = vmatprep.subr.bf16.mxu0 0
      %2619 = vmatpush1.bf16.msra.mxu0 0
      %2620 = vmatprep.mubr.bf16.mxu0 0
      %2621 = vmatmul.mubr.bf16.gmra.mrb[0].mxu0 %v2586
      %v2622 = vpop.f32.mrb[0].mxu0
      %v2623 = vadd.f32 0.0, %v2622
      %v2624 = vpop.f32.mrb[0].mxu0
      %v2625 = vpop.f32.mrb[0].mxu0
      %v2626 = vadd.f32 0.0, %v2625
      %v2627 = vpop.f32.mrb[0].mxu0
      %2628 = vdwg.mxu0
      %v2629 = vadd.f32 %v1060, %v1888
      %v2630 = vadd.f32 %v1063, %v1891
      %v2631 = vadd.f32 %v1109, %v1937
      %v2632 = vadd.f32 %v1112, %v1940
      %v2633 = vadd.f32 %v1158, %v1986
      %v2634 = vadd.f32 %v1161, %v1989
      %v2635 = vadd.f32 %v1207, %v2035
      %v2636 = vadd.f32 %v1210, %v2038
      %v2637 = vadd.f32 %v1256, %v2084
      %v2638 = vadd.f32 %v1259, %v2087
      %v2639 = vadd.f32 %v1305, %v2133
      %v2640 = vadd.f32 %v1308, %v2136
      %v2641 = vadd.f32 %v1354, %v2182
      %v2642 = vadd.f32 %v1357, %v2185
      %v2643 = vadd.f32 %v1403, %v2231
      %v2644 = vadd.f32 %v1406, %v2234
      %v2645 = vadd.f32 %v1452, %v2280
      %v2646 = vadd.f32 %v1455, %v2283
      %v2647 = vadd.f32 %v1501, %v2329
      %v2648 = vadd.f32 %v1504, %v2332
      %v2649 = vadd.f32 %v1550, %v2378
      %v2650 = vadd.f32 %v1553, %v2381
      %v2651 = vadd.f32 %v1599, %v2427
      %v2652 = vadd.f32 %v1602, %v2430
      %v2653 = vadd.f32 %v1648, %v2476
      %v2654 = vadd.f32 %v1651, %v2479
      %v2655 = vadd.f32 %v1697, %v2525
      %v2656 = vadd.f32 %v1700, %v2528
      %v2657 = vadd.f32 %v1746, %v2574
      %v2658 = vadd.f32 %v1749, %v2577
      %v2659 = vadd.f32 %v1795, %v2623
      %v2660 = vadd.f32 %v1798, %v2626
      %s2661 = scalar_lea.vmem %s138, 24
      %v2662 = vld [vmem:[%s2661] sm:$0xf]
      %v2663 = vld [vmem:[%s2661 + $0x4] sm:$0xf]
      %v2664 = vld [vmem:[%s2661 + $0x10] sm:$0xf]
      %v2665 = vld [vmem:[%s2661 + $0x14] sm:$0xf]
      %v2666 = vld [vmem:[%s2661 + $0x20] sm:$0xf]
      %v2667 = vld [vmem:[%s2661 + $0x24] sm:$0xf]
      %v2668 = vld [vmem:[%s2661 + $0x30] sm:$0xf]
      %v2669 = vld [vmem:[%s2661 + $0x34] sm:$0xf]
      %v2670 = vld [vmem:[%s2661 + $0x40] sm:$0xf]
      %v2671 = vld [vmem:[%s2661 + $0x44] sm:$0xf]
      %v2672 = vld [vmem:[%s2661 + $0x50] sm:$0xf]
      %v2673 = vld [vmem:[%s2661 + $0x54] sm:$0xf]
      %v2674 = vld [vmem:[%s2661 + $0x60] sm:$0xf]
      %v2675 = vld [vmem:[%s2661 + $0x64] sm:$0xf]
      %v2676 = vld [vmem:[%s2661 + $0x70] sm:$0xf]
      %v2677 = vld [vmem:[%s2661 + $0x74] sm:$0xf]
      %v2678 = vld [vmem:[%s2661 + $0x80] sm:$0xf]
      %v2679 = vld [vmem:[%s2661 + $0x84] sm:$0xf]
      %v2680 = vld [vmem:[%s2661 + $0x90] sm:$0xf]
      %v2681 = vld [vmem:[%s2661 + $0x94] sm:$0xf]
      %v2682 = vld [vmem:[%s2661 + $0xa0] sm:$0xf]
      %v2683 = vld [vmem:[%s2661 + $0xa4] sm:$0xf]
      %v2684 = vld [vmem:[%s2661 + $0xb0] sm:$0xf]
      %v2685 = vld [vmem:[%s2661 + $0xb4] sm:$0xf]
      %v2686 = vld [vmem:[%s2661 + $0xc0] sm:$0xf]
      %v2687 = vld [vmem:[%s2661 + $0xc4] sm:$0xf]
      %v2688 = vld [vmem:[%s2661 + $0xd0] sm:$0xf]
      %v2689 = vld [vmem:[%s2661 + $0xd4] sm:$0xf]
      %v2690 = vld [vmem:[%s2661 + $0xe0] sm:$0xf]
      %v2691 = vld [vmem:[%s2661 + $0xe4] sm:$0xf]
      %v2692 = vld [vmem:[%s2661 + $0xf0] sm:$0xf]
      %v2693 = vld [vmem:[%s2661 + $0xf4] sm:$0xf]
      %s2694 = scalar_lea.vmem %s1, 24
      %v2695 = vld [vmem:[%s2694] sm:$0xf]
      %v2696 = vld [vmem:[%s2694 + $0x4] sm:$0x3]
      %v2699 = vunpack.c.l.b16 %v2662
      %v2700 = vunpack.c.l.b16 %v2663
      %v2701 = vpack.c.b16 %v2700, %v2699
      %v2704 = vunpack.c.l.b16 %v2695
      %v2705 = vunpack.c.l.b16 %v2696
      %v2706 = vpack.c.b16 %v2705, %v2704
      %v2708 = vsel %vm225, %v2701, 0
      %v2711 = vsel %vm229, %v2706, 0
      %2713 = vmatprep.subr.bf16.mxu0 0
      %2714 = vmatpush1.bf16.msra.mxu0 %v2711
      %2715 = vmatprep.subr.bf16.mxu0 0
      %2716 = vmatpush1.bf16.msra.mxu0 0
      %2717 = vmatprep.subr.bf16.mxu0 0
      %2718 = vmatpush1.bf16.msra.mxu0 0
      %2719 = vmatprep.subr.bf16.mxu0 0
      %2720 = vmatpush1.bf16.msra.mxu0 0
      %2721 = vmatprep.subr.bf16.mxu0 0
      %2722 = vmatpush1.bf16.msra.mxu0 0
      %2723 = vmatprep.subr.bf16.mxu0 0
      %2724 = vmatpush1.bf16.msra.mxu0 0
      %2725 = vmatprep.subr.bf16.mxu0 0
      %2726 = vmatpush1.bf16.msra.mxu0 0
      %2727 = vmatprep.subr.bf16.mxu0 0
      %2728 = vmatpush1.bf16.msra.mxu0 0
      %2729 = vmatprep.subr.bf16.mxu0 0
      %2730 = vmatpush1.bf16.msra.mxu0 0
      %2731 = vmatprep.subr.bf16.mxu0 0
      %2732 = vmatpush1.bf16.msra.mxu0 0
      %2733 = vmatprep.subr.bf16.mxu0 0
      %2734 = vmatpush1.bf16.msra.mxu0 0
      %2735 = vmatprep.subr.bf16.mxu0 0
      %2736 = vmatpush1.bf16.msra.mxu0 0
      %2737 = vmatprep.subr.bf16.mxu0 0
      %2738 = vmatpush1.bf16.msra.mxu0 0
      %2739 = vmatprep.subr.bf16.mxu0 0
      %2740 = vmatpush1.bf16.msra.mxu0 0
      %2741 = vmatprep.subr.bf16.mxu0 0
      %2742 = vmatpush1.bf16.msra.mxu0 0
      %2743 = vmatprep.subr.bf16.mxu0 0
      %2744 = vmatpush1.bf16.msra.mxu0 0
      %2745 = vmatprep.mubr.bf16.mxu0 0
      %2746 = vmatmul.mubr.bf16.gmra.mrb[0].mxu0 %v2708
      %v2747 = vpop.f32.mrb[0].mxu0
      %v2748 = vadd.f32 0.0, %v2747
      %v2749 = vpop.f32.mrb[0].mxu0
      %v2750 = vpop.f32.mrb[0].mxu0
      %v2751 = vadd.f32 0.0, %v2750
      %v2752 = vpop.f32.mrb[0].mxu0
      %2753 = vdwg.mxu0
      %v2756 = vunpack.c.l.b16 %v2664
      %v2757 = vunpack.c.l.b16 %v2665
      %v2758 = vpack.c.b16 %v2757, %v2756
      %v2760 = vsel %vm225, %v2758, 0
      %2762 = vmatprep.subr.bf16.mxu0 0
      %2763 = vmatpush1.bf16.msra.mxu0 %v2711
      %2764 = vmatprep.subr.bf16.mxu0 0
      %2765 = vmatpush1.bf16.msra.mxu0 0
      %2766 = vmatprep.subr.bf16.mxu0 0
      %2767 = vmatpush1.bf16.msra.mxu0 0
      %2768 = vmatprep.subr.bf16.mxu0 0
      %2769 = vmatpush1.bf16.msra.mxu0 0
      %2770 = vmatprep.subr.bf16.mxu0 0
      %2771 = vmatpush1.bf16.msra.mxu0 0
      %2772 = vmatprep.subr.bf16.mxu0 0
      %2773 = vmatpush1.bf16.msra.mxu0 0
      %2774 = vmatprep.subr.bf16.mxu0 0
      %2775 = vmatpush1.bf16.msra.mxu0 0
      %2776 = vmatprep.subr.bf16.mxu0 0
      %2777 = vmatpush1.bf16.msra.mxu0 0
      %2778 = vmatprep.subr.bf16.mxu0 0
      %2779 = vmatpush1.bf16.msra.mxu0 0
      %2780 = vmatprep.subr.bf16.mxu0 0
      %2781 = vmatpush1.bf16.msra.mxu0 0
      %2782 = vmatprep.subr.bf16.mxu0 0
      %2783 = vmatpush1.bf16.msra.mxu0 0
      %2784 = vmatprep.subr.bf16.mxu0 0
      %2785 = vmatpush1.bf16.msra.mxu0 0
      %2786 = vmatprep.subr.bf16.mxu0 0
      %2787 = vmatpush1.bf16.msra.mxu0 0
      %2788 = vmatprep.subr.bf16.mxu0 0
      %2789 = vmatpush1.bf16.msra.mxu0 0
      %2790 = vmatprep.subr.bf16.mxu0 0
      %2791 = vmatpush1.bf16.msra.mxu0 0
      %2792 = vmatprep.subr.bf16.mxu0 0
      %2793 = vmatpush1.bf16.msra.mxu0 0
      %2794 = vmatprep.mubr.bf16.mxu0 0
      %2795 = vmatmul.mubr.bf16.gmra.mrb[0].mxu0 %v2760
      %v2796 = vpop.f32.mrb[0].mxu0
      %v2797 = vadd.f32 0.0, %v2796
      %v2798 = vpop.f32.mrb[0].mxu0
      %v2799 = vpop.f32.mrb[0].mxu0
      %v2800 = vadd.f32 0.0, %v2799
      %v2801 = vpop.f32.mrb[0].mxu0
      %2802 = vdwg.mxu0
      %v2805 = vunpack.c.l.b16 %v2666
      %v2806 = vunpack.c.l.b16 %v2667
      %v2807 = vpack.c.b16 %v2806, %v2805
      %v2809 = vsel %vm225, %v2807, 0
      %2811 = vmatprep.subr.bf16.mxu0 0
      %2812 = vmatpush1.bf16.msra.mxu0 %v2711
      %2813 = vmatprep.subr.bf16.mxu0 0
      %2814 = vmatpush1.bf16.msra.mxu0 0
      %2815 = vmatprep.subr.bf16.mxu0 0
      %2816 = vmatpush1.bf16.msra.mxu0 0
      %2817 = vmatprep.subr.bf16.mxu0 0
      %2818 = vmatpush1.bf16.msra.mxu0 0
      %2819 = vmatprep.subr.bf16.mxu0 0
      %2820 = vmatpush1.bf16.msra.mxu0 0
      %2821 = vmatprep.subr.bf16.mxu0 0
      %2822 = vmatpush1.bf16.msra.mxu0 0
      %2823 = vmatprep.subr.bf16.mxu0 0
      %2824 = vmatpush1.bf16.msra.mxu0 0
      %2825 = vmatprep.subr.bf16.mxu0 0
      %2826 = vmatpush1.bf16.msra.mxu0 0
      %2827 = vmatprep.subr.bf16.mxu0 0
      %2828 = vmatpush1.bf16.msra.mxu0 0
      %2829 = vmatprep.subr.bf16.mxu0 0
      %2830 = vmatpush1.bf16.msra.mxu0 0
      %2831 = vmatprep.subr.bf16.mxu0 0
      %2832 = vmatpush1.bf16.msra.mxu0 0
      %2833 = vmatprep.subr.bf16.mxu0 0
      %2834 = vmatpush1.bf16.msra.mxu0 0
      %2835 = vmatprep.subr.bf16.mxu0 0
      %2836 = vmatpush1.bf16.msra.mxu0 0
      %2837 = vmatprep.subr.bf16.mxu0 0
      %2838 = vmatpush1.bf16.msra.mxu0 0
      %2839 = vmatprep.subr.bf16.mxu0 0
      %2840 = vmatpush1.bf16.msra.mxu0 0
      %2841 = vmatprep.subr.bf16.mxu0 0
      %2842 = vmatpush1.bf16.msra.mxu0 0
      %2843 = vmatprep.mubr.bf16.mxu0 0
      %2844 = vmatmul.mubr.bf16.gmra.mrb[0].mxu0 %v2809
      %v2845 = vpop.f32.mrb[0].mxu0
      %v2846 = vadd.f32 0.0, %v2845
      %v2847 = vpop.f32.mrb[0].mxu0
      %v2848 = vpop.f32.mrb[0].mxu0
      %v2849 = vadd.f32 0.0, %v2848
      %v2850 = vpop.f32.mrb[0].mxu0
      %2851 = vdwg.mxu0
      %v2854 = vunpack.c.l.b16 %v2668
      %v2855 = vunpack.c.l.b16 %v2669
      %v2856 = vpack.c.b16 %v2855, %v2854
      %v2858 = vsel %vm225, %v2856, 0
      %2860 = vmatprep.subr.bf16.mxu0 0
      %2861 = vmatpush1.bf16.msra.mxu0 %v2711
      %2862 = vmatprep.subr.bf16.mxu0 0
      %2863 = vmatpush1.bf16.msra.mxu0 0
      %2864 = vmatprep.subr.bf16.mxu0 0
      %2865 = vmatpush1.bf16.msra.mxu0 0
      %2866 = vmatprep.subr.bf16.mxu0 0
      %2867 = vmatpush1.bf16.msra.mxu0 0
      %2868 = vmatprep.subr.bf16.mxu0 0
      %2869 = vmatpush1.bf16.msra.mxu0 0
      %2870 = vmatprep.subr.bf16.mxu0 0
      %2871 = vmatpush1.bf16.msra.mxu0 0
      %2872 = vmatprep.subr.bf16.mxu0 0
      %2873 = vmatpush1.bf16.msra.mxu0 0
      %2874 = vmatprep.subr.bf16.mxu0 0
      %2875 = vmatpush1.bf16.msra.mxu0 0
      %2876 = vmatprep.subr.bf16.mxu0 0
      %2877 = vmatpush1.bf16.msra.mxu0 0
      %2878 = vmatprep.subr.bf16.mxu0 0
      %2879 = vmatpush1.bf16.msra.mxu0 0
      %2880 = vmatprep.subr.bf16.mxu0 0
      %2881 = vmatpush1.bf16.msra.mxu0 0
      %2882 = vmatprep.subr.bf16.mxu0 0
      %2883 = vmatpush1.bf16.msra.mxu0 0
      %2884 = vmatprep.subr.bf16.mxu0 0
      %2885 = vmatpush1.bf16.msra.mxu0 0
      %2886 = vmatprep.subr.bf16.mxu0 0
      %2887 = vmatpush1.bf16.msra.mxu0 0
      %2888 = vmatprep.subr.bf16.mxu0 0
      %2889 = vmatpush1.bf16.msra.mxu0 0
      %2890 = vmatprep.subr.bf16.mxu0 0
      %2891 = vmatpush1.bf16.msra.mxu0 0
      %2892 = vmatprep.mubr.bf16.mxu0 0
      %2893 = vmatmul.mubr.bf16.gmra.mrb[0].mxu0 %v2858
      %v2894 = vpop.f32.mrb[0].mxu0
      %v2895 = vadd.f32 0.0, %v2894
      %v2896 = vpop.f32.mrb[0].mxu0
      %v2897 = vpop.f32.mrb[0].mxu0
      %v2898 = vadd.f32 0.0, %v2897
      %v2899 = vpop.f32.mrb[0].mxu0
      %2900 = vdwg.mxu0
      %v2903 = vunpack.c.l.b16 %v2670
      %v2904 = vunpack.c.l.b16 %v2671
      %v2905 = vpack.c.b16 %v2904, %v2903
      %v2907 = vsel %vm225, %v2905, 0
      %2909 = vmatprep.subr.bf16.mxu0 0
      %2910 = vmatpush1.bf16.msra.mxu0 %v2711
      %2911 = vmatprep.subr.bf16.mxu0 0
      %2912 = vmatpush1.bf16.msra.mxu0 0
      %2913 = vmatprep.subr.bf16.mxu0 0
      %2914 = vmatpush1.bf16.msra.mxu0 0
      %2915 = vmatprep.subr.bf16.mxu0 0
      %2916 = vmatpush1.bf16.msra.mxu0 0
      %2917 = vmatprep.subr.bf16.mxu0 0
      %2918 = vmatpush1.bf16.msra.mxu0 0
      %2919 = vmatprep.subr.bf16.mxu0 0
      %2920 = vmatpush1.bf16.msra.mxu0 0
      %2921 = vmatprep.subr.bf16.mxu0 0
      %2922 = vmatpush1.bf16.msra.mxu0 0
      %2923 = vmatprep.subr.bf16.mxu0 0
      %2924 = vmatpush1.bf16.msra.mxu0 0
      %2925 = vmatprep.subr.bf16.mxu0 0
      %2926 = vmatpush1.bf16.msra.mxu0 0
      %2927 = vmatprep.subr.bf16.mxu0 0
      %2928 = vmatpush1.bf16.msra.mxu0 0
      %2929 = vmatprep.subr.bf16.mxu0 0
      %2930 = vmatpush1.bf16.msra.mxu0 0
      %2931 = vmatprep.subr.bf16.mxu0 0
      %2932 = vmatpush1.bf16.msra.mxu0 0
      %2933 = vmatprep.subr.bf16.mxu0 0
      %2934 = vmatpush1.bf16.msra.mxu0 0
      %2935 = vmatprep.subr.bf16.mxu0 0
      %2936 = vmatpush1.bf16.msra.mxu0 0
      %2937 = vmatprep.subr.bf16.mxu0 0
      %2938 = vmatpush1.bf16.msra.mxu0 0
      %2939 = vmatprep.subr.bf16.mxu0 0
      %2940 = vmatpush1.bf16.msra.mxu0 0
      %2941 = vmatprep.mubr.bf16.mxu0 0
      %2942 = vmatmul.mubr.bf16.gmra.mrb[0].mxu0 %v2907
      %v2943 = vpop.f32.mrb[0].mxu0
      %v2944 = vadd.f32 0.0, %v2943
      %v2945 = vpop.f32.mrb[0].mxu0
      %v2946 = vpop.f32.mrb[0].mxu0
      %v2947 = vadd.f32 0.0, %v2946
      %v2948 = vpop.f32.mrb[0].mxu0
      %2949 = vdwg.mxu0
      %v2952 = vunpack.c.l.b16 %v2672
      %v2953 = vunpack.c.l.b16 %v2673
      %v2954 = vpack.c.b16 %v2953, %v2952
      %v2956 = vsel %vm225, %v2954, 0
      %2958 = vmatprep.subr.bf16.mxu0 0
      %2959 = vmatpush1.bf16.msra.mxu0 %v2711
      %2960 = vmatprep.subr.bf16.mxu0 0
      %2961 = vmatpush1.bf16.msra.mxu0 0
      %2962 = vmatprep.subr.bf16.mxu0 0
      %2963 = vmatpush1.bf16.msra.mxu0 0
      %2964 = vmatprep.subr.bf16.mxu0 0
      %2965 = vmatpush1.bf16.msra.mxu0 0
      %2966 = vmatprep.subr.bf16.mxu0 0
      %2967 = vmatpush1.bf16.msra.mxu0 0
      %2968 = vmatprep.subr.bf16.mxu0 0
      %2969 = vmatpush1.bf16.msra.mxu0 0
      %2970 = vmatprep.subr.bf16.mxu0 0
      %2971 = vmatpush1.bf16.msra.mxu0 0
      %2972 = vmatprep.subr.bf16.mxu0 0
      %2973 = vmatpush1.bf16.msra.mxu0 0
      %2974 = vmatprep.subr.bf16.mxu0 0
      %2975 = vmatpush1.bf16.msra.mxu0 0
      %2976 = vmatprep.subr.bf16.mxu0 0
      %2977 = vmatpush1.bf16.msra.mxu0 0
      %2978 = vmatprep.subr.bf16.mxu0 0
      %2979 = vmatpush1.bf16.msra.mxu0 0
      %2980 = vmatprep.subr.bf16.mxu0 0
      %2981 = vmatpush1.bf16.msra.mxu0 0
      %2982 = vmatprep.subr.bf16.mxu0 0
      %2983 = vmatpush1.bf16.msra.mxu0 0
      %2984 = vmatprep.subr.bf16.mxu0 0
      %2985 = vmatpush1.bf16.msra.mxu0 0
      %2986 = vmatprep.subr.bf16.mxu0 0
      %2987 = vmatpush1.bf16.msra.mxu0 0
      %2988 = vmatprep.subr.bf16.mxu0 0
      %2989 = vmatpush1.bf16.msra.mxu0 0
      %2990 = vmatprep.mubr.bf16.mxu0 0
      %2991 = vmatmul.mubr.bf16.gmra.mrb[0].mxu0 %v2956
      %v2992 = vpop.f32.mrb[0].mxu0
      %v2993 = vadd.f32 0.0, %v2992
      %v2994 = vpop.f32.mrb[0].mxu0
      %v2995 = vpop.f32.mrb[0].mxu0
      %v2996 = vadd.f32 0.0, %v2995
      %v2997 = vpop.f32.mrb[0].mxu0
      %2998 = vdwg.mxu0
      %v3001 = vunpack.c.l.b16 %v2674
      %v3002 = vunpack.c.l.b16 %v2675
      %v3003 = vpack.c.b16 %v3002, %v3001
      %v3005 = vsel %vm225, %v3003, 0
      %3007 = vmatprep.subr.bf16.mxu0 0
      %3008 = vmatpush1.bf16.msra.mxu0 %v2711
      %3009 = vmatprep.subr.bf16.mxu0 0
      %3010 = vmatpush1.bf16.msra.mxu0 0
      %3011 = vmatprep.subr.bf16.mxu0 0
      %3012 = vmatpush1.bf16.msra.mxu0 0
      %3013 = vmatprep.subr.bf16.mxu0 0
      %3014 = vmatpush1.bf16.msra.mxu0 0
      %3015 = vmatprep.subr.bf16.mxu0 0
      %3016 = vmatpush1.bf16.msra.mxu0 0
      %3017 = vmatprep.subr.bf16.mxu0 0
      %3018 = vmatpush1.bf16.msra.mxu0 0
      %3019 = vmatprep.subr.bf16.mxu0 0
      %3020 = vmatpush1.bf16.msra.mxu0 0
      %3021 = vmatprep.subr.bf16.mxu0 0
      %3022 = vmatpush1.bf16.msra.mxu0 0
      %3023 = vmatprep.subr.bf16.mxu0 0
      %3024 = vmatpush1.bf16.msra.mxu0 0
      %3025 = vmatprep.subr.bf16.mxu0 0
      %3026 = vmatpush1.bf16.msra.mxu0 0
      %3027 = vmatprep.subr.bf16.mxu0 0
      %3028 = vmatpush1.bf16.msra.mxu0 0
      %3029 = vmatprep.subr.bf16.mxu0 0
      %3030 = vmatpush1.bf16.msra.mxu0 0
      %3031 = vmatprep.subr.bf16.mxu0 0
      %3032 = vmatpush1.bf16.msra.mxu0 0
      %3033 = vmatprep.subr.bf16.mxu0 0
      %3034 = vmatpush1.bf16.msra.mxu0 0
      %3035 = vmatprep.subr.bf16.mxu0 0
      %3036 = vmatpush1.bf16.msra.mxu0 0
      %3037 = vmatprep.subr.bf16.mxu0 0
      %3038 = vmatpush1.bf16.msra.mxu0 0
      %3039 = vmatprep.mubr.bf16.mxu0 0
      %3040 = vmatmul.mubr.bf16.gmra.mrb[0].mxu0 %v3005
      %v3041 = vpop.f32.mrb[0].mxu0
      %v3042 = vadd.f32 0.0, %v3041
      %v3043 = vpop.f32.mrb[0].mxu0
      %v3044 = vpop.f32.mrb[0].mxu0
      %v3045 = vadd.f32 0.0, %v3044
      %v3046 = vpop.f32.mrb[0].mxu0
      %3047 = vdwg.mxu0
      %v3050 = vunpack.c.l.b16 %v2676
      %v3051 = vunpack.c.l.b16 %v2677
      %v3052 = vpack.c.b16 %v3051, %v3050
      %v3054 = vsel %vm225, %v3052, 0
      %3056 = vmatprep.subr.bf16.mxu0 0
      %3057 = vmatpush1.bf16.msra.mxu0 %v2711
      %3058 = vmatprep.subr.bf16.mxu0 0
      %3059 = vmatpush1.bf16.msra.mxu0 0
      %3060 = vmatprep.subr.bf16.mxu0 0
      %3061 = vmatpush1.bf16.msra.mxu0 0
      %3062 = vmatprep.subr.bf16.mxu0 0
      %3063 = vmatpush1.bf16.msra.mxu0 0
      %3064 = vmatprep.subr.bf16.mxu0 0
      %3065 = vmatpush1.bf16.msra.mxu0 0
      %3066 = vmatprep.subr.bf16.mxu0 0
      %3067 = vmatpush1.bf16.msra.mxu0 0
      %3068 = vmatprep.subr.bf16.mxu0 0
      %3069 = vmatpush1.bf16.msra.mxu0 0
      %3070 = vmatprep.subr.bf16.mxu0 0
      %3071 = vmatpush1.bf16.msra.mxu0 0
      %3072 = vmatprep.subr.bf16.mxu0 0
      %3073 = vmatpush1.bf16.msra.mxu0 0
      %3074 = vmatprep.subr.bf16.mxu0 0
      %3075 = vmatpush1.bf16.msra.mxu0 0
      %3076 = vmatprep.subr.bf16.mxu0 0
      %3077 = vmatpush1.bf16.msra.mxu0 0
      %3078 = vmatprep.subr.bf16.mxu0 0
      %3079 = vmatpush1.bf16.msra.mxu0 0
      %3080 = vmatprep.subr.bf16.mxu0 0
      %3081 = vmatpush1.bf16.msra.mxu0 0
      %3082 = vmatprep.subr.bf16.mxu0 0
      %3083 = vmatpush1.bf16.msra.mxu0 0
      %3084 = vmatprep.subr.bf16.mxu0 0
      %3085 = vmatpush1.bf16.msra.mxu0 0
      %3086 = vmatprep.subr.bf16.mxu0 0
      %3087 = vmatpush1.bf16.msra.mxu0 0
      %3088 = vmatprep.mubr.bf16.mxu0 0
      %3089 = vmatmul.mubr.bf16.gmra.mrb[0].mxu0 %v3054
      %v3090 = vpop.f32.mrb[0].mxu0
      %v3091 = vadd.f32 0.0, %v3090
      %v3092 = vpop.f32.mrb[0].mxu0
      %v3093 = vpop.f32.mrb[0].mxu0
      %v3094 = vadd.f32 0.0, %v3093
      %v3095 = vpop.f32.mrb[0].mxu0
      %3096 = vdwg.mxu0
      %v3099 = vunpack.c.l.b16 %v2678
      %v3100 = vunpack.c.l.b16 %v2679
      %v3101 = vpack.c.b16 %v3100, %v3099
      %v3103 = vsel %vm225, %v3101, 0
      %3105 = vmatprep.subr.bf16.mxu0 0
      %3106 = vmatpush1.bf16.msra.mxu0 %v2711
      %3107 = vmatprep.subr.bf16.mxu0 0
      %3108 = vmatpush1.bf16.msra.mxu0 0
      %3109 = vmatprep.subr.bf16.mxu0 0
      %3110 = vmatpush1.bf16.msra.mxu0 0
      %3111 = vmatprep.subr.bf16.mxu0 0
      %3112 = vmatpush1.bf16.msra.mxu0 0
      %3113 = vmatprep.subr.bf16.mxu0 0
      %3114 = vmatpush1.bf16.msra.mxu0 0
      %3115 = vmatprep.subr.bf16.mxu0 0
      %3116 = vmatpush1.bf16.msra.mxu0 0
      %3117 = vmatprep.subr.bf16.mxu0 0
      %3118 = vmatpush1.bf16.msra.mxu0 0
      %3119 = vmatprep.subr.bf16.mxu0 0
      %3120 = vmatpush1.bf16.msra.mxu0 0
      %3121 = vmatprep.subr.bf16.mxu0 0
      %3122 = vmatpush1.bf16.msra.mxu0 0
      %3123 = vmatprep.subr.bf16.mxu0 0
      %3124 = vmatpush1.bf16.msra.mxu0 0
      %3125 = vmatprep.subr.bf16.mxu0 0
      %3126 = vmatpush1.bf16.msra.mxu0 0
      %3127 = vmatprep.subr.bf16.mxu0 0
      %3128 = vmatpush1.bf16.msra.mxu0 0
      %3129 = vmatprep.subr.bf16.mxu0 0
      %3130 = vmatpush1.bf16.msra.mxu0 0
      %3131 = vmatprep.subr.bf16.mxu0 0
      %3132 = vmatpush1.bf16.msra.mxu0 0
      %3133 = vmatprep.subr.bf16.mxu0 0
      %3134 = vmatpush1.bf16.msra.mxu0 0
      %3135 = vmatprep.subr.bf16.mxu0 0
      %3136 = vmatpush1.bf16.msra.mxu0 0
      %3137 = vmatprep.mubr.bf16.mxu0 0
      %3138 = vmatmul.mubr.bf16.gmra.mrb[0].mxu0 %v3103
      %v3139 = vpop.f32.mrb[0].mxu0
      %v3140 = vadd.f32 0.0, %v3139
      %v3141 = vpop.f32.mrb[0].mxu0
      %v3142 = vpop.f32.mrb[0].mxu0
      %v3143 = vadd.f32 0.0, %v3142
      %v3144 = vpop.f32.mrb[0].mxu0
      %3145 = vdwg.mxu0
      %v3148 = vunpack.c.l.b16 %v2680
      %v3149 = vunpack.c.l.b16 %v2681
      %v3150 = vpack.c.b16 %v3149, %v3148
      %v3152 = vsel %vm225, %v3150, 0
      %3154 = vmatprep.subr.bf16.mxu0 0
      %3155 = vmatpush1.bf16.msra.mxu0 %v2711
      %3156 = vmatprep.subr.bf16.mxu0 0
      %3157 = vmatpush1.bf16.msra.mxu0 0
      %3158 = vmatprep.subr.bf16.mxu0 0
      %3159 = vmatpush1.bf16.msra.mxu0 0
      %3160 = vmatprep.subr.bf16.mxu0 0
      %3161 = vmatpush1.bf16.msra.mxu0 0
      %3162 = vmatprep.subr.bf16.mxu0 0
      %3163 = vmatpush1.bf16.msra.mxu0 0
      %3164 = vmatprep.subr.bf16.mxu0 0
      %3165 = vmatpush1.bf16.msra.mxu0 0
      %3166 = vmatprep.subr.bf16.mxu0 0
      %3167 = vmatpush1.bf16.msra.mxu0 0
      %3168 = vmatprep.subr.bf16.mxu0 0
      %3169 = vmatpush1.bf16.msra.mxu0 0
      %3170 = vmatprep.subr.bf16.mxu0 0
      %3171 = vmatpush1.bf16.msra.mxu0 0
      %3172 = vmatprep.subr.bf16.mxu0 0
      %3173 = vmatpush1.bf16.msra.mxu0 0
      %3174 = vmatprep.subr.bf16.mxu0 0
      %3175 = vmatpush1.bf16.msra.mxu0 0
      %3176 = vmatprep.subr.bf16.mxu0 0
      %3177 = vmatpush1.bf16.msra.mxu0 0
      %3178 = vmatprep.subr.bf16.mxu0 0
      %3179 = vmatpush1.bf16.msra.mxu0 0
      %3180 = vmatprep.subr.bf16.mxu0 0
      %3181 = vmatpush1.bf16.msra.mxu0 0
      %3182 = vmatprep.subr.bf16.mxu0 0
      %3183 = vmatpush1.bf16.msra.mxu0 0
      %3184 = vmatprep.subr.bf16.mxu0 0
      %3185 = vmatpush1.bf16.msra.mxu0 0
      %3186 = vmatprep.mubr.bf16.mxu0 0
      %3187 = vmatmul.mubr.bf16.gmra.mrb[0].mxu0 %v3152
      %v3188 = vpop.f32.mrb[0].mxu0
      %v3189 = vadd.f32 0.0, %v3188
      %v3190 = vpop.f32.mrb[0].mxu0
      %v3191 = vpop.f32.mrb[0].mxu0
      %v3192 = vadd.f32 0.0, %v3191
      %v3193 = vpop.f32.mrb[0].mxu0
      %3194 = vdwg.mxu0
      %v3197 = vunpack.c.l.b16 %v2682
      %v3198 = vunpack.c.l.b16 %v2683
      %v3199 = vpack.c.b16 %v3198, %v3197
      %v3201 = vsel %vm225, %v3199, 0
      %3203 = vmatprep.subr.bf16.mxu0 0
      %3204 = vmatpush1.bf16.msra.mxu0 %v2711
      %3205 = vmatprep.subr.bf16.mxu0 0
      %3206 = vmatpush1.bf16.msra.mxu0 0
      %3207 = vmatprep.subr.bf16.mxu0 0
      %3208 = vmatpush1.bf16.msra.mxu0 0
      %3209 = vmatprep.subr.bf16.mxu0 0
      %3210 = vmatpush1.bf16.msra.mxu0 0
      %3211 = vmatprep.subr.bf16.mxu0 0
      %3212 = vmatpush1.bf16.msra.mxu0 0
      %3213 = vmatprep.subr.bf16.mxu0 0
      %3214 = vmatpush1.bf16.msra.mxu0 0
      %3215 = vmatprep.subr.bf16.mxu0 0
      %3216 = vmatpush1.bf16.msra.mxu0 0
      %3217 = vmatprep.subr.bf16.mxu0 0
      %3218 = vmatpush1.bf16.msra.mxu0 0
      %3219 = vmatprep.subr.bf16.mxu0 0
      %3220 = vmatpush1.bf16.msra.mxu0 0
      %3221 = vmatprep.subr.bf16.mxu0 0
      %3222 = vmatpush1.bf16.msra.mxu0 0
      %3223 = vmatprep.subr.bf16.mxu0 0
      %3224 = vmatpush1.bf16.msra.mxu0 0
      %3225 = vmatprep.subr.bf16.mxu0 0
      %3226 = vmatpush1.bf16.msra.mxu0 0
      %3227 = vmatprep.subr.bf16.mxu0 0
      %3228 = vmatpush1.bf16.msra.mxu0 0
      %3229 = vmatprep.subr.bf16.mxu0 0
      %3230 = vmatpush1.bf16.msra.mxu0 0
      %3231 = vmatprep.subr.bf16.mxu0 0
      %3232 = vmatpush1.bf16.msra.mxu0 0
      %3233 = vmatprep.subr.bf16.mxu0 0
      %3234 = vmatpush1.bf16.msra.mxu0 0
      %3235 = vmatprep.mubr.bf16.mxu0 0
      %3236 = vmatmul.mubr.bf16.gmra.mrb[0].mxu0 %v3201
      %v3237 = vpop.f32.mrb[0].mxu0
      %v3238 = vadd.f32 0.0, %v3237
      %v3239 = vpop.f32.mrb[0].mxu0
      %v3240 = vpop.f32.mrb[0].mxu0
      %v3241 = vadd.f32 0.0, %v3240
      %v3242 = vpop.f32.mrb[0].mxu0
      %3243 = vdwg.mxu0
      %v3246 = vunpack.c.l.b16 %v2684
      %v3247 = vunpack.c.l.b16 %v2685
      %v3248 = vpack.c.b16 %v3247, %v3246
      %v3250 = vsel %vm225, %v3248, 0
      %3252 = vmatprep.subr.bf16.mxu0 0
      %3253 = vmatpush1.bf16.msra.mxu0 %v2711
      %3254 = vmatprep.subr.bf16.mxu0 0
      %3255 = vmatpush1.bf16.msra.mxu0 0
      %3256 = vmatprep.subr.bf16.mxu0 0
      %3257 = vmatpush1.bf16.msra.mxu0 0
      %3258 = vmatprep.subr.bf16.mxu0 0
      %3259 = vmatpush1.bf16.msra.mxu0 0
      %3260 = vmatprep.subr.bf16.mxu0 0
      %3261 = vmatpush1.bf16.msra.mxu0 0
      %3262 = vmatprep.subr.bf16.mxu0 0
      %3263 = vmatpush1.bf16.msra.mxu0 0
      %3264 = vmatprep.subr.bf16.mxu0 0
      %3265 = vmatpush1.bf16.msra.mxu0 0
      %3266 = vmatprep.subr.bf16.mxu0 0
      %3267 = vmatpush1.bf16.msra.mxu0 0
      %3268 = vmatprep.subr.bf16.mxu0 0
      %3269 = vmatpush1.bf16.msra.mxu0 0
      %3270 = vmatprep.subr.bf16.mxu0 0
      %3271 = vmatpush1.bf16.msra.mxu0 0
      %3272 = vmatprep.subr.bf16.mxu0 0
      %3273 = vmatpush1.bf16.msra.mxu0 0
      %3274 = vmatprep.subr.bf16.mxu0 0
      %3275 = vmatpush1.bf16.msra.mxu0 0
      %3276 = vmatprep.subr.bf16.mxu0 0
      %3277 = vmatpush1.bf16.msra.mxu0 0
      %3278 = vmatprep.subr.bf16.mxu0 0
      %3279 = vmatpush1.bf16.msra.mxu0 0
      %3280 = vmatprep.subr.bf16.mxu0 0
      %3281 = vmatpush1.bf16.msra.mxu0 0
      %3282 = vmatprep.subr.bf16.mxu0 0
      %3283 = vmatpush1.bf16.msra.mxu0 0
      %3284 = vmatprep.mubr.bf16.mxu0 0
      %3285 = vmatmul.mubr.bf16.gmra.mrb[0].mxu0 %v3250
      %v3286 = vpop.f32.mrb[0].mxu0
      %v3287 = vadd.f32 0.0, %v3286
      %v3288 = vpop.f32.mrb[0].mxu0
      %v3289 = vpop.f32.mrb[0].mxu0
      %v3290 = vadd.f32 0.0, %v3289
      %v3291 = vpop.f32.mrb[0].mxu0
      %3292 = vdwg.mxu0
      %v3295 = vunpack.c.l.b16 %v2686
      %v3296 = vunpack.c.l.b16 %v2687
      %v3297 = vpack.c.b16 %v3296, %v3295
      %v3299 = vsel %vm225, %v3297, 0
      %3301 = vmatprep.subr.bf16.mxu0 0
      %3302 = vmatpush1.bf16.msra.mxu0 %v2711
      %3303 = vmatprep.subr.bf16.mxu0 0
      %3304 = vmatpush1.bf16.msra.mxu0 0
      %3305 = vmatprep.subr.bf16.mxu0 0
      %3306 = vmatpush1.bf16.msra.mxu0 0
      %3307 = vmatprep.subr.bf16.mxu0 0
      %3308 = vmatpush1.bf16.msra.mxu0 0
      %3309 = vmatprep.subr.bf16.mxu0 0
      %3310 = vmatpush1.bf16.msra.mxu0 0
      %3311 = vmatprep.subr.bf16.mxu0 0
      %3312 = vmatpush1.bf16.msra.mxu0 0
      %3313 = vmatprep.subr.bf16.mxu0 0
      %3314 = vmatpush1.bf16.msra.mxu0 0
      %3315 = vmatprep.subr.bf16.mxu0 0
      %3316 = vmatpush1.bf16.msra.mxu0 0
      %3317 = vmatprep.subr.bf16.mxu0 0
      %3318 = vmatpush1.bf16.msra.mxu0 0
      %3319 = vmatprep.subr.bf16.mxu0 0
      %3320 = vmatpush1.bf16.msra.mxu0 0
      %3321 = vmatprep.subr.bf16.mxu0 0
      %3322 = vmatpush1.bf16.msra.mxu0 0
      %3323 = vmatprep.subr.bf16.mxu0 0
      %3324 = vmatpush1.bf16.msra.mxu0 0
      %3325 = vmatprep.subr.bf16.mxu0 0
      %3326 = vmatpush1.bf16.msra.mxu0 0
      %3327 = vmatprep.subr.bf16.mxu0 0
      %3328 = vmatpush1.bf16.msra.mxu0 0
      %3329 = vmatprep.subr.bf16.mxu0 0
      %3330 = vmatpush1.bf16.msra.mxu0 0
      %3331 = vmatprep.subr.bf16.mxu0 0
      %3332 = vmatpush1.bf16.msra.mxu0 0
      %3333 = vmatprep.mubr.bf16.mxu0 0
      %3334 = vmatmul.mubr.bf16.gmra.mrb[0].mxu0 %v3299
      %v3335 = vpop.f32.mrb[0].mxu0
      %v3336 = vadd.f32 0.0, %v3335
      %v3337 = vpop.f32.mrb[0].mxu0
      %v3338 = vpop.f32.mrb[0].mxu0
      %v3339 = vadd.f32 0.0, %v3338
      %v3340 = vpop.f32.mrb[0].mxu0
      %3341 = vdwg.mxu0
      %v3344 = vunpack.c.l.b16 %v2688
      %v3345 = vunpack.c.l.b16 %v2689
      %v3346 = vpack.c.b16 %v3345, %v3344
      %v3348 = vsel %vm225, %v3346, 0
      %3350 = vmatprep.subr.bf16.mxu0 0
      %3351 = vmatpush1.bf16.msra.mxu0 %v2711
      %3352 = vmatprep.subr.bf16.mxu0 0
      %3353 = vmatpush1.bf16.msra.mxu0 0
      %3354 = vmatprep.subr.bf16.mxu0 0
      %3355 = vmatpush1.bf16.msra.mxu0 0
      %3356 = vmatprep.subr.bf16.mxu0 0
      %3357 = vmatpush1.bf16.msra.mxu0 0
      %3358 = vmatprep.subr.bf16.mxu0 0
      %3359 = vmatpush1.bf16.msra.mxu0 0
      %3360 = vmatprep.subr.bf16.mxu0 0
      %3361 = vmatpush1.bf16.msra.mxu0 0
      %3362 = vmatprep.subr.bf16.mxu0 0
      %3363 = vmatpush1.bf16.msra.mxu0 0
      %3364 = vmatprep.subr.bf16.mxu0 0
      %3365 = vmatpush1.bf16.msra.mxu0 0
      %3366 = vmatprep.subr.bf16.mxu0 0
      %3367 = vmatpush1.bf16.msra.mxu0 0
      %3368 = vmatprep.subr.bf16.mxu0 0
      %3369 = vmatpush1.bf16.msra.mxu0 0
      %3370 = vmatprep.subr.bf16.mxu0 0
      %3371 = vmatpush1.bf16.msra.mxu0 0
      %3372 = vmatprep.subr.bf16.mxu0 0
      %3373 = vmatpush1.bf16.msra.mxu0 0
      %3374 = vmatprep.subr.bf16.mxu0 0
      %3375 = vmatpush1.bf16.msra.mxu0 0
      %3376 = vmatprep.subr.bf16.mxu0 0
      %3377 = vmatpush1.bf16.msra.mxu0 0
      %3378 = vmatprep.subr.bf16.mxu0 0
      %3379 = vmatpush1.bf16.msra.mxu0 0
      %3380 = vmatprep.subr.bf16.mxu0 0
      %3381 = vmatpush1.bf16.msra.mxu0 0
      %3382 = vmatprep.mubr.bf16.mxu0 0
      %3383 = vmatmul.mubr.bf16.gmra.mrb[0].mxu0 %v3348
      %v3384 = vpop.f32.mrb[0].mxu0
      %v3385 = vadd.f32 0.0, %v3384
      %v3386 = vpop.f32.mrb[0].mxu0
      %v3387 = vpop.f32.mrb[0].mxu0
      %v3388 = vadd.f32 0.0, %v3387
      %v3389 = vpop.f32.mrb[0].mxu0
      %3390 = vdwg.mxu0
      %v3393 = vunpack.c.l.b16 %v2690
      %v3394 = vunpack.c.l.b16 %v2691
      %v3395 = vpack.c.b16 %v3394, %v3393
      %v3397 = vsel %vm225, %v3395, 0
      %3399 = vmatprep.subr.bf16.mxu0 0
      %3400 = vmatpush1.bf16.msra.mxu0 %v2711
      %3401 = vmatprep.subr.bf16.mxu0 0
      %3402 = vmatpush1.bf16.msra.mxu0 0
      %3403 = vmatprep.subr.bf16.mxu0 0
      %3404 = vmatpush1.bf16.msra.mxu0 0
      %3405 = vmatprep.subr.bf16.mxu0 0
      %3406 = vmatpush1.bf16.msra.mxu0 0
      %3407 = vmatprep.subr.bf16.mxu0 0
      %3408 = vmatpush1.bf16.msra.mxu0 0
      %3409 = vmatprep.subr.bf16.mxu0 0
      %3410 = vmatpush1.bf16.msra.mxu0 0
      %3411 = vmatprep.subr.bf16.mxu0 0
      %3412 = vmatpush1.bf16.msra.mxu0 0
      %3413 = vmatprep.subr.bf16.mxu0 0
      %3414 = vmatpush1.bf16.msra.mxu0 0
      %3415 = vmatprep.subr.bf16.mxu0 0
      %3416 = vmatpush1.bf16.msra.mxu0 0
      %3417 = vmatprep.subr.bf16.mxu0 0
      %3418 = vmatpush1.bf16.msra.mxu0 0
      %3419 = vmatprep.subr.bf16.mxu0 0
      %3420 = vmatpush1.bf16.msra.mxu0 0
      %3421 = vmatprep.subr.bf16.mxu0 0
      %3422 = vmatpush1.bf16.msra.mxu0 0
      %3423 = vmatprep.subr.bf16.mxu0 0
      %3424 = vmatpush1.bf16.msra.mxu0 0
      %3425 = vmatprep.subr.bf16.mxu0 0
      %3426 = vmatpush1.bf16.msra.mxu0 0
      %3427 = vmatprep.subr.bf16.mxu0 0
      %3428 = vmatpush1.bf16.msra.mxu0 0
      %3429 = vmatprep.subr.bf16.mxu0 0
      %3430 = vmatpush1.bf16.msra.mxu0 0
      %3431 = vmatprep.mubr.bf16.mxu0 0
      %3432 = vmatmul.mubr.bf16.gmra.mrb[0].mxu0 %v3397
      %v3433 = vpop.f32.mrb[0].mxu0
      %v3434 = vadd.f32 0.0, %v3433
      %v3435 = vpop.f32.mrb[0].mxu0
      %v3436 = vpop.f32.mrb[0].mxu0
      %v3437 = vadd.f32 0.0, %v3436
      %v3438 = vpop.f32.mrb[0].mxu0
      %3439 = vdwg.mxu0
      %v3442 = vunpack.c.l.b16 %v2692
      %v3443 = vunpack.c.l.b16 %v2693
      %v3444 = vpack.c.b16 %v3443, %v3442
      %v3446 = vsel %vm225, %v3444, 0
      %3448 = vmatprep.subr.bf16.mxu0 0
      %3449 = vmatpush1.bf16.msra.mxu0 %v2711
      %3450 = vmatprep.subr.bf16.mxu0 0
      %3451 = vmatpush1.bf16.msra.mxu0 0
      %3452 = vmatprep.subr.bf16.mxu0 0
      %3453 = vmatpush1.bf16.msra.mxu0 0
      %3454 = vmatprep.subr.bf16.mxu0 0
      %3455 = vmatpush1.bf16.msra.mxu0 0
      %3456 = vmatprep.subr.bf16.mxu0 0
      %3457 = vmatpush1.bf16.msra.mxu0 0
      %3458 = vmatprep.subr.bf16.mxu0 0
      %3459 = vmatpush1.bf16.msra.mxu0 0
      %3460 = vmatprep.subr.bf16.mxu0 0
      %3461 = vmatpush1.bf16.msra.mxu0 0
      %3462 = vmatprep.subr.bf16.mxu0 0
      %3463 = vmatpush1.bf16.msra.mxu0 0
      %3464 = vmatprep.subr.bf16.mxu0 0
      %3465 = vmatpush1.bf16.msra.mxu0 0
      %3466 = vmatprep.subr.bf16.mxu0 0
      %3467 = vmatpush1.bf16.msra.mxu0 0
      %3468 = vmatprep.subr.bf16.mxu0 0
      %3469 = vmatpush1.bf16.msra.mxu0 0
      %3470 = vmatprep.subr.bf16.mxu0 0
      %3471 = vmatpush1.bf16.msra.mxu0 0
      %3472 = vmatprep.subr.bf16.mxu0 0
      %3473 = vmatpush1.bf16.msra.mxu0 0
      %3474 = vmatprep.subr.bf16.mxu0 0
      %3475 = vmatpush1.bf16.msra.mxu0 0
      %3476 = vmatprep.subr.bf16.mxu0 0
      %3477 = vmatpush1.bf16.msra.mxu0 0
      %3478 = vmatprep.subr.bf16.mxu0 0
      %3479 = vmatpush1.bf16.msra.mxu0 0
      %3480 = vmatprep.mubr.bf16.mxu0 0
      %3481 = vmatmul.mubr.bf16.gmra.mrb[0].mxu0 %v3446
      %v3482 = vpop.f32.mrb[0].mxu0
      %v3483 = vadd.f32 0.0, %v3482
      %v3484 = vpop.f32.mrb[0].mxu0
      %v3485 = vpop.f32.mrb[0].mxu0
      %v3486 = vadd.f32 0.0, %v3485
      %v3487 = vpop.f32.mrb[0].mxu0
      %3488 = vdwg.mxu0
      %v3489 = vadd.f32 %v2629, %v2748
      %v3490 = vadd.f32 %v2630, %v2751
      %v3491 = vadd.f32 %v2631, %v2797
      %v3492 = vadd.f32 %v2632, %v2800
      %v3493 = vadd.f32 %v2633, %v2846
      %v3494 = vadd.f32 %v2634, %v2849
      %v3495 = vadd.f32 %v2635, %v2895
      %v3496 = vadd.f32 %v2636, %v2898
      %v3497 = vadd.f32 %v2637, %v2944
      %v3498 = vadd.f32 %v2638, %v2947
      %v3499 = vadd.f32 %v2639, %v2993
      %v3500 = vadd.f32 %v2640, %v2996
      %v3501 = vadd.f32 %v2641, %v3042
      %v3502 = vadd.f32 %v2642, %v3045
      %v3503 = vadd.f32 %v2643, %v3091
      %v3504 = vadd.f32 %v2644, %v3094
      %v3505 = vadd.f32 %v2645, %v3140
      %v3506 = vadd.f32 %v2646, %v3143
      %v3507 = vadd.f32 %v2647, %v3189
      %v3508 = vadd.f32 %v2648, %v3192
      %v3509 = vadd.f32 %v2649, %v3238
      %v3510 = vadd.f32 %v2650, %v3241
      %v3511 = vadd.f32 %v2651, %v3287
      %v3512 = vadd.f32 %v2652, %v3290
      %v3513 = vadd.f32 %v2653, %v3336
      %v3514 = vadd.f32 %v2654, %v3339
      %v3515 = vadd.f32 %v2655, %v3385
      %v3516 = vadd.f32 %v2656, %v3388
      %v3517 = vadd.f32 %v2657, %v3434
      %v3518 = vadd.f32 %v2658, %v3437
      %v3519 = vadd.f32 %v2659, %v3483
      %v3520 = vadd.f32 %v2660, %v3486
      %vm3521 = vcmp.ge.f32.partialorder %v3489, 0.0
      %vm3522 = vcmp.ge.f32.partialorder %v3490, 0.0
      %vm3523 = vcmp.ge.f32.partialorder %v3491, 0.0
      %vm3524 = vcmp.ge.f32.partialorder %v3492, 0.0
      %vm3525 = vcmp.ge.f32.partialorder %v3493, 0.0
      %vm3526 = vcmp.ge.f32.partialorder %v3494, 0.0
      %vm3527 = vcmp.ge.f32.partialorder %v3495, 0.0
      %vm3528 = vcmp.ge.f32.partialorder %v3496, 0.0
      %vm3529 = vcmp.ge.f32.partialorder %v3497, 0.0
      %vm3530 = vcmp.ge.f32.partialorder %v3498, 0.0
      %vm3531 = vcmp.ge.f32.partialorder %v3499, 0.0
      %vm3532 = vcmp.ge.f32.partialorder %v3500, 0.0
      %vm3533 = vcmp.ge.f32.partialorder %v3501, 0.0
      %vm3534 = vcmp.ge.f32.partialorder %v3502, 0.0
      %vm3535 = vcmp.ge.f32.partialorder %v3503, 0.0
      %vm3536 = vcmp.ge.f32.partialorder %v3504, 0.0
      %vm3537 = vcmp.ge.f32.partialorder %v3505, 0.0
      %vm3538 = vcmp.ge.f32.partialorder %v3506, 0.0
      %vm3539 = vcmp.ge.f32.partialorder %v3507, 0.0
      %vm3540 = vcmp.ge.f32.partialorder %v3508, 0.0
      %vm3541 = vcmp.ge.f32.partialorder %v3509, 0.0
      %vm3542 = vcmp.ge.f32.partialorder %v3510, 0.0
      %vm3543 = vcmp.ge.f32.partialorder %v3511, 0.0
      %vm3544 = vcmp.ge.f32.partialorder %v3512, 0.0
      %vm3545 = vcmp.ge.f32.partialorder %v3513, 0.0
      %vm3546 = vcmp.ge.f32.partialorder %v3514, 0.0
      %vm3547 = vcmp.ge.f32.partialorder %v3515, 0.0
      %vm3548 = vcmp.ge.f32.partialorder %v3516, 0.0
      %vm3549 = vcmp.ge.f32.partialorder %v3517, 0.0
      %vm3550 = vcmp.ge.f32.partialorder %v3518, 0.0
      %vm3551 = vcmp.ge.f32.partialorder %v3519, 0.0
      %vm3552 = vcmp.ge.f32.partialorder %v3520, 0.0
      %v3553 = vmul.f32 %v3489, 0.2
      %v3554 = vmul.f32 %v3490, 0.2
      %v3555 = vmul.f32 %v3491, 0.2
      %v3556 = vmul.f32 %v3492, 0.2
      %v3557 = vmul.f32 %v3493, 0.2
      %v3558 = vmul.f32 %v3494, 0.2
      %v3559 = vmul.f32 %v3495, 0.2
      %v3560 = vmul.f32 %v3496, 0.2
      %v3561 = vmul.f32 %v3497, 0.2
      %v3562 = vmul.f32 %v3498, 0.2
      %v3563 = vmul.f32 %v3499, 0.2
      %v3564 = vmul.f32 %v3500, 0.2
      %v3565 = vmul.f32 %v3501, 0.2
      %v3566 = vmul.f32 %v3502, 0.2
      %v3567 = vmul.f32 %v3503, 0.2
      %v3568 = vmul.f32 %v3504, 0.2
      %v3569 = vmul.f32 %v3505, 0.2
      %v3570 = vmul.f32 %v3506, 0.2
      %v3571 = vmul.f32 %v3507, 0.2
      %v3572 = vmul.f32 %v3508, 0.2
      %v3573 = vmul.f32 %v3509, 0.2
      %v3574 = vmul.f32 %v3510, 0.2
      %v3575 = vmul.f32 %v3511, 0.2
      %v3576 = vmul.f32 %v3512, 0.2
      %v3577 = vmul.f32 %v3513, 0.2
      %v3578 = vmul.f32 %v3514, 0.2
      %v3579 = vmul.f32 %v3515, 0.2
      %v3580 = vmul.f32 %v3516, 0.2
      %v3581 = vmul.f32 %v3517, 0.2
      %v3582 = vmul.f32 %v3518, 0.2
      %v3583 = vmul.f32 %v3519, 0.2
      %v3584 = vmul.f32 %v3520, 0.2
      %v3585 = vsel %vm3521, %v3489, %v3553
      %v3586 = vsel %vm3522, %v3490, %v3554
      %v3587 = vsel %vm3523, %v3491, %v3555
      %v3588 = vsel %vm3524, %v3492, %v3556
      %v3589 = vsel %vm3525, %v3493, %v3557
      %v3590 = vsel %vm3526, %v3494, %v3558
      %v3591 = vsel %vm3527, %v3495, %v3559
      %v3592 = vsel %vm3528, %v3496, %v3560
      %v3593 = vsel %vm3529, %v3497, %v3561
      %v3594 = vsel %vm3530, %v3498, %v3562
      %v3595 = vsel %vm3531, %v3499, %v3563
      %v3596 = vsel %vm3532, %v3500, %v3564
      %v3597 = vsel %vm3533, %v3501, %v3565
      %v3598 = vsel %vm3534, %v3502, %v3566
      %v3599 = vsel %vm3535, %v3503, %v3567
      %v3600 = vsel %vm3536, %v3504, %v3568
      %v3601 = vsel %vm3537, %v3505, %v3569
      %v3602 = vsel %vm3538, %v3506, %v3570
      %v3603 = vsel %vm3539, %v3507, %v3571
      %v3604 = vsel %vm3540, %v3508, %v3572
      %v3605 = vsel %vm3541, %v3509, %v3573
      %v3606 = vsel %vm3542, %v3510, %v3574
      %v3607 = vsel %vm3543, %v3511, %v3575
      %v3608 = vsel %vm3544, %v3512, %v3576
      %v3609 = vsel %vm3545, %v3513, %v3577
      %v3610 = vsel %vm3546, %v3514, %v3578
      %v3611 = vsel %vm3547, %v3515, %v3579
      %v3612 = vsel %vm3548, %v3516, %v3580
      %v3613 = vsel %vm3549, %v3517, %v3581
      %v3614 = vsel %vm3550, %v3518, %v3582
      %v3615 = vsel %vm3551, %v3519, %v3583
      %v3616 = vsel %vm3552, %v3520, %v3584
      %v3617 = vpack.c.bf16 %v3586, %v3585
      %v3618 = vpack.c.bf16 %v3588, %v3587
      %v3619 = vpack.c.bf16 %v3590, %v3589
      %v3620 = vpack.c.bf16 %v3592, %v3591
      %v3621 = vpack.c.bf16 %v3594, %v3593
      %v3622 = vpack.c.bf16 %v3596, %v3595
      %v3623 = vpack.c.bf16 %v3598, %v3597
      %v3624 = vpack.c.bf16 %v3600, %v3599
      %v3625 = vpack.c.bf16 %v3602, %v3601
      %v3626 = vpack.c.bf16 %v3604, %v3603
      %v3627 = vpack.c.bf16 %v3606, %v3605
      %v3628 = vpack.c.bf16 %v3608, %v3607
      %v3629 = vpack.c.bf16 %v3610, %v3609
      %v3630 = vpack.c.bf16 %v3612, %v3611
      %v3631 = vpack.c.bf16 %v3614, %v3613
      %v3632 = vpack.c.bf16 %v3616, %v3615
      %v3649 = vunpack.c.l.b16 %v3617
      %v3650 = vunpack.c.h.b16 %v3617
      %v3651 = vunpack.c.l.b16 %v3618
      %v3652 = vunpack.c.h.b16 %v3618
      %v3653 = vunpack.c.l.b16 %v3619
      %v3654 = vunpack.c.h.b16 %v3619
      %v3655 = vunpack.c.l.b16 %v3620
      %v3656 = vunpack.c.h.b16 %v3620
      %v3657 = vunpack.c.l.b16 %v3621
      %v3658 = vunpack.c.h.b16 %v3621
      %v3659 = vunpack.c.l.b16 %v3622
      %v3660 = vunpack.c.h.b16 %v3622
      %v3661 = vunpack.c.l.b16 %v3623
      %v3662 = vunpack.c.h.b16 %v3623
      %v3663 = vunpack.c.l.b16 %v3624
      %v3664 = vunpack.c.h.b16 %v3624
      %v3665 = vunpack.c.l.b16 %v3625
      %v3666 = vunpack.c.h.b16 %v3625
      %v3667 = vunpack.c.l.b16 %v3626
      %v3668 = vunpack.c.h.b16 %v3626
      %v3669 = vunpack.c.l.b16 %v3627
      %v3670 = vunpack.c.h.b16 %v3627
      %v3671 = vunpack.c.l.b16 %v3628
      %v3672 = vunpack.c.h.b16 %v3628
      %v3673 = vunpack.c.l.b16 %v3629
      %v3674 = vunpack.c.h.b16 %v3629
      %v3675 = vunpack.c.l.b16 %v3630
      %v3676 = vunpack.c.h.b16 %v3630
      %v3677 = vunpack.c.l.b16 %v3631
      %v3678 = vunpack.c.h.b16 %v3631
      %v3679 = vunpack.c.l.b16 %v3632
      %v3680 = vunpack.c.h.b16 %v3632
      %v3681 = vpack.c.b16 %v3649, %v3649
      %v3682 = vpack.c.b16 %v3650, %v3650
      %v3683 = vpack.c.b16 %v3651, %v3651
      %v3684 = vpack.c.b16 %v3652, %v3652
      %v3685 = vpack.c.b16 %v3653, %v3653
      %v3686 = vpack.c.b16 %v3654, %v3654
      %v3687 = vpack.c.b16 %v3655, %v3655
      %v3688 = vpack.c.b16 %v3656, %v3656
      %v3689 = vpack.c.b16 %v3657, %v3657
      %v3690 = vpack.c.b16 %v3658, %v3658
      %v3691 = vpack.c.b16 %v3659, %v3659
      %v3692 = vpack.c.b16 %v3660, %v3660
      %v3693 = vpack.c.b16 %v3661, %v3661
      %v3694 = vpack.c.b16 %v3662, %v3662
      %v3695 = vpack.c.b16 %v3663, %v3663
      %v3696 = vpack.c.b16 %v3664, %v3664
      %v3697 = vpack.c.b16 %v3665, %v3665
      %v3698 = vpack.c.b16 %v3666, %v3666
      %v3699 = vpack.c.b16 %v3667, %v3667
      %v3700 = vpack.c.b16 %v3668, %v3668
      %v3701 = vpack.c.b16 %v3669, %v3669
      %v3702 = vpack.c.b16 %v3670, %v3670
      %v3703 = vpack.c.b16 %v3671, %v3671
      %v3704 = vpack.c.b16 %v3672, %v3672
      %v3705 = vpack.c.b16 %v3673, %v3673
      %v3706 = vpack.c.b16 %v3674, %v3674
      %v3707 = vpack.c.b16 %v3675, %v3675
      %v3708 = vpack.c.b16 %v3676, %v3676
      %v3709 = vpack.c.b16 %v3677, %v3677
      %v3710 = vpack.c.b16 %v3678, %v3678
      %v3711 = vpack.c.b16 %v3679, %v3679
      %v3712 = vpack.c.b16 %v3680, %v3680
      %vm3745 = vcmask 125952
      %3746 = vst.msk [vmem:[%s143] sm:$0xf] %vm3745, %v3681
      %3747 = vst.msk [vmem:[%s143 + $0x4] sm:$0xf] %vm3745, %v3682
      %3748 = vst.msk [vmem:[%s143 + $0x8] sm:$0xf] %vm3745, %v3683
      %3749 = vst.msk [vmem:[%s143 + $0xc] sm:$0xf] %vm3745, %v3684
      %3750 = vst.msk [vmem:[%s143 + $0x10] sm:$0xf] %vm3745, %v3685
      %3751 = vst.msk [vmem:[%s143 + $0x14] sm:$0xf] %vm3745, %v3686
      %3752 = vst.msk [vmem:[%s143 + $0x18] sm:$0xf] %vm3745, %v3687
      %3753 = vst.msk [vmem:[%s143 + $0x1c] sm:$0xf] %vm3745, %v3688
      %3754 = vst.msk [vmem:[%s143 + $0x20] sm:$0xf] %vm3745, %v3689
      %3755 = vst.msk [vmem:[%s143 + $0x24] sm:$0xf] %vm3745, %v3690
      %3756 = vst.msk [vmem:[%s143 + $0x28] sm:$0xf] %vm3745, %v3691
      %3757 = vst.msk [vmem:[%s143 + $0x2c] sm:$0xf] %vm3745, %v3692
      %3758 = vst.msk [vmem:[%s143 + $0x30] sm:$0xf] %vm3745, %v3693
      %3759 = vst.msk [vmem:[%s143 + $0x34] sm:$0xf] %vm3745, %v3694
      %3760 = vst.msk [vmem:[%s143 + $0x38] sm:$0xf] %vm3745, %v3695
      %3761 = vst.msk [vmem:[%s143 + $0x3c] sm:$0xf] %vm3745, %v3696
      %3762 = vst.msk [vmem:[%s143 + $0x40] sm:$0xf] %vm3745, %v3697
      %3763 = vst.msk [vmem:[%s143 + $0x44] sm:$0xf] %vm3745, %v3698
      %3764 = vst.msk [vmem:[%s143 + $0x48] sm:$0xf] %vm3745, %v3699
      %3765 = vst.msk [vmem:[%s143 + $0x4c] sm:$0xf] %vm3745, %v3700
      %3766 = vst.msk [vmem:[%s143 + $0x50] sm:$0xf] %vm3745, %v3701
      %3767 = vst.msk [vmem:[%s143 + $0x54] sm:$0xf] %vm3745, %v3702
      %3768 = vst.msk [vmem:[%s143 + $0x58] sm:$0xf] %vm3745, %v3703
      %3769 = vst.msk [vmem:[%s143 + $0x5c] sm:$0xf] %vm3745, %v3704
      %3770 = vst.msk [vmem:[%s143 + $0x60] sm:$0xf] %vm3745, %v3705
      %3771 = vst.msk [vmem:[%s143 + $0x64] sm:$0xf] %vm3745, %v3706
      %3772 = vst.msk [vmem:[%s143 + $0x68] sm:$0xf] %vm3745, %v3707
      %3773 = vst.msk [vmem:[%s143 + $0x6c] sm:$0xf] %vm3745, %v3708
      %3774 = vst.msk [vmem:[%s143 + $0x70] sm:$0xf] %vm3745, %v3709
      %3775 = vst.msk [vmem:[%s143 + $0x74] sm:$0xf] %vm3745, %v3710
      %3776 = vst.msk [vmem:[%s143 + $0x78] sm:$0xf] %vm3745, %v3711
      %3777 = vst.msk [vmem:[%s143 + $0x7c] sm:$0xf] %vm3745, %v3712
      %p3778 = scmp.lt.s32.totalorder %s13, 1
      %s3779 = scalar_select %p3778, %s13, 1
      %s3780 = smul.addr %s3779, 32
      %s3781 = smul.addr %s3780, 4
      %s3782 = scalar_lea.vmem %s2, %s3781
      // Predicated region
      $region29: #{d_forward.4} parent=27 // pred_check
        %p3783 = pneg %p78
      $region30: #{d_forward.4} parent=27 // pred_check_branch
        %3785 = sbr.rel (%p3783) target = $region32
      $region31: #{d_forward.4} parent=27 // pred_region
        _
      $region32: #{d_forward.4} parent=27 // pred_fallthru
        _
    $region28: #{d_forward.4} parent=5 // pred_fallthru
      _
    %p3786 = scmp.le.s32.totalorder 2, %s8
    // Predicated region
    $region33: #{d_forward.4} parent=5 // pred_check
      %p3787 = pneg %p3786
    $region34: #{d_forward.4} parent=5 // pred_check_branch
      %3789 = sbr.rel (%p3787) target = $region36
    $region35: #{d_forward.4} parent=5 // pred_region
      %s3790 = ssub.s32 %s8, 2
      // Predicated region
      $region37: #{d_forward.4} parent=35 // pred_check
        %p3791 = pneg %p84
      $region38: #{d_forward.4} parent=35 // pred_check_branch
        %3793 = sbr.rel (%p3791) target = $region40
      $region39: #{d_forward.4} parent=35 // pred_region
        %p3794 = scmp.lt.s32.totalorder %s14, 1
        %s3795 = scalar_select %p3794, %s14, 1
        %s3796 = smul.addr %s3795, 32
        %s3797 = smul.addr %s3796, 4
        %s3798 = scalar_lea.vmem %s2, %s3797
      $region40: #{d_forward.4} parent=35 // pred_fallthru
        _
    $region36: #{d_forward.4} parent=5 // pred_fallthru
      _
  $region6: #{d_forward.4} parent=0 // loop_footer
    %s12 = sadd.s32 1, %s8
  $region7: #{d_forward.4} parent=0 // loop_footer_branch
    %7 = sbr.rel target = $region3
  $region8: #{d_forward.4} parent=0 // loop_exit
    _

// kernel: d_forward.7
$region0: #{d_forward.7}
  #allocation0 [shape = 'u32[]', space=smem, size = 0x4, offset = 0x4, fixed_abs, tag = 'smem constant byte address 0x4 - core index']
  #allocation1 [shape = 'u32[144,128]{1,0:T(1,128)}', space=vmem, size = 0x12000, scoped, tag = 'internal scratch']
  %s0 = inlined_call_operand.vmem [shape: bf16[2,1024], index: 0, kind: input, shape index: {}]
  %s1 = inlined_call_operand.vmem [shape: bf16[1024,32], index: 1, kind: input, shape index: {}]
  %s2 = inlined_call_operand.hbm [shape: f32[2,32], index: 2, kind: output, shape index: {}]
  %s3 = sld [smem:[#allocation0]]
  $region18: #{d_forward.7} parent=0
    _
  %s5 = ssub.s32 1, %s3
  %s6 = scalar_select 0, %s5, %s3
  $region1: #{d_forward.7} parent=0
    #allocation2 [shape = 'u8[1024]{0}', space=vmem, size = 0x400, scoped, tag = 'output window, operand 0, single buffered']
    #allocation3 [shape = 's32[1]{0}', space=sflag, size = 0x4, scoped, tag = 'scoped memory for d_forward.7']
    %7 = vsyncpa [#allocation3], 0
    // Predicated region
    $region2: #{d_forward.7} parent=1 // pred_check
      _
    $region3: #{d_forward.7} parent=1 // pred_check_branch
      %9 = sbr.rel (0) target = $region5
    $region4: #{d_forward.7} parent=1 // pred_region
      _
    $region5: #{d_forward.7} parent=1 // pred_fallthru
      _
    // Predicated region
    $region6: #{d_forward.7} parent=1 // pred_check
      _
    $region7: #{d_forward.7} parent=1 // pred_check_branch
      %11 = sbr.rel (0) target = $region9
    $region8: #{d_forward.7} parent=1 // pred_region
      _
    $region9: #{d_forward.7} parent=1 // pred_fallthru
      _
    %v13 = vld [vmem:[%s0] sm:$0xff]
    %v14 = vld [vmem:[%s1] sm:$0xf]
    %v15 = vld [vmem:[%s1 + $0x4] sm:$0xf]
    %v16 = vld [vmem:[%s1 + $0x8] sm:$0xf]
    %v17 = vld [vmem:[%s1 + $0xc] sm:$0xf]
    %v18 = vld [vmem:[%s1 + $0x10] sm:$0xf]
    %v19 = vld [vmem:[%s1 + $0x14] sm:$0xf]
    %v20 = vld [vmem:[%s1 + $0x18] sm:$0xf]
    %v21 = vld [vmem:[%s1 + $0x1c] sm:$0xf]
    %v22 = vld [vmem:[%s1 + $0x20] sm:$0xf]
    %v23 = vld [vmem:[%s1 + $0x24] sm:$0xf]
    %v24 = vld [vmem:[%s1 + $0x28] sm:$0xf]
    %v25 = vld [vmem:[%s1 + $0x2c] sm:$0xf]
    %v26 = vld [vmem:[%s1 + $0x30] sm:$0xf]
    %v27 = vld [vmem:[%s1 + $0x34] sm:$0xf]
    %v28 = vld [vmem:[%s1 + $0x38] sm:$0xf]
    %v29 = vld [vmem:[%s1 + $0x3c] sm:$0xf]
    %v30 = vld [vmem:[%s1 + $0x40] sm:$0xf]
    %v31 = vld [vmem:[%s1 + $0x44] sm:$0xf]
    %v32 = vld [vmem:[%s1 + $0x48] sm:$0xf]
    %v33 = vld [vmem:[%s1 + $0x4c] sm:$0xf]
    %v34 = vld [vmem:[%s1 + $0x50] sm:$0xf]
    %v35 = vld [vmem:[%s1 + $0x54] sm:$0xf]
    %v36 = vld [vmem:[%s1 + $0x58] sm:$0xf]
    %v37 = vld [vmem:[%s1 + $0x5c] sm:$0xf]
    %v38 = vld [vmem:[%s1 + $0x60] sm:$0xf]
    %v39 = vld [vmem:[%s1 + $0x64] sm:$0xf]
    %v40 = vld [vmem:[%s1 + $0x68] sm:$0xf]
    %v41 = vld [vmem:[%s1 + $0x6c] sm:$0xf]
    %v42 = vld [vmem:[%s1 + $0x70] sm:$0xf]
    %v43 = vld [vmem:[%s1 + $0x74] sm:$0xf]
    %v44 = vld [vmem:[%s1 + $0x78] sm:$0xf]
    %v45 = vld [vmem:[%s1 + $0x7c] sm:$0xf]
    %v46 = vld [vmem:[%s1 + $0x80] sm:$0xf]
    %v47 = vld [vmem:[%s1 + $0x84] sm:$0xf]
    %v48 = vld [vmem:[%s1 + $0x88] sm:$0xf]
    %v49 = vld [vmem:[%s1 + $0x8c] sm:$0xf]
    %v50 = vld [vmem:[%s1 + $0x90] sm:$0xf]
    %v51 = vld [vmem:[%s1 + $0x94] sm:$0xf]
    %v52 = vld [vmem:[%s1 + $0x98] sm:$0xf]
    %v53 = vld [vmem:[%s1 + $0x9c] sm:$0xf]
    %v54 = vld [vmem:[%s1 + $0xa0] sm:$0xf]
    %v55 = vld [vmem:[%s1 + $0xa4] sm:$0xf]
    %v56 = vld [vmem:[%s1 + $0xa8] sm:$0xf]
    %v57 = vld [vmem:[%s1 + $0xac] sm:$0xf]
    %v58 = vld [vmem:[%s1 + $0xb0] sm:$0xf]
    %v59 = vld [vmem:[%s1 + $0xb4] sm:$0xf]
    %v60 = vld [vmem:[%s1 + $0xb8] sm:$0xf]
    %v61 = vld [vmem:[%s1 + $0xbc] sm:$0xf]
    %v62 = vld [vmem:[%s1 + $0xc0] sm:$0xf]
    %v63 = vld [vmem:[%s1 + $0xc4] sm:$0xf]
    %v64 = vld [vmem:[%s1 + $0xc8] sm:$0xf]
    %v65 = vld [vmem:[%s1 + $0xcc] sm:$0xf]
    %v66 = vld [vmem:[%s1 + $0xd0] sm:$0xf]
    %v67 = vld [vmem:[%s1 + $0xd4] sm:$0xf]
    %v68 = vld [vmem:[%s1 + $0xd8] sm:$0xf]
    %v69 = vld [vmem:[%s1 + $0xdc] sm:$0xf]
    %v70 = vld [vmem:[%s1 + $0xe0] sm:$0xf]
    %v71 = vld [vmem:[%s1 + $0xe4] sm:$0xf]
    %v72 = vld [vmem:[%s1 + $0xe8] sm:$0xf]
    %v73 = vld [vmem:[%s1 + $0xec] sm:$0xf]
    %v74 = vld [vmem:[%s1 + $0xf0] sm:$0xf]
    %v75 = vld [vmem:[%s1 + $0xf4] sm:$0xf]
    %v76 = vld [vmem:[%s1 + $0xf8] sm:$0xf]
    %v77 = vld [vmem:[%s1 + $0xfc] sm:$0xf]
    %v78 = vld [vmem:[%s1 + $0x100] sm:$0xf]
    %v79 = vld [vmem:[%s1 + $0x104] sm:$0xf]
    %v80 = vld [vmem:[%s1 + $0x108] sm:$0xf]
    %v81 = vld [vmem:[%s1 + $0x10c] sm:$0xf]
    %v82 = vld [vmem:[%s1 + $0x110] sm:$0xf]
    %v83 = vld [vmem:[%s1 + $0x114] sm:$0xf]
    %v84 = vld [vmem:[%s1 + $0x118] sm:$0xf]
    %v85 = vld [vmem:[%s1 + $0x11c] sm:$0xf]
    %v86 = vld [vmem:[%s1 + $0x120] sm:$0xf]
    %v87 = vld [vmem:[%s1 + $0x124] sm:$0xf]
    %v88 = vld [vmem:[%s1 + $0x128] sm:$0xf]
    %v89 = vld [vmem:[%s1 + $0x12c] sm:$0xf]
    %v90 = vld [vmem:[%s1 + $0x130] sm:$0xf]
    %v91 = vld [vmem:[%s1 + $0x134] sm:$0xf]
    %v92 = vld [vmem:[%s1 + $0x138] sm:$0xf]
    %v93 = vld [vmem:[%s1 + $0x13c] sm:$0xf]
    %v94 = vld [vmem:[%s1 + $0x140] sm:$0xf]
    %v95 = vld [vmem:[%s1 + $0x144] sm:$0xf]
    %v96 = vld [vmem:[%s1 + $0x148] sm:$0xf]
    %v97 = vld [vmem:[%s1 + $0x14c] sm:$0xf]
    %v98 = vld [vmem:[%s1 + $0x150] sm:$0xf]
    %v99 = vld [vmem:[%s1 + $0x154] sm:$0xf]
    %v100 = vld [vmem:[%s1 + $0x158] sm:$0xf]
    %v101 = vld [vmem:[%s1 + $0x15c] sm:$0xf]
    %v102 = vld [vmem:[%s1 + $0x160] sm:$0xf]
    %v103 = vld [vmem:[%s1 + $0x164] sm:$0xf]
    %v104 = vld [vmem:[%s1 + $0x168] sm:$0xf]
    %v105 = vld [vmem:[%s1 + $0x16c] sm:$0xf]
    %v106 = vld [vmem:[%s1 + $0x170] sm:$0xf]
    %v107 = vld [vmem:[%s1 + $0x174] sm:$0xf]
    %v108 = vld [vmem:[%s1 + $0x178] sm:$0xf]
    %v109 = vld [vmem:[%s1 + $0x17c] sm:$0xf]
    %v110 = vld [vmem:[%s1 + $0x180] sm:$0xf]
    %v111 = vld [vmem:[%s1 + $0x184] sm:$0xf]
    %v112 = vld [vmem:[%s1 + $0x188] sm:$0xf]
    %v113 = vld [vmem:[%s1 + $0x18c] sm:$0xf]
    %v114 = vld [vmem:[%s1 + $0x190] sm:$0xf]
    %v115 = vld [vmem:[%s1 + $0x194] sm:$0xf]
    %v116 = vld [vmem:[%s1 + $0x198] sm:$0xf]
    %v117 = vld [vmem:[%s1 + $0x19c] sm:$0xf]
    %v118 = vld [vmem:[%s1 + $0x1a0] sm:$0xf]
    %v119 = vld [vmem:[%s1 + $0x1a4] sm:$0xf]
    %v120 = vld [vmem:[%s1 + $0x1a8] sm:$0xf]
    %v121 = vld [vmem:[%s1 + $0x1ac] sm:$0xf]
    %v122 = vld [vmem:[%s1 + $0x1b0] sm:$0xf]
    %v123 = vld [vmem:[%s1 + $0x1b4] sm:$0xf]
    %v124 = vld [vmem:[%s1 + $0x1b8] sm:$0xf]
    %v125 = vld [vmem:[%s1 + $0x1bc] sm:$0xf]
    %v126 = vld [vmem:[%s1 + $0x1c0] sm:$0xf]
    %v127 = vld [vmem:[%s1 + $0x1c4] sm:$0xf]
    %v128 = vld [vmem:[%s1 + $0x1c8] sm:$0xf]
    %v129 = vld [vmem:[%s1 + $0x1cc] sm:$0xf]
    %v130 = vld [vmem:[%s1 + $0x1d0] sm:$0xf]
    %v131 = vld [vmem:[%s1 + $0x1d4] sm:$0xf]
    %v132 = vld [vmem:[%s1 + $0x1d8] sm:$0xf]
    %v133 = vld [vmem:[%s1 + $0x1dc] sm:$0xf]
    %v134 = vld [vmem:[%s1 + $0x1e0] sm:$0xf]
    %v135 = vld [vmem:[%s1 + $0x1e4] sm:$0xf]
    %v136 = vld [vmem:[%s1 + $0x1e8] sm:$0xf]
    %v137 = vld [vmem:[%s1 + $0x1ec] sm:$0xf]
    %v138 = vld [vmem:[%s1 + $0x1f0] sm:$0xf]
    %v139 = vld [vmem:[%s1 + $0x1f4] sm:$0xf]
    %v140 = vld [vmem:[%s1 + $0x1f8] sm:$0xf]
    %v141 = vld [vmem:[%s1 + $0x1fc] sm:$0xf]
    %v143 = vcombine.high %v13, %v13
    %v145 = vunpack.c.l.s4 1966171168
    %v146 = vunpack.c.0.s8 %v145
    %v147 = vlaneseq
    %v148 = vshrl.u32 %v147, 7
    %v149 = vsub.s32 %v146, %v148
    %v150 = vrot.slane %v13, %v149
    %v152 = vunpack.c.l.s4 1966171168
    %v153 = vunpack.c.0.s8 %v152
    %v154 = vlaneseq
    %v155 = vshrl.u32 %v154, 7
    %v156 = vsub.s32 %v153, %v155
    %v157 = vrot.slane %v143, %v156
    %v158 = vcombine.high %v150, %v150
    %v159 = vcombine.high %v157, %v157
    %v161 = vunpack.c.l.s4 1966171168
    %v162 = vunpack.c.0.s8 %v161
    %v163 = vlaneseq
    %v164 = vshrl.u32 %v163, 7
    %v165 = vsub.s32 %v162, %v164
    %v166 = vrot.slane %v150, %v165
    %v168 = vunpack.c.l.s4 1966171168
    %v169 = vunpack.c.0.s8 %v168
    %v170 = vlaneseq
    %v171 = vshrl.u32 %v170, 7
    %v172 = vsub.s32 %v169, %v171
    %v173 = vrot.slane %v157, %v172
    %v175 = vunpack.c.l.s4 1966171168
    %v176 = vunpack.c.0.s8 %v175
    %v177 = vlaneseq
    %v178 = vshrl.u32 %v177, 7
    %v179 = vsub.s32 %v176, %v178
    %v180 = vrot.slane %v158, %v179
    %v182 = vunpack.c.l.s4 1966171168
    %v183 = vunpack.c.0.s8 %v182
    %v184 = vlaneseq
    %v185 = vshrl.u32 %v184, 7
    %v186 = vsub.s32 %v183, %v185
    %v187 = vrot.slane %v159, %v186
    %v188 = vcombine.high %v166, %v166
    %v189 = vcombine.high %v173, %v173
    %v190 = vcombine.high %v180, %v180
    %v191 = vcombine.high %v187, %v187
    %v328 = vunpack.c.l.b16 %v14
    %v329 = vunpack.c.l.b16 %v15
    %v330 = vunpack.c.l.b16 %v16
    %v331 = vunpack.c.l.b16 %v17
    %v332 = vunpack.c.l.b16 %v18
    %v333 = vunpack.c.l.b16 %v19
    %v334 = vunpack.c.l.b16 %v20
    %v335 = vunpack.c.l.b16 %v21
    %v336 = vunpack.c.l.b16 %v22
    %v337 = vunpack.c.l.b16 %v23
    %v338 = vunpack.c.l.b16 %v24
    %v339 = vunpack.c.l.b16 %v25
    %v340 = vunpack.c.l.b16 %v26
    %v341 = vunpack.c.l.b16 %v27
    %v342 = vunpack.c.l.b16 %v28
    %v343 = vunpack.c.l.b16 %v29
    %v344 = vunpack.c.l.b16 %v30
    %v345 = vunpack.c.l.b16 %v31
    %v346 = vunpack.c.l.b16 %v32
    %v347 = vunpack.c.l.b16 %v33
    %v348 = vunpack.c.l.b16 %v34
    %v349 = vunpack.c.l.b16 %v35
    %v350 = vunpack.c.l.b16 %v36
    %v351 = vunpack.c.l.b16 %v37
    %v352 = vunpack.c.l.b16 %v38
    %v353 = vunpack.c.l.b16 %v39
    %v354 = vunpack.c.l.b16 %v40
    %v355 = vunpack.c.l.b16 %v41
    %v356 = vunpack.c.l.b16 %v42
    %v357 = vunpack.c.l.b16 %v43
    %v358 = vunpack.c.l.b16 %v44
    %v359 = vunpack.c.l.b16 %v45
    %v360 = vunpack.c.l.b16 %v46
    %v361 = vunpack.c.l.b16 %v47
    %v362 = vunpack.c.l.b16 %v48
    %v363 = vunpack.c.l.b16 %v49
    %v364 = vunpack.c.l.b16 %v50
    %v365 = vunpack.c.l.b16 %v51
    %v366 = vunpack.c.l.b16 %v52
    %v367 = vunpack.c.l.b16 %v53
    %v368 = vunpack.c.l.b16 %v54
    %v369 = vunpack.c.l.b16 %v55
    %v370 = vunpack.c.l.b16 %v56
    %v371 = vunpack.c.l.b16 %v57
    %v372 = vunpack.c.l.b16 %v58
    %v373 = vunpack.c.l.b16 %v59
    %v374 = vunpack.c.l.b16 %v60
    %v375 = vunpack.c.l.b16 %v61
    %v376 = vunpack.c.l.b16 %v62
    %v377 = vunpack.c.l.b16 %v63
    %v378 = vunpack.c.l.b16 %v64
    %v379 = vunpack.c.l.b16 %v65
    %v380 = vunpack.c.l.b16 %v66
    %v381 = vunpack.c.l.b16 %v67
    %v382 = vunpack.c.l.b16 %v68
    %v383 = vunpack.c.l.b16 %v69
    %v384 = vunpack.c.l.b16 %v70
    %v385 = vunpack.c.l.b16 %v71
    %v386 = vunpack.c.l.b16 %v72
    %v387 = vunpack.c.l.b16 %v73
    %v388 = vunpack.c.l.b16 %v74
    %v389 = vunpack.c.l.b16 %v75
    %v390 = vunpack.c.l.b16 %v76
    %v391 = vunpack.c.l.b16 %v77
    %v392 = vunpack.c.l.b16 %v78
    %v393 = vunpack.c.l.b16 %v79
    %v394 = vunpack.c.l.b16 %v80
    %v395 = vunpack.c.l.b16 %v81
    %v396 = vunpack.c.l.b16 %v82
    %v397 = vunpack.c.l.b16 %v83
    %v398 = vunpack.c.l.b16 %v84
    %v399 = vunpack.c.l.b16 %v85
    %v400 = vunpack.c.l.b16 %v86
    %v401 = vunpack.c.l.b16 %v87
    %v402 = vunpack.c.l.b16 %v88
    %v403 = vunpack.c.l.b16 %v89
    %v404 = vunpack.c.l.b16 %v90
    %v405 = vunpack.c.l.b16 %v91
    %v406 = vunpack.c.l.b16 %v92
    %v407 = vunpack.c.l.b16 %v93
    %v408 = vunpack.c.l.b16 %v94
    %v409 = vunpack.c.l.b16 %v95
    %v410 = vunpack.c.l.b16 %v96
    %v411 = vunpack.c.l.b16 %v97
    %v412 = vunpack.c.l.b16 %v98
    %v413 = vunpack.c.l.b16 %v99
    %v414 = vunpack.c.l.b16 %v100
    %v415 = vunpack.c.l.b16 %v101
    %v416 = vunpack.c.l.b16 %v102
    %v417 = vunpack.c.l.b16 %v103
    %v418 = vunpack.c.l.b16 %v104
    %v419 = vunpack.c.l.b16 %v105
    %v420 = vunpack.c.l.b16 %v106
    %v421 = vunpack.c.l.b16 %v107
    %v422 = vunpack.c.l.b16 %v108
    %v423 = vunpack.c.l.b16 %v109
    %v424 = vunpack.c.l.b16 %v110
    %v425 = vunpack.c.l.b16 %v111
    %v426 = vunpack.c.l.b16 %v112
    %v427 = vunpack.c.l.b16 %v113
    %v428 = vunpack.c.l.b16 %v114
    %v429 = vunpack.c.l.b16 %v115
    %v430 = vunpack.c.l.b16 %v116
    %v431 = vunpack.c.l.b16 %v117
    %v432 = vunpack.c.l.b16 %v118
    %v433 = vunpack.c.l.b16 %v119
    %v434 = vunpack.c.l.b16 %v120
    %v435 = vunpack.c.l.b16 %v121
    %v436 = vunpack.c.l.b16 %v122
    %v437 = vunpack.c.l.b16 %v123
    %v438 = vunpack.c.l.b16 %v124
    %v439 = vunpack.c.l.b16 %v125
    %v440 = vunpack.c.l.b16 %v126
    %v441 = vunpack.c.l.b16 %v127
    %v442 = vunpack.c.l.b16 %v128
    %v443 = vunpack.c.l.b16 %v129
    %v444 = vunpack.c.l.b16 %v130
    %v445 = vunpack.c.l.b16 %v131
    %v446 = vunpack.c.l.b16 %v132
    %v447 = vunpack.c.l.b16 %v133
    %v448 = vunpack.c.l.b16 %v134
    %v449 = vunpack.c.l.b16 %v135
    %v450 = vunpack.c.l.b16 %v136
    %v451 = vunpack.c.l.b16 %v137
    %v452 = vunpack.c.l.b16 %v138
    %v453 = vunpack.c.l.b16 %v139
    %v454 = vunpack.c.l.b16 %v140
    %v455 = vunpack.c.l.b16 %v141
    %v456 = vpack.c.b16 %v329, %v328
    %v457 = vpack.c.b16 %v331, %v330
    %v458 = vpack.c.b16 %v333, %v332
    %v459 = vpack.c.b16 %v335, %v334
    %v460 = vpack.c.b16 %v337, %v336
    %v461 = vpack.c.b16 %v339, %v338
    %v462 = vpack.c.b16 %v341, %v340
    %v463 = vpack.c.b16 %v343, %v342
    %v464 = vpack.c.b16 %v345, %v344
    %v465 = vpack.c.b16 %v347, %v346
    %v466 = vpack.c.b16 %v349, %v348
    %v467 = vpack.c.b16 %v351, %v350
    %v468 = vpack.c.b16 %v353, %v352
    %v469 = vpack.c.b16 %v355, %v354
    %v470 = vpack.c.b16 %v357, %v356
    %v471 = vpack.c.b16 %v359, %v358
    %v472 = vpack.c.b16 %v361, %v360
    %v473 = vpack.c.b16 %v363, %v362
    %v474 = vpack.c.b16 %v365, %v364
    %v475 = vpack.c.b16 %v367, %v366
    %v476 = vpack.c.b16 %v369, %v368
    %v477 = vpack.c.b16 %v371, %v370
    %v478 = vpack.c.b16 %v373, %v372
    %v479 = vpack.c.b16 %v375, %v374
    %v480 = vpack.c.b16 %v377, %v376
    %v481 = vpack.c.b16 %v379, %v378
    %v482 = vpack.c.b16 %v381, %v380
    %v483 = vpack.c.b16 %v383, %v382
    %v484 = vpack.c.b16 %v385, %v384
    %v485 = vpack.c.b16 %v387, %v386
    %v486 = vpack.c.b16 %v389, %v388
    %v487 = vpack.c.b16 %v391, %v390
    %v488 = vpack.c.b16 %v393, %v392
    %v489 = vpack.c.b16 %v395, %v394
    %v490 = vpack.c.b16 %v397, %v396
    %v491 = vpack.c.b16 %v399, %v398
    %v492 = vpack.c.b16 %v401, %v400
    %v493 = vpack.c.b16 %v403, %v402
    %v494 = vpack.c.b16 %v405, %v404
    %v495 = vpack.c.b16 %v407, %v406
    %v496 = vpack.c.b16 %v409, %v408
    %v497 = vpack.c.b16 %v411, %v410
    %v498 = vpack.c.b16 %v413, %v412
    %v499 = vpack.c.b16 %v415, %v414
    %v500 = vpack.c.b16 %v417, %v416
    %v501 = vpack.c.b16 %v419, %v418
    %v502 = vpack.c.b16 %v421, %v420
    %v503 = vpack.c.b16 %v423, %v422
    %v504 = vpack.c.b16 %v425, %v424
    %v505 = vpack.c.b16 %v427, %v426
    %v506 = vpack.c.b16 %v429, %v428
    %v507 = vpack.c.b16 %v431, %v430
    %v508 = vpack.c.b16 %v433, %v432
    %v509 = vpack.c.b16 %v435, %v434
    %v510 = vpack.c.b16 %v437, %v436
    %v511 = vpack.c.b16 %v439, %v438
    %v512 = vpack.c.b16 %v441, %v440
    %v513 = vpack.c.b16 %v443, %v442
    %v514 = vpack.c.b16 %v445, %v444
    %v515 = vpack.c.b16 %v447, %v446
    %v516 = vpack.c.b16 %v449, %v448
    %v517 = vpack.c.b16 %v451, %v450
    %v518 = vpack.c.b16 %v453, %v452
    %v519 = vpack.c.b16 %v455, %v454
    %584 = vmatprep.subr.bf16.mxu0 0
    %585 = vmatpush1.bf16.msra.mxu0 %v456
    %586 = vmatprep.subr.bf16.mxu0 0
    %587 = vmatpush1.bf16.msra.mxu0 %v457
    %588 = vmatprep.subr.bf16.mxu0 0
    %589 = vmatpush1.bf16.msra.mxu0 %v458
    %590 = vmatprep.subr.bf16.mxu0 0
    %591 = vmatpush1.bf16.msra.mxu0 %v459
    %592 = vmatprep.subr.bf16.mxu0 0
    %593 = vmatpush1.bf16.msra.mxu0 %v460
    %594 = vmatprep.subr.bf16.mxu0 0
    %595 = vmatpush1.bf16.msra.mxu0 %v461
    %596 = vmatprep.subr.bf16.mxu0 0
    %597 = vmatpush1.bf16.msra.mxu0 %v462
    %598 = vmatprep.subr.bf16.mxu0 0
    %599 = vmatpush1.bf16.msra.mxu0 %v463
    %600 = vmatprep.subr.bf16.mxu0 0
    %601 = vmatpush1.bf16.msra.mxu0 %v464
    %602 = vmatprep.subr.bf16.mxu0 0
    %603 = vmatpush1.bf16.msra.mxu0 %v465
    %604 = vmatprep.subr.bf16.mxu0 0
    %605 = vmatpush1.bf16.msra.mxu0 %v466
    %606 = vmatprep.subr.bf16.mxu0 0
    %607 = vmatpush1.bf16.msra.mxu0 %v467
    %608 = vmatprep.subr.bf16.mxu0 0
    %609 = vmatpush1.bf16.msra.mxu0 %v468
    %610 = vmatprep.subr.bf16.mxu0 0
    %611 = vmatpush1.bf16.msra.mxu0 %v469
    %612 = vmatprep.subr.bf16.mxu0 0
    %613 = vmatpush1.bf16.msra.mxu0 %v470
    %614 = vmatprep.subr.bf16.mxu0 0
    %615 = vmatpush1.bf16.msra.mxu0 %v471
    %616 = vmatprep.mubr.bf16.mxu0 %v180
    %617 = vmatmul.mubr.bf16.gmra.mrb[0].mxu0 %v166
    %v618 = vpop.f32.mrb[0].mxu0
    %v619 = vadd.f32 0.0, %v618
    %v620 = vpop.f32.mrb[0].mxu0
    %v621 = vpop.f32.mrb[0].mxu0
    %v622 = vpop.f32.mrb[0].mxu0
    %623 = vdwg.mxu0
    %624 = vmatprep.subr.bf16.mxu0 0
    %625 = vmatpush1.bf16.msra.mxu0 %v472
    %626 = vmatprep.subr.bf16.mxu0 0
    %627 = vmatpush1.bf16.msra.mxu0 %v473
    %628 = vmatprep.subr.bf16.mxu0 0
    %629 = vmatpush1.bf16.msra.mxu0 %v474
    %630 = vmatprep.subr.bf16.mxu0 0
    %631 = vmatpush1.bf16.msra.mxu0 %v475
    %632 = vmatprep.subr.bf16.mxu0 0
    %633 = vmatpush1.bf16.msra.mxu0 %v476
    %634 = vmatprep.subr.bf16.mxu0 0
    %635 = vmatpush1.bf16.msra.mxu0 %v477
    %636 = vmatprep.subr.bf16.mxu0 0
    %637 = vmatpush1.bf16.msra.mxu0 %v478
    %638 = vmatprep.subr.bf16.mxu0 0
    %639 = vmatpush1.bf16.msra.mxu0 %v479
    %640 = vmatprep.subr.bf16.mxu0 0
    %641 = vmatpush1.bf16.msra.mxu0 %v480
    %642 = vmatprep.subr.bf16.mxu0 0
    %643 = vmatpush1.bf16.msra.mxu0 %v481
    %644 = vmatprep.subr.bf16.mxu0 0
    %645 = vmatpush1.bf16.msra.mxu0 %v482
    %646 = vmatprep.subr.bf16.mxu0 0
    %647 = vmatpush1.bf16.msra.mxu0 %v483
    %648 = vmatprep.subr.bf16.mxu0 0
    %649 = vmatpush1.bf16.msra.mxu0 %v484
    %650 = vmatprep.subr.bf16.mxu0 0
    %651 = vmatpush1.bf16.msra.mxu0 %v485
    %652 = vmatprep.subr.bf16.mxu0 0
    %653 = vmatpush1.bf16.msra.mxu0 %v486
    %654 = vmatprep.subr.bf16.mxu0 0
    %655 = vmatpush1.bf16.msra.mxu0 %v487
    %656 = vmatprep.mubr.bf16.mxu0 %v190
    %657 = vmatmul.mubr.bf16.gmra.mrb[0].mxu0 %v188
    %v658 = vpop.f32.mrb[0].mxu0
    %v659 = vadd.f32 %v619, %v658
    %v660 = vpop.f32.mrb[0].mxu0
    %v661 = vpop.f32.mrb[0].mxu0
    %v662 = vpop.f32.mrb[0].mxu0
    %663 = vdwg.mxu0
    %664 = vmatprep.subr.bf16.mxu0 0
    %665 = vmatpush1.bf16.msra.mxu0 %v488
    %666 = vmatprep.subr.bf16.mxu0 0
    %667 = vmatpush1.bf16.msra.mxu0 %v489
    %668 = vmatprep.subr.bf16.mxu0 0
    %669 = vmatpush1.bf16.msra.mxu0 %v490
    %670 = vmatprep.subr.bf16.mxu0 0
    %671 = vmatpush1.bf16.msra.mxu0 %v491
    %672 = vmatprep.subr.bf16.mxu0 0
    %673 = vmatpush1.bf16.msra.mxu0 %v492
    %674 = vmatprep.subr.bf16.mxu0 0
    %675 = vmatpush1.bf16.msra.mxu0 %v493
    %676 = vmatprep.subr.bf16.mxu0 0
    %677 = vmatpush1.bf16.msra.mxu0 %v494
    %678 = vmatprep.subr.bf16.mxu0 0
    %679 = vmatpush1.bf16.msra.mxu0 %v495
    %680 = vmatprep.subr.bf16.mxu0 0
    %681 = vmatpush1.bf16.msra.mxu0 %v496
    %682 = vmatprep.subr.bf16.mxu0 0
    %683 = vmatpush1.bf16.msra.mxu0 %v497
    %684 = vmatprep.subr.bf16.mxu0 0
    %685 = vmatpush1.bf16.msra.mxu0 %v498
    %686 = vmatprep.subr.bf16.mxu0 0
    %687 = vmatpush1.bf16.msra.mxu0 %v499
    %688 = vmatprep.subr.bf16.mxu0 0
    %689 = vmatpush1.bf16.msra.mxu0 %v500
    %690 = vmatprep.subr.bf16.mxu0 0
    %691 = vmatpush1.bf16.msra.mxu0 %v501
    %692 = vmatprep.subr.bf16.mxu0 0
    %693 = vmatpush1.bf16.msra.mxu0 %v502
    %694 = vmatprep.subr.bf16.mxu0 0
    %695 = vmatpush1.bf16.msra.mxu0 %v503
    %696 = vmatprep.mubr.bf16.mxu0 %v187
    %697 = vmatmul.mubr.bf16.gmra.mrb[0].mxu0 %v173
    %v698 = vpop.f32.mrb[0].mxu0
    %v699 = vadd.f32 %v659, %v698
    %v700 = vpop.f32.mrb[0].mxu0
    %v701 = vpop.f32.mrb[0].mxu0
    %v702 = vpop.f32.mrb[0].mxu0
    %703 = vdwg.mxu0
    %704 = vmatprep.subr.bf16.mxu0 0
    %705 = vmatpush1.bf16.msra.mxu0 %v504
    %706 = vmatprep.subr.bf16.mxu0 0
    %707 = vmatpush1.bf16.msra.mxu0 %v505
    %708 = vmatprep.subr.bf16.mxu0 0
    %709 = vmatpush1.bf16.msra.mxu0 %v506
    %710 = vmatprep.subr.bf16.mxu0 0
    %711 = vmatpush1.bf16.msra.mxu0 %v507
    %712 = vmatprep.subr.bf16.mxu0 0
    %713 = vmatpush1.bf16.msra.mxu0 %v508
    %714 = vmatprep.subr.bf16.mxu0 0
    %715 = vmatpush1.bf16.msra.mxu0 %v509
    %716 = vmatprep.subr.bf16.mxu0 0
    %717 = vmatpush1.bf16.msra.mxu0 %v510
    %718 = vmatprep.subr.bf16.mxu0 0
    %719 = vmatpush1.bf16.msra.mxu0 %v511
    %720 = vmatprep.subr.bf16.mxu0 0
    %721 = vmatpush1.bf16.msra.mxu0 %v512
    %722 = vmatprep.subr.bf16.mxu0 0
    %723 = vmatpush1.bf16.msra.mxu0 %v513
    %724 = vmatprep.subr.bf16.mxu0 0
    %725 = vmatpush1.bf16.msra.mxu0 %v514
    %726 = vmatprep.subr.bf16.mxu0 0
    %727 = vmatpush1.bf16.msra.mxu0 %v515
    %728 = vmatprep.subr.bf16.mxu0 0
    %729 = vmatpush1.bf16.msra.mxu0 %v516
    %730 = vmatprep.subr.bf16.mxu0 0
    %731 = vmatpush1.bf16.msra.mxu0 %v517
    %732 = vmatprep.subr.bf16.mxu0 0
    %733 = vmatpush1.bf16.msra.mxu0 %v518
    %734 = vmatprep.subr.bf16.mxu0 0
    %735 = vmatpush1.bf16.msra.mxu0 %v519
    %736 = vmatprep.mubr.bf16.mxu0 %v191
    %737 = vmatmul.mubr.bf16.gmra.mrb[0].mxu0 %v189
    %v738 = vpop.f32.mrb[0].mxu0
    %v739 = vadd.f32 %v699, %v738
    %v740 = vpop.f32.mrb[0].mxu0
    %v741 = vpop.f32.mrb[0].mxu0
    %v742 = vpop.f32.mrb[0].mxu0
    %743 = vdwg.mxu0
    %vm744 = vcmask 254976
    %745 = vst.msk [vmem:[#allocation2] sm:$0x3] %vm744, %v739
    // Predicated region
    $region10: #{d_forward.7} parent=1 // pred_check
      _
    $region11: #{d_forward.7} parent=1 // pred_check_branch
      %747 = sbr.rel (0) target = $region13
    $region12: #{d_forward.7} parent=1 // pred_region
      %s749 = ssub.s32 32, 32
      %750 = vsyncadd [#allocation3], %s749
      %s752 = sshll.u32 [#allocation2], 4
      %s753 = int_to_ptr.vmem [resolvable:$true] %s752
      %755 = dma.vmem_to_hbm [thread:$0]  %s753, 32, %s2, [#allocation3]
    $region13: #{d_forward.7} parent=1 // pred_fallthru
      _
    // Predicated region
    $region14: #{d_forward.7} parent=1 // pred_check
      _
    $region15: #{d_forward.7} parent=1 // pred_check_branch
      %757 = sbr.rel (0) target = $region17
    $region16: #{d_forward.7} parent=1 // pred_region
      %758 = dma.done [#allocation3], 32
    $region17: #{d_forward.7} parent=1 // pred_fallthru
      _
    %759 = vsyncpa [#allocation3], 1

</llo_original>
